<compile_context>
chip_gen: v6e
topology: v6e:2x2x1
jax: 0.10.0
libtpu: 0.0.40
codegen_flags: <defaults>
</compile_context>

<pallas_src>
import jax
import jax.numpy as jnp
import numpy as np
from jax import lax
from jax.experimental import pallas as pl
from jax.experimental.pallas import tpu as pltpu

KH, KW = 3, 7          # ContextNet kernel size
PH, PW = 1, 3          # 'same' padding
NEG_SLOPE = 0.01       # F.leaky_relu default slope
LP = 8                 # left pad inside every flattened row (>= PW)
SLACK = 16             # extra rows loaded per chunk (>= KW-1 + LP - PW = 11)


def _round_up(x, m):
    return (x + m - 1) // m * m


def _device_kind():
    try:
        return jax.devices()[0].device_kind.lower()
    except Exception:
        return ""


def _fold_weight_k(w_hwio):
    """(KH, KW, Cin, Cout) -> (KH*Cin, KW*Cout): KH folded into the contraction
    dim (matches the lane-concatenated LHS), KW folded into the output dim."""
    kh, kw, cin, cout = w_hwio.shape
    return jnp.transpose(w_hwio, (0, 2, 1, 3)).reshape(kh * cin, kw * cout)


def _fold_weight_n(w_hwio):
    """(KH, KW, Cin, Cout) -> (KH, Cin, KW*Cout): only KW folded (used when the
    input channel count is too small to bother lane-concatenating the LHS)."""
    kh, kw, cin, cout = w_hwio.shape
    return jnp.transpose(w_hwio, (0, 2, 1, 3)).reshape(kh, cin, kw * cout)


def _make_fused_kernel(H, W, C0, C1, C2, C3, RS, MB, MB1, LANE_T, FOLD1):
    HR = H * RS                      # flattened output rows (incl. pad columns)
    PR = (H + KH - 1) * RS + SLACK   # rows of every padded activation slab
    TOP = RS + LP                    # first slab row written by the chunk stores
    f32 = jnp.float32

    def kernel(x_ref, mask_ref, w1_ref, b1_ref, w2_ref, b2_ref, w3_ref, b3_ref,
               o_ref, p1, p2):
        # Zero only the halo rows the chunk stores never touch.  Cheap
        # (O(RS) rows, not O(H*RS)) and done every grid step, so it is correct
        # under megacore grid partitioning (no cross-iteration scratch state).
        p1[0:TOP, :] = jnp.zeros((TOP, C1), p1.dtype)
        p2[0:TOP, :] = jnp.zeros((TOP, C2), p2.dtype)
        p1[TOP + HR:PR, :] = jnp.zeros((PR - TOP - HR, C1), p1.dtype)
        p2[TOP + HR:PR, :] = jnp.zeros((PR - TOP - HR, C2), p2.dtype)

        def conv_layer(load, wsl, b_ref, cin, cout, act, fold_kh, mb, store):
            bias = b_ref[...].astype(f32)                 # (1, cout), hoisted
            gt = max(1, min(KW, LANE_T // cout))          # taps per MXU dot
            for m0 in range(0, HR, mb):
                cur = min(mb, HR - m0)
                nld = cur + SLACK
                # Three row-shifted views of the source slab (bf16).
                parts = [load(kh * RS + m0, nld) for kh in range(KH)]
                lhs = jnp.concatenate(parts, axis=1) if fold_kh else None
                acc = None
                for kw0 in range(0, KW, gt):
                    gc = min(gt, KW - kw0)
                    lo, hi = kw0 * cout, (kw0 + gc) * cout
                    if fold_kh:
                        # One dot: K = KH*cin, N = gc*cout.
                        z = jnp.dot(lhs, wsl(0, lo, hi),
                                    preferred_element_type=f32)
                    else:
                        # Tiny-cin layer: per-kh dots, summed before shifting
                        # so the shifted adds stay at KW per chunk.
                        z = None
                        for kh in range(KH):
                            zk = jnp.dot(parts[kh], wsl(kh, lo, hi),
                                         preferred_element_type=f32)
                            z = zk if z is None else z + zk
                    for j in range(gc):
                        s = kw0 + j + LP - PW             # sublane shift of tap
                        t = z[s:s + cur, j * cout:(j + 1) * cout]
                        acc = t if acc is None else acc + t
                acc = acc + bias
                if act:
                    acc = jnp.maximum(acc, NEG_SLOPE * acc)   # LeakyReLU
                store(m0, cur, acc)

        def store_slab(dst):
            def st(m0, cur, val):
                msk = mask_ref[m0:m0 + cur, :]            # (cur, 1) in {0, 1}
                dst[TOP + m0:TOP + m0 + cur, :] = (val * msk).astype(dst.dtype)
            return st

        def store_out(m0, cur, val):
            # pad columns are sliced off by the wrapper -> no mask needed
            o_ref[0, m0:m0 + cur, :] = val.astype(o_ref.dtype)

        load_x = lambda r, n: x_ref[0, r:r + n, :]
        load_p1 = lambda r, n: p1[r:r + n, :]
        load_p2 = lambda r, n: p2[r:r + n, :]

        if FOLD1:
            w1s = lambda kh, lo, hi: w1_ref[:, lo:hi]
        else:
            w1s = lambda kh, lo, hi: w1_ref[kh, :, lo:hi]
        w2s = lambda kh, lo, hi: w2_ref[:, lo:hi]
        w3s = lambda kh, lo, hi: w3_ref[:, lo:hi]

        conv_layer(load_x, w1s, b1_ref, C0, C1, True, FOLD1, MB1, store_slab(p1))
        conv_layer(load_p1, w2s, b2_ref, C1, C2, True, True, MB, store_slab(p2))
        conv_layer(load_p2, w3s, b3_ref, C2, C3, False, True, MB, store_out)

    return kernel


def context_net_forward(params, x_nchw):
    """Equivalent of ContextNet.forward; x is NCHW (PyTorch), output is NCHW."""
    w1, b1, w2, b2, w3, b3 = params
    N, C0, H, W = x_nchw.shape
    C1, C2, C3 = w1.shape[3], w2.shape[3], w3.shape[3]

    kind = _device_kind()
    old_gen = any(t in kind for t in ("v2", "v3", "v4", "v5"))
    LANE_T = 128 if old_gen else 256      # MXU output lanes per dot
    MB = 64 if old_gen else 128           # flattened rows per accumulator chunk
    MB1 = 64                              # conv1 uses small chunks (wide z tile)
    FOLD1 = C0 >= 32                      # fold KH into K only if cin is wide

    RS = _round_up(W + LP + PW, 16)       # padded row stride (16-aligned loads)
    HR = H * RS
    PR = (H + KH - 1) * RS + SLACK

    # NCHW -> NHWC, bf16 cast and zero padding into the flattened padded-row
    # layout the kernel consumes directly (all fused by XLA into one copy-ish
    # op; removes the in-kernel scatter and the p0 scratch slab).
    xt = jnp.transpose(x_nchw, (0, 2, 3, 1)).astype(jnp.bfloat16)
    xp = jnp.pad(xt, ((0, 0), (PH, KH - 1 - PH), (LP, RS - LP - W), (0, 0)))
    xf = jnp.pad(xp.reshape(N, (H + KH - 1) * RS, C0),
                 ((0, 0), (0, SLACK), (0, 0)))

    # 1.0 for real pixels, 0.0 for pad columns (constant, built at trace time).
    colmask = jnp.asarray(
        (np.arange(HR) % RS < W).astype(np.float32).reshape(HR, 1))

    wf1 = (_fold_weight_k(w1) if FOLD1 else _fold_weight_n(w1)).astype(jnp.bfloat16)
    wf2 = _fold_weight_k(w2).astype(jnp.bfloat16)
    wf3 = _fold_weight_k(w3).astype(jnp.bfloat16)
    bs1 = b1.reshape(1, C1).astype(jnp.float32)
    bs2 = b2.reshape(1, C2).astype(jnp.float32)
    bs3 = b3.reshape(1, C3).astype(jnp.float32)

    kernel = _make_fused_kernel(H, W, C0, C1, C2, C3, RS, MB, MB1, LANE_T, FOLD1)

    w1_spec = (pl.BlockSpec((KH * C0, KW * C1), lambda n: (0, 0)) if FOLD1
               else pl.BlockSpec((KH, C0, KW * C1), lambda n: (0, 0, 0)))

    flops = 2 * N * H * W * KH * KW * (C0 * C1 + C1 * C2 + C2 * C3)
    bytes_accessed = int(N * PR * C0 * 2 + N * HR * C3 * 4 + HR * 4
                         + 2 * (wf1.size + wf2.size + wf3.size)
                         + 4 * (C1 + C2 + C3))
    cost = pl.CostEstimate(flops=int(flops), transcendentals=0,
                           bytes_accessed=bytes_accessed)

    # VMEM footprint: resident slabs + double-buffered in/out blocks + weights.
    need = (PR * (C1 + C2) * 2 + 2 * PR * C0 * 2 + 2 * HR * C3 * 4
            + 2 * HR * 4 + 4 * (wf1.size + wf2.size + wf3.size) + (4 << 20))
    cap = (48 << 20) if ("v7" in kind or "7x" in kind) else (96 << 20)
    vmem_limit = int(min(cap, max(32 << 20, need)))

    out = pl.pallas_call(
        kernel,
        out_shape=jax.ShapeDtypeStruct((N, HR, C3), jnp.float32),
        grid_spec=pltpu.PrefetchScalarGridSpec(
            num_scalar_prefetch=0,
            grid=(N,),
            in_specs=[
                pl.BlockSpec((1, PR, C0), lambda n: (n, 0, 0)),
                pl.BlockSpec((HR, 1), lambda n: (0, 0)),
                w1_spec,
                pl.BlockSpec((1, C1), lambda n: (0, 0)),
                pl.BlockSpec((KH * C1, KW * C2), lambda n: (0, 0)),
                pl.BlockSpec((1, C2), lambda n: (0, 0)),
                pl.BlockSpec((KH * C2, KW * C3), lambda n: (0, 0)),
                pl.BlockSpec((1, C3), lambda n: (0, 0)),
            ],
            out_specs=pl.BlockSpec((1, HR, C3), lambda n: (n, 0, 0)),
            scratch_shapes=[
                pltpu.VMEM((PR, C1), jnp.bfloat16),   # padded conv1 output slab
                pltpu.VMEM((PR, C2), jnp.bfloat16),   # padded conv2 output slab
            ],
        ),
        compiler_params=pltpu.CompilerParams(
            dimension_semantics=("parallel",),
            vmem_limit_bytes=vmem_limit,
        ),
        cost_estimate=cost,
    )(xf, colmask, wf1, bs1, wf2, bs2, wf3, bs3)

    y = out.reshape(N, H, RS, C3)[:, :, :W, :]    # drop pad columns
    return jnp.transpose(y, (0, 3, 1, 2))         # NHWC -> NCHW


def init_context_net_params(key, inp_size, out_size):
    """Deterministic PyTorch-style (uniform +-1/sqrt(fan_in)) init, HWIO layout."""
    ks = jax.random.split(key, 6)

    def conv_init(kw_key, kb_key, cin, cout, kh, kw):
        fan_in = cin * kh * kw
        bound = 1.0 / (fan_in ** 0.5)
        w = jax.random.uniform(kw_key, (kh, kw, cin, cout), jnp.float32, -bound, bound)
        b = jax.random.uniform(kb_key, (cout,), jnp.float32, -bound, bound)
        return w, b

    w1, b1 = conv_init(ks[0], ks[1], inp_size, 64, KH, KW)
    w2, b2 = conv_init(ks[2], ks[3], 64, 32, KH, KW)
    w3, b3 = conv_init(ks[4], ks[5], 32, out_size, KH, KW)
    return (w1, b1, w2, b2, w3, b3)


# ---------------- references (pure XLA) for correctness check ----------------
def _ref_conv(x_nhwc, w_hwio, b, act):
    y = lax.conv_general_dilated(
        x_nhwc, w_hwio, window_strides=(1, 1),
        padding=((PH, PH), (PW, PW)),
        dimension_numbers=("NHWC", "HWIO", "NHWC"),
    ) + b[None, None, None, :]
    if act:
        y = jnp.where(y >= 0, y, NEG_SLOPE * y)
    return y


def _ref_forward_f32(params, x_nchw):
    w1, b1, w2, b2, w3, b3 = params
    x = jnp.transpose(x_nchw, (0, 2, 3, 1))
    x = _ref_conv(x, w1, b1, True)
    x = _ref_conv(x, w2, b2, True)
    x = _ref_conv(x, w3, b3, False)
    return jnp.transpose(x, (0, 3, 1, 2))


def _ref_forward_bf16(params, x_nchw):
    """Mirrors the kernel's precision: bf16 activations/weights, f32 accumulate."""
    w1, b1, w2, b2, w3, b3 = params
    bf = lambda a: a.astype(jnp.bfloat16).astype(jnp.float32)
    x = bf(jnp.transpose(x_nchw, (0, 2, 3, 1)))
    x = bf(_ref_conv(x, bf(w1), b1, True))
    x = bf(_ref_conv(x, bf(w2), b2, True))
    x = _ref_conv(x, bf(w3), b3, False)
    return jnp.transpose(x, (0, 3, 1, 2))


if __name__ == "__main__":
    key = jax.random.PRNGKey(0)
    k_param, k_x = jax.random.split(key)

    inp_size, out_size = 4, 8
    N, H, W = 2, 8, 16

    params = init_context_net_params(k_param, inp_size, out_size)
    x = jax.random.normal(k_x, (N, inp_size, H, W), jnp.float32)  # NCHW

    fwd = jax.jit(context_net_forward)
    out = jax.block_until_ready(fwd(params, x))
    assert out.shape == (N, out_size, H, W), out.shape

    ref_bf = jax.block_until_ready(_ref_forward_bf16(params, x))
    ref_f32 = jax.block_until_ready(_ref_forward_f32(params, x))
    err_bf = float(jnp.max(jnp.abs(out - ref_bf)))
    err_f32 = float(jnp.max(jnp.abs(out - ref_f32)))
    assert err_bf < 2e-3, f"max abs error vs bf16-matched reference: {err_bf}"
    assert err_f32 < 5e-2, f"max abs error vs f32 reference: {err_f32}"

    print("KERNEL_OK")
</pallas_src>

<mosaic_0001>
module attributes {stable_mosaic.version = 11 : i64} {
  func.func @kernel(%arg0: i32, %arg1: memref<1x336x4xbf16, #tpu.memory_space<vmem>>, %arg2: memref<256x1xf32, #tpu.memory_space<vmem>>, %arg3: memref<3x4x448xbf16, #tpu.memory_space<vmem>>, %arg4: memref<1x64xf32, #tpu.memory_space<vmem>>, %arg5: memref<192x224xbf16, #tpu.memory_space<vmem>>, %arg6: memref<1x32xf32, #tpu.memory_space<vmem>>, %arg7: memref<96x56xbf16, #tpu.memory_space<vmem>>, %arg8: memref<1x8xf32, #tpu.memory_space<vmem>>, %arg9: memref<1x256x8xf32, #tpu.memory_space<vmem>>, %arg10: memref<336x64xbf16, #tpu.memory_space<vmem>>, %arg11: memref<336x32xbf16, #tpu.memory_space<vmem>>) attributes {dimension_semantics = [#tpu.dimension_semantics<parallel>], iteration_bounds = array<i64: 2>, scalar_prefetch = 0 : i64, scratch_operands = 2 : i64, tpu.core_type = #tpu.core_type<tc>, window_params = [{transform_indices = @transform_0, window_bounds = array<i64: 1, 336, 4>}, {pipeline_mode = #tpu.pipeline_mode<synchronous>, transform_indices = @transform_1, window_bounds = array<i64: 256, 1>}, {pipeline_mode = #tpu.pipeline_mode<synchronous>, transform_indices = @transform_2, window_bounds = array<i64: 3, 4, 448>}, {pipeline_mode = #tpu.pipeline_mode<synchronous>, transform_indices = @transform_3, window_bounds = array<i64: 1, 64>}, {pipeline_mode = #tpu.pipeline_mode<synchronous>, transform_indices = @transform_4, window_bounds = array<i64: 192, 224>}, {pipeline_mode = #tpu.pipeline_mode<synchronous>, transform_indices = @transform_5, window_bounds = array<i64: 1, 32>}, {pipeline_mode = #tpu.pipeline_mode<synchronous>, transform_indices = @transform_6, window_bounds = array<i64: 96, 56>}, {pipeline_mode = #tpu.pipeline_mode<synchronous>, transform_indices = @transform_7, window_bounds = array<i64: 1, 8>}, {transform_indices = @transform_8, window_bounds = array<i64: 1, 256, 8>}]} {
    %cst = arith.constant 0.000000e+00 : bf16
    %0 = vector.broadcast %cst : bf16 to vector<40x64xbf16>
    %c0 = arith.constant 0 : index
    %c0_0 = arith.constant 0 : index
    %1 = vector.load %arg10[%c0, %c0_0] : memref<336x64xbf16, #tpu.memory_space<vmem>>, vector<40x64xbf16>
    tpu.vector_store %arg10[%c0, %c0_0], %0 {strides = array<i32>} : memref<336x64xbf16, #tpu.memory_space<vmem>>, vector<40x64xbf16>,
    %cst_1 = arith.constant 0.000000e+00 : bf16
    %2 = vector.broadcast %cst_1 : bf16 to vector<40x32xbf16>
    %c0_2 = arith.constant 0 : index
    %c0_3 = arith.constant 0 : index
    %3 = vector.load %arg11[%c0_2, %c0_3] : memref<336x32xbf16, #tpu.memory_space<vmem>>, vector<40x32xbf16>
    tpu.vector_store %arg11[%c0_2, %c0_3], %2 {strides = array<i32>} : memref<336x32xbf16, #tpu.memory_space<vmem>>, vector<40x32xbf16>,
    %cst_4 = arith.constant 0.000000e+00 : bf16
    %4 = vector.broadcast %cst_4 : bf16 to vector<40x64xbf16>
    %c296 = arith.constant 296 : index
    %c0_5 = arith.constant 0 : index
    %5 = vector.load %arg10[%c296, %c0_5] : memref<336x64xbf16, #tpu.memory_space<vmem>>, vector<40x64xbf16>
    tpu.vector_store %arg10[%c296, %c0_5], %4 {strides = array<i32>} : memref<336x64xbf16, #tpu.memory_space<vmem>>, vector<40x64xbf16>,
    %cst_6 = arith.constant 0.000000e+00 : bf16
    %6 = vector.broadcast %cst_6 : bf16 to vector<40x32xbf16>
    %c296_7 = arith.constant 296 : index
    %c0_8 = arith.constant 0 : index
    %7 = vector.load %arg11[%c296_7, %c0_8] : memref<336x32xbf16, #tpu.memory_space<vmem>>, vector<40x32xbf16>
    tpu.vector_store %arg11[%c296_7, %c0_8], %6 {strides = array<i32>} : memref<336x32xbf16, #tpu.memory_space<vmem>>, vector<40x32xbf16>,
    %c0_9 = arith.constant 0 : index
    %c0_10 = arith.constant 0 : index
    %8 = vector.load %arg4[%c0_9, %c0_10] : memref<1x64xf32, #tpu.memory_space<vmem>>, vector<1x64xf32>
    %c0_11 = arith.constant 0 : index
    %c0_12 = arith.constant 0 : index
    %c0_13 = arith.constant 0 : index
    %9 = vector.load %arg1[%c0_11, %c0_12, %c0_13] : memref<1x336x4xbf16, #tpu.memory_space<vmem>>, vector<1x80x4xbf16>
    %10 = vector.shape_cast %9 : vector<1x80x4xbf16> to vector<80x4xbf16>
    %c0_14 = arith.constant 0 : index
    %c32 = arith.constant 32 : index
    %c0_15 = arith.constant 0 : index
    %11 = vector.load %arg1[%c0_14, %c32, %c0_15] : memref<1x336x4xbf16, #tpu.memory_space<vmem>>, vector<1x80x4xbf16>
    %12 = vector.shape_cast %11 : vector<1x80x4xbf16> to vector<80x4xbf16>
    %c0_16 = arith.constant 0 : index
    %c64 = arith.constant 64 : index
    %c0_17 = arith.constant 0 : index
    %13 = vector.load %arg1[%c0_16, %c64, %c0_17] : memref<1x336x4xbf16, #tpu.memory_space<vmem>>, vector<1x80x4xbf16>
    %14 = vector.shape_cast %13 : vector<1x80x4xbf16> to vector<80x4xbf16>
    %c0_18 = arith.constant 0 : index
    %c0_19 = arith.constant 0 : index
    %c0_20 = arith.constant 0 : index
    %15 = vector.load %arg3[%c0_18, %c0_19, %c0_20] : memref<3x4x448xbf16, #tpu.memory_space<vmem>>, vector<1x4x256xbf16>
    %16 = vector.shape_cast %15 : vector<1x4x256xbf16> to vector<4x256xbf16>
    %cst_21 = arith.constant dense<0.000000e+00> : vector<80x256xf32>
    %17 = tpu.matmul %10, %16, %cst_21 {dimension_numbers = #tpu.dot_dimension_numbers<[1], [0], [0], [1], [0, 0, 1, 1], [], []>} : vector<80x4xbf16>, vector<4x256xbf16>, vector<80x256xf32> -> vector<80x256xf32>
    %c1 = arith.constant 1 : index
    %c0_22 = arith.constant 0 : index
    %c0_23 = arith.constant 0 : index
    %18 = vector.load %arg3[%c1, %c0_22, %c0_23] : memref<3x4x448xbf16, #tpu.memory_space<vmem>>, vector<1x4x256xbf16>
    %19 = vector.shape_cast %18 : vector<1x4x256xbf16> to vector<4x256xbf16>
    %cst_24 = arith.constant dense<0.000000e+00> : vector<80x256xf32>
    %20 = tpu.matmul %12, %19, %cst_24 {dimension_numbers = #tpu.dot_dimension_numbers<[1], [0], [0], [1], [0, 0, 1, 1], [], []>} : vector<80x4xbf16>, vector<4x256xbf16>, vector<80x256xf32> -> vector<80x256xf32>
    %21 = arith.addf %17, %20 : vector<80x256xf32>
    %c2 = arith.constant 2 : index
    %c0_25 = arith.constant 0 : index
    %c0_26 = arith.constant 0 : index
    %22 = vector.load %arg3[%c2, %c0_25, %c0_26] : memref<3x4x448xbf16, #tpu.memory_space<vmem>>, vector<1x4x256xbf16>
    %23 = vector.shape_cast %22 : vector<1x4x256xbf16> to vector<4x256xbf16>
    %cst_27 = arith.constant dense<0.000000e+00> : vector<80x256xf32>
    %24 = tpu.matmul %14, %23, %cst_27 {dimension_numbers = #tpu.dot_dimension_numbers<[1], [0], [0], [1], [0, 0, 1, 1], [], []>} : vector<80x4xbf16>, vector<4x256xbf16>, vector<80x256xf32> -> vector<80x256xf32>
    %25 = arith.addf %21, %24 : vector<80x256xf32>
    %26 = vector.extract_strided_slice %25 {offsets = [5, 0], sizes = [64, 64], strides = [1, 1]} : vector<80x256xf32> to vector<64x64xf32>
    %27 = vector.extract_strided_slice %25 {offsets = [6, 64], sizes = [64, 64], strides = [1, 1]} : vector<80x256xf32> to vector<64x64xf32>
    %28 = arith.addf %26, %27 : vector<64x64xf32>
    %29 = vector.extract_strided_slice %25 {offsets = [7, 128], sizes = [64, 64], strides = [1, 1]} : vector<80x256xf32> to vector<64x64xf32>
    %30 = arith.addf %28, %29 : vector<64x64xf32>
    %31 = vector.extract_strided_slice %25 {offsets = [8, 192], sizes = [64, 64], strides = [1, 1]} : vector<80x256xf32> to vector<64x64xf32>
    %32 = arith.addf %30, %31 : vector<64x64xf32>
    %c0_28 = arith.constant 0 : index
    %c0_29 = arith.constant 0 : index
    %c256 = arith.constant 256 : index
    %33 = vector.load %arg3[%c0_28, %c0_29, %c256] : memref<3x4x448xbf16, #tpu.memory_space<vmem>>, vector<1x4x192xbf16>
    %34 = vector.shape_cast %33 : vector<1x4x192xbf16> to vector<4x192xbf16>
    %cst_30 = arith.constant dense<0.000000e+00> : vector<80x192xf32>
    %35 = tpu.matmul %10, %34, %cst_30 {dimension_numbers = #tpu.dot_dimension_numbers<[1], [0], [0], [1], [0, 0, 1, 1], [], []>} : vector<80x4xbf16>, vector<4x192xbf16>, vector<80x192xf32> -> vector<80x192xf32>
    %c1_31 = arith.constant 1 : index
    %c0_32 = arith.constant 0 : index
    %c256_33 = arith.constant 256 : index
    %36 = vector.load %arg3[%c1_31, %c0_32, %c256_33] : memref<3x4x448xbf16, #tpu.memory_space<vmem>>, vector<1x4x192xbf16>
    %37 = vector.shape_cast %36 : vector<1x4x192xbf16> to vector<4x192xbf16>
    %cst_34 = arith.constant dense<0.000000e+00> : vector<80x192xf32>
    %38 = tpu.matmul %12, %37, %cst_34 {dimension_numbers = #tpu.dot_dimension_numbers<[1], [0], [0], [1], [0, 0, 1, 1], [], []>} : vector<80x4xbf16>, vector<4x192xbf16>, vector<80x192xf32> -> vector<80x192xf32>
    %39 = arith.addf %35, %38 : vector<80x192xf32>
    %c2_35 = arith.constant 2 : index
    %c0_36 = arith.constant 0 : index
    %c256_37 = arith.constant 256 : index
    %40 = vector.load %arg3[%c2_35, %c0_36, %c256_37] : memref<3x4x448xbf16, #tpu.memory_space<vmem>>, vector<1x4x192xbf16>
    %41 = vector.shape_cast %40 : vector<1x4x192xbf16> to vector<4x192xbf16>
    %cst_38 = arith.constant dense<0.000000e+00> : vector<80x192xf32>
    %42 = tpu.matmul %14, %41, %cst_38 {dimension_numbers = #tpu.dot_dimension_numbers<[1], [0], [0], [1], [0, 0, 1, 1], [], []>} : vector<80x4xbf16>, vector<4x192xbf16>, vector<80x192xf32> -> vector<80x192xf32>
    %43 = arith.addf %39, %42 : vector<80x192xf32>
    %44 = vector.extract_strided_slice %43 {offsets = [9, 0], sizes = [64, 64], strides = [1, 1]} : vector<80x192xf32> to vector<64x64xf32>
    %45 = arith.addf %32, %44 : vector<64x64xf32>
    %46 = vector.extract_strided_slice %43 {offsets = [10, 64], sizes = [64, 64], strides = [1, 1]} : vector<80x192xf32> to vector<64x64xf32>
    %47 = arith.addf %45, %46 : vector<64x64xf32>
    %48 = vector.extract_strided_slice %43 {offsets = [11, 128], sizes = [64, 64], strides = [1, 1]} : vector<80x192xf32> to vector<64x64xf32>
    %49 = arith.addf %47, %48 : vector<64x64xf32>
    %50 = vector.broadcast %8 : vector<1x64xf32> to vector<64x64xf32>
    %51 = arith.addf %49, %50 : vector<64x64xf32>
    %cst_39 = arith.constant 0.00999999977 : f32
    %52 = vector.broadcast %cst_39 : f32 to vector<64x64xf32>
    %53 = arith.mulf %52, %51 : vector<64x64xf32>
    %54 = arith.maximumf %51, %53 : vector<64x64xf32>
    %c0_40 = arith.constant 0 : index
    %c0_41 = arith.constant 0 : index
    %55 = vector.load %arg2[%c0_40, %c0_41] : memref<256x1xf32, #tpu.memory_space<vmem>>, vector<64x1xf32>
    %56 = vector.broadcast %55 : vector<64x1xf32> to vector<64x64xf32>
    %57 = arith.mulf %54, %56 : vector<64x64xf32>
    %58 = arith.truncf %57 : vector<64x64xf32> to vector<64x64xbf16>
    %c40 = arith.constant 40 : index
    %c0_42 = arith.constant 0 : index
    %59 = vector.load %arg10[%c40, %c0_42] : memref<336x64xbf16, #tpu.memory_space<vmem>>, vector<64x64xbf16>
    tpu.vector_store %arg10[%c40, %c0_42], %58 {strides = array<i32>} : memref<336x64xbf16, #tpu.memory_space<vmem>>, vector<64x64xbf16>,
    %c0_43 = arith.constant 0 : index
    %c64_44 = arith.constant 64 : index
    %c0_45 = arith.constant 0 : index
    %60 = vector.load %arg1[%c0_43, %c64_44, %c0_45] : memref<1x336x4xbf16, #tpu.memory_space<vmem>>, vector<1x80x4xbf16>
    %61 = vector.shape_cast %60 : vector<1x80x4xbf16> to vector<80x4xbf16>
    %c0_46 = arith.constant 0 : index
    %c96 = arith.constant 96 : index
    %c0_47 = arith.constant 0 : index
    %62 = vector.load %arg1[%c0_46, %c96, %c0_47] : memref<1x336x4xbf16, #tpu.memory_space<vmem>>, vector<1x80x4xbf16>
    %63 = vector.shape_cast %62 : vector<1x80x4xbf16> to vector<80x4xbf16>
    %c0_48 = arith.constant 0 : index
    %c128 = arith.constant 128 : index
    %c0_49 = arith.constant 0 : index
    %64 = vector.load %arg1[%c0_48, %c128, %c0_49] : memref<1x336x4xbf16, #tpu.memory_space<vmem>>, vector<1x80x4xbf16>
    %65 = vector.shape_cast %64 : vector<1x80x4xbf16> to vector<80x4xbf16>
    %c0_50 = arith.constant 0 : index
    %c0_51 = arith.constant 0 : index
    %c0_52 = arith.constant 0 : index
    %66 = vector.load %arg3[%c0_50, %c0_51, %c0_52] : memref<3x4x448xbf16, #tpu.memory_space<vmem>>, vector<1x4x256xbf16>
    %67 = vector.shape_cast %66 : vector<1x4x256xbf16> to vector<4x256xbf16>
    %cst_53 = arith.constant dense<0.000000e+00> : vector<80x256xf32>
    %68 = tpu.matmul %61, %67, %cst_53 {dimension_numbers = #tpu.dot_dimension_numbers<[1], [0], [0], [1], [0, 0, 1, 1], [], []>} : vector<80x4xbf16>, vector<4x256xbf16>, vector<80x256xf32> -> vector<80x256xf32>
    %c1_54 = arith.constant 1 : index
    %c0_55 = arith.constant 0 : index
    %c0_56 = arith.constant 0 : index
    %69 = vector.load %arg3[%c1_54, %c0_55, %c0_56] : memref<3x4x448xbf16, #tpu.memory_space<vmem>>, vector<1x4x256xbf16>
    %70 = vector.shape_cast %69 : vector<1x4x256xbf16> to vector<4x256xbf16>
    %cst_57 = arith.constant dense<0.000000e+00> : vector<80x256xf32>
    %71 = tpu.matmul %63, %70, %cst_57 {dimension_numbers = #tpu.dot_dimension_numbers<[1], [0], [0], [1], [0, 0, 1, 1], [], []>} : vector<80x4xbf16>, vector<4x256xbf16>, vector<80x256xf32> -> vector<80x256xf32>
    %72 = arith.addf %68, %71 : vector<80x256xf32>
    %c2_58 = arith.constant 2 : index
    %c0_59 = arith.constant 0 : index
    %c0_60 = arith.constant 0 : index
    %73 = vector.load %arg3[%c2_58, %c0_59, %c0_60] : memref<3x4x448xbf16, #tpu.memory_space<vmem>>, vector<1x4x256xbf16>
    %74 = vector.shape_cast %73 : vector<1x4x256xbf16> to vector<4x256xbf16>
    %cst_61 = arith.constant dense<0.000000e+00> : vector<80x256xf32>
    %75 = tpu.matmul %65, %74, %cst_61 {dimension_numbers = #tpu.dot_dimension_numbers<[1], [0], [0], [1], [0, 0, 1, 1], [], []>} : vector<80x4xbf16>, vector<4x256xbf16>, vector<80x256xf32> -> vector<80x256xf32>
    %76 = arith.addf %72, %75 : vector<80x256xf32>
    %77 = vector.extract_strided_slice %76 {offsets = [5, 0], sizes = [64, 64], strides = [1, 1]} : vector<80x256xf32> to vector<64x64xf32>
    %78 = vector.extract_strided_slice %76 {offsets = [6, 64], sizes = [64, 64], strides = [1, 1]} : vector<80x256xf32> to vector<64x64xf32>
    %79 = arith.addf %77, %78 : vector<64x64xf32>
    %80 = vector.extract_strided_slice %76 {offsets = [7, 128], sizes = [64, 64], strides = [1, 1]} : vector<80x256xf32> to vector<64x64xf32>
    %81 = arith.addf %79, %80 : vector<64x64xf32>
    %82 = vector.extract_strided_slice %76 {offsets = [8, 192], sizes = [64, 64], strides = [1, 1]} : vector<80x256xf32> to vector<64x64xf32>
    %83 = arith.addf %81, %82 : vector<64x64xf32>
    %c0_62 = arith.constant 0 : index
    %c0_63 = arith.constant 0 : index
    %c256_64 = arith.constant 256 : index
    %84 = vector.load %arg3[%c0_62, %c0_63, %c256_64] : memref<3x4x448xbf16, #tpu.memory_space<vmem>>, vector<1x4x192xbf16>
    %85 = vector.shape_cast %84 : vector<1x4x192xbf16> to vector<4x192xbf16>
    %cst_65 = arith.constant dense<0.000000e+00> : vector<80x192xf32>
    %86 = tpu.matmul %61, %85, %cst_65 {dimension_numbers = #tpu.dot_dimension_numbers<[1], [0], [0], [1], [0, 0, 1, 1], [], []>} : vector<80x4xbf16>, vector<4x192xbf16>, vector<80x192xf32> -> vector<80x192xf32>
    %c1_66 = arith.constant 1 : index
    %c0_67 = arith.constant 0 : index
    %c256_68 = arith.constant 256 : index
    %87 = vector.load %arg3[%c1_66, %c0_67, %c256_68] : memref<3x4x448xbf16, #tpu.memory_space<vmem>>, vector<1x4x192xbf16>
    %88 = vector.shape_cast %87 : vector<1x4x192xbf16> to vector<4x192xbf16>
    %cst_69 = arith.constant dense<0.000000e+00> : vector<80x192xf32>
    %89 = tpu.matmul %63, %88, %cst_69 {dimension_numbers = #tpu.dot_dimension_numbers<[1], [0], [0], [1], [0, 0, 1, 1], [], []>} : vector<80x4xbf16>, vector<4x192xbf16>, vector<80x192xf32> -> vector<80x192xf32>
    %90 = arith.addf %86, %89 : vector<80x192xf32>
    %c2_70 = arith.constant 2 : index
    %c0_71 = arith.constant 0 : index
    %c256_72 = arith.constant 256 : index
    %91 = vector.load %arg3[%c2_70, %c0_71, %c256_72] : memref<3x4x448xbf16, #tpu.memory_space<vmem>>, vector<1x4x192xbf16>
    %92 = vector.shape_cast %91 : vector<1x4x192xbf16> to vector<4x192xbf16>
    %cst_73 = arith.constant dense<0.000000e+00> : vector<80x192xf32>
    %93 = tpu.matmul %65, %92, %cst_73 {dimension_numbers = #tpu.dot_dimension_numbers<[1], [0], [0], [1], [0, 0, 1, 1], [], []>} : vector<80x4xbf16>, vector<4x192xbf16>, vector<80x192xf32> -> vector<80x192xf32>
    %94 = arith.addf %90, %93 : vector<80x192xf32>
    %95 = vector.extract_strided_slice %94 {offsets = [9, 0], sizes = [64, 64], strides = [1, 1]} : vector<80x192xf32> to vector<64x64xf32>
    %96 = arith.addf %83, %95 : vector<64x64xf32>
    %97 = vector.extract_strided_slice %94 {offsets = [10, 64], sizes = [64, 64], strides = [1, 1]} : vector<80x192xf32> to vector<64x64xf32>
    %98 = arith.addf %96, %97 : vector<64x64xf32>
    %99 = vector.extract_strided_slice %94 {offsets = [11, 128], sizes = [64, 64], strides = [1, 1]} : vector<80x192xf32> to vector<64x64xf32>
    %100 = arith.addf %98, %99 : vector<64x64xf32>
    %101 = vector.broadcast %8 : vector<1x64xf32> to vector<64x64xf32>
    %102 = arith.addf %100, %101 : vector<64x64xf32>
    %cst_74 = arith.constant 0.00999999977 : f32
    %103 = vector.broadcast %cst_74 : f32 to vector<64x64xf32>
    %104 = arith.mulf %103, %102 : vector<64x64xf32>
    %105 = arith.maximumf %102, %104 : vector<64x64xf32>
    %c64_75 = arith.constant 64 : index
    %c0_76 = arith.constant 0 : index
    %106 = vector.load %arg2[%c64_75, %c0_76] : memref<256x1xf32, #tpu.memory_space<vmem>>, vector<64x1xf32>
    %107 = vector.broadcast %106 : vector<64x1xf32> to vector<64x64xf32>
    %108 = arith.mulf %105, %107 : vector<64x64xf32>
    %109 = arith.truncf %108 : vector<64x64xf32> to vector<64x64xbf16>
    %c104 = arith.constant 104 : index
    %c0_77 = arith.constant 0 : index
    %110 = vector.load %arg10[%c104, %c0_77] : memref<336x64xbf16, #tpu.memory_space<vmem>>, vector<64x64xbf16>
    tpu.vector_store %arg10[%c104, %c0_77], %109 {strides = array<i32>} : memref<336x64xbf16, #tpu.memory_space<vmem>>, vector<64x64xbf16>,
    %c0_78 = arith.constant 0 : index
    %c128_79 = arith.constant 128 : index
    %c0_80 = arith.constant 0 : index
    %111 = vector.load %arg1[%c0_78, %c128_79, %c0_80] : memref<1x336x4xbf16, #tpu.memory_space<vmem>>, vector<1x80x4xbf16>
    %112 = vector.shape_cast %111 : vector<1x80x4xbf16> to vector<80x4xbf16>
    %c0_81 = arith.constant 0 : index
    %c160 = arith.constant 160 : index
    %c0_82 = arith.constant 0 : index
    %113 = vector.load %arg1[%c0_81, %c160, %c0_82] : memref<1x336x4xbf16, #tpu.memory_space<vmem>>, vector<1x80x4xbf16>
    %114 = vector.shape_cast %113 : vector<1x80x4xbf16> to vector<80x4xbf16>
    %c0_83 = arith.constant 0 : index
    %c192 = arith.constant 192 : index
    %c0_84 = arith.constant 0 : index
    %115 = vector.load %arg1[%c0_83, %c192, %c0_84] : memref<1x336x4xbf16, #tpu.memory_space<vmem>>, vector<1x80x4xbf16>
    %116 = vector.shape_cast %115 : vector<1x80x4xbf16> to vector<80x4xbf16>
    %c0_85 = arith.constant 0 : index
    %c0_86 = arith.constant 0 : index
    %c0_87 = arith.constant 0 : index
    %117 = vector.load %arg3[%c0_85, %c0_86, %c0_87] : memref<3x4x448xbf16, #tpu.memory_space<vmem>>, vector<1x4x256xbf16>
    %118 = vector.shape_cast %117 : vector<1x4x256xbf16> to vector<4x256xbf16>
    %cst_88 = arith.constant dense<0.000000e+00> : vector<80x256xf32>
    %119 = tpu.matmul %112, %118, %cst_88 {dimension_numbers = #tpu.dot_dimension_numbers<[1], [0], [0], [1], [0, 0, 1, 1], [], []>} : vector<80x4xbf16>, vector<4x256xbf16>, vector<80x256xf32> -> vector<80x256xf32>
    %c1_89 = arith.constant 1 : index
    %c0_90 = arith.constant 0 : index
    %c0_91 = arith.constant 0 : index
    %120 = vector.load %arg3[%c1_89, %c0_90, %c0_91] : memref<3x4x448xbf16, #tpu.memory_space<vmem>>, vector<1x4x256xbf16>
    %121 = vector.shape_cast %120 : vector<1x4x256xbf16> to vector<4x256xbf16>
    %cst_92 = arith.constant dense<0.000000e+00> : vector<80x256xf32>
    %122 = tpu.matmul %114, %121, %cst_92 {dimension_numbers = #tpu.dot_dimension_numbers<[1], [0], [0], [1], [0, 0, 1, 1], [], []>} : vector<80x4xbf16>, vector<4x256xbf16>, vector<80x256xf32> -> vector<80x256xf32>
    %123 = arith.addf %119, %122 : vector<80x256xf32>
    %c2_93 = arith.constant 2 : index
    %c0_94 = arith.constant 0 : index
    %c0_95 = arith.constant 0 : index
    %124 = vector.load %arg3[%c2_93, %c0_94, %c0_95] : memref<3x4x448xbf16, #tpu.memory_space<vmem>>, vector<1x4x256xbf16>
    %125 = vector.shape_cast %124 : vector<1x4x256xbf16> to vector<4x256xbf16>
    %cst_96 = arith.constant dense<0.000000e+00> : vector<80x256xf32>
    %126 = tpu.matmul %116, %125, %cst_96 {dimension_numbers = #tpu.dot_dimension_numbers<[1], [0], [0], [1], [0, 0, 1, 1], [], []>} : vector<80x4xbf16>, vector<4x256xbf16>, vector<80x256xf32> -> vector<80x256xf32>
    %127 = arith.addf %123, %126 : vector<80x256xf32>
    %128 = vector.extract_strided_slice %127 {offsets = [5, 0], sizes = [64, 64], strides = [1, 1]} : vector<80x256xf32> to vector<64x64xf32>
    %129 = vector.extract_strided_slice %127 {offsets = [6, 64], sizes = [64, 64], strides = [1, 1]} : vector<80x256xf32> to vector<64x64xf32>
    %130 = arith.addf %128, %129 : vector<64x64xf32>
    %131 = vector.extract_strided_slice %127 {offsets = [7, 128], sizes = [64, 64], strides = [1, 1]} : vector<80x256xf32> to vector<64x64xf32>
    %132 = arith.addf %130, %131 : vector<64x64xf32>
    %133 = vector.extract_strided_slice %127 {offsets = [8, 192], sizes = [64, 64], strides = [1, 1]} : vector<80x256xf32> to vector<64x64xf32>
    %134 = arith.addf %132, %133 : vector<64x64xf32>
    %c0_97 = arith.constant 0 : index
    %c0_98 = arith.constant 0 : index
    %c256_99 = arith.constant 256 : index
    %135 = vector.load %arg3[%c0_97, %c0_98, %c256_99] : memref<3x4x448xbf16, #tpu.memory_space<vmem>>, vector<1x4x192xbf16>
    %136 = vector.shape_cast %135 : vector<1x4x192xbf16> to vector<4x192xbf16>
    %cst_100 = arith.constant dense<0.000000e+00> : vector<80x192xf32>
    %137 = tpu.matmul %112, %136, %cst_100 {dimension_numbers = #tpu.dot_dimension_numbers<[1], [0], [0], [1], [0, 0, 1, 1], [], []>} : vector<80x4xbf16>, vector<4x192xbf16>, vector<80x192xf32> -> vector<80x192xf32>
    %c1_101 = arith.constant 1 : index
    %c0_102 = arith.constant 0 : index
    %c256_103 = arith.constant 256 : index
    %138 = vector.load %arg3[%c1_101, %c0_102, %c256_103] : memref<3x4x448xbf16, #tpu.memory_space<vmem>>, vector<1x4x192xbf16>
    %139 = vector.shape_cast %138 : vector<1x4x192xbf16> to vector<4x192xbf16>
    %cst_104 = arith.constant dense<0.000000e+00> : vector<80x192xf32>
    %140 = tpu.matmul %114, %139, %cst_104 {dimension_numbers = #tpu.dot_dimension_numbers<[1], [0], [0], [1], [0, 0, 1, 1], [], []>} : vector<80x4xbf16>, vector<4x192xbf16>, vector<80x192xf32> -> vector<80x192xf32>
    %141 = arith.addf %137, %140 : vector<80x192xf32>
    %c2_105 = arith.constant 2 : index
    %c0_106 = arith.constant 0 : index
    %c256_107 = arith.constant 256 : index
    %142 = vector.load %arg3[%c2_105, %c0_106, %c256_107] : memref<3x4x448xbf16, #tpu.memory_space<vmem>>, vector<1x4x192xbf16>
    %143 = vector.shape_cast %142 : vector<1x4x192xbf16> to vector<4x192xbf16>
    %cst_108 = arith.constant dense<0.000000e+00> : vector<80x192xf32>
    %144 = tpu.matmul %116, %143, %cst_108 {dimension_numbers = #tpu.dot_dimension_numbers<[1], [0], [0], [1], [0, 0, 1, 1], [], []>} : vector<80x4xbf16>, vector<4x192xbf16>, vector<80x192xf32> -> vector<80x192xf32>
    %145 = arith.addf %141, %144 : vector<80x192xf32>
    %146 = vector.extract_strided_slice %145 {offsets = [9, 0], sizes = [64, 64], strides = [1, 1]} : vector<80x192xf32> to vector<64x64xf32>
    %147 = arith.addf %134, %146 : vector<64x64xf32>
    %148 = vector.extract_strided_slice %145 {offsets = [10, 64], sizes = [64, 64], strides = [1, 1]} : vector<80x192xf32> to vector<64x64xf32>
    %149 = arith.addf %147, %148 : vector<64x64xf32>
    %150 = vector.extract_strided_slice %145 {offsets = [11, 128], sizes = [64, 64], strides = [1, 1]} : vector<80x192xf32> to vector<64x64xf32>
    %151 = arith.addf %149, %150 : vector<64x64xf32>
    %152 = vector.broadcast %8 : vector<1x64xf32> to vector<64x64xf32>
    %153 = arith.addf %151, %152 : vector<64x64xf32>
    %cst_109 = arith.constant 0.00999999977 : f32
    %154 = vector.broadcast %cst_109 : f32 to vector<64x64xf32>
    %155 = arith.mulf %154, %153 : vector<64x64xf32>
    %156 = arith.maximumf %153, %155 : vector<64x64xf32>
    %c128_110 = arith.constant 128 : index
    %c0_111 = arith.constant 0 : index
    %157 = vector.load %arg2[%c128_110, %c0_111] : memref<256x1xf32, #tpu.memory_space<vmem>>, vector<64x1xf32>
    %158 = vector.broadcast %157 : vector<64x1xf32> to vector<64x64xf32>
    %159 = arith.mulf %156, %158 : vector<64x64xf32>
    %160 = arith.truncf %159 : vector<64x64xf32> to vector<64x64xbf16>
    %c168 = arith.constant 168 : index
    %c0_112 = arith.constant 0 : index
    %161 = vector.load %arg10[%c168, %c0_112] : memref<336x64xbf16, #tpu.memory_space<vmem>>, vector<64x64xbf16>
    tpu.vector_store %arg10[%c168, %c0_112], %160 {strides = array<i32>} : memref<336x64xbf16, #tpu.memory_space<vmem>>, vector<64x64xbf16>,
    %c0_113 = arith.constant 0 : index
    %c192_114 = arith.constant 192 : index
    %c0_115 = arith.constant 0 : index
    %162 = vector.load %arg1[%c0_113, %c192_114, %c0_115] : memref<1x336x4xbf16, #tpu.memory_space<vmem>>, vector<1x80x4xbf16>
    %163 = vector.shape_cast %162 : vector<1x80x4xbf16> to vector<80x4xbf16>
    %c0_116 = arith.constant 0 : index
    %c224 = arith.constant 224 : index
    %c0_117 = arith.constant 0 : index
    %164 = vector.load %arg1[%c0_116, %c224, %c0_117] : memref<1x336x4xbf16, #tpu.memory_space<vmem>>, vector<1x80x4xbf16>
    %165 = vector.shape_cast %164 : vector<1x80x4xbf16> to vector<80x4xbf16>
    %c0_118 = arith.constant 0 : index
    %c256_119 = arith.constant 256 : index
    %c0_120 = arith.constant 0 : index
    %166 = vector.load %arg1[%c0_118, %c256_119, %c0_120] : memref<1x336x4xbf16, #tpu.memory_space<vmem>>, vector<1x80x4xbf16>
    %167 = vector.shape_cast %166 : vector<1x80x4xbf16> to vector<80x4xbf16>
    %c0_121 = arith.constant 0 : index
    %c0_122 = arith.constant 0 : index
    %c0_123 = arith.constant 0 : index
    %168 = vector.load %arg3[%c0_121, %c0_122, %c0_123] : memref<3x4x448xbf16, #tpu.memory_space<vmem>>, vector<1x4x256xbf16>
    %169 = vector.shape_cast %168 : vector<1x4x256xbf16> to vector<4x256xbf16>
    %cst_124 = arith.constant dense<0.000000e+00> : vector<80x256xf32>
    %170 = tpu.matmul %163, %169, %cst_124 {dimension_numbers = #tpu.dot_dimension_numbers<[1], [0], [0], [1], [0, 0, 1, 1], [], []>} : vector<80x4xbf16>, vector<4x256xbf16>, vector<80x256xf32> -> vector<80x256xf32>
    %c1_125 = arith.constant 1 : index
    %c0_126 = arith.constant 0 : index
    %c0_127 = arith.constant 0 : index
    %171 = vector.load %arg3[%c1_125, %c0_126, %c0_127] : memref<3x4x448xbf16, #tpu.memory_space<vmem>>, vector<1x4x256xbf16>
    %172 = vector.shape_cast %171 : vector<1x4x256xbf16> to vector<4x256xbf16>
    %cst_128 = arith.constant dense<0.000000e+00> : vector<80x256xf32>
    %173 = tpu.matmul %165, %172, %cst_128 {dimension_numbers = #tpu.dot_dimension_numbers<[1], [0], [0], [1], [0, 0, 1, 1], [], []>} : vector<80x4xbf16>, vector<4x256xbf16>, vector<80x256xf32> -> vector<80x256xf32>
    %174 = arith.addf %170, %173 : vector<80x256xf32>
    %c2_129 = arith.constant 2 : index
    %c0_130 = arith.constant 0 : index
    %c0_131 = arith.constant 0 : index
    %175 = vector.load %arg3[%c2_129, %c0_130, %c0_131] : memref<3x4x448xbf16, #tpu.memory_space<vmem>>, vector<1x4x256xbf16>
    %176 = vector.shape_cast %175 : vector<1x4x256xbf16> to vector<4x256xbf16>
    %cst_132 = arith.constant dense<0.000000e+00> : vector<80x256xf32>
    %177 = tpu.matmul %167, %176, %cst_132 {dimension_numbers = #tpu.dot_dimension_numbers<[1], [0], [0], [1], [0, 0, 1, 1], [], []>} : vector<80x4xbf16>, vector<4x256xbf16>, vector<80x256xf32> -> vector<80x256xf32>
    %178 = arith.addf %174, %177 : vector<80x256xf32>
    %179 = vector.extract_strided_slice %178 {offsets = [5, 0], sizes = [64, 64], strides = [1, 1]} : vector<80x256xf32> to vector<64x64xf32>
    %180 = vector.extract_strided_slice %178 {offsets = [6, 64], sizes = [64, 64], strides = [1, 1]} : vector<80x256xf32> to vector<64x64xf32>
    %181 = arith.addf %179, %180 : vector<64x64xf32>
    %182 = vector.extract_strided_slice %178 {offsets = [7, 128], sizes = [64, 64], strides = [1, 1]} : vector<80x256xf32> to vector<64x64xf32>
    %183 = arith.addf %181, %182 : vector<64x64xf32>
    %184 = vector.extract_strided_slice %178 {offsets = [8, 192], sizes = [64, 64], strides = [1, 1]} : vector<80x256xf32> to vector<64x64xf32>
    %185 = arith.addf %183, %184 : vector<64x64xf32>
    %c0_133 = arith.constant 0 : index
    %c0_134 = arith.constant 0 : index
    %c256_135 = arith.constant 256 : index
    %186 = vector.load %arg3[%c0_133, %c0_134, %c256_135] : memref<3x4x448xbf16, #tpu.memory_space<vmem>>, vector<1x4x192xbf16>
    %187 = vector.shape_cast %186 : vector<1x4x192xbf16> to vector<4x192xbf16>
    %cst_136 = arith.constant dense<0.000000e+00> : vector<80x192xf32>
    %188 = tpu.matmul %163, %187, %cst_136 {dimension_numbers = #tpu.dot_dimension_numbers<[1], [0], [0], [1], [0, 0, 1, 1], [], []>} : vector<80x4xbf16>, vector<4x192xbf16>, vector<80x192xf32> -> vector<80x192xf32>
    %c1_137 = arith.constant 1 : index
    %c0_138 = arith.constant 0 : index
    %c256_139 = arith.constant 256 : index
    %189 = vector.load %arg3[%c1_137, %c0_138, %c256_139] : memref<3x4x448xbf16, #tpu.memory_space<vmem>>, vector<1x4x192xbf16>
    %190 = vector.shape_cast %189 : vector<1x4x192xbf16> to vector<4x192xbf16>
    %cst_140 = arith.constant dense<0.000000e+00> : vector<80x192xf32>
    %191 = tpu.matmul %165, %190, %cst_140 {dimension_numbers = #tpu.dot_dimension_numbers<[1], [0], [0], [1], [0, 0, 1, 1], [], []>} : vector<80x4xbf16>, vector<4x192xbf16>, vector<80x192xf32> -> vector<80x192xf32>
    %192 = arith.addf %188, %191 : vector<80x192xf32>
    %c2_141 = arith.constant 2 : index
    %c0_142 = arith.constant 0 : index
    %c256_143 = arith.constant 256 : index
    %193 = vector.load %arg3[%c2_141, %c0_142, %c256_143] : memref<3x4x448xbf16, #tpu.memory_space<vmem>>, vector<1x4x192xbf16>
    %194 = vector.shape_cast %193 : vector<1x4x192xbf16> to vector<4x192xbf16>
    %cst_144 = arith.constant dense<0.000000e+00> : vector<80x192xf32>
    %195 = tpu.matmul %167, %194, %cst_144 {dimension_numbers = #tpu.dot_dimension_numbers<[1], [0], [0], [1], [0, 0, 1, 1], [], []>} : vector<80x4xbf16>, vector<4x192xbf16>, vector<80x192xf32> -> vector<80x192xf32>
    %196 = arith.addf %192, %195 : vector<80x192xf32>
    %197 = vector.extract_strided_slice %196 {offsets = [9, 0], sizes = [64, 64], strides = [1, 1]} : vector<80x192xf32> to vector<64x64xf32>
    %198 = arith.addf %185, %197 : vector<64x64xf32>
    %199 = vector.extract_strided_slice %196 {offsets = [10, 64], sizes = [64, 64], strides = [1, 1]} : vector<80x192xf32> to vector<64x64xf32>
    %200 = arith.addf %198, %199 : vector<64x64xf32>
    %201 = vector.extract_strided_slice %196 {offsets = [11, 128], sizes = [64, 64], strides = [1, 1]} : vector<80x192xf32> to vector<64x64xf32>
    %202 = arith.addf %200, %201 : vector<64x64xf32>
    %203 = vector.broadcast %8 : vector<1x64xf32> to vector<64x64xf32>
    %204 = arith.addf %202, %203 : vector<64x64xf32>
    %cst_145 = arith.constant 0.00999999977 : f32
    %205 = vector.broadcast %cst_145 : f32 to vector<64x64xf32>
    %206 = arith.mulf %205, %204 : vector<64x64xf32>
    %207 = arith.maximumf %204, %206 : vector<64x64xf32>
    %c192_146 = arith.constant 192 : index
    %c0_147 = arith.constant 0 : index
    %208 = vector.load %arg2[%c192_146, %c0_147] : memref<256x1xf32, #tpu.memory_space<vmem>>, vector<64x1xf32>
    %209 = vector.broadcast %208 : vector<64x1xf32> to vector<64x64xf32>
    %210 = arith.mulf %207, %209 : vector<64x64xf32>
    %211 = arith.truncf %210 : vector<64x64xf32> to vector<64x64xbf16>
    %c232 = arith.constant 232 : index
    %c0_148 = arith.constant 0 : index
    %212 = vector.load %arg10[%c232, %c0_148] : memref<336x64xbf16, #tpu.memory_space<vmem>>, vector<64x64xbf16>
    tpu.vector_store %arg10[%c232, %c0_148], %211 {strides = array<i32>} : memref<336x64xbf16, #tpu.memory_space<vmem>>, vector<64x64xbf16>,
    %c0_149 = arith.constant 0 : index
    %c0_150 = arith.constant 0 : index
    %213 = vector.load %arg6[%c0_149, %c0_150] : memref<1x32xf32, #tpu.memory_space<vmem>>, vector<1x32xf32>
    %c0_151 = arith.constant 0 : index
    %c0_152 = arith.constant 0 : index
    %214 = vector.load %arg10[%c0_151, %c0_152] : memref<336x64xbf16, #tpu.memory_space<vmem>>, vector<144x64xbf16>
    %c32_153 = arith.constant 32 : index
    %c0_154 = arith.constant 0 : index
    %215 = vector.load %arg10[%c32_153, %c0_154] : memref<336x64xbf16, #tpu.memory_space<vmem>>, vector<144x64xbf16>
    %c64_155 = arith.constant 64 : index
    %c0_156 = arith.constant 0 : index
    %216 = vector.load %arg10[%c64_155, %c0_156] : memref<336x64xbf16, #tpu.memory_space<vmem>>, vector<144x64xbf16>
    %217 = tpu.concatenate %214, %215, %216 in 1 : vector<144x64xbf16>, vector<144x64xbf16>, vector<144x64xbf16> -> vector<144x192xbf16>
    %c0_157 = arith.constant 0 : index
    %c0_158 = arith.constant 0 : index
    %218 = vector.load %arg5[%c0_157, %c0_158] : memref<192x224xbf16, #tpu.memory_space<vmem>>, vector<192x224xbf16>
    %cst_159 = arith.constant dense<0.000000e+00> : vector<144x224xf32>
    %219 = tpu.matmul %217, %218, %cst_159 {dimension_numbers = #tpu.dot_dimension_numbers<[1], [0], [0], [1], [0, 0, 1, 1], [], []>} : vector<144x192xbf16>, vector<192x224xbf16>, vector<144x224xf32> -> vector<144x224xf32>
    %220 = vector.extract_strided_slice %219 {offsets = [5, 0], sizes = [128, 32], strides = [1, 1]} : vector<144x224xf32> to vector<128x32xf32>
    %221 = vector.extract_strided_slice %219 {offsets = [6, 32], sizes = [128, 32], strides = [1, 1]} : vector<144x224xf32> to vector<128x32xf32>
    %222 = arith.addf %220, %221 : vector<128x32xf32>
    %223 = vector.extract_strided_slice %219 {offsets = [7, 64], sizes = [128, 32], strides = [1, 1]} : vector<144x224xf32> to vector<128x32xf32>
    %224 = arith.addf %222, %223 : vector<128x32xf32>
    %225 = vector.extract_strided_slice %219 {offsets = [8, 96], sizes = [128, 32], strides = [1, 1]} : vector<144x224xf32> to vector<128x32xf32>
    %226 = arith.addf %224, %225 : vector<128x32xf32>
    %227 = vector.extract_strided_slice %219 {offsets = [9, 128], sizes = [128, 32], strides = [1, 1]} : vector<144x224xf32> to vector<128x32xf32>
    %228 = arith.addf %226, %227 : vector<128x32xf32>
    %229 = vector.extract_strided_slice %219 {offsets = [10, 160], sizes = [128, 32], strides = [1, 1]} : vector<144x224xf32> to vector<128x32xf32>
    %230 = arith.addf %228, %229 : vector<128x32xf32>
    %231 = vector.extract_strided_slice %219 {offsets = [11, 192], sizes = [128, 32], strides = [1, 1]} : vector<144x224xf32> to vector<128x32xf32>
    %232 = arith.addf %230, %231 : vector<128x32xf32>
    %233 = vector.broadcast %213 : vector<1x32xf32> to vector<128x32xf32>
    %234 = arith.addf %232, %233 : vector<128x32xf32>
    %cst_160 = arith.constant 0.00999999977 : f32
    %235 = vector.broadcast %cst_160 : f32 to vector<128x32xf32>
    %236 = arith.mulf %235, %234 : vector<128x32xf32>
    %237 = arith.maximumf %234, %236 : vector<128x32xf32>
    %c0_161 = arith.constant 0 : index
    %c0_162 = arith.constant 0 : index
    %238 = vector.load %arg2[%c0_161, %c0_162] : memref<256x1xf32, #tpu.memory_space<vmem>>, vector<128x1xf32>
    %239 = vector.broadcast %238 : vector<128x1xf32> to vector<128x32xf32>
    %240 = arith.mulf %237, %239 : vector<128x32xf32>
    %241 = arith.truncf %240 : vector<128x32xf32> to vector<128x32xbf16>
    %c40_163 = arith.constant 40 : index
    %c0_164 = arith.constant 0 : index
    %242 = vector.load %arg11[%c40_163, %c0_164] : memref<336x32xbf16, #tpu.memory_space<vmem>>, vector<128x32xbf16>
    tpu.vector_store %arg11[%c40_163, %c0_164], %241 {strides = array<i32>} : memref<336x32xbf16, #tpu.memory_space<vmem>>, vector<128x32xbf16>,
    %c128_165 = arith.constant 128 : index
    %c0_166 = arith.constant 0 : index
    %243 = vector.load %arg10[%c128_165, %c0_166] : memref<336x64xbf16, #tpu.memory_space<vmem>>, vector<144x64xbf16>
    %c160_167 = arith.constant 160 : index
    %c0_168 = arith.constant 0 : index
    %244 = vector.load %arg10[%c160_167, %c0_168] : memref<336x64xbf16, #tpu.memory_space<vmem>>, vector<144x64xbf16>
    %c192_169 = arith.constant 192 : index
    %c0_170 = arith.constant 0 : index
    %245 = vector.load %arg10[%c192_169, %c0_170] : memref<336x64xbf16, #tpu.memory_space<vmem>>, vector<144x64xbf16>
    %246 = tpu.concatenate %243, %244, %245 in 1 : vector<144x64xbf16>, vector<144x64xbf16>, vector<144x64xbf16> -> vector<144x192xbf16>
    %c0_171 = arith.constant 0 : index
    %c0_172 = arith.constant 0 : index
    %247 = vector.load %arg5[%c0_171, %c0_172] : memref<192x224xbf16, #tpu.memory_space<vmem>>, vector<192x224xbf16>
    %cst_173 = arith.constant dense<0.000000e+00> : vector<144x224xf32>
    %248 = tpu.matmul %246, %247, %cst_173 {dimension_numbers = #tpu.dot_dimension_numbers<[1], [0], [0], [1], [0, 0, 1, 1], [], []>} : vector<144x192xbf16>, vector<192x224xbf16>, vector<144x224xf32> -> vector<144x224xf32>
    %249 = vector.extract_strided_slice %248 {offsets = [5, 0], sizes = [128, 32], strides = [1, 1]} : vector<144x224xf32> to vector<128x32xf32>
    %250 = vector.extract_strided_slice %248 {offsets = [6, 32], sizes = [128, 32], strides = [1, 1]} : vector<144x224xf32> to vector<128x32xf32>
    %251 = arith.addf %249, %250 : vector<128x32xf32>
    %252 = vector.extract_strided_slice %248 {offsets = [7, 64], sizes = [128, 32], strides = [1, 1]} : vector<144x224xf32> to vector<128x32xf32>
    %253 = arith.addf %251, %252 : vector<128x32xf32>
    %254 = vector.extract_strided_slice %248 {offsets = [8, 96], sizes = [128, 32], strides = [1, 1]} : vector<144x224xf32> to vector<128x32xf32>
    %255 = arith.addf %253, %254 : vector<128x32xf32>
    %256 = vector.extract_strided_slice %248 {offsets = [9, 128], sizes = [128, 32], strides = [1, 1]} : vector<144x224xf32> to vector<128x32xf32>
    %257 = arith.addf %255, %256 : vector<128x32xf32>
    %258 = vector.extract_strided_slice %248 {offsets = [10, 160], sizes = [128, 32], strides = [1, 1]} : vector<144x224xf32> to vector<128x32xf32>
    %259 = arith.addf %257, %258 : vector<128x32xf32>
    %260 = vector.extract_strided_slice %248 {offsets = [11, 192], sizes = [128, 32], strides = [1, 1]} : vector<144x224xf32> to vector<128x32xf32>
    %261 = arith.addf %259, %260 : vector<128x32xf32>
    %262 = vector.broadcast %213 : vector<1x32xf32> to vector<128x32xf32>
    %263 = arith.addf %261, %262 : vector<128x32xf32>
    %cst_174 = arith.constant 0.00999999977 : f32
    %264 = vector.broadcast %cst_174 : f32 to vector<128x32xf32>
    %265 = arith.mulf %264, %263 : vector<128x32xf32>
    %266 = arith.maximumf %263, %265 : vector<128x32xf32>
    %c128_175 = arith.constant 128 : index
    %c0_176 = arith.constant 0 : index
    %267 = vector.load %arg2[%c128_175, %c0_176] : memref<256x1xf32, #tpu.memory_space<vmem>>, vector<128x1xf32>
    %268 = vector.broadcast %267 : vector<128x1xf32> to vector<128x32xf32>
    %269 = arith.mulf %266, %268 : vector<128x32xf32>
    %270 = arith.truncf %269 : vector<128x32xf32> to vector<128x32xbf16>
    %c168_177 = arith.constant 168 : index
    %c0_178 = arith.constant 0 : index
    %271 = vector.load %arg11[%c168_177, %c0_178] : memref<336x32xbf16, #tpu.memory_space<vmem>>, vector<128x32xbf16>
    tpu.vector_store %arg11[%c168_177, %c0_178], %270 {strides = array<i32>} : memref<336x32xbf16, #tpu.memory_space<vmem>>, vector<128x32xbf16>,
    %c0_179 = arith.constant 0 : index
    %c0_180 = arith.constant 0 : index
    %272 = vector.load %arg8[%c0_179, %c0_180] : memref<1x8xf32, #tpu.memory_space<vmem>>, vector<1x8xf32>
    %c0_181 = arith.constant 0 : index
    %c0_182 = arith.constant 0 : index
    %273 = vector.load %arg11[%c0_181, %c0_182] : memref<336x32xbf16, #tpu.memory_space<vmem>>, vector<144x32xbf16>
    %c32_183 = arith.constant 32 : index
    %c0_184 = arith.constant 0 : index
    %274 = vector.load %arg11[%c32_183, %c0_184] : memref<336x32xbf16, #tpu.memory_space<vmem>>, vector<144x32xbf16>
    %c64_185 = arith.constant 64 : index
    %c0_186 = arith.constant 0 : index
    %275 = vector.load %arg11[%c64_185, %c0_186] : memref<336x32xbf16, #tpu.memory_space<vmem>>, vector<144x32xbf16>
    %276 = tpu.concatenate %273, %274, %275 in 1 : vector<144x32xbf16>, vector<144x32xbf16>, vector<144x32xbf16> -> vector<144x96xbf16>
    %c0_187 = arith.constant 0 : index
    %c0_188 = arith.constant 0 : index
    %277 = vector.load %arg7[%c0_187, %c0_188] : memref<96x56xbf16, #tpu.memory_space<vmem>>, vector<96x56xbf16>
    %cst_189 = arith.constant dense<0.000000e+00> : vector<144x56xf32>
    %278 = tpu.matmul %276, %277, %cst_189 {dimension_numbers = #tpu.dot_dimension_numbers<[1], [0], [0], [1], [0, 0, 1, 1], [], []>} : vector<144x96xbf16>, vector<96x56xbf16>, vector<144x56xf32> -> vector<144x56xf32>
    %279 = vector.extract_strided_slice %278 {offsets = [5, 0], sizes = [128, 8], strides = [1, 1]} : vector<144x56xf32> to vector<128x8xf32>
    %280 = vector.extract_strided_slice %278 {offsets = [6, 8], sizes = [128, 8], strides = [1, 1]} : vector<144x56xf32> to vector<128x8xf32>
    %281 = arith.addf %279, %280 : vector<128x8xf32>
    %282 = vector.extract_strided_slice %278 {offsets = [7, 16], sizes = [128, 8], strides = [1, 1]} : vector<144x56xf32> to vector<128x8xf32>
    %283 = arith.addf %281, %282 : vector<128x8xf32>
    %284 = vector.extract_strided_slice %278 {offsets = [8, 24], sizes = [128, 8], strides = [1, 1]} : vector<144x56xf32> to vector<128x8xf32>
    %285 = arith.addf %283, %284 : vector<128x8xf32>
    %286 = vector.extract_strided_slice %278 {offsets = [9, 32], sizes = [128, 8], strides = [1, 1]} : vector<144x56xf32> to vector<128x8xf32>
    %287 = arith.addf %285, %286 : vector<128x8xf32>
    %288 = vector.extract_strided_slice %278 {offsets = [10, 40], sizes = [128, 8], strides = [1, 1]} : vector<144x56xf32> to vector<128x8xf32>
    %289 = arith.addf %287, %288 : vector<128x8xf32>
    %290 = vector.extract_strided_slice %278 {offsets = [11, 48], sizes = [128, 8], strides = [1, 1]} : vector<144x56xf32> to vector<128x8xf32>
    %291 = arith.addf %289, %290 : vector<128x8xf32>
    %292 = vector.broadcast %272 : vector<1x8xf32> to vector<128x8xf32>
    %293 = arith.addf %291, %292 : vector<128x8xf32>
    %c0_190 = arith.constant 0 : index
    %c0_191 = arith.constant 0 : index
    %c0_192 = arith.constant 0 : index
    %294 = vector.load %arg9[%c0_190, %c0_191, %c0_192] : memref<1x256x8xf32, #tpu.memory_space<vmem>>, vector<1x128x8xf32>
    %295 = vector.shape_cast %294 : vector<1x128x8xf32> to vector<128x8xf32>
    %296 = vector.shape_cast %293 : vector<128x8xf32> to vector<1x128x8xf32>
    tpu.vector_store %arg9[%c0_190, %c0_191, %c0_192], %296 {strides = array<i32>} : memref<1x256x8xf32, #tpu.memory_space<vmem>>, vector<1x128x8xf32>,
    %c128_193 = arith.constant 128 : index
    %c0_194 = arith.constant 0 : index
    %297 = vector.load %arg11[%c128_193, %c0_194] : memref<336x32xbf16, #tpu.memory_space<vmem>>, vector<144x32xbf16>
    %c160_195 = arith.constant 160 : index
    %c0_196 = arith.constant 0 : index
    %298 = vector.load %arg11[%c160_195, %c0_196] : memref<336x32xbf16, #tpu.memory_space<vmem>>, vector<144x32xbf16>
    %c192_197 = arith.constant 192 : index
    %c0_198 = arith.constant 0 : index
    %299 = vector.load %arg11[%c192_197, %c0_198] : memref<336x32xbf16, #tpu.memory_space<vmem>>, vector<144x32xbf16>
    %300 = tpu.concatenate %297, %298, %299 in 1 : vector<144x32xbf16>, vector<144x32xbf16>, vector<144x32xbf16> -> vector<144x96xbf16>
    %c0_199 = arith.constant 0 : index
    %c0_200 = arith.constant 0 : index
    %301 = vector.load %arg7[%c0_199, %c0_200] : memref<96x56xbf16, #tpu.memory_space<vmem>>, vector<96x56xbf16>
    %cst_201 = arith.constant dense<0.000000e+00> : vector<144x56xf32>
    %302 = tpu.matmul %300, %301, %cst_201 {dimension_numbers = #tpu.dot_dimension_numbers<[1], [0], [0], [1], [0, 0, 1, 1], [], []>} : vector<144x96xbf16>, vector<96x56xbf16>, vector<144x56xf32> -> vector<144x56xf32>
    %303 = vector.extract_strided_slice %302 {offsets = [5, 0], sizes = [128, 8], strides = [1, 1]} : vector<144x56xf32> to vector<128x8xf32>
    %304 = vector.extract_strided_slice %302 {offsets = [6, 8], sizes = [128, 8], strides = [1, 1]} : vector<144x56xf32> to vector<128x8xf32>
    %305 = arith.addf %303, %304 : vector<128x8xf32>
    %306 = vector.extract_strided_slice %302 {offsets = [7, 16], sizes = [128, 8], strides = [1, 1]} : vector<144x56xf32> to vector<128x8xf32>
    %307 = arith.addf %305, %306 : vector<128x8xf32>
    %308 = vector.extract_strided_slice %302 {offsets = [8, 24], sizes = [128, 8], strides = [1, 1]} : vector<144x56xf32> to vector<128x8xf32>
    %309 = arith.addf %307, %308 : vector<128x8xf32>
    %310 = vector.extract_strided_slice %302 {offsets = [9, 32], sizes = [128, 8], strides = [1, 1]} : vector<144x56xf32> to vector<128x8xf32>
    %311 = arith.addf %309, %310 : vector<128x8xf32>
    %312 = vector.extract_strided_slice %302 {offsets = [10, 40], sizes = [128, 8], strides = [1, 1]} : vector<144x56xf32> to vector<128x8xf32>
    %313 = arith.addf %311, %312 : vector<128x8xf32>
    %314 = vector.extract_strided_slice %302 {offsets = [11, 48], sizes = [128, 8], strides = [1, 1]} : vector<144x56xf32> to vector<128x8xf32>
    %315 = arith.addf %313, %314 : vector<128x8xf32>
    %316 = vector.broadcast %272 : vector<1x8xf32> to vector<128x8xf32>
    %317 = arith.addf %315, %316 : vector<128x8xf32>
    %c0_202 = arith.constant 0 : index
    %c128_203 = arith.constant 128 : index
    %c0_204 = arith.constant 0 : index
    %318 = vector.load %arg9[%c0_202, %c128_203, %c0_204] : memref<1x256x8xf32, #tpu.memory_space<vmem>>, vector<1x128x8xf32>
    %319 = vector.shape_cast %318 : vector<1x128x8xf32> to vector<128x8xf32>
    %320 = vector.shape_cast %317 : vector<128x8xf32> to vector<1x128x8xf32>
    tpu.vector_store %arg9[%c0_202, %c128_203, %c0_204], %320 {strides = array<i32>} : memref<1x256x8xf32, #tpu.memory_space<vmem>>, vector<1x128x8xf32>,
    return
  }
  func.func @transform_0(%arg0: i32) -> (i32, i32, i32) {
    %c0_i32 = arith.constant 0 : i32
    %c0_i32_0 = arith.constant 0 : i32
    %c0_i32_1 = arith.constant 0 : i32
    return %arg0, %c0_i32, %c0_i32_0 : i32, i32, i32
  }
  func.func @transform_1(%arg0: i32) -> (i32, i32) {
    %c0_i32 = arith.constant 0 : i32
    %c0_i32_0 = arith.constant 0 : i32
    %c0_i32_1 = arith.constant 0 : i32
    return %c0_i32, %c0_i32_0 : i32, i32
  }
  func.func @transform_2(%arg0: i32) -> (i32, i32, i32) {
    %c0_i32 = arith.constant 0 : i32
    %c0_i32_0 = arith.constant 0 : i32
    %c0_i32_1 = arith.constant 0 : i32
    %c0_i32_2 = arith.constant 0 : i32
    return %c0_i32, %c0_i32_0, %c0_i32_1 : i32, i32, i32
  }
  func.func @transform_3(%arg0: i32) -> (i32, i32) {
    %c0_i32 = arith.constant 0 : i32
    %c0_i32_0 = arith.constant 0 : i32
    %c0_i32_1 = arith.constant 0 : i32
    return %c0_i32, %c0_i32_0 : i32, i32
  }
  func.func @transform_4(%arg0: i32) -> (i32, i32) {
    %c0_i32 = arith.constant 0 : i32
    %c0_i32_0 = arith.constant 0 : i32
    %c0_i32_1 = arith.constant 0 : i32
    return %c0_i32, %c0_i32_0 : i32, i32
  }
  func.func @transform_5(%arg0: i32) -> (i32, i32) {
    %c0_i32 = arith.constant 0 : i32
    %c0_i32_0 = arith.constant 0 : i32
    %c0_i32_1 = arith.constant 0 : i32
    return %c0_i32, %c0_i32_0 : i32, i32
  }
  func.func @transform_6(%arg0: i32) -> (i32, i32) {
    %c0_i32 = arith.constant 0 : i32
    %c0_i32_0 = arith.constant 0 : i32
    %c0_i32_1 = arith.constant 0 : i32
    return %c0_i32, %c0_i32_0 : i32, i32
  }
  func.func @transform_7(%arg0: i32) -> (i32, i32) {
    %c0_i32 = arith.constant 0 : i32
    %c0_i32_0 = arith.constant 0 : i32
    %c0_i32_1 = arith.constant 0 : i32
    return %c0_i32, %c0_i32_0 : i32, i32
  }
  func.func @transform_8(%arg0: i32) -> (i32, i32, i32) {
    %c0_i32 = arith.constant 0 : i32
    %c0_i32_0 = arith.constant 0 : i32
    %c0_i32_1 = arith.constant 0 : i32
    return %arg0, %c0_i32, %c0_i32_0 : i32, i32, i32
  }
}

</mosaic_0001>

<llo_original>
// kernel: context_net_forward.1
$region0: #{context_net_forward.1}
  #allocation0 [shape = 'u32[]', space=smem, size = 0x4, offset = 0x4, fixed_abs, tag = 'smem constant byte address 0x4 - core index']
  #allocation1 [shape = 'u32[144,128]{1,0:T(1,128)}', space=vmem, size = 0x12000, scoped, tag = 'internal scratch']
  #allocation2 [shape = 'bf16[336,64]{1,0:T(8,128)(2,1)}', space=vmem, size = 0x15000, scoped, tag = 'scratch operand']
  #allocation3 [shape = 'bf16[336,32]{1,0:T(8,128)(2,1)}', space=vmem, size = 0x15000, scoped, tag = 'scratch operand']
  %s0 = inlined_call_operand.vmem [shape: bf16[2,336,4], index: 0, kind: input, shape index: {}]
  %s1 = inlined_call_operand.vmem [shape: f32[256,1], index: 1, kind: input, shape index: {}]
  %s2 = inlined_call_operand.vmem [shape: bf16[3,4,448], index: 2, kind: input, shape index: {}]
  %s3 = inlined_call_operand.vmem [shape: f32[1,64], index: 3, kind: input, shape index: {}]
  %s4 = inlined_call_operand.vmem [shape: bf16[192,224], index: 4, kind: input, shape index: {}]
  %s5 = inlined_call_operand.vmem [shape: f32[1,32], index: 5, kind: input, shape index: {}]
  %s6 = inlined_call_operand.vmem [shape: bf16[96,56], index: 6, kind: input, shape index: {}]
  %s7 = inlined_call_operand.vmem [shape: f32[1,8], index: 7, kind: input, shape index: {}]
  %s8 = inlined_call_operand.vmem [shape: f32[2,256,8], index: 8, kind: output, shape index: {}]
  %s9 = sld [smem:[#allocation0]]
  $region65: #{context_net_forward.1} parent=0
    _
  %s11 = ssub.s32 1, %s9
  %s12 = scalar_select 0, %s11, %s9
  loop: start=0, step=1, limit=4
  $region2: #{context_net_forward.1} parent=0 // loop_pre_header
    _
  $region3: #{context_net_forward.1} parent=0 // loop_header
    %s14 = sphi 0, %s18
    %p15 = scmp.ge.s32.totalorder %s14, 4
    %s24 = sphi 0, %s26
    %s27 = sphi 0, %s24
    %s28 = sphi 0, %s27
    %s44 = sphi 0, %s28
    %s48 = sphi 0, %s48
    %s50 = sphi 0, %s48
    %s51 = sphi 0, %s50
    %s65 = sphi 0, %s51
    %s69 = sphi 0, %s69
    %s71 = sphi 0, %s69
    %s72 = sphi 0, %s71
    %s86 = sphi 0, %s72
    %s90 = sphi 0, %s90
    %s92 = sphi 0, %s90
    %s93 = sphi 0, %s92
    %s107 = sphi 0, %s93
    %s111 = sphi 0, %s111
    %s113 = sphi 0, %s111
    %s114 = sphi 0, %s113
    %s128 = sphi 0, %s114
    %s132 = sphi 0, %s132
    %s134 = sphi 0, %s132
    %s135 = sphi 0, %s134
    %s149 = sphi 0, %s135
    %s153 = sphi 0, %s153
    %s155 = sphi 0, %s153
    %s156 = sphi 0, %s155
    %s170 = sphi 0, %s156
    %s174 = sphi 0, %s174
    %s176 = sphi 0, %s174
    %s177 = sphi 0, %s176
    %s191 = sphi 0, %s177
    %s197 = sphi 0, %s199
    %s200 = sphi 0, %s197
    %s201 = sphi 0, %s200
    %s217 = sphi 0, %s201
  $region4: #{context_net_forward.1} parent=0 // loop_header_branch
    %17 = sbr.rel (%p15) target = $region8
  $region5: #{context_net_forward.1} parent=0 // loop_body
    %s19 = ssub.s32 %s14, 1
    %s20 = ssub.s32 %s14, 2
    %s21 = sadd.s32 %s14, 1
    %s22 = ssub.s32 %s14, %s21
    %p23 = scmp.eq.s32.totalorder %s22, 0
    %s25 = sadd.s32 %s24, 1
    %s26 = scalar_select %p23, %s24, %s25
    %p29 = pneg %p23
    %p30 = scmp.eq.s32.totalorder %s14, 1
    %p31 = por %p29, %p30
    %p32 = scmp.ne.s32.totalorder %s24, %s27
    %p33 = scmp.eq.s32.totalorder %s14, 0
    %p34 = por %p32, %p33
    %p35 = scmp.ne.s32.totalorder %s24, %s27
    %p36 = scmp.eq.s32.totalorder %s19, 1
    %p37 = por %p35, %p36
    %p38 = scmp.ne.s32.totalorder %s27, %s28
    %p39 = scmp.eq.s32.totalorder %s19, 0
    %p40 = por %p38, %p39
    %p41 = scmp.ne.s32.totalorder %s27, %s28
    %p42 = scmp.eq.s32.totalorder %s20, 1
    %p43 = por %p41, %p42
    %p45 = scmp.ne.s32.totalorder %s28, %s44
    %p46 = scmp.eq.s32.totalorder %s20, 0
    %p47 = por %p45, %p46
    %s49 = sadd.s32 %s48, 1
    %p52 = scmp.eq.s32.totalorder %s14, 1
    %p53 = scmp.ne.s32.totalorder %s48, %s50
    %p54 = scmp.eq.s32.totalorder %s14, 0
    %p55 = por %p53, %p54
    %p56 = scmp.ne.s32.totalorder %s48, %s50
    %p57 = scmp.eq.s32.totalorder %s19, 1
    %p58 = por %p56, %p57
    %p59 = scmp.ne.s32.totalorder %s50, %s51
    %p60 = scmp.eq.s32.totalorder %s19, 0
    %p61 = por %p59, %p60
    %p62 = scmp.ne.s32.totalorder %s50, %s51
    %p63 = scmp.eq.s32.totalorder %s20, 1
    %p64 = por %p62, %p63
    %p66 = scmp.ne.s32.totalorder %s51, %s65
    %p67 = scmp.eq.s32.totalorder %s20, 0
    %p68 = por %p66, %p67
    %s70 = sadd.s32 %s69, 1
    %p73 = scmp.eq.s32.totalorder %s14, 1
    %p74 = scmp.ne.s32.totalorder %s69, %s71
    %p75 = scmp.eq.s32.totalorder %s14, 0
    %p76 = por %p74, %p75
    %p77 = scmp.ne.s32.totalorder %s69, %s71
    %p78 = scmp.eq.s32.totalorder %s19, 1
    %p79 = por %p77, %p78
    %p80 = scmp.ne.s32.totalorder %s71, %s72
    %p81 = scmp.eq.s32.totalorder %s19, 0
    %p82 = por %p80, %p81
    %p83 = scmp.ne.s32.totalorder %s71, %s72
    %p84 = scmp.eq.s32.totalorder %s20, 1
    %p85 = por %p83, %p84
    %p87 = scmp.ne.s32.totalorder %s72, %s86
    %p88 = scmp.eq.s32.totalorder %s20, 0
    %p89 = por %p87, %p88
    %s91 = sadd.s32 %s90, 1
    %p94 = scmp.eq.s32.totalorder %s14, 1
    %p95 = scmp.ne.s32.totalorder %s90, %s92
    %p96 = scmp.eq.s32.totalorder %s14, 0
    %p97 = por %p95, %p96
    %p98 = scmp.ne.s32.totalorder %s90, %s92
    %p99 = scmp.eq.s32.totalorder %s19, 1
    %p100 = por %p98, %p99
    %p101 = scmp.ne.s32.totalorder %s92, %s93
    %p102 = scmp.eq.s32.totalorder %s19, 0
    %p103 = por %p101, %p102
    %p104 = scmp.ne.s32.totalorder %s92, %s93
    %p105 = scmp.eq.s32.totalorder %s20, 1
    %p106 = por %p104, %p105
    %p108 = scmp.ne.s32.totalorder %s93, %s107
    %p109 = scmp.eq.s32.totalorder %s20, 0
    %p110 = por %p108, %p109
    %s112 = sadd.s32 %s111, 1
    %p115 = scmp.eq.s32.totalorder %s14, 1
    %p116 = scmp.ne.s32.totalorder %s111, %s113
    %p117 = scmp.eq.s32.totalorder %s14, 0
    %p118 = por %p116, %p117
    %p119 = scmp.ne.s32.totalorder %s111, %s113
    %p120 = scmp.eq.s32.totalorder %s19, 1
    %p121 = por %p119, %p120
    %p122 = scmp.ne.s32.totalorder %s113, %s114
    %p123 = scmp.eq.s32.totalorder %s19, 0
    %p124 = por %p122, %p123
    %p125 = scmp.ne.s32.totalorder %s113, %s114
    %p126 = scmp.eq.s32.totalorder %s20, 1
    %p127 = por %p125, %p126
    %p129 = scmp.ne.s32.totalorder %s114, %s128
    %p130 = scmp.eq.s32.totalorder %s20, 0
    %p131 = por %p129, %p130
    %s133 = sadd.s32 %s132, 1
    %p136 = scmp.eq.s32.totalorder %s14, 1
    %p137 = scmp.ne.s32.totalorder %s132, %s134
    %p138 = scmp.eq.s32.totalorder %s14, 0
    %p139 = por %p137, %p138
    %p140 = scmp.ne.s32.totalorder %s132, %s134
    %p141 = scmp.eq.s32.totalorder %s19, 1
    %p142 = por %p140, %p141
    %p143 = scmp.ne.s32.totalorder %s134, %s135
    %p144 = scmp.eq.s32.totalorder %s19, 0
    %p145 = por %p143, %p144
    %p146 = scmp.ne.s32.totalorder %s134, %s135
    %p147 = scmp.eq.s32.totalorder %s20, 1
    %p148 = por %p146, %p147
    %p150 = scmp.ne.s32.totalorder %s135, %s149
    %p151 = scmp.eq.s32.totalorder %s20, 0
    %p152 = por %p150, %p151
    %s154 = sadd.s32 %s153, 1
    %p157 = scmp.eq.s32.totalorder %s14, 1
    %p158 = scmp.ne.s32.totalorder %s153, %s155
    %p159 = scmp.eq.s32.totalorder %s14, 0
    %p160 = por %p158, %p159
    %p161 = scmp.ne.s32.totalorder %s153, %s155
    %p162 = scmp.eq.s32.totalorder %s19, 1
    %p163 = por %p161, %p162
    %p164 = scmp.ne.s32.totalorder %s155, %s156
    %p165 = scmp.eq.s32.totalorder %s19, 0
    %p166 = por %p164, %p165
    %p167 = scmp.ne.s32.totalorder %s155, %s156
    %p168 = scmp.eq.s32.totalorder %s20, 1
    %p169 = por %p167, %p168
    %p171 = scmp.ne.s32.totalorder %s156, %s170
    %p172 = scmp.eq.s32.totalorder %s20, 0
    %p173 = por %p171, %p172
    %s175 = sadd.s32 %s174, 1
    %p178 = scmp.eq.s32.totalorder %s14, 1
    %p179 = scmp.ne.s32.totalorder %s174, %s176
    %p180 = scmp.eq.s32.totalorder %s14, 0
    %p181 = por %p179, %p180
    %p182 = scmp.ne.s32.totalorder %s174, %s176
    %p183 = scmp.eq.s32.totalorder %s19, 1
    %p184 = por %p182, %p183
    %p185 = scmp.ne.s32.totalorder %s176, %s177
    %p186 = scmp.eq.s32.totalorder %s19, 0
    %p187 = por %p185, %p186
    %p188 = scmp.ne.s32.totalorder %s176, %s177
    %p189 = scmp.eq.s32.totalorder %s20, 1
    %p190 = por %p188, %p189
    %p192 = scmp.ne.s32.totalorder %s177, %s191
    %p193 = scmp.eq.s32.totalorder %s20, 0
    %p194 = por %p192, %p193
    %s195 = ssub.s32 %s14, %s21
    %p196 = scmp.eq.s32.totalorder %s195, 0
    %s198 = sadd.s32 %s197, 1
    %s199 = scalar_select %p196, %s197, %s198
    %p202 = pneg %p196
    %p203 = scmp.eq.s32.totalorder %s14, 1
    %p204 = por %p202, %p203
    %p205 = scmp.ne.s32.totalorder %s197, %s200
    %p206 = scmp.eq.s32.totalorder %s14, 0
    %p207 = por %p205, %p206
    %p208 = scmp.ne.s32.totalorder %s197, %s200
    %p209 = scmp.eq.s32.totalorder %s19, 1
    %p210 = por %p208, %p209
    %p211 = scmp.ne.s32.totalorder %s200, %s201
    %p212 = scmp.eq.s32.totalorder %s19, 0
    %p213 = por %p211, %p212
    %p214 = scmp.ne.s32.totalorder %s200, %s201
    %p215 = scmp.eq.s32.totalorder %s20, 1
    %p216 = por %p214, %p215
    %p218 = scmp.ne.s32.totalorder %s201, %s217
    %p219 = scmp.eq.s32.totalorder %s20, 0
    %p220 = por %p218, %p219
    %p221 = scmp.le.s32.totalorder 1, %s14
    %p222 = scmp.lt.s32.totalorder %s14, 3
    %p223 = pnand %p221, %p222
    %p224 = pneg %p223
    // Predicated region
    $region9: #{context_net_forward.1} parent=5 // pred_check
      _
    $region10: #{context_net_forward.1} parent=5 // pred_check_branch
      %226 = sbr.rel (%p223) target = $region12
    $region11: #{context_net_forward.1} parent=5 // pred_region
      %s227 = ssub.s32 %s14, 1
      // Predicated region
      $region13: #{context_net_forward.1} parent=11 // pred_check
        %p228 = pneg %p61
      $region14: #{context_net_forward.1} parent=11 // pred_check_branch
        %230 = sbr.rel (%p228) target = $region16
      $region15: #{context_net_forward.1} parent=11 // pred_region
        _
      $region16: #{context_net_forward.1} parent=11 // pred_fallthru
        _
      // Predicated region
      $region17: #{context_net_forward.1} parent=11 // pred_check
        %p231 = pneg %p82
      $region18: #{context_net_forward.1} parent=11 // pred_check_branch
        %233 = sbr.rel (%p231) target = $region20
      $region19: #{context_net_forward.1} parent=11 // pred_region
        _
      $region20: #{context_net_forward.1} parent=11 // pred_fallthru
        _
      // Predicated region
      $region21: #{context_net_forward.1} parent=11 // pred_check
        %p234 = pneg %p103
      $region22: #{context_net_forward.1} parent=11 // pred_check_branch
        %236 = sbr.rel (%p234) target = $region24
      $region23: #{context_net_forward.1} parent=11 // pred_region
        _
      $region24: #{context_net_forward.1} parent=11 // pred_fallthru
        _
      // Predicated region
      $region25: #{context_net_forward.1} parent=11 // pred_check
        %p237 = pneg %p124
      $region26: #{context_net_forward.1} parent=11 // pred_check_branch
        %239 = sbr.rel (%p237) target = $region28
      $region27: #{context_net_forward.1} parent=11 // pred_region
        _
      $region28: #{context_net_forward.1} parent=11 // pred_fallthru
        _
      // Predicated region
      $region29: #{context_net_forward.1} parent=11 // pred_check
        %p240 = pneg %p145
      $region30: #{context_net_forward.1} parent=11 // pred_check_branch
        %242 = sbr.rel (%p240) target = $region32
      $region31: #{context_net_forward.1} parent=11 // pred_region
        _
      $region32: #{context_net_forward.1} parent=11 // pred_fallthru
        _
      // Predicated region
      $region33: #{context_net_forward.1} parent=11 // pred_check
        %p243 = pneg %p166
      $region34: #{context_net_forward.1} parent=11 // pred_check_branch
        %245 = sbr.rel (%p243) target = $region36
      $region35: #{context_net_forward.1} parent=11 // pred_region
        _
      $region36: #{context_net_forward.1} parent=11 // pred_fallthru
        _
      // Predicated region
      $region37: #{context_net_forward.1} parent=11 // pred_check
        %p246 = pneg %p187
      $region38: #{context_net_forward.1} parent=11 // pred_check_branch
        %248 = sbr.rel (%p246) target = $region40
      $region39: #{context_net_forward.1} parent=11 // pred_region
        _
      $region40: #{context_net_forward.1} parent=11 // pred_fallthru
        _
    $region12: #{context_net_forward.1} parent=5 // pred_fallthru
      _
    %p249 = scmp.lt.s32.totalorder %s14, 2
    // Predicated region
    $region41: #{context_net_forward.1} parent=5 // pred_check
      %p250 = pneg %p249
    $region42: #{context_net_forward.1} parent=5 // pred_check_branch
      %252 = sbr.rel (%p250) target = $region44
    $region43: #{context_net_forward.1} parent=5 // pred_region
      // Predicated region
      $region45: #{context_net_forward.1} parent=43 // pred_check
        %p253 = pneg %p34
      $region46: #{context_net_forward.1} parent=43 // pred_check_branch
        %255 = sbr.rel (%p253) target = $region48
      $region47: #{context_net_forward.1} parent=43 // pred_region
        %p256 = scmp.lt.s32.totalorder %s14, 1
        %s257 = scalar_select %p256, %s14, 1
        %s258 = smul.addr %s257, 42
        %s259 = smul.addr %s258, 4
        %s260 = scalar_lea.vmem %s0, %s259
      $region48: #{context_net_forward.1} parent=43 // pred_fallthru
        _
    $region44: #{context_net_forward.1} parent=5 // pred_fallthru
      _
    %p261 = scmp.le.s32.totalorder 1, %s14
    %p262 = scmp.lt.s32.totalorder %s14, 3
    %p263 = pnand %p261, %p262
    %p264 = pneg %p263
    // Predicated region
    $region49: #{context_net_forward.1} parent=5 // pred_check
      _
    $region50: #{context_net_forward.1} parent=5 // pred_check_branch
      %266 = sbr.rel (%p263) target = $region52
    $region51: #{context_net_forward.1} parent=5 // pred_region
      %s267 = ssub.s32 %s14, 1
      %p268 = scmp.lt.s32.totalorder %s19, 1
      %s269 = scalar_select %p268, %s19, 1
      %s270 = smul.addr %s269, 42
      %s271 = smul.addr %s270, 4
      %s272 = scalar_lea.vmem %s0, %s271
      %p273 = pneg %p40
      %p274 = pneg %p37
      %p275 = pneg %p61
      %p276 = pneg %p58
      %p277 = pneg %p82
      %p278 = pneg %p79
      %p279 = pneg %p103
      %p280 = pneg %p100
      %p281 = pneg %p124
      %p282 = pneg %p121
      %p283 = pneg %p145
      %p284 = pneg %p142
      %p285 = pneg %p166
      %p286 = pneg %p163
      %p287 = pneg %p187
      %p288 = pneg %p184
      %p289 = pneg %p213
      %p290 = pneg %p210
      %p291 = scmp.lt.s32.totalorder %s19, 1
      %s292 = scalar_select %p291, %s19, 1
      %s293 = smul.addr %s292, 32
      %s294 = smul.addr %s293, 8
      %s295 = scalar_lea.vmem %s8, %s294
      %p296 = scmp.lt.s32.totalorder %s19, 1
      %s297 = scalar_select %p296, %s19, 1
      %s298 = smul.addr %s297, 42
      %s299 = smul.addr %s298, 4
      %s300 = scalar_lea.vmem %s0, %s299
      %p301 = scmp.lt.s32.totalorder %s19, 1
      %s302 = scalar_select %p301, %s19, 1
      %s303 = smul.addr %s302, 32
      %s304 = smul.addr %s303, 8
      %s305 = scalar_lea.vmem %s8, %s304
      %vm307 = vcmask 519168
      %308 = vst.msk [vmem:[#allocation2] sm:$0xf] %vm307, 0
      %309 = vst.msk [vmem:[#allocation2 + $0x4] sm:$0xf] %vm307, 0
      %310 = vst.msk [vmem:[#allocation2 + $0x8] sm:$0xf] %vm307, 0
      %311 = vst.msk [vmem:[#allocation2 + $0xc] sm:$0xf] %vm307, 0
      %312 = vst.msk [vmem:[#allocation2 + $0x10] sm:$0xf] %vm307, 0
      %vm313 = vcmask 257024
      %314 = vst.msk [vmem:[#allocation3] sm:$0xf] %vm313, 0
      %315 = vst.msk [vmem:[#allocation3 + $0x4] sm:$0xf] %vm313, 0
      %316 = vst.msk [vmem:[#allocation3 + $0x8] sm:$0xf] %vm313, 0
      %317 = vst.msk [vmem:[#allocation3 + $0xc] sm:$0xf] %vm313, 0
      %318 = vst.msk [vmem:[#allocation3 + $0x10] sm:$0xf] %vm313, 0
      %319 = vst.msk [vmem:[#allocation2 + $0x94] sm:$0xf] %vm307, 0
      %320 = vst.msk [vmem:[#allocation2 + $0x98] sm:$0xf] %vm307, 0
      %321 = vst.msk [vmem:[#allocation2 + $0x9c] sm:$0xf] %vm307, 0
      %322 = vst.msk [vmem:[#allocation2 + $0xa0] sm:$0xf] %vm307, 0
      %323 = vst.msk [vmem:[#allocation2 + $0xa4] sm:$0xf] %vm307, 0
      %324 = vst.msk [vmem:[#allocation3 + $0x94] sm:$0xf] %vm313, 0
      %325 = vst.msk [vmem:[#allocation3 + $0x98] sm:$0xf] %vm313, 0
      %326 = vst.msk [vmem:[#allocation3 + $0x9c] sm:$0xf] %vm313, 0
      %327 = vst.msk [vmem:[#allocation3 + $0xa0] sm:$0xf] %vm313, 0
      %328 = vst.msk [vmem:[#allocation3 + $0xa4] sm:$0xf] %vm313, 0
      %v329 = vld [vmem:[%s3] sm:$0x1]
      %v330 = vld [vmem:[%s300] sm:$0xf]
      %v331 = vld [vmem:[%s300 + $0x4] sm:$0xf]
      %v332 = vld [vmem:[%s300 + $0x8] sm:$0xf]
      %v333 = vld [vmem:[%s300 + $0xc] sm:$0xf]
      %v334 = vld [vmem:[%s300 + $0x10] sm:$0xf]
      %v335 = vld [vmem:[%s300 + $0x14] sm:$0xf]
      %v336 = vld [vmem:[%s300 + $0x18] sm:$0xf]
      %v337 = vld [vmem:[%s300 + $0x1c] sm:$0xf]
      %v338 = vld [vmem:[%s300 + $0x20] sm:$0xf]
      %v339 = vld [vmem:[%s300 + $0x24] sm:$0xf]
      %v340 = vld [vmem:[%s300 + $0x28] sm:$0xf]
      %v341 = vld [vmem:[%s300 + $0x2c] sm:$0xf]
      %v342 = vld [vmem:[%s300 + $0x30] sm:$0xf]
      %v343 = vld [vmem:[%s300 + $0x34] sm:$0xf]
      %v344 = vld [vmem:[%s300 + $0x38] sm:$0xf]
      %v345 = vld [vmem:[%s300 + $0x3c] sm:$0xf]
      %v346 = vld [vmem:[%s300 + $0x40] sm:$0xf]
      %v347 = vld [vmem:[%s300 + $0x44] sm:$0xf]
      %v348 = vld [vmem:[%s2] sm:$0xf]
      %s349 = scalar_lea.vmem %s2, 8
      %v350 = vld [vmem:[%s349] sm:$0xf]
      %v361 = vunpack.c.l.b16 %v334
      %v362 = vunpack.c.l.b16 %v335
      %v363 = vunpack.c.l.b16 %v336
      %v364 = vunpack.c.l.b16 %v337
      %v365 = vunpack.c.l.b16 %v338
      %v366 = vunpack.c.l.b16 %v339
      %v367 = vunpack.c.l.b16 %v340
      %v368 = vunpack.c.l.b16 %v341
      %v369 = vunpack.c.l.b16 %v342
      %v370 = vunpack.c.l.b16 %v343
      %v371 = vpack.c.b16 %v362, %v361
      %v372 = vpack.c.b16 %v364, %v363
      %v373 = vpack.c.b16 %v366, %v365
      %v374 = vpack.c.b16 %v368, %v367
      %v375 = vpack.c.b16 %v370, %v369
      %v378 = vunpack.c.l.s4 1983009808
      %v379 = vunpack.c.0.s8 %v378
      %v380 = vlaneseq
      %v381 = vshrl.u32 %v380, 7
      %v382 = vsub.s32 %v379, %v381
      %v383 = vrot.slane %v350, %v382
      %v384 = vcombine.high %v383, %v383
      %vm385 = vcmask 31744
      %v387 = vsel %vm385, %v371, 0
      %v390 = vsel %vm385, %v372, 0
      %v393 = vsel %vm385, %v373, 0
      %v396 = vsel %vm385, %v374, 0
      %v399 = vsel %vm385, %v375, 0
      %vm401 = vcmask 1041408
      %v403 = vsel %vm401, %v383, 0
      %v406 = vsel %vm401, %v384, 0
      %408 = vmatprep.subr.bf16.mxu0 0
      %409 = vmatpush1.bf16.msra.mxu0 0
      %410 = vmatprep.subr.bf16.mxu0 0
      %411 = vmatpush1.bf16.msra.mxu0 0
      %412 = vmatprep.subr.bf16.mxu0 0
      %413 = vmatpush1.bf16.msra.mxu0 0
      %414 = vmatprep.subr.bf16.mxu0 0
      %415 = vmatpush1.bf16.msra.mxu0 0
      %416 = vmatprep.subr.bf16.mxu0 0
      %417 = vmatpush1.bf16.msra.mxu0 0
      %418 = vmatprep.subr.bf16.mxu0 0
      %419 = vmatpush1.bf16.msra.mxu0 0
      %420 = vmatprep.subr.bf16.mxu0 0
      %421 = vmatpush1.bf16.msra.mxu0 0
      %422 = vmatprep.subr.bf16.mxu0 %v406
      %423 = vmatpush1.bf16.msra.mxu0 %v403
      %424 = vmatprep.subr.bf16.mxu0 0
      %425 = vmatpush2.bf16.msra.mxu0 0
      %426 = vmatprep.subr.bf16.mxu0 0
      %427 = vmatpush2.bf16.msra.mxu0 0
      %428 = vmatprep.subr.bf16.mxu0 0
      %429 = vmatpush2.bf16.msra.mxu0 0
      %430 = vmatprep.subr.bf16.mxu0 0
      %431 = vmatpush2.bf16.msra.mxu0 0
      %432 = vmatprep.subr.bf16.mxu0 0
      %433 = vmatpush2.bf16.msra.mxu0 0
      %434 = vmatprep.subr.bf16.mxu0 0
      %435 = vmatpush2.bf16.msra.mxu0 0
      %436 = vmatprep.subr.bf16.mxu0 0
      %437 = vmatpush2.bf16.msra.mxu0 0
      %438 = vmatprep.subr.bf16.mxu0 0
      %439 = vmatpush2.bf16.msra.mxu0 0
      %440 = vmatprep.mubr.bf16.mxu0 0
      %441 = vmatmul.mubr.bf16.gmra.mxu0 %v387
      %v442 = vpop.f32.mrf.mxu0
      %v443 = vadd.f32 0.0, %v442
      %v444 = vpop.f32.mrf.mxu0
      %v445 = vadd.f32 0.0, %v444
      %v446 = vpop.f32.mrf.mxu0
      %v447 = vadd.f32 0.0, %v446
      %v448 = vpop.f32.mrf.mxu0
      %v449 = vadd.f32 0.0, %v448
      %450 = vmatprep.mubr.bf16.mxu0 0
      %451 = vmatmul.mubr.bf16.gmra.mxu0 %v390
      %v452 = vpop.f32.mrf.mxu0
      %v453 = vadd.f32 0.0, %v452
      %v454 = vpop.f32.mrf.mxu0
      %v455 = vadd.f32 0.0, %v454
      %v456 = vpop.f32.mrf.mxu0
      %v457 = vadd.f32 0.0, %v456
      %v458 = vpop.f32.mrf.mxu0
      %v459 = vadd.f32 0.0, %v458
      %460 = vmatprep.mubr.bf16.mxu0 0
      %461 = vmatmul.mubr.bf16.gmra.mxu0 %v393
      %v462 = vpop.f32.mrf.mxu0
      %v463 = vadd.f32 0.0, %v462
      %v464 = vpop.f32.mrf.mxu0
      %v465 = vadd.f32 0.0, %v464
      %v466 = vpop.f32.mrf.mxu0
      %v467 = vadd.f32 0.0, %v466
      %v468 = vpop.f32.mrf.mxu0
      %v469 = vadd.f32 0.0, %v468
      %470 = vmatprep.mubr.bf16.mxu0 0
      %471 = vmatmul.mubr.bf16.gmra.mxu0 %v396
      %v472 = vpop.f32.mrf.mxu0
      %v473 = vadd.f32 0.0, %v472
      %v474 = vpop.f32.mrf.mxu0
      %v475 = vadd.f32 0.0, %v474
      %v476 = vpop.f32.mrf.mxu0
      %v477 = vadd.f32 0.0, %v476
      %v478 = vpop.f32.mrf.mxu0
      %v479 = vadd.f32 0.0, %v478
      %480 = vmatprep.mubr.bf16.mxu0 0
      %481 = vmatmul.mubr.bf16.gmra.mxu0 %v399
      %v482 = vpop.f32.mrf.mxu0
      %v483 = vadd.f32 0.0, %v482
      %v484 = vpop.f32.mrf.mxu0
      %v485 = vadd.f32 0.0, %v484
      %v486 = vpop.f32.mrf.mxu0
      %v487 = vpop.f32.mrf.mxu0
      %488 = vdwg.mxu0
      %v493 = vunpack.c.l.b16 %v330
      %v494 = vunpack.c.l.b16 %v331
      %v495 = vunpack.c.l.b16 %v332
      %v496 = vunpack.c.l.b16 %v333
      %v497 = vpack.c.b16 %v494, %v493
      %v498 = vpack.c.b16 %v496, %v495
      %v501 = vunpack.c.l.s4 1983009808
      %v502 = vunpack.c.0.s8 %v501
      %v503 = vlaneseq
      %v504 = vshrl.u32 %v503, 7
      %v505 = vsub.s32 %v502, %v504
      %v506 = vrot.slane %v348, %v505
      %v507 = vcombine.high %v506, %v506
      %v509 = vsel %vm385, %v497, 0
      %v512 = vsel %vm385, %v498, 0
      %v515 = vsel %vm401, %v506, 0
      %v518 = vsel %vm401, %v507, 0
      %520 = vmatprep.subr.bf16.mxu0 0
      %521 = vmatpush1.bf16.msra.mxu0 0
      %522 = vmatprep.subr.bf16.mxu0 0
      %523 = vmatpush1.bf16.msra.mxu0 0
      %524 = vmatprep.subr.bf16.mxu0 0
      %525 = vmatpush1.bf16.msra.mxu0 0
      %526 = vmatprep.subr.bf16.mxu0 0
      %527 = vmatpush1.bf16.msra.mxu0 0
      %528 = vmatprep.subr.bf16.mxu0 0
      %529 = vmatpush1.bf16.msra.mxu0 0
      %530 = vmatprep.subr.bf16.mxu0 0
      %531 = vmatpush1.bf16.msra.mxu0 0
      %532 = vmatprep.subr.bf16.mxu0 0
      %533 = vmatpush1.bf16.msra.mxu0 0
      %534 = vmatprep.subr.bf16.mxu0 %v518
      %535 = vmatpush1.bf16.msra.mxu0 %v515
      %536 = vmatprep.subr.bf16.mxu0 0
      %537 = vmatpush2.bf16.msra.mxu0 0
      %538 = vmatprep.subr.bf16.mxu0 0
      %539 = vmatpush2.bf16.msra.mxu0 0
      %540 = vmatprep.subr.bf16.mxu0 0
      %541 = vmatpush2.bf16.msra.mxu0 0
      %542 = vmatprep.subr.bf16.mxu0 0
      %543 = vmatpush2.bf16.msra.mxu0 0
      %544 = vmatprep.subr.bf16.mxu0 0
      %545 = vmatpush2.bf16.msra.mxu0 0
      %546 = vmatprep.subr.bf16.mxu0 0
      %547 = vmatpush2.bf16.msra.mxu0 0
      %548 = vmatprep.subr.bf16.mxu0 0
      %549 = vmatpush2.bf16.msra.mxu0 0
      %550 = vmatprep.subr.bf16.mxu0 0
      %551 = vmatpush2.bf16.msra.mxu0 0
      %552 = vmatprep.mubr.bf16.mxu0 0
      %553 = vmatmul.mubr.bf16.gmra.mxu0 %v509
      %v554 = vpop.f32.mrf.mxu0
      %v555 = vadd.f32 %v443, %v554
      %v556 = vpop.f32.mrf.mxu0
      %v557 = vadd.f32 %v445, %v556
      %v558 = vpop.f32.mrf.mxu0
      %v559 = vadd.f32 %v447, %v558
      %v560 = vpop.f32.mrf.mxu0
      %v561 = vadd.f32 %v449, %v560
      %562 = vmatprep.mubr.bf16.mxu0 0
      %563 = vmatmul.mubr.bf16.gmra.mxu0 %v512
      %v564 = vpop.f32.mrf.mxu0
      %v565 = vadd.f32 %v453, %v564
      %v566 = vpop.f32.mrf.mxu0
      %v567 = vadd.f32 %v455, %v566
      %v568 = vpop.f32.mrf.mxu0
      %v569 = vadd.f32 %v457, %v568
      %v570 = vpop.f32.mrf.mxu0
      %v571 = vadd.f32 %v459, %v570
      %572 = vmatprep.mubr.bf16.mxu0 0
      %573 = vmatmul.mubr.bf16.gmra.mxu0 %v387
      %v574 = vpop.f32.mrf.mxu0
      %v575 = vadd.f32 %v463, %v574
      %v576 = vpop.f32.mrf.mxu0
      %v577 = vadd.f32 %v465, %v576
      %v578 = vpop.f32.mrf.mxu0
      %v579 = vadd.f32 %v467, %v578
      %v580 = vpop.f32.mrf.mxu0
      %v581 = vadd.f32 %v469, %v580
      %582 = vmatprep.mubr.bf16.mxu0 0
      %583 = vmatmul.mubr.bf16.gmra.mxu0 %v390
      %v584 = vpop.f32.mrf.mxu0
      %v585 = vadd.f32 %v473, %v584
      %v586 = vpop.f32.mrf.mxu0
      %v587 = vadd.f32 %v475, %v586
      %v588 = vpop.f32.mrf.mxu0
      %v589 = vadd.f32 %v477, %v588
      %v590 = vpop.f32.mrf.mxu0
      %v591 = vadd.f32 %v479, %v590
      %592 = vmatprep.mubr.bf16.mxu0 0
      %593 = vmatmul.mubr.bf16.gmra.mxu0 %v393
      %v594 = vpop.f32.mrf.mxu0
      %v595 = vadd.f32 %v483, %v594
      %v596 = vpop.f32.mrf.mxu0
      %v597 = vadd.f32 %v485, %v596
      %v598 = vpop.f32.mrf.mxu0
      %v599 = vpop.f32.mrf.mxu0
      %600 = vdwg.mxu0
      %s601 = scalar_lea.vmem %s2, 16
      %v602 = vld [vmem:[%s601] sm:$0xf]
      %v607 = vunpack.c.l.b16 %v344
      %v608 = vunpack.c.l.b16 %v345
      %v609 = vunpack.c.l.b16 %v346
      %v610 = vunpack.c.l.b16 %v347
      %v611 = vpack.c.b16 %v608, %v607
      %v612 = vpack.c.b16 %v610, %v609
      %v615 = vunpack.c.l.s4 1983009808
      %v616 = vunpack.c.0.s8 %v615
      %v617 = vlaneseq
      %v618 = vshrl.u32 %v617, 7
      %v619 = vsub.s32 %v616, %v618
      %v620 = vrot.slane %v602, %v619
      %v621 = vcombine.high %v620, %v620
      %v623 = vsel %vm385, %v611, 0
      %v626 = vsel %vm385, %v612, 0
      %v629 = vsel %vm401, %v620, 0
      %v632 = vsel %vm401, %v621, 0
      %634 = vmatprep.subr.bf16.mxu0 0
      %635 = vmatpush1.bf16.msra.mxu0 0
      %636 = vmatprep.subr.bf16.mxu0 0
      %637 = vmatpush1.bf16.msra.mxu0 0
      %638 = vmatprep.subr.bf16.mxu0 0
      %639 = vmatpush1.bf16.msra.mxu0 0
      %640 = vmatprep.subr.bf16.mxu0 0
      %641 = vmatpush1.bf16.msra.mxu0 0
      %642 = vmatprep.subr.bf16.mxu0 0
      %643 = vmatpush1.bf16.msra.mxu0 0
      %644 = vmatprep.subr.bf16.mxu0 0
      %645 = vmatpush1.bf16.msra.mxu0 0
      %646 = vmatprep.subr.bf16.mxu0 0
      %647 = vmatpush1.bf16.msra.mxu0 0
      %648 = vmatprep.subr.bf16.mxu0 %v632
      %649 = vmatpush1.bf16.msra.mxu0 %v629
      %650 = vmatprep.subr.bf16.mxu0 0
      %651 = vmatpush2.bf16.msra.mxu0 0
      %652 = vmatprep.subr.bf16.mxu0 0
      %653 = vmatpush2.bf16.msra.mxu0 0
      %654 = vmatprep.subr.bf16.mxu0 0
      %655 = vmatpush2.bf16.msra.mxu0 0
      %656 = vmatprep.subr.bf16.mxu0 0
      %657 = vmatpush2.bf16.msra.mxu0 0
      %658 = vmatprep.subr.bf16.mxu0 0
      %659 = vmatpush2.bf16.msra.mxu0 0
      %660 = vmatprep.subr.bf16.mxu0 0
      %661 = vmatpush2.bf16.msra.mxu0 0
      %662 = vmatprep.subr.bf16.mxu0 0
      %663 = vmatpush2.bf16.msra.mxu0 0
      %664 = vmatprep.subr.bf16.mxu0 0
      %665 = vmatpush2.bf16.msra.mxu0 0
      %666 = vmatprep.mubr.bf16.mxu0 0
      %667 = vmatmul.mubr.bf16.gmra.mxu0 %v393
      %v668 = vpop.f32.mrf.mxu0
      %v669 = vadd.f32 0.0, %v668
      %v670 = vpop.f32.mrf.mxu0
      %v671 = vadd.f32 0.0, %v670
      %v672 = vpop.f32.mrf.mxu0
      %v673 = vadd.f32 0.0, %v672
      %v674 = vpop.f32.mrf.mxu0
      %v675 = vadd.f32 0.0, %v674
      %676 = vmatprep.mubr.bf16.mxu0 0
      %677 = vmatmul.mubr.bf16.gmra.mxu0 %v396
      %v678 = vpop.f32.mrf.mxu0
      %v679 = vadd.f32 0.0, %v678
      %v680 = vpop.f32.mrf.mxu0
      %v681 = vadd.f32 0.0, %v680
      %v682 = vpop.f32.mrf.mxu0
      %v683 = vadd.f32 0.0, %v682
      %v684 = vpop.f32.mrf.mxu0
      %v685 = vadd.f32 0.0, %v684
      %686 = vmatprep.mubr.bf16.mxu0 0
      %687 = vmatmul.mubr.bf16.gmra.mxu0 %v399
      %v688 = vpop.f32.mrf.mxu0
      %v689 = vadd.f32 0.0, %v688
      %v690 = vpop.f32.mrf.mxu0
      %v691 = vadd.f32 0.0, %v690
      %v692 = vpop.f32.mrf.mxu0
      %v693 = vadd.f32 0.0, %v692
      %v694 = vpop.f32.mrf.mxu0
      %v695 = vadd.f32 0.0, %v694
      %696 = vmatprep.mubr.bf16.mxu0 0
      %697 = vmatmul.mubr.bf16.gmra.mxu0 %v623
      %v698 = vpop.f32.mrf.mxu0
      %v699 = vadd.f32 0.0, %v698
      %v700 = vpop.f32.mrf.mxu0
      %v701 = vadd.f32 0.0, %v700
      %v702 = vpop.f32.mrf.mxu0
      %v703 = vadd.f32 0.0, %v702
      %v704 = vpop.f32.mrf.mxu0
      %v705 = vadd.f32 0.0, %v704
      %706 = vmatprep.mubr.bf16.mxu0 0
      %707 = vmatmul.mubr.bf16.gmra.mxu0 %v626
      %v708 = vpop.f32.mrf.mxu0
      %v709 = vadd.f32 0.0, %v708
      %v710 = vpop.f32.mrf.mxu0
      %v711 = vadd.f32 0.0, %v710
      %v712 = vpop.f32.mrf.mxu0
      %v713 = vpop.f32.mrf.mxu0
      %714 = vdwg.mxu0
      %v715 = vadd.f32 %v555, %v669
      %v716 = vadd.f32 %v557, %v671
      %v717 = vadd.f32 %v559, %v673
      %v718 = vadd.f32 %v561, %v675
      %v719 = vadd.f32 %v565, %v679
      %v720 = vadd.f32 %v567, %v681
      %v721 = vadd.f32 %v569, %v683
      %v722 = vadd.f32 %v571, %v685
      %v723 = vadd.f32 %v575, %v689
      %v724 = vadd.f32 %v577, %v691
      %v725 = vadd.f32 %v579, %v693
      %v726 = vadd.f32 %v581, %v695
      %v727 = vadd.f32 %v585, %v699
      %v728 = vadd.f32 %v587, %v701
      %v729 = vadd.f32 %v589, %v703
      %v730 = vadd.f32 %v591, %v705
      %v731 = vadd.f32 %v595, %v709
      %v732 = vadd.f32 %v597, %v711
      %vm742 = vcmask 1046528
      %v743 = vrot.slane %v715, 1
      %v744 = vrot.slane %v717, 1
      %v745 = vsel %vm742, %v743, %v744
      %v746 = vrot.slane %v719, 1
      %v747 = vsel %vm742, %v744, %v746
      %v748 = vrot.slane %v721, 1
      %v749 = vsel %vm742, %v746, %v748
      %v750 = vrot.slane %v723, 1
      %v751 = vsel %vm742, %v748, %v750
      %v752 = vrot.slane %v725, 1
      %v753 = vsel %vm742, %v750, %v752
      %v754 = vrot.slane %v727, 1
      %v755 = vsel %vm742, %v752, %v754
      %v756 = vrot.slane %v729, 1
      %v757 = vsel %vm742, %v754, %v756
      %v758 = vrot.slane %v731, 1
      %v759 = vsel %vm742, %v756, %v758
      %760 = vrot.lane.b32.xlu0 %v745, 64
      %v761 = vpop.permute.xlu0 %760
      %762 = vrot.lane.b32.xlu0 %v747, 64
      %v763 = vpop.permute.xlu0 %762
      %764 = vrot.lane.b32.xlu0 %v749, 64
      %v765 = vpop.permute.xlu0 %764
      %766 = vrot.lane.b32.xlu0 %v751, 64
      %v767 = vpop.permute.xlu0 %766
      %768 = vrot.lane.b32.xlu0 %v753, 64
      %v769 = vpop.permute.xlu0 %768
      %770 = vrot.lane.b32.xlu0 %v755, 64
      %v771 = vpop.permute.xlu0 %770
      %772 = vrot.lane.b32.xlu0 %v757, 64
      %v773 = vpop.permute.xlu0 %772
      %774 = vrot.lane.b32.xlu0 %v759, 64
      %v775 = vpop.permute.xlu0 %774
      %776 = vrot.lane.b32.xlu0 %v758, 64
      %v777 = vpop.permute.xlu0 %776
      %v787 = vadd.f32 %v715, %v761
      %v788 = vadd.f32 %v717, %v763
      %v789 = vadd.f32 %v719, %v765
      %v790 = vadd.f32 %v721, %v767
      %v791 = vadd.f32 %v723, %v769
      %v792 = vadd.f32 %v725, %v771
      %v793 = vadd.f32 %v727, %v773
      %v794 = vadd.f32 %v729, %v775
      %v795 = vadd.f32 %v731, %v777
      %vm805 = vcmask 1045504
      %v806 = vrot.slane %v716, 2
      %v807 = vrot.slane %v718, 2
      %v808 = vsel %vm805, %v806, %v807
      %v809 = vrot.slane %v720, 2
      %v810 = vsel %vm805, %v807, %v809
      %v811 = vrot.slane %v722, 2
      %v812 = vsel %vm805, %v809, %v811
      %v813 = vrot.slane %v724, 2
      %v814 = vsel %vm805, %v811, %v813
      %v815 = vrot.slane %v726, 2
      %v816 = vsel %vm805, %v813, %v815
      %v817 = vrot.slane %v728, 2
      %v818 = vsel %vm805, %v815, %v817
      %v819 = vrot.slane %v730, 2
      %v820 = vsel %vm805, %v817, %v819
      %v821 = vrot.slane %v732, 2
      %v822 = vsel %vm805, %v819, %v821
      %v832 = vadd.f32 %v787, %v808
      %v833 = vadd.f32 %v788, %v810
      %v834 = vadd.f32 %v789, %v812
      %v835 = vadd.f32 %v790, %v814
      %v836 = vadd.f32 %v791, %v816
      %v837 = vadd.f32 %v792, %v818
      %v838 = vadd.f32 %v793, %v820
      %v839 = vadd.f32 %v794, %v822
      %v840 = vadd.f32 %v795, %v821
      %vm841 = vcmask 1044480
      %v842 = vrot.slane %v718, 3
      %v843 = vrot.slane %v720, 3
      %v844 = vsel %vm841, %v842, %v843
      %v845 = vrot.slane %v722, 3
      %v846 = vsel %vm841, %v843, %v845
      %v847 = vrot.slane %v724, 3
      %v848 = vsel %vm841, %v845, %v847
      %v849 = vrot.slane %v726, 3
      %v850 = vsel %vm841, %v847, %v849
      %v851 = vrot.slane %v728, 3
      %v852 = vsel %vm841, %v849, %v851
      %v853 = vrot.slane %v730, 3
      %v854 = vsel %vm841, %v851, %v853
      %v855 = vrot.slane %v732, 3
      %v856 = vsel %vm841, %v853, %v855
      %857 = vrot.lane.b32.xlu0 %v842, 64
      %v858 = vpop.permute.xlu0 %857
      %859 = vrot.lane.b32.xlu0 %v844, 64
      %v860 = vpop.permute.xlu0 %859
      %861 = vrot.lane.b32.xlu0 %v846, 64
      %v862 = vpop.permute.xlu0 %861
      %863 = vrot.lane.b32.xlu0 %v848, 64
      %v864 = vpop.permute.xlu0 %863
      %865 = vrot.lane.b32.xlu0 %v850, 64
      %v866 = vpop.permute.xlu0 %865
      %867 = vrot.lane.b32.xlu0 %v852, 64
      %v868 = vpop.permute.xlu0 %867
      %869 = vrot.lane.b32.xlu0 %v854, 64
      %v870 = vpop.permute.xlu0 %869
      %871 = vrot.lane.b32.xlu0 %v856, 64
      %v872 = vpop.permute.xlu0 %871
      %873 = vrot.lane.b32.xlu0 %v855, 64
      %v874 = vpop.permute.xlu0 %873
      %v884 = vadd.f32 %v832, %v858
      %v885 = vadd.f32 %v833, %v860
      %v886 = vadd.f32 %v834, %v862
      %v887 = vadd.f32 %v835, %v864
      %v888 = vadd.f32 %v836, %v866
      %v889 = vadd.f32 %v837, %v868
      %v890 = vadd.f32 %v838, %v870
      %v891 = vadd.f32 %v839, %v872
      %v892 = vadd.f32 %v840, %v874
      %v893 = vld [vmem:[%s2 + $0x4] sm:$0xf]
      %v894 = vld [vmem:[%s349 + $0x4] sm:$0xf]
      %v897 = vunpack.c.l.s4 1983009808
      %v898 = vunpack.c.0.s8 %v897
      %v899 = vlaneseq
      %v900 = vshrl.u32 %v899, 7
      %v901 = vsub.s32 %v898, %v900
      %v902 = vrot.slane %v894, %v901
      %v903 = vcombine.high %v902, %v902
      %v905 = vsel %vm401, %v902, 0
      %v908 = vsel %vm401, %v903, 0
      %910 = vmatprep.subr.bf16.mxu0 0
      %911 = vmatpush1.bf16.msra.mxu0 0
      %912 = vmatprep.subr.bf16.mxu0 0
      %913 = vmatpush1.bf16.msra.mxu0 0
      %914 = vmatprep.subr.bf16.mxu0 0
      %915 = vmatpush1.bf16.msra.mxu0 0
      %916 = vmatprep.subr.bf16.mxu0 0
      %917 = vmatpush1.bf16.msra.mxu0 0
      %918 = vmatprep.subr.bf16.mxu0 0
      %919 = vmatpush1.bf16.msra.mxu0 0
      %920 = vmatprep.subr.bf16.mxu0 0
      %921 = vmatpush1.bf16.msra.mxu0 0
      %922 = vmatprep.subr.bf16.mxu0 0
      %923 = vmatpush1.bf16.msra.mxu0 0
      %924 = vmatprep.subr.bf16.mxu0 %v908
      %925 = vmatpush1.bf16.msra.mxu0 %v905
      %926 = vmatprep.subr.bf16.mxu0 0
      %927 = vmatpush2.bf16.msra.mxu0 0
      %928 = vmatprep.subr.bf16.mxu0 0
      %929 = vmatpush2.bf16.msra.mxu0 0
      %930 = vmatprep.subr.bf16.mxu0 0
      %931 = vmatpush2.bf16.msra.mxu0 0
      %932 = vmatprep.subr.bf16.mxu0 0
      %933 = vmatpush2.bf16.msra.mxu0 0
      %934 = vmatprep.subr.bf16.mxu0 0
      %935 = vmatpush2.bf16.msra.mxu0 0
      %936 = vmatprep.subr.bf16.mxu0 0
      %937 = vmatpush2.bf16.msra.mxu0 0
      %938 = vmatprep.subr.bf16.mxu0 0
      %939 = vmatpush2.bf16.msra.mxu0 0
      %940 = vmatprep.subr.bf16.mxu0 0
      %941 = vmatpush2.bf16.msra.mxu0 0
      %942 = vmatprep.mubr.bf16.mxu0 0
      %943 = vmatmul.mubr.bf16.gmra.mxu0 %v387
      %v944 = vpop.f32.mrf.mxu0
      %v945 = vpop.f32.mrf.mxu0
      %v946 = vpop.f32.mrf.mxu0
      %v947 = vadd.f32 0.0, %v946
      %v948 = vpop.f32.mrf.mxu0
      %v949 = vadd.f32 0.0, %v948
      %950 = vmatprep.mubr.bf16.mxu0 0
      %951 = vmatmul.mubr.bf16.gmra.mxu0 %v390
      %v952 = vpop.f32.mrf.mxu0
      %v953 = vadd.f32 0.0, %v952
      %v954 = vpop.f32.mrf.mxu0
      %v955 = vadd.f32 0.0, %v954
      %v956 = vpop.f32.mrf.mxu0
      %v957 = vadd.f32 0.0, %v956
      %v958 = vpop.f32.mrf.mxu0
      %v959 = vadd.f32 0.0, %v958
      %960 = vmatprep.mubr.bf16.mxu0 0
      %961 = vmatmul.mubr.bf16.gmra.mxu0 %v393
      %v962 = vpop.f32.mrf.mxu0
      %v963 = vadd.f32 0.0, %v962
      %v964 = vpop.f32.mrf.mxu0
      %v965 = vadd.f32 0.0, %v964
      %v966 = vpop.f32.mrf.mxu0
      %v967 = vadd.f32 0.0, %v966
      %v968 = vpop.f32.mrf.mxu0
      %v969 = vadd.f32 0.0, %v968
      %970 = vmatprep.mubr.bf16.mxu0 0
      %971 = vmatmul.mubr.bf16.gmra.mxu0 %v396
      %v972 = vpop.f32.mrf.mxu0
      %v973 = vadd.f32 0.0, %v972
      %v974 = vpop.f32.mrf.mxu0
      %v975 = vadd.f32 0.0, %v974
      %v976 = vpop.f32.mrf.mxu0
      %v977 = vadd.f32 0.0, %v976
      %v978 = vpop.f32.mrf.mxu0
      %v979 = vadd.f32 0.0, %v978
      %980 = vmatprep.mubr.bf16.mxu0 0
      %981 = vmatmul.mubr.bf16.gmra.mxu0 %v399
      %v982 = vpop.f32.mrf.mxu0
      %v983 = vadd.f32 0.0, %v982
      %v984 = vpop.f32.mrf.mxu0
      %v985 = vadd.f32 0.0, %v984
      %v986 = vpop.f32.mrf.mxu0
      %v987 = vadd.f32 0.0, %v986
      %v988 = vpop.f32.mrf.mxu0
      %v989 = vadd.f32 0.0, %v988
      %990 = vdwg.mxu0
      %v993 = vunpack.c.l.s4 1983009808
      %v994 = vunpack.c.0.s8 %v993
      %v995 = vlaneseq
      %v996 = vshrl.u32 %v995, 7
      %v997 = vsub.s32 %v994, %v996
      %v998 = vrot.slane %v893, %v997
      %v999 = vcombine.high %v998, %v998
      %v1001 = vsel %vm401, %v998, 0
      %v1004 = vsel %vm401, %v999, 0
      %1006 = vmatprep.subr.bf16.mxu0 0
      %1007 = vmatpush1.bf16.msra.mxu0 0
      %1008 = vmatprep.subr.bf16.mxu0 0
      %1009 = vmatpush1.bf16.msra.mxu0 0
      %1010 = vmatprep.subr.bf16.mxu0 0
      %1011 = vmatpush1.bf16.msra.mxu0 0
      %1012 = vmatprep.subr.bf16.mxu0 0
      %1013 = vmatpush1.bf16.msra.mxu0 0
      %1014 = vmatprep.subr.bf16.mxu0 0
      %1015 = vmatpush1.bf16.msra.mxu0 0
      %1016 = vmatprep.subr.bf16.mxu0 0
      %1017 = vmatpush1.bf16.msra.mxu0 0
      %1018 = vmatprep.subr.bf16.mxu0 0
      %1019 = vmatpush1.bf16.msra.mxu0 0
      %1020 = vmatprep.subr.bf16.mxu0 %v1004
      %1021 = vmatpush1.bf16.msra.mxu0 %v1001
      %1022 = vmatprep.subr.bf16.mxu0 0
      %1023 = vmatpush2.bf16.msra.mxu0 0
      %1024 = vmatprep.subr.bf16.mxu0 0
      %1025 = vmatpush2.bf16.msra.mxu0 0
      %1026 = vmatprep.subr.bf16.mxu0 0
      %1027 = vmatpush2.bf16.msra.mxu0 0
      %1028 = vmatprep.subr.bf16.mxu0 0
      %1029 = vmatpush2.bf16.msra.mxu0 0
      %1030 = vmatprep.subr.bf16.mxu0 0
      %1031 = vmatpush2.bf16.msra.mxu0 0
      %1032 = vmatprep.subr.bf16.mxu0 0
      %1033 = vmatpush2.bf16.msra.mxu0 0
      %1034 = vmatprep.subr.bf16.mxu0 0
      %1035 = vmatpush2.bf16.msra.mxu0 0
      %1036 = vmatprep.subr.bf16.mxu0 0
      %1037 = vmatpush2.bf16.msra.mxu0 0
      %1038 = vmatprep.mubr.bf16.mxu0 0
      %1039 = vmatmul.mubr.bf16.gmra.mxu0 %v509
      %v1040 = vpop.f32.mrf.mxu0
      %v1041 = vpop.f32.mrf.mxu0
      %v1042 = vpop.f32.mrf.mxu0
      %v1043 = vadd.f32 %v947, %v1042
      %v1044 = vpop.f32.mrf.mxu0
      %v1045 = vadd.f32 %v949, %v1044
      %1046 = vmatprep.mubr.bf16.mxu0 0
      %1047 = vmatmul.mubr.bf16.gmra.mxu0 %v512
      %v1048 = vpop.f32.mrf.mxu0
      %v1049 = vadd.f32 %v953, %v1048
      %v1050 = vpop.f32.mrf.mxu0
      %v1051 = vadd.f32 %v955, %v1050
      %v1052 = vpop.f32.mrf.mxu0
      %v1053 = vadd.f32 %v957, %v1052
      %v1054 = vpop.f32.mrf.mxu0
      %v1055 = vadd.f32 %v959, %v1054
      %1056 = vmatprep.mubr.bf16.mxu0 0
      %1057 = vmatmul.mubr.bf16.gmra.mxu0 %v387
      %v1058 = vpop.f32.mrf.mxu0
      %v1059 = vadd.f32 %v963, %v1058
      %v1060 = vpop.f32.mrf.mxu0
      %v1061 = vadd.f32 %v965, %v1060
      %v1062 = vpop.f32.mrf.mxu0
      %v1063 = vadd.f32 %v967, %v1062
      %v1064 = vpop.f32.mrf.mxu0
      %v1065 = vadd.f32 %v969, %v1064
      %1066 = vmatprep.mubr.bf16.mxu0 0
      %1067 = vmatmul.mubr.bf16.gmra.mxu0 %v390
      %v1068 = vpop.f32.mrf.mxu0
      %v1069 = vadd.f32 %v973, %v1068
      %v1070 = vpop.f32.mrf.mxu0
      %v1071 = vadd.f32 %v975, %v1070
      %v1072 = vpop.f32.mrf.mxu0
      %v1073 = vadd.f32 %v977, %v1072
      %v1074 = vpop.f32.mrf.mxu0
      %v1075 = vadd.f32 %v979, %v1074
      %1076 = vmatprep.mubr.bf16.mxu0 0
      %1077 = vmatmul.mubr.bf16.gmra.mxu0 %v393
      %v1078 = vpop.f32.mrf.mxu0
      %v1079 = vadd.f32 %v983, %v1078
      %v1080 = vpop.f32.mrf.mxu0
      %v1081 = vadd.f32 %v985, %v1080
      %v1082 = vpop.f32.mrf.mxu0
      %v1083 = vadd.f32 %v987, %v1082
      %v1084 = vpop.f32.mrf.mxu0
      %v1085 = vadd.f32 %v989, %v1084
      %1086 = vdwg.mxu0
      %v1087 = vld [vmem:[%s601 + $0x4] sm:$0xf]
      %v1090 = vunpack.c.l.s4 1983009808
      %v1091 = vunpack.c.0.s8 %v1090
      %v1092 = vlaneseq
      %v1093 = vshrl.u32 %v1092, 7
      %v1094 = vsub.s32 %v1091, %v1093
      %v1095 = vrot.slane %v1087, %v1094
      %v1096 = vcombine.high %v1095, %v1095
      %v1098 = vsel %vm401, %v1095, 0
      %v1101 = vsel %vm401, %v1096, 0
      %1103 = vmatprep.subr.bf16.mxu0 0
      %1104 = vmatpush1.bf16.msra.mxu0 0
      %1105 = vmatprep.subr.bf16.mxu0 0
      %1106 = vmatpush1.bf16.msra.mxu0 0
      %1107 = vmatprep.subr.bf16.mxu0 0
      %1108 = vmatpush1.bf16.msra.mxu0 0
      %1109 = vmatprep.subr.bf16.mxu0 0
      %1110 = vmatpush1.bf16.msra.mxu0 0
      %1111 = vmatprep.subr.bf16.mxu0 0
      %1112 = vmatpush1.bf16.msra.mxu0 0
      %1113 = vmatprep.subr.bf16.mxu0 0
      %1114 = vmatpush1.bf16.msra.mxu0 0
      %1115 = vmatprep.subr.bf16.mxu0 0
      %1116 = vmatpush1.bf16.msra.mxu0 0
      %1117 = vmatprep.subr.bf16.mxu0 %v1101
      %1118 = vmatpush1.bf16.msra.mxu0 %v1098
      %1119 = vmatprep.subr.bf16.mxu0 0
      %1120 = vmatpush2.bf16.msra.mxu0 0
      %1121 = vmatprep.subr.bf16.mxu0 0
      %1122 = vmatpush2.bf16.msra.mxu0 0
      %1123 = vmatprep.subr.bf16.mxu0 0
      %1124 = vmatpush2.bf16.msra.mxu0 0
      %1125 = vmatprep.subr.bf16.mxu0 0
      %1126 = vmatpush2.bf16.msra.mxu0 0
      %1127 = vmatprep.subr.bf16.mxu0 0
      %1128 = vmatpush2.bf16.msra.mxu0 0
      %1129 = vmatprep.subr.bf16.mxu0 0
      %1130 = vmatpush2.bf16.msra.mxu0 0
      %1131 = vmatprep.subr.bf16.mxu0 0
      %1132 = vmatpush2.bf16.msra.mxu0 0
      %1133 = vmatprep.subr.bf16.mxu0 0
      %1134 = vmatpush2.bf16.msra.mxu0 0
      %1135 = vmatprep.mubr.bf16.mxu0 0
      %1136 = vmatmul.mubr.bf16.gmra.mxu0 %v393
      %v1137 = vpop.f32.mrf.mxu0
      %v1138 = vpop.f32.mrf.mxu0
      %v1139 = vpop.f32.mrf.mxu0
      %v1140 = vadd.f32 0.0, %v1139
      %v1141 = vpop.f32.mrf.mxu0
      %v1142 = vadd.f32 0.0, %v1141
      %1143 = vmatprep.mubr.bf16.mxu0 0
      %1144 = vmatmul.mubr.bf16.gmra.mxu0 %v396
      %v1145 = vpop.f32.mrf.mxu0
      %v1146 = vadd.f32 0.0, %v1145
      %v1147 = vpop.f32.mrf.mxu0
      %v1148 = vadd.f32 0.0, %v1147
      %v1149 = vpop.f32.mrf.mxu0
      %v1150 = vadd.f32 0.0, %v1149
      %v1151 = vpop.f32.mrf.mxu0
      %v1152 = vadd.f32 0.0, %v1151
      %1153 = vmatprep.mubr.bf16.mxu0 0
      %1154 = vmatmul.mubr.bf16.gmra.mxu0 %v399
      %v1155 = vpop.f32.mrf.mxu0
      %v1156 = vadd.f32 0.0, %v1155
      %v1157 = vpop.f32.mrf.mxu0
      %v1158 = vadd.f32 0.0, %v1157
      %v1159 = vpop.f32.mrf.mxu0
      %v1160 = vadd.f32 0.0, %v1159
      %v1161 = vpop.f32.mrf.mxu0
      %v1162 = vadd.f32 0.0, %v1161
      %1163 = vmatprep.mubr.bf16.mxu0 0
      %1164 = vmatmul.mubr.bf16.gmra.mxu0 %v623
      %v1165 = vpop.f32.mrf.mxu0
      %v1166 = vadd.f32 0.0, %v1165
      %v1167 = vpop.f32.mrf.mxu0
      %v1168 = vadd.f32 0.0, %v1167
      %v1169 = vpop.f32.mrf.mxu0
      %v1170 = vadd.f32 0.0, %v1169
      %v1171 = vpop.f32.mrf.mxu0
      %v1172 = vadd.f32 0.0, %v1171
      %1173 = vmatprep.mubr.bf16.mxu0 0
      %1174 = vmatmul.mubr.bf16.gmra.mxu0 %v626
      %v1175 = vpop.f32.mrf.mxu0
      %v1176 = vadd.f32 0.0, %v1175
      %v1177 = vpop.f32.mrf.mxu0
      %v1178 = vadd.f32 0.0, %v1177
      %v1179 = vpop.f32.mrf.mxu0
      %v1180 = vadd.f32 0.0, %v1179
      %v1181 = vpop.f32.mrf.mxu0
      %v1182 = vadd.f32 0.0, %v1181
      %1183 = vdwg.mxu0
      %v1184 = vadd.f32 %v1043, %v1140
      %v1185 = vadd.f32 %v1045, %v1142
      %v1186 = vadd.f32 %v1049, %v1146
      %v1187 = vadd.f32 %v1051, %v1148
      %v1188 = vadd.f32 %v1053, %v1150
      %v1189 = vadd.f32 %v1055, %v1152
      %v1190 = vadd.f32 %v1059, %v1156
      %v1191 = vadd.f32 %v1061, %v1158
      %v1192 = vadd.f32 %v1063, %v1160
      %v1193 = vadd.f32 %v1065, %v1162
      %v1194 = vadd.f32 %v1069, %v1166
      %v1195 = vadd.f32 %v1071, %v1168
      %v1196 = vadd.f32 %v1073, %v1170
      %v1197 = vadd.f32 %v1075, %v1172
      %v1198 = vadd.f32 %v1079, %v1176
      %v1199 = vadd.f32 %v1081, %v1178
      %v1200 = vadd.f32 %v1083, %v1180
      %v1201 = vadd.f32 %v1085, %v1182
      %vm1211 = vcmask 1043456
      %v1212 = vrot.slane %v1184, 4
      %v1213 = vrot.slane %v1186, 4
      %v1214 = vsel %vm1211, %v1212, %v1213
      %v1215 = vrot.slane %v1188, 4
      %v1216 = vsel %vm1211, %v1213, %v1215
      %v1217 = vrot.slane %v1190, 4
      %v1218 = vsel %vm1211, %v1215, %v1217
      %v1219 = vrot.slane %v1192, 4
      %v1220 = vsel %vm1211, %v1217, %v1219
      %v1221 = vrot.slane %v1194, 4
      %v1222 = vsel %vm1211, %v1219, %v1221
      %v1223 = vrot.slane %v1196, 4
      %v1224 = vsel %vm1211, %v1221, %v1223
      %v1225 = vrot.slane %v1198, 4
      %v1226 = vsel %vm1211, %v1223, %v1225
      %v1227 = vrot.slane %v1200, 4
      %v1228 = vsel %vm1211, %v1225, %v1227
      %v1238 = vadd.f32 %v884, %v1212
      %v1239 = vadd.f32 %v885, %v1214
      %v1240 = vadd.f32 %v886, %v1216
      %v1241 = vadd.f32 %v887, %v1218
      %v1242 = vadd.f32 %v888, %v1220
      %v1243 = vadd.f32 %v889, %v1222
      %v1244 = vadd.f32 %v890, %v1224
      %v1245 = vadd.f32 %v891, %v1226
      %v1246 = vadd.f32 %v892, %v1228
      %vm1247 = vcmask 1042432
      %v1248 = vrot.slane %v1184, 5
      %v1249 = vrot.slane %v1186, 5
      %v1250 = vsel %vm1247, %v1248, %v1249
      %v1251 = vrot.slane %v1188, 5
      %v1252 = vsel %vm1247, %v1249, %v1251
      %v1253 = vrot.slane %v1190, 5
      %v1254 = vsel %vm1247, %v1251, %v1253
      %v1255 = vrot.slane %v1192, 5
      %v1256 = vsel %vm1247, %v1253, %v1255
      %v1257 = vrot.slane %v1194, 5
      %v1258 = vsel %vm1247, %v1255, %v1257
      %v1259 = vrot.slane %v1196, 5
      %v1260 = vsel %vm1247, %v1257, %v1259
      %v1261 = vrot.slane %v1198, 5
      %v1262 = vsel %vm1247, %v1259, %v1261
      %v1263 = vrot.slane %v1200, 5
      %v1264 = vsel %vm1247, %v1261, %v1263
      %1265 = vrot.lane.b32.xlu0 %v1248, 64
      %v1266 = vpop.permute.xlu0 %1265
      %1267 = vrot.lane.b32.xlu0 %v1250, 64
      %v1268 = vpop.permute.xlu0 %1267
      %1269 = vrot.lane.b32.xlu0 %v1252, 64
      %v1270 = vpop.permute.xlu0 %1269
      %1271 = vrot.lane.b32.xlu0 %v1254, 64
      %v1272 = vpop.permute.xlu0 %1271
      %1273 = vrot.lane.b32.xlu0 %v1256, 64
      %v1274 = vpop.permute.xlu0 %1273
      %1275 = vrot.lane.b32.xlu0 %v1258, 64
      %v1276 = vpop.permute.xlu0 %1275
      %1277 = vrot.lane.b32.xlu0 %v1260, 64
      %v1278 = vpop.permute.xlu0 %1277
      %1279 = vrot.lane.b32.xlu0 %v1262, 64
      %v1280 = vpop.permute.xlu0 %1279
      %1281 = vrot.lane.b32.xlu0 %v1264, 64
      %v1282 = vpop.permute.xlu0 %1281
      %v1292 = vadd.f32 %v1238, %v1266
      %v1293 = vadd.f32 %v1239, %v1268
      %v1294 = vadd.f32 %v1240, %v1270
      %v1295 = vadd.f32 %v1241, %v1272
      %v1296 = vadd.f32 %v1242, %v1274
      %v1297 = vadd.f32 %v1243, %v1276
      %v1298 = vadd.f32 %v1244, %v1278
      %v1299 = vadd.f32 %v1245, %v1280
      %v1300 = vadd.f32 %v1246, %v1282
      %v1310 = vrot.slane %v1185, 6
      %v1311 = vrot.slane %v1187, 6
      %v1312 = vsel %vm401, %v1310, %v1311
      %v1313 = vrot.slane %v1189, 6
      %v1314 = vsel %vm401, %v1311, %v1313
      %v1315 = vrot.slane %v1191, 6
      %v1316 = vsel %vm401, %v1313, %v1315
      %v1317 = vrot.slane %v1193, 6
      %v1318 = vsel %vm401, %v1315, %v1317
      %v1319 = vrot.slane %v1195, 6
      %v1320 = vsel %vm401, %v1317, %v1319
      %v1321 = vrot.slane %v1197, 6
      %v1322 = vsel %vm401, %v1319, %v1321
      %v1323 = vrot.slane %v1199, 6
      %v1324 = vsel %vm401, %v1321, %v1323
      %v1325 = vrot.slane %v1201, 6
      %v1326 = vsel %vm401, %v1323, %v1325
      %v1336 = vadd.f32 %v1292, %v1310
      %v1337 = vadd.f32 %v1293, %v1312
      %v1338 = vadd.f32 %v1294, %v1314
      %v1339 = vadd.f32 %v1295, %v1316
      %v1340 = vadd.f32 %v1296, %v1318
      %v1341 = vadd.f32 %v1297, %v1320
      %v1342 = vadd.f32 %v1298, %v1322
      %v1343 = vadd.f32 %v1299, %v1324
      %v1344 = vadd.f32 %v1300, %v1326
      %v1346 = vlaneseq
      %v1347 = vshrl.u32 %v1346, 7
      %v1348 = vsub.s32 0, %v1347
      %v1349 = vrot.slane %v329, %v1348
      %v1351 = vadd.f32 %v1336, %v1349
      %v1352 = vadd.f32 %v1337, %v1349
      %v1353 = vadd.f32 %v1338, %v1349
      %v1354 = vadd.f32 %v1339, %v1349
      %v1355 = vadd.f32 %v1340, %v1349
      %v1356 = vadd.f32 %v1341, %v1349
      %v1357 = vadd.f32 %v1342, %v1349
      %v1358 = vadd.f32 %v1343, %v1349
      %v1359 = vadd.f32 %v1344, %v1349
      %v1360 = vmul.f32 %v1351, 0.01
      %v1361 = vmul.f32 %v1352, 0.01
      %v1362 = vmul.f32 %v1353, 0.01
      %v1363 = vmul.f32 %v1354, 0.01
      %v1364 = vmul.f32 %v1355, 0.01
      %v1365 = vmul.f32 %v1356, 0.01
      %v1366 = vmul.f32 %v1357, 0.01
      %v1367 = vmul.f32 %v1358, 0.01
      %v1368 = vmul.f32 %v1359, 0.01
      %v1369 = vmax.f32 %v1351, %v1360
      %v1370 = vmax.f32 %v1352, %v1361
      %v1371 = vmax.f32 %v1353, %v1362
      %v1372 = vmax.f32 %v1354, %v1363
      %v1373 = vmax.f32 %v1355, %v1364
      %v1374 = vmax.f32 %v1356, %v1365
      %v1375 = vmax.f32 %v1357, %v1366
      %v1376 = vmax.f32 %v1358, %v1367
      %v1377 = vmax.f32 %v1359, %v1368
      %v1378 = vld [vmem:[%s1] sm:$0xff]
      %v1379 = vld [vmem:[%s1 + $0x8] sm:$0xff]
      %v1380 = vld [vmem:[%s1 + $0x10] sm:$0xff]
      %v1381 = vld [vmem:[%s1 + $0x18] sm:$0xff]
      %v1382 = vld [vmem:[%s1 + $0x20] sm:$0xff]
      %v1383 = vld [vmem:[%s1 + $0x28] sm:$0xff]
      %v1384 = vld [vmem:[%s1 + $0x30] sm:$0xff]
      %v1385 = vld [vmem:[%s1 + $0x38] sm:$0xff]
      %1387 = vset.pattern.permute.xlu0 0
      %1388 = vperm.xlu0 %1387, %v1378
      %v1389 = vpop.permute.xlu0 %1388
      %1391 = vset.pattern.permute.xlu0 0
      %1392 = vperm.xlu0 %1391, %v1379
      %v1393 = vpop.permute.xlu0 %1392
      %1395 = vset.pattern.permute.xlu0 0
      %1396 = vperm.xlu0 %1395, %v1380
      %v1397 = vpop.permute.xlu0 %1396
      %1399 = vset.pattern.permute.xlu0 0
      %1400 = vperm.xlu0 %1399, %v1381
      %v1401 = vpop.permute.xlu0 %1400
      %1403 = vset.pattern.permute.xlu0 0
      %1404 = vperm.xlu0 %1403, %v1382
      %v1405 = vpop.permute.xlu0 %1404
      %1407 = vset.pattern.permute.xlu0 0
      %1408 = vperm.xlu0 %1407, %v1383
      %v1409 = vpop.permute.xlu0 %1408
      %1411 = vset.pattern.permute.xlu0 0
      %1412 = vperm.xlu0 %1411, %v1384
      %v1413 = vpop.permute.xlu0 %1412
      %1415 = vset.pattern.permute.xlu0 0
      %1416 = vperm.xlu0 %1415, %v1385
      %v1417 = vpop.permute.xlu0 %1416
      %v1418 = vrot.slane %v1389, 3
      %v1419 = vrot.slane %v1393, 3
      %v1420 = vsel %vm841, %v1418, %v1419
      %v1421 = vrot.slane %v1397, 3
      %v1422 = vsel %vm841, %v1419, %v1421
      %v1423 = vrot.slane %v1401, 3
      %v1424 = vsel %vm841, %v1421, %v1423
      %v1425 = vrot.slane %v1405, 3
      %v1426 = vsel %vm841, %v1423, %v1425
      %v1427 = vrot.slane %v1409, 3
      %v1428 = vsel %vm841, %v1425, %v1427
      %v1429 = vrot.slane %v1413, 3
      %v1430 = vsel %vm841, %v1427, %v1429
      %v1431 = vrot.slane %v1417, 3
      %v1432 = vsel %vm841, %v1429, %v1431
      %v1442 = vmul.f32 %v1369, %v1418
      %v1443 = vmul.f32 %v1370, %v1420
      %v1444 = vmul.f32 %v1371, %v1422
      %v1445 = vmul.f32 %v1372, %v1424
      %v1446 = vmul.f32 %v1373, %v1426
      %v1447 = vmul.f32 %v1374, %v1428
      %v1448 = vmul.f32 %v1375, %v1430
      %v1449 = vmul.f32 %v1376, %v1432
      %v1450 = vmul.f32 %v1377, %v1431
      %v1451 = vpack.c.bf16 %v1443, %v1442
      %v1452 = vpack.c.bf16 %v1445, %v1444
      %v1453 = vpack.c.bf16 %v1447, %v1446
      %v1454 = vpack.c.bf16 %v1449, %v1448
      %v1455 = vpack.c.bf16 %v1450, %v1450
      %v1461 = vunpack.c.l.b16 %v1451
      %v1462 = vunpack.c.h.b16 %v1451
      %v1463 = vunpack.c.l.b16 %v1452
      %v1464 = vunpack.c.h.b16 %v1452
      %v1465 = vunpack.c.l.b16 %v1453
      %v1466 = vunpack.c.h.b16 %v1453
      %v1467 = vunpack.c.l.b16 %v1454
      %v1468 = vunpack.c.h.b16 %v1454
      %v1469 = vunpack.c.l.b16 %v1455
      %v1470 = vpack.c.b16 %v1461, %v1461
      %v1471 = vpack.c.b16 %v1462, %v1462
      %v1472 = vpack.c.b16 %v1463, %v1463
      %v1473 = vpack.c.b16 %v1464, %v1464
      %v1474 = vpack.c.b16 %v1465, %v1465
      %v1475 = vpack.c.b16 %v1466, %v1466
      %v1476 = vpack.c.b16 %v1467, %v1467
      %v1477 = vpack.c.b16 %v1468, %v1468
      %v1478 = vpack.c.b16 %v1469, %v1469
      %vm1479 = vsmask.f32 1280
      %vm1480 = vsmask.f32 5392
      %vm1481 = vmor %vm1479, %vm1480
      %v1483 = vshrl.u32 %v1470, 16
      %v1485 = vrot.slane %v1483, 6
      %v1486 = vshll.u32 %v1470, 16
      %v1488 = vrot.slane %v1486, 7
      %v1489 = vor.u32 %v1485, %v1488
      %v1490 = vrot.slane %v1489, 4
      %v1492 = vshrl.u32 %v1471, 16
      %v1494 = vrot.slane %v1492, 6
      %v1495 = vshll.u32 %v1471, 16
      %v1497 = vrot.slane %v1495, 7
      %v1498 = vor.u32 %v1494, %v1497
      %v1499 = vsel %vm1481, %v1490, %v1498
      %v1500 = vrot.slane %v1498, 4
      %v1502 = vshrl.u32 %v1472, 16
      %v1504 = vrot.slane %v1502, 6
      %v1505 = vshll.u32 %v1472, 16
      %v1507 = vrot.slane %v1505, 7
      %v1508 = vor.u32 %v1504, %v1507
      %v1509 = vsel %vm1481, %v1500, %v1508
      %v1510 = vrot.slane %v1508, 4
      %v1512 = vshrl.u32 %v1473, 16
      %v1514 = vrot.slane %v1512, 6
      %v1515 = vshll.u32 %v1473, 16
      %v1517 = vrot.slane %v1515, 7
      %v1518 = vor.u32 %v1514, %v1517
      %v1519 = vsel %vm1481, %v1510, %v1518
      %v1520 = vrot.slane %v1518, 4
      %v1522 = vshrl.u32 %v1474, 16
      %v1524 = vrot.slane %v1522, 6
      %v1525 = vshll.u32 %v1474, 16
      %v1527 = vrot.slane %v1525, 7
      %v1528 = vor.u32 %v1524, %v1527
      %v1529 = vsel %vm1481, %v1520, %v1528
      %v1530 = vrot.slane %v1528, 4
      %v1532 = vshrl.u32 %v1475, 16
      %v1534 = vrot.slane %v1532, 6
      %v1535 = vshll.u32 %v1475, 16
      %v1537 = vrot.slane %v1535, 7
      %v1538 = vor.u32 %v1534, %v1537
      %v1539 = vsel %vm1481, %v1530, %v1538
      %v1540 = vrot.slane %v1538, 4
      %v1542 = vshrl.u32 %v1476, 16
      %v1544 = vrot.slane %v1542, 6
      %v1545 = vshll.u32 %v1476, 16
      %v1547 = vrot.slane %v1545, 7
      %v1548 = vor.u32 %v1544, %v1547
      %v1549 = vsel %vm1481, %v1540, %v1548
      %v1550 = vrot.slane %v1548, 4
      %v1552 = vshrl.u32 %v1477, 16
      %v1554 = vrot.slane %v1552, 6
      %v1555 = vshll.u32 %v1477, 16
      %v1557 = vrot.slane %v1555, 7
      %v1558 = vor.u32 %v1554, %v1557
      %v1559 = vsel %vm1481, %v1550, %v1558
      %v1560 = vrot.slane %v1558, 4
      %v1562 = vshrl.u32 %v1478, 16
      %v1564 = vrot.slane %v1562, 6
      %v1565 = vshll.u32 %v1478, 16
      %v1567 = vrot.slane %v1565, 7
      %v1568 = vor.u32 %v1564, %v1567
      %v1569 = vsel %vm1481, %v1560, %v1568
      %1578 = vst.msk [vmem:[#allocation2 + $0x14] sm:$0xf] %vm307, %v1499
      %1579 = vst.msk [vmem:[#allocation2 + $0x18] sm:$0xf] %vm307, %v1509
      %1580 = vst.msk [vmem:[#allocation2 + $0x1c] sm:$0xf] %vm307, %v1519
      %1581 = vst.msk [vmem:[#allocation2 + $0x20] sm:$0xf] %vm307, %v1529
      %1582 = vst.msk [vmem:[#allocation2 + $0x24] sm:$0xf] %vm307, %v1539
      %1583 = vst.msk [vmem:[#allocation2 + $0x28] sm:$0xf] %vm307, %v1549
      %1584 = vst.msk [vmem:[#allocation2 + $0x2c] sm:$0xf] %vm307, %v1559
      %1585 = vst.msk [vmem:[#allocation2 + $0x30] sm:$0xf] %vm307, %v1569
      %v1586 = vld [vmem:[%s300 + $0x20] sm:$0xf]
      %v1587 = vld [vmem:[%s300 + $0x24] sm:$0xf]
      %v1588 = vld [vmem:[%s300 + $0x28] sm:$0xf]
      %v1589 = vld [vmem:[%s300 + $0x2c] sm:$0xf]
      %v1590 = vld [vmem:[%s300 + $0x30] sm:$0xf]
      %v1591 = vld [vmem:[%s300 + $0x34] sm:$0xf]
      %v1592 = vld [vmem:[%s300 + $0x38] sm:$0xf]
      %v1593 = vld [vmem:[%s300 + $0x3c] sm:$0xf]
      %v1594 = vld [vmem:[%s300 + $0x40] sm:$0xf]
      %v1595 = vld [vmem:[%s300 + $0x44] sm:$0xf]
      %v1596 = vld [vmem:[%s300 + $0x48] sm:$0xf]
      %v1597 = vld [vmem:[%s300 + $0x4c] sm:$0xf]
      %v1598 = vld [vmem:[%s300 + $0x50] sm:$0xf]
      %v1599 = vld [vmem:[%s300 + $0x54] sm:$0xf]
      %v1600 = vld [vmem:[%s300 + $0x58] sm:$0xf]
      %v1601 = vld [vmem:[%s300 + $0x5c] sm:$0xf]
      %v1602 = vld [vmem:[%s300 + $0x60] sm:$0xf]
      %v1603 = vld [vmem:[%s300 + $0x64] sm:$0xf]
      %v1604 = vld [vmem:[%s2] sm:$0xf]
      %v1605 = vld [vmem:[%s349] sm:$0xf]
      %v1616 = vunpack.c.l.b16 %v1590
      %v1617 = vunpack.c.l.b16 %v1591
      %v1618 = vunpack.c.l.b16 %v1592
      %v1619 = vunpack.c.l.b16 %v1593
      %v1620 = vunpack.c.l.b16 %v1594
      %v1621 = vunpack.c.l.b16 %v1595
      %v1622 = vunpack.c.l.b16 %v1596
      %v1623 = vunpack.c.l.b16 %v1597
      %v1624 = vunpack.c.l.b16 %v1598
      %v1625 = vunpack.c.l.b16 %v1599
      %v1626 = vpack.c.b16 %v1617, %v1616
      %v1627 = vpack.c.b16 %v1619, %v1618
      %v1628 = vpack.c.b16 %v1621, %v1620
      %v1629 = vpack.c.b16 %v1623, %v1622
      %v1630 = vpack.c.b16 %v1625, %v1624
      %v1633 = vunpack.c.l.s4 1983009808
      %v1634 = vunpack.c.0.s8 %v1633
      %v1635 = vlaneseq
      %v1636 = vshrl.u32 %v1635, 7
      %v1637 = vsub.s32 %v1634, %v1636
      %v1638 = vrot.slane %v1605, %v1637
      %v1639 = vcombine.high %v1638, %v1638
      %v1641 = vsel %vm385, %v1626, 0
      %v1644 = vsel %vm385, %v1627, 0
      %v1647 = vsel %vm385, %v1628, 0
      %v1650 = vsel %vm385, %v1629, 0
      %v1653 = vsel %vm385, %v1630, 0
      %v1656 = vsel %vm401, %v1638, 0
      %v1659 = vsel %vm401, %v1639, 0
      %1661 = vmatprep.subr.bf16.mxu0 0
      %1662 = vmatpush1.bf16.msra.mxu0 0
      %1663 = vmatprep.subr.bf16.mxu0 0
      %1664 = vmatpush1.bf16.msra.mxu0 0
      %1665 = vmatprep.subr.bf16.mxu0 0
      %1666 = vmatpush1.bf16.msra.mxu0 0
      %1667 = vmatprep.subr.bf16.mxu0 0
      %1668 = vmatpush1.bf16.msra.mxu0 0
      %1669 = vmatprep.subr.bf16.mxu0 0
      %1670 = vmatpush1.bf16.msra.mxu0 0
      %1671 = vmatprep.subr.bf16.mxu0 0
      %1672 = vmatpush1.bf16.msra.mxu0 0
      %1673 = vmatprep.subr.bf16.mxu0 0
      %1674 = vmatpush1.bf16.msra.mxu0 0
      %1675 = vmatprep.subr.bf16.mxu0 %v1659
      %1676 = vmatpush1.bf16.msra.mxu0 %v1656
      %1677 = vmatprep.subr.bf16.mxu0 0
      %1678 = vmatpush2.bf16.msra.mxu0 0
      %1679 = vmatprep.subr.bf16.mxu0 0
      %1680 = vmatpush2.bf16.msra.mxu0 0
      %1681 = vmatprep.subr.bf16.mxu0 0
      %1682 = vmatpush2.bf16.msra.mxu0 0
      %1683 = vmatprep.subr.bf16.mxu0 0
      %1684 = vmatpush2.bf16.msra.mxu0 0
      %1685 = vmatprep.subr.bf16.mxu0 0
      %1686 = vmatpush2.bf16.msra.mxu0 0
      %1687 = vmatprep.subr.bf16.mxu0 0
      %1688 = vmatpush2.bf16.msra.mxu0 0
      %1689 = vmatprep.subr.bf16.mxu0 0
      %1690 = vmatpush2.bf16.msra.mxu0 0
      %1691 = vmatprep.subr.bf16.mxu0 0
      %1692 = vmatpush2.bf16.msra.mxu0 0
      %1693 = vmatprep.mubr.bf16.mxu0 0
      %1694 = vmatmul.mubr.bf16.gmra.mxu0 %v1641
      %v1695 = vpop.f32.mrf.mxu0
      %v1696 = vadd.f32 0.0, %v1695
      %v1697 = vpop.f32.mrf.mxu0
      %v1698 = vadd.f32 0.0, %v1697
      %v1699 = vpop.f32.mrf.mxu0
      %v1700 = vadd.f32 0.0, %v1699
      %v1701 = vpop.f32.mrf.mxu0
      %v1702 = vadd.f32 0.0, %v1701
      %1703 = vmatprep.mubr.bf16.mxu0 0
      %1704 = vmatmul.mubr.bf16.gmra.mxu0 %v1644
      %v1705 = vpop.f32.mrf.mxu0
      %v1706 = vadd.f32 0.0, %v1705
      %v1707 = vpop.f32.mrf.mxu0
      %v1708 = vadd.f32 0.0, %v1707
      %v1709 = vpop.f32.mrf.mxu0
      %v1710 = vadd.f32 0.0, %v1709
      %v1711 = vpop.f32.mrf.mxu0
      %v1712 = vadd.f32 0.0, %v1711
      %1713 = vmatprep.mubr.bf16.mxu0 0
      %1714 = vmatmul.mubr.bf16.gmra.mxu0 %v1647
      %v1715 = vpop.f32.mrf.mxu0
      %v1716 = vadd.f32 0.0, %v1715
      %v1717 = vpop.f32.mrf.mxu0
      %v1718 = vadd.f32 0.0, %v1717
      %v1719 = vpop.f32.mrf.mxu0
      %v1720 = vadd.f32 0.0, %v1719
      %v1721 = vpop.f32.mrf.mxu0
      %v1722 = vadd.f32 0.0, %v1721
      %1723 = vmatprep.mubr.bf16.mxu0 0
      %1724 = vmatmul.mubr.bf16.gmra.mxu0 %v1650
      %v1725 = vpop.f32.mrf.mxu0
      %v1726 = vadd.f32 0.0, %v1725
      %v1727 = vpop.f32.mrf.mxu0
      %v1728 = vadd.f32 0.0, %v1727
      %v1729 = vpop.f32.mrf.mxu0
      %v1730 = vadd.f32 0.0, %v1729
      %v1731 = vpop.f32.mrf.mxu0
      %v1732 = vadd.f32 0.0, %v1731
      %1733 = vmatprep.mubr.bf16.mxu0 0
      %1734 = vmatmul.mubr.bf16.gmra.mxu0 %v1653
      %v1735 = vpop.f32.mrf.mxu0
      %v1736 = vadd.f32 0.0, %v1735
      %v1737 = vpop.f32.mrf.mxu0
      %v1738 = vadd.f32 0.0, %v1737
      %v1739 = vpop.f32.mrf.mxu0
      %v1740 = vpop.f32.mrf.mxu0
      %1741 = vdwg.mxu0
      %v1746 = vunpack.c.l.b16 %v1586
      %v1747 = vunpack.c.l.b16 %v1587
      %v1748 = vunpack.c.l.b16 %v1588
      %v1749 = vunpack.c.l.b16 %v1589
      %v1750 = vpack.c.b16 %v1747, %v1746
      %v1751 = vpack.c.b16 %v1749, %v1748
      %v1754 = vunpack.c.l.s4 1983009808
      %v1755 = vunpack.c.0.s8 %v1754
      %v1756 = vlaneseq
      %v1757 = vshrl.u32 %v1756, 7
      %v1758 = vsub.s32 %v1755, %v1757
      %v1759 = vrot.slane %v1604, %v1758
      %v1760 = vcombine.high %v1759, %v1759
      %v1762 = vsel %vm385, %v1750, 0
      %v1765 = vsel %vm385, %v1751, 0
      %v1768 = vsel %vm401, %v1759, 0
      %v1771 = vsel %vm401, %v1760, 0
      %1773 = vmatprep.subr.bf16.mxu0 0
      %1774 = vmatpush1.bf16.msra.mxu0 0
      %1775 = vmatprep.subr.bf16.mxu0 0
      %1776 = vmatpush1.bf16.msra.mxu0 0
      %1777 = vmatprep.subr.bf16.mxu0 0
      %1778 = vmatpush1.bf16.msra.mxu0 0
      %1779 = vmatprep.subr.bf16.mxu0 0
      %1780 = vmatpush1.bf16.msra.mxu0 0
      %1781 = vmatprep.subr.bf16.mxu0 0
      %1782 = vmatpush1.bf16.msra.mxu0 0
      %1783 = vmatprep.subr.bf16.mxu0 0
      %1784 = vmatpush1.bf16.msra.mxu0 0
      %1785 = vmatprep.subr.bf16.mxu0 0
      %1786 = vmatpush1.bf16.msra.mxu0 0
      %1787 = vmatprep.subr.bf16.mxu0 %v1771
      %1788 = vmatpush1.bf16.msra.mxu0 %v1768
      %1789 = vmatprep.subr.bf16.mxu0 0
      %1790 = vmatpush2.bf16.msra.mxu0 0
      %1791 = vmatprep.subr.bf16.mxu0 0
      %1792 = vmatpush2.bf16.msra.mxu0 0
      %1793 = vmatprep.subr.bf16.mxu0 0
      %1794 = vmatpush2.bf16.msra.mxu0 0
      %1795 = vmatprep.subr.bf16.mxu0 0
      %1796 = vmatpush2.bf16.msra.mxu0 0
      %1797 = vmatprep.subr.bf16.mxu0 0
      %1798 = vmatpush2.bf16.msra.mxu0 0
      %1799 = vmatprep.subr.bf16.mxu0 0
      %1800 = vmatpush2.bf16.msra.mxu0 0
      %1801 = vmatprep.subr.bf16.mxu0 0
      %1802 = vmatpush2.bf16.msra.mxu0 0
      %1803 = vmatprep.subr.bf16.mxu0 0
      %1804 = vmatpush2.bf16.msra.mxu0 0
      %1805 = vmatprep.mubr.bf16.mxu0 0
      %1806 = vmatmul.mubr.bf16.gmra.mxu0 %v1762
      %v1807 = vpop.f32.mrf.mxu0
      %v1808 = vadd.f32 %v1696, %v1807
      %v1809 = vpop.f32.mrf.mxu0
      %v1810 = vadd.f32 %v1698, %v1809
      %v1811 = vpop.f32.mrf.mxu0
      %v1812 = vadd.f32 %v1700, %v1811
      %v1813 = vpop.f32.mrf.mxu0
      %v1814 = vadd.f32 %v1702, %v1813
      %1815 = vmatprep.mubr.bf16.mxu0 0
      %1816 = vmatmul.mubr.bf16.gmra.mxu0 %v1765
      %v1817 = vpop.f32.mrf.mxu0
      %v1818 = vadd.f32 %v1706, %v1817
      %v1819 = vpop.f32.mrf.mxu0
      %v1820 = vadd.f32 %v1708, %v1819
      %v1821 = vpop.f32.mrf.mxu0
      %v1822 = vadd.f32 %v1710, %v1821
      %v1823 = vpop.f32.mrf.mxu0
      %v1824 = vadd.f32 %v1712, %v1823
      %1825 = vmatprep.mubr.bf16.mxu0 0
      %1826 = vmatmul.mubr.bf16.gmra.mxu0 %v1641
      %v1827 = vpop.f32.mrf.mxu0
      %v1828 = vadd.f32 %v1716, %v1827
      %v1829 = vpop.f32.mrf.mxu0
      %v1830 = vadd.f32 %v1718, %v1829
      %v1831 = vpop.f32.mrf.mxu0
      %v1832 = vadd.f32 %v1720, %v1831
      %v1833 = vpop.f32.mrf.mxu0
      %v1834 = vadd.f32 %v1722, %v1833
      %1835 = vmatprep.mubr.bf16.mxu0 0
      %1836 = vmatmul.mubr.bf16.gmra.mxu0 %v1644
      %v1837 = vpop.f32.mrf.mxu0
      %v1838 = vadd.f32 %v1726, %v1837
      %v1839 = vpop.f32.mrf.mxu0
      %v1840 = vadd.f32 %v1728, %v1839
      %v1841 = vpop.f32.mrf.mxu0
      %v1842 = vadd.f32 %v1730, %v1841
      %v1843 = vpop.f32.mrf.mxu0
      %v1844 = vadd.f32 %v1732, %v1843
      %1845 = vmatprep.mubr.bf16.mxu0 0
      %1846 = vmatmul.mubr.bf16.gmra.mxu0 %v1647
      %v1847 = vpop.f32.mrf.mxu0
      %v1848 = vadd.f32 %v1736, %v1847
      %v1849 = vpop.f32.mrf.mxu0
      %v1850 = vadd.f32 %v1738, %v1849
      %v1851 = vpop.f32.mrf.mxu0
      %v1852 = vpop.f32.mrf.mxu0
      %1853 = vdwg.mxu0
      %v1854 = vld [vmem:[%s601] sm:$0xf]
      %v1859 = vunpack.c.l.b16 %v1600
      %v1860 = vunpack.c.l.b16 %v1601
      %v1861 = vunpack.c.l.b16 %v1602
      %v1862 = vunpack.c.l.b16 %v1603
      %v1863 = vpack.c.b16 %v1860, %v1859
      %v1864 = vpack.c.b16 %v1862, %v1861
      %v1867 = vunpack.c.l.s4 1983009808
      %v1868 = vunpack.c.0.s8 %v1867
      %v1869 = vlaneseq
      %v1870 = vshrl.u32 %v1869, 7
      %v1871 = vsub.s32 %v1868, %v1870
      %v1872 = vrot.slane %v1854, %v1871
      %v1873 = vcombine.high %v1872, %v1872
      %v1875 = vsel %vm385, %v1863, 0
      %v1878 = vsel %vm385, %v1864, 0
      %v1881 = vsel %vm401, %v1872, 0
      %v1884 = vsel %vm401, %v1873, 0
      %1886 = vmatprep.subr.bf16.mxu0 0
      %1887 = vmatpush1.bf16.msra.mxu0 0
      %1888 = vmatprep.subr.bf16.mxu0 0
      %1889 = vmatpush1.bf16.msra.mxu0 0
      %1890 = vmatprep.subr.bf16.mxu0 0
      %1891 = vmatpush1.bf16.msra.mxu0 0
      %1892 = vmatprep.subr.bf16.mxu0 0
      %1893 = vmatpush1.bf16.msra.mxu0 0
      %1894 = vmatprep.subr.bf16.mxu0 0
      %1895 = vmatpush1.bf16.msra.mxu0 0
      %1896 = vmatprep.subr.bf16.mxu0 0
      %1897 = vmatpush1.bf16.msra.mxu0 0
      %1898 = vmatprep.subr.bf16.mxu0 0
      %1899 = vmatpush1.bf16.msra.mxu0 0
      %1900 = vmatprep.subr.bf16.mxu0 %v1884
      %1901 = vmatpush1.bf16.msra.mxu0 %v1881
      %1902 = vmatprep.subr.bf16.mxu0 0
      %1903 = vmatpush2.bf16.msra.mxu0 0
      %1904 = vmatprep.subr.bf16.mxu0 0
      %1905 = vmatpush2.bf16.msra.mxu0 0
      %1906 = vmatprep.subr.bf16.mxu0 0
      %1907 = vmatpush2.bf16.msra.mxu0 0
      %1908 = vmatprep.subr.bf16.mxu0 0
      %1909 = vmatpush2.bf16.msra.mxu0 0
      %1910 = vmatprep.subr.bf16.mxu0 0
      %1911 = vmatpush2.bf16.msra.mxu0 0
      %1912 = vmatprep.subr.bf16.mxu0 0
      %1913 = vmatpush2.bf16.msra.mxu0 0
      %1914 = vmatprep.subr.bf16.mxu0 0
      %1915 = vmatpush2.bf16.msra.mxu0 0
      %1916 = vmatprep.subr.bf16.mxu0 0
      %1917 = vmatpush2.bf16.msra.mxu0 0
      %1918 = vmatprep.mubr.bf16.mxu0 0
      %1919 = vmatmul.mubr.bf16.gmra.mxu0 %v1647
      %v1920 = vpop.f32.mrf.mxu0
      %v1921 = vadd.f32 0.0, %v1920
      %v1922 = vpop.f32.mrf.mxu0
      %v1923 = vadd.f32 0.0, %v1922
      %v1924 = vpop.f32.mrf.mxu0
      %v1925 = vadd.f32 0.0, %v1924
      %v1926 = vpop.f32.mrf.mxu0
      %v1927 = vadd.f32 0.0, %v1926
      %1928 = vmatprep.mubr.bf16.mxu0 0
      %1929 = vmatmul.mubr.bf16.gmra.mxu0 %v1650
      %v1930 = vpop.f32.mrf.mxu0
      %v1931 = vadd.f32 0.0, %v1930
      %v1932 = vpop.f32.mrf.mxu0
      %v1933 = vadd.f32 0.0, %v1932
      %v1934 = vpop.f32.mrf.mxu0
      %v1935 = vadd.f32 0.0, %v1934
      %v1936 = vpop.f32.mrf.mxu0
      %v1937 = vadd.f32 0.0, %v1936
      %1938 = vmatprep.mubr.bf16.mxu0 0
      %1939 = vmatmul.mubr.bf16.gmra.mxu0 %v1653
      %v1940 = vpop.f32.mrf.mxu0
      %v1941 = vadd.f32 0.0, %v1940
      %v1942 = vpop.f32.mrf.mxu0
      %v1943 = vadd.f32 0.0, %v1942
      %v1944 = vpop.f32.mrf.mxu0
      %v1945 = vadd.f32 0.0, %v1944
      %v1946 = vpop.f32.mrf.mxu0
      %v1947 = vadd.f32 0.0, %v1946
      %1948 = vmatprep.mubr.bf16.mxu0 0
      %1949 = vmatmul.mubr.bf16.gmra.mxu0 %v1875
      %v1950 = vpop.f32.mrf.mxu0
      %v1951 = vadd.f32 0.0, %v1950
      %v1952 = vpop.f32.mrf.mxu0
      %v1953 = vadd.f32 0.0, %v1952
      %v1954 = vpop.f32.mrf.mxu0
      %v1955 = vadd.f32 0.0, %v1954
      %v1956 = vpop.f32.mrf.mxu0
      %v1957 = vadd.f32 0.0, %v1956
      %1958 = vmatprep.mubr.bf16.mxu0 0
      %1959 = vmatmul.mubr.bf16.gmra.mxu0 %v1878
      %v1960 = vpop.f32.mrf.mxu0
      %v1961 = vadd.f32 0.0, %v1960
      %v1962 = vpop.f32.mrf.mxu0
      %v1963 = vadd.f32 0.0, %v1962
      %v1964 = vpop.f32.mrf.mxu0
      %v1965 = vpop.f32.mrf.mxu0
      %1966 = vdwg.mxu0
      %v1967 = vadd.f32 %v1808, %v1921
      %v1968 = vadd.f32 %v1810, %v1923
      %v1969 = vadd.f32 %v1812, %v1925
      %v1970 = vadd.f32 %v1814, %v1927
      %v1971 = vadd.f32 %v1818, %v1931
      %v1972 = vadd.f32 %v1820, %v1933
      %v1973 = vadd.f32 %v1822, %v1935
      %v1974 = vadd.f32 %v1824, %v1937
      %v1975 = vadd.f32 %v1828, %v1941
      %v1976 = vadd.f32 %v1830, %v1943
      %v1977 = vadd.f32 %v1832, %v1945
      %v1978 = vadd.f32 %v1834, %v1947
      %v1979 = vadd.f32 %v1838, %v1951
      %v1980 = vadd.f32 %v1840, %v1953
      %v1981 = vadd.f32 %v1842, %v1955
      %v1982 = vadd.f32 %v1844, %v1957
      %v1983 = vadd.f32 %v1848, %v1961
      %v1984 = vadd.f32 %v1850, %v1963
      %v1994 = vrot.slane %v1967, 1
      %v1995 = vrot.slane %v1969, 1
      %v1996 = vsel %vm742, %v1994, %v1995
      %v1997 = vrot.slane %v1971, 1
      %v1998 = vsel %vm742, %v1995, %v1997
      %v1999 = vrot.slane %v1973, 1
      %v2000 = vsel %vm742, %v1997, %v1999
      %v2001 = vrot.slane %v1975, 1
      %v2002 = vsel %vm742, %v1999, %v2001
      %v2003 = vrot.slane %v1977, 1
      %v2004 = vsel %vm742, %v2001, %v2003
      %v2005 = vrot.slane %v1979, 1
      %v2006 = vsel %vm742, %v2003, %v2005
      %v2007 = vrot.slane %v1981, 1
      %v2008 = vsel %vm742, %v2005, %v2007
      %v2009 = vrot.slane %v1983, 1
      %v2010 = vsel %vm742, %v2007, %v2009
      %2011 = vrot.lane.b32.xlu0 %v1996, 64
      %v2012 = vpop.permute.xlu0 %2011
      %2013 = vrot.lane.b32.xlu0 %v1998, 64
      %v2014 = vpop.permute.xlu0 %2013
      %2015 = vrot.lane.b32.xlu0 %v2000, 64
      %v2016 = vpop.permute.xlu0 %2015
      %2017 = vrot.lane.b32.xlu0 %v2002, 64
      %v2018 = vpop.permute.xlu0 %2017
      %2019 = vrot.lane.b32.xlu0 %v2004, 64
      %v2020 = vpop.permute.xlu0 %2019
      %2021 = vrot.lane.b32.xlu0 %v2006, 64
      %v2022 = vpop.permute.xlu0 %2021
      %2023 = vrot.lane.b32.xlu0 %v2008, 64
      %v2024 = vpop.permute.xlu0 %2023
      %2025 = vrot.lane.b32.xlu0 %v2010, 64
      %v2026 = vpop.permute.xlu0 %2025
      %2027 = vrot.lane.b32.xlu0 %v2009, 64
      %v2028 = vpop.permute.xlu0 %2027
      %v2038 = vadd.f32 %v1967, %v2012
      %v2039 = vadd.f32 %v1969, %v2014
      %v2040 = vadd.f32 %v1971, %v2016
      %v2041 = vadd.f32 %v1973, %v2018
      %v2042 = vadd.f32 %v1975, %v2020
      %v2043 = vadd.f32 %v1977, %v2022
      %v2044 = vadd.f32 %v1979, %v2024
      %v2045 = vadd.f32 %v1981, %v2026
      %v2046 = vadd.f32 %v1983, %v2028
      %v2056 = vrot.slane %v1968, 2
      %v2057 = vrot.slane %v1970, 2
      %v2058 = vsel %vm805, %v2056, %v2057
      %v2059 = vrot.slane %v1972, 2
      %v2060 = vsel %vm805, %v2057, %v2059
      %v2061 = vrot.slane %v1974, 2
      %v2062 = vsel %vm805, %v2059, %v2061
      %v2063 = vrot.slane %v1976, 2
      %v2064 = vsel %vm805, %v2061, %v2063
      %v2065 = vrot.slane %v1978, 2
      %v2066 = vsel %vm805, %v2063, %v2065
      %v2067 = vrot.slane %v1980, 2
      %v2068 = vsel %vm805, %v2065, %v2067
      %v2069 = vrot.slane %v1982, 2
      %v2070 = vsel %vm805, %v2067, %v2069
      %v2071 = vrot.slane %v1984, 2
      %v2072 = vsel %vm805, %v2069, %v2071
      %v2082 = vadd.f32 %v2038, %v2058
      %v2083 = vadd.f32 %v2039, %v2060
      %v2084 = vadd.f32 %v2040, %v2062
      %v2085 = vadd.f32 %v2041, %v2064
      %v2086 = vadd.f32 %v2042, %v2066
      %v2087 = vadd.f32 %v2043, %v2068
      %v2088 = vadd.f32 %v2044, %v2070
      %v2089 = vadd.f32 %v2045, %v2072
      %v2090 = vadd.f32 %v2046, %v2071
      %v2091 = vrot.slane %v1970, 3
      %v2092 = vrot.slane %v1972, 3
      %v2093 = vsel %vm841, %v2091, %v2092
      %v2094 = vrot.slane %v1974, 3
      %v2095 = vsel %vm841, %v2092, %v2094
      %v2096 = vrot.slane %v1976, 3
      %v2097 = vsel %vm841, %v2094, %v2096
      %v2098 = vrot.slane %v1978, 3
      %v2099 = vsel %vm841, %v2096, %v2098
      %v2100 = vrot.slane %v1980, 3
      %v2101 = vsel %vm841, %v2098, %v2100
      %v2102 = vrot.slane %v1982, 3
      %v2103 = vsel %vm841, %v2100, %v2102
      %v2104 = vrot.slane %v1984, 3
      %v2105 = vsel %vm841, %v2102, %v2104
      %2106 = vrot.lane.b32.xlu0 %v2091, 64
      %v2107 = vpop.permute.xlu0 %2106
      %2108 = vrot.lane.b32.xlu0 %v2093, 64
      %v2109 = vpop.permute.xlu0 %2108
      %2110 = vrot.lane.b32.xlu0 %v2095, 64
      %v2111 = vpop.permute.xlu0 %2110
      %2112 = vrot.lane.b32.xlu0 %v2097, 64
      %v2113 = vpop.permute.xlu0 %2112
      %2114 = vrot.lane.b32.xlu0 %v2099, 64
      %v2115 = vpop.permute.xlu0 %2114
      %2116 = vrot.lane.b32.xlu0 %v2101, 64
      %v2117 = vpop.permute.xlu0 %2116
      %2118 = vrot.lane.b32.xlu0 %v2103, 64
      %v2119 = vpop.permute.xlu0 %2118
      %2120 = vrot.lane.b32.xlu0 %v2105, 64
      %v2121 = vpop.permute.xlu0 %2120
      %2122 = vrot.lane.b32.xlu0 %v2104, 64
      %v2123 = vpop.permute.xlu0 %2122
      %v2133 = vadd.f32 %v2082, %v2107
      %v2134 = vadd.f32 %v2083, %v2109
      %v2135 = vadd.f32 %v2084, %v2111
      %v2136 = vadd.f32 %v2085, %v2113
      %v2137 = vadd.f32 %v2086, %v2115
      %v2138 = vadd.f32 %v2087, %v2117
      %v2139 = vadd.f32 %v2088, %v2119
      %v2140 = vadd.f32 %v2089, %v2121
      %v2141 = vadd.f32 %v2090, %v2123
      %v2142 = vld [vmem:[%s2 + $0x4] sm:$0xf]
      %v2143 = vld [vmem:[%s349 + $0x4] sm:$0xf]
      %v2146 = vunpack.c.l.s4 1983009808
      %v2147 = vunpack.c.0.s8 %v2146
      %v2148 = vlaneseq
      %v2149 = vshrl.u32 %v2148, 7
      %v2150 = vsub.s32 %v2147, %v2149
      %v2151 = vrot.slane %v2143, %v2150
      %v2152 = vcombine.high %v2151, %v2151
      %v2154 = vsel %vm401, %v2151, 0
      %v2157 = vsel %vm401, %v2152, 0
      %2159 = vmatprep.subr.bf16.mxu0 0
      %2160 = vmatpush1.bf16.msra.mxu0 0
      %2161 = vmatprep.subr.bf16.mxu0 0
      %2162 = vmatpush1.bf16.msra.mxu0 0
      %2163 = vmatprep.subr.bf16.mxu0 0
      %2164 = vmatpush1.bf16.msra.mxu0 0
      %2165 = vmatprep.subr.bf16.mxu0 0
      %2166 = vmatpush1.bf16.msra.mxu0 0
      %2167 = vmatprep.subr.bf16.mxu0 0
      %2168 = vmatpush1.bf16.msra.mxu0 0
      %2169 = vmatprep.subr.bf16.mxu0 0
      %2170 = vmatpush1.bf16.msra.mxu0 0
      %2171 = vmatprep.subr.bf16.mxu0 0
      %2172 = vmatpush1.bf16.msra.mxu0 0
      %2173 = vmatprep.subr.bf16.mxu0 %v2157
      %2174 = vmatpush1.bf16.msra.mxu0 %v2154
      %2175 = vmatprep.subr.bf16.mxu0 0
      %2176 = vmatpush2.bf16.msra.mxu0 0
      %2177 = vmatprep.subr.bf16.mxu0 0
      %2178 = vmatpush2.bf16.msra.mxu0 0
      %2179 = vmatprep.subr.bf16.mxu0 0
      %2180 = vmatpush2.bf16.msra.mxu0 0
      %2181 = vmatprep.subr.bf16.mxu0 0
      %2182 = vmatpush2.bf16.msra.mxu0 0
      %2183 = vmatprep.subr.bf16.mxu0 0
      %2184 = vmatpush2.bf16.msra.mxu0 0
      %2185 = vmatprep.subr.bf16.mxu0 0
      %2186 = vmatpush2.bf16.msra.mxu0 0
      %2187 = vmatprep.subr.bf16.mxu0 0
      %2188 = vmatpush2.bf16.msra.mxu0 0
      %2189 = vmatprep.subr.bf16.mxu0 0
      %2190 = vmatpush2.bf16.msra.mxu0 0
      %2191 = vmatprep.mubr.bf16.mxu0 0
      %2192 = vmatmul.mubr.bf16.gmra.mxu0 %v1641
      %v2193 = vpop.f32.mrf.mxu0
      %v2194 = vpop.f32.mrf.mxu0
      %v2195 = vpop.f32.mrf.mxu0
      %v2196 = vadd.f32 0.0, %v2195
      %v2197 = vpop.f32.mrf.mxu0
      %v2198 = vadd.f32 0.0, %v2197
      %2199 = vmatprep.mubr.bf16.mxu0 0
      %2200 = vmatmul.mubr.bf16.gmra.mxu0 %v1644
      %v2201 = vpop.f32.mrf.mxu0
      %v2202 = vadd.f32 0.0, %v2201
      %v2203 = vpop.f32.mrf.mxu0
      %v2204 = vadd.f32 0.0, %v2203
      %v2205 = vpop.f32.mrf.mxu0
      %v2206 = vadd.f32 0.0, %v2205
      %v2207 = vpop.f32.mrf.mxu0
      %v2208 = vadd.f32 0.0, %v2207
      %2209 = vmatprep.mubr.bf16.mxu0 0
      %2210 = vmatmul.mubr.bf16.gmra.mxu0 %v1647
      %v2211 = vpop.f32.mrf.mxu0
      %v2212 = vadd.f32 0.0, %v2211
      %v2213 = vpop.f32.mrf.mxu0
      %v2214 = vadd.f32 0.0, %v2213
      %v2215 = vpop.f32.mrf.mxu0
      %v2216 = vadd.f32 0.0, %v2215
      %v2217 = vpop.f32.mrf.mxu0
      %v2218 = vadd.f32 0.0, %v2217
      %2219 = vmatprep.mubr.bf16.mxu0 0
      %2220 = vmatmul.mubr.bf16.gmra.mxu0 %v1650
      %v2221 = vpop.f32.mrf.mxu0
      %v2222 = vadd.f32 0.0, %v2221
      %v2223 = vpop.f32.mrf.mxu0
      %v2224 = vadd.f32 0.0, %v2223
      %v2225 = vpop.f32.mrf.mxu0
      %v2226 = vadd.f32 0.0, %v2225
      %v2227 = vpop.f32.mrf.mxu0
      %v2228 = vadd.f32 0.0, %v2227
      %2229 = vmatprep.mubr.bf16.mxu0 0
      %2230 = vmatmul.mubr.bf16.gmra.mxu0 %v1653
      %v2231 = vpop.f32.mrf.mxu0
      %v2232 = vadd.f32 0.0, %v2231
      %v2233 = vpop.f32.mrf.mxu0
      %v2234 = vadd.f32 0.0, %v2233
      %v2235 = vpop.f32.mrf.mxu0
      %v2236 = vadd.f32 0.0, %v2235
      %v2237 = vpop.f32.mrf.mxu0
      %v2238 = vadd.f32 0.0, %v2237
      %2239 = vdwg.mxu0
      %v2242 = vunpack.c.l.s4 1983009808
      %v2243 = vunpack.c.0.s8 %v2242
      %v2244 = vlaneseq
      %v2245 = vshrl.u32 %v2244, 7
      %v2246 = vsub.s32 %v2243, %v2245
      %v2247 = vrot.slane %v2142, %v2246
      %v2248 = vcombine.high %v2247, %v2247
      %v2250 = vsel %vm401, %v2247, 0
      %v2253 = vsel %vm401, %v2248, 0
      %2255 = vmatprep.subr.bf16.mxu0 0
      %2256 = vmatpush1.bf16.msra.mxu0 0
      %2257 = vmatprep.subr.bf16.mxu0 0
      %2258 = vmatpush1.bf16.msra.mxu0 0
      %2259 = vmatprep.subr.bf16.mxu0 0
      %2260 = vmatpush1.bf16.msra.mxu0 0
      %2261 = vmatprep.subr.bf16.mxu0 0
      %2262 = vmatpush1.bf16.msra.mxu0 0
      %2263 = vmatprep.subr.bf16.mxu0 0
      %2264 = vmatpush1.bf16.msra.mxu0 0
      %2265 = vmatprep.subr.bf16.mxu0 0
      %2266 = vmatpush1.bf16.msra.mxu0 0
      %2267 = vmatprep.subr.bf16.mxu0 0
      %2268 = vmatpush1.bf16.msra.mxu0 0
      %2269 = vmatprep.subr.bf16.mxu0 %v2253
      %2270 = vmatpush1.bf16.msra.mxu0 %v2250
      %2271 = vmatprep.subr.bf16.mxu0 0
      %2272 = vmatpush2.bf16.msra.mxu0 0
      %2273 = vmatprep.subr.bf16.mxu0 0
      %2274 = vmatpush2.bf16.msra.mxu0 0
      %2275 = vmatprep.subr.bf16.mxu0 0
      %2276 = vmatpush2.bf16.msra.mxu0 0
      %2277 = vmatprep.subr.bf16.mxu0 0
      %2278 = vmatpush2.bf16.msra.mxu0 0
      %2279 = vmatprep.subr.bf16.mxu0 0
      %2280 = vmatpush2.bf16.msra.mxu0 0
      %2281 = vmatprep.subr.bf16.mxu0 0
      %2282 = vmatpush2.bf16.msra.mxu0 0
      %2283 = vmatprep.subr.bf16.mxu0 0
      %2284 = vmatpush2.bf16.msra.mxu0 0
      %2285 = vmatprep.subr.bf16.mxu0 0
      %2286 = vmatpush2.bf16.msra.mxu0 0
      %2287 = vmatprep.mubr.bf16.mxu0 0
      %2288 = vmatmul.mubr.bf16.gmra.mxu0 %v1762
      %v2289 = vpop.f32.mrf.mxu0
      %v2290 = vpop.f32.mrf.mxu0
      %v2291 = vpop.f32.mrf.mxu0
      %v2292 = vadd.f32 %v2196, %v2291
      %v2293 = vpop.f32.mrf.mxu0
      %v2294 = vadd.f32 %v2198, %v2293
      %2295 = vmatprep.mubr.bf16.mxu0 0
      %2296 = vmatmul.mubr.bf16.gmra.mxu0 %v1765
      %v2297 = vpop.f32.mrf.mxu0
      %v2298 = vadd.f32 %v2202, %v2297
      %v2299 = vpop.f32.mrf.mxu0
      %v2300 = vadd.f32 %v2204, %v2299
      %v2301 = vpop.f32.mrf.mxu0
      %v2302 = vadd.f32 %v2206, %v2301
      %v2303 = vpop.f32.mrf.mxu0
      %v2304 = vadd.f32 %v2208, %v2303
      %2305 = vmatprep.mubr.bf16.mxu0 0
      %2306 = vmatmul.mubr.bf16.gmra.mxu0 %v1641
      %v2307 = vpop.f32.mrf.mxu0
      %v2308 = vadd.f32 %v2212, %v2307
      %v2309 = vpop.f32.mrf.mxu0
      %v2310 = vadd.f32 %v2214, %v2309
      %v2311 = vpop.f32.mrf.mxu0
      %v2312 = vadd.f32 %v2216, %v2311
      %v2313 = vpop.f32.mrf.mxu0
      %v2314 = vadd.f32 %v2218, %v2313
      %2315 = vmatprep.mubr.bf16.mxu0 0
      %2316 = vmatmul.mubr.bf16.gmra.mxu0 %v1644
      %v2317 = vpop.f32.mrf.mxu0
      %v2318 = vadd.f32 %v2222, %v2317
      %v2319 = vpop.f32.mrf.mxu0
      %v2320 = vadd.f32 %v2224, %v2319
      %v2321 = vpop.f32.mrf.mxu0
      %v2322 = vadd.f32 %v2226, %v2321
      %v2323 = vpop.f32.mrf.mxu0
      %v2324 = vadd.f32 %v2228, %v2323
      %2325 = vmatprep.mubr.bf16.mxu0 0
      %2326 = vmatmul.mubr.bf16.gmra.mxu0 %v1647
      %v2327 = vpop.f32.mrf.mxu0
      %v2328 = vadd.f32 %v2232, %v2327
      %v2329 = vpop.f32.mrf.mxu0
      %v2330 = vadd.f32 %v2234, %v2329
      %v2331 = vpop.f32.mrf.mxu0
      %v2332 = vadd.f32 %v2236, %v2331
      %v2333 = vpop.f32.mrf.mxu0
      %v2334 = vadd.f32 %v2238, %v2333
      %2335 = vdwg.mxu0
      %v2336 = vld [vmem:[%s601 + $0x4] sm:$0xf]
      %v2339 = vunpack.c.l.s4 1983009808
      %v2340 = vunpack.c.0.s8 %v2339
      %v2341 = vlaneseq
      %v2342 = vshrl.u32 %v2341, 7
      %v2343 = vsub.s32 %v2340, %v2342
      %v2344 = vrot.slane %v2336, %v2343
      %v2345 = vcombine.high %v2344, %v2344
      %v2347 = vsel %vm401, %v2344, 0
      %v2350 = vsel %vm401, %v2345, 0
      %2352 = vmatprep.subr.bf16.mxu0 0
      %2353 = vmatpush1.bf16.msra.mxu0 0
      %2354 = vmatprep.subr.bf16.mxu0 0
      %2355 = vmatpush1.bf16.msra.mxu0 0
      %2356 = vmatprep.subr.bf16.mxu0 0
      %2357 = vmatpush1.bf16.msra.mxu0 0
      %2358 = vmatprep.subr.bf16.mxu0 0
      %2359 = vmatpush1.bf16.msra.mxu0 0
      %2360 = vmatprep.subr.bf16.mxu0 0
      %2361 = vmatpush1.bf16.msra.mxu0 0
      %2362 = vmatprep.subr.bf16.mxu0 0
      %2363 = vmatpush1.bf16.msra.mxu0 0
      %2364 = vmatprep.subr.bf16.mxu0 0
      %2365 = vmatpush1.bf16.msra.mxu0 0
      %2366 = vmatprep.subr.bf16.mxu0 %v2350
      %2367 = vmatpush1.bf16.msra.mxu0 %v2347
      %2368 = vmatprep.subr.bf16.mxu0 0
      %2369 = vmatpush2.bf16.msra.mxu0 0
      %2370 = vmatprep.subr.bf16.mxu0 0
      %2371 = vmatpush2.bf16.msra.mxu0 0
      %2372 = vmatprep.subr.bf16.mxu0 0
      %2373 = vmatpush2.bf16.msra.mxu0 0
      %2374 = vmatprep.subr.bf16.mxu0 0
      %2375 = vmatpush2.bf16.msra.mxu0 0
      %2376 = vmatprep.subr.bf16.mxu0 0
      %2377 = vmatpush2.bf16.msra.mxu0 0
      %2378 = vmatprep.subr.bf16.mxu0 0
      %2379 = vmatpush2.bf16.msra.mxu0 0
      %2380 = vmatprep.subr.bf16.mxu0 0
      %2381 = vmatpush2.bf16.msra.mxu0 0
      %2382 = vmatprep.subr.bf16.mxu0 0
      %2383 = vmatpush2.bf16.msra.mxu0 0
      %2384 = vmatprep.mubr.bf16.mxu0 0
      %2385 = vmatmul.mubr.bf16.gmra.mxu0 %v1647
      %v2386 = vpop.f32.mrf.mxu0
      %v2387 = vpop.f32.mrf.mxu0
      %v2388 = vpop.f32.mrf.mxu0
      %v2389 = vadd.f32 0.0, %v2388
      %v2390 = vpop.f32.mrf.mxu0
      %v2391 = vadd.f32 0.0, %v2390
      %2392 = vmatprep.mubr.bf16.mxu0 0
      %2393 = vmatmul.mubr.bf16.gmra.mxu0 %v1650
      %v2394 = vpop.f32.mrf.mxu0
      %v2395 = vadd.f32 0.0, %v2394
      %v2396 = vpop.f32.mrf.mxu0
      %v2397 = vadd.f32 0.0, %v2396
      %v2398 = vpop.f32.mrf.mxu0
      %v2399 = vadd.f32 0.0, %v2398
      %v2400 = vpop.f32.mrf.mxu0
      %v2401 = vadd.f32 0.0, %v2400
      %2402 = vmatprep.mubr.bf16.mxu0 0
      %2403 = vmatmul.mubr.bf16.gmra.mxu0 %v1653
      %v2404 = vpop.f32.mrf.mxu0
      %v2405 = vadd.f32 0.0, %v2404
      %v2406 = vpop.f32.mrf.mxu0
      %v2407 = vadd.f32 0.0, %v2406
      %v2408 = vpop.f32.mrf.mxu0
      %v2409 = vadd.f32 0.0, %v2408
      %v2410 = vpop.f32.mrf.mxu0
      %v2411 = vadd.f32 0.0, %v2410
      %2412 = vmatprep.mubr.bf16.mxu0 0
      %2413 = vmatmul.mubr.bf16.gmra.mxu0 %v1875
      %v2414 = vpop.f32.mrf.mxu0
      %v2415 = vadd.f32 0.0, %v2414
      %v2416 = vpop.f32.mrf.mxu0
      %v2417 = vadd.f32 0.0, %v2416
      %v2418 = vpop.f32.mrf.mxu0
      %v2419 = vadd.f32 0.0, %v2418
      %v2420 = vpop.f32.mrf.mxu0
      %v2421 = vadd.f32 0.0, %v2420
      %2422 = vmatprep.mubr.bf16.mxu0 0
      %2423 = vmatmul.mubr.bf16.gmra.mxu0 %v1878
      %v2424 = vpop.f32.mrf.mxu0
      %v2425 = vadd.f32 0.0, %v2424
      %v2426 = vpop.f32.mrf.mxu0
      %v2427 = vadd.f32 0.0, %v2426
      %v2428 = vpop.f32.mrf.mxu0
      %v2429 = vadd.f32 0.0, %v2428
      %v2430 = vpop.f32.mrf.mxu0
      %v2431 = vadd.f32 0.0, %v2430
      %2432 = vdwg.mxu0
      %v2433 = vadd.f32 %v2292, %v2389
      %v2434 = vadd.f32 %v2294, %v2391
      %v2435 = vadd.f32 %v2298, %v2395
      %v2436 = vadd.f32 %v2300, %v2397
      %v2437 = vadd.f32 %v2302, %v2399
      %v2438 = vadd.f32 %v2304, %v2401
      %v2439 = vadd.f32 %v2308, %v2405
      %v2440 = vadd.f32 %v2310, %v2407
      %v2441 = vadd.f32 %v2312, %v2409
      %v2442 = vadd.f32 %v2314, %v2411
      %v2443 = vadd.f32 %v2318, %v2415
      %v2444 = vadd.f32 %v2320, %v2417
      %v2445 = vadd.f32 %v2322, %v2419
      %v2446 = vadd.f32 %v2324, %v2421
      %v2447 = vadd.f32 %v2328, %v2425
      %v2448 = vadd.f32 %v2330, %v2427
      %v2449 = vadd.f32 %v2332, %v2429
      %v2450 = vadd.f32 %v2334, %v2431
      %v2460 = vrot.slane %v2433, 4
      %v2461 = vrot.slane %v2435, 4
      %v2462 = vsel %vm1211, %v2460, %v2461
      %v2463 = vrot.slane %v2437, 4
      %v2464 = vsel %vm1211, %v2461, %v2463
      %v2465 = vrot.slane %v2439, 4
      %v2466 = vsel %vm1211, %v2463, %v2465
      %v2467 = vrot.slane %v2441, 4
      %v2468 = vsel %vm1211, %v2465, %v2467
      %v2469 = vrot.slane %v2443, 4
      %v2470 = vsel %vm1211, %v2467, %v2469
      %v2471 = vrot.slane %v2445, 4
      %v2472 = vsel %vm1211, %v2469, %v2471
      %v2473 = vrot.slane %v2447, 4
      %v2474 = vsel %vm1211, %v2471, %v2473
      %v2475 = vrot.slane %v2449, 4
      %v2476 = vsel %vm1211, %v2473, %v2475
      %v2486 = vadd.f32 %v2133, %v2460
      %v2487 = vadd.f32 %v2134, %v2462
      %v2488 = vadd.f32 %v2135, %v2464
      %v2489 = vadd.f32 %v2136, %v2466
      %v2490 = vadd.f32 %v2137, %v2468
      %v2491 = vadd.f32 %v2138, %v2470
      %v2492 = vadd.f32 %v2139, %v2472
      %v2493 = vadd.f32 %v2140, %v2474
      %v2494 = vadd.f32 %v2141, %v2476
      %v2495 = vrot.slane %v2433, 5
      %v2496 = vrot.slane %v2435, 5
      %v2497 = vsel %vm1247, %v2495, %v2496
      %v2498 = vrot.slane %v2437, 5
      %v2499 = vsel %vm1247, %v2496, %v2498
      %v2500 = vrot.slane %v2439, 5
      %v2501 = vsel %vm1247, %v2498, %v2500
      %v2502 = vrot.slane %v2441, 5
      %v2503 = vsel %vm1247, %v2500, %v2502
      %v2504 = vrot.slane %v2443, 5
      %v2505 = vsel %vm1247, %v2502, %v2504
      %v2506 = vrot.slane %v2445, 5
      %v2507 = vsel %vm1247, %v2504, %v2506
      %v2508 = vrot.slane %v2447, 5
      %v2509 = vsel %vm1247, %v2506, %v2508
      %v2510 = vrot.slane %v2449, 5
      %v2511 = vsel %vm1247, %v2508, %v2510
      %2512 = vrot.lane.b32.xlu0 %v2495, 64
      %v2513 = vpop.permute.xlu0 %2512
      %2514 = vrot.lane.b32.xlu0 %v2497, 64
      %v2515 = vpop.permute.xlu0 %2514
      %2516 = vrot.lane.b32.xlu0 %v2499, 64
      %v2517 = vpop.permute.xlu0 %2516
      %2518 = vrot.lane.b32.xlu0 %v2501, 64
      %v2519 = vpop.permute.xlu0 %2518
      %2520 = vrot.lane.b32.xlu0 %v2503, 64
      %v2521 = vpop.permute.xlu0 %2520
      %2522 = vrot.lane.b32.xlu0 %v2505, 64
      %v2523 = vpop.permute.xlu0 %2522
      %2524 = vrot.lane.b32.xlu0 %v2507, 64
      %v2525 = vpop.permute.xlu0 %2524
      %2526 = vrot.lane.b32.xlu0 %v2509, 64
      %v2527 = vpop.permute.xlu0 %2526
      %2528 = vrot.lane.b32.xlu0 %v2511, 64
      %v2529 = vpop.permute.xlu0 %2528
      %v2539 = vadd.f32 %v2486, %v2513
      %v2540 = vadd.f32 %v2487, %v2515
      %v2541 = vadd.f32 %v2488, %v2517
      %v2542 = vadd.f32 %v2489, %v2519
      %v2543 = vadd.f32 %v2490, %v2521
      %v2544 = vadd.f32 %v2491, %v2523
      %v2545 = vadd.f32 %v2492, %v2525
      %v2546 = vadd.f32 %v2493, %v2527
      %v2547 = vadd.f32 %v2494, %v2529
      %v2557 = vrot.slane %v2434, 6
      %v2558 = vrot.slane %v2436, 6
      %v2559 = vsel %vm401, %v2557, %v2558
      %v2560 = vrot.slane %v2438, 6
      %v2561 = vsel %vm401, %v2558, %v2560
      %v2562 = vrot.slane %v2440, 6
      %v2563 = vsel %vm401, %v2560, %v2562
      %v2564 = vrot.slane %v2442, 6
      %v2565 = vsel %vm401, %v2562, %v2564
      %v2566 = vrot.slane %v2444, 6
      %v2567 = vsel %vm401, %v2564, %v2566
      %v2568 = vrot.slane %v2446, 6
      %v2569 = vsel %vm401, %v2566, %v2568
      %v2570 = vrot.slane %v2448, 6
      %v2571 = vsel %vm401, %v2568, %v2570
      %v2572 = vrot.slane %v2450, 6
      %v2573 = vsel %vm401, %v2570, %v2572
      %v2583 = vadd.f32 %v2539, %v2557
      %v2584 = vadd.f32 %v2540, %v2559
      %v2585 = vadd.f32 %v2541, %v2561
      %v2586 = vadd.f32 %v2542, %v2563
      %v2587 = vadd.f32 %v2543, %v2565
      %v2588 = vadd.f32 %v2544, %v2567
      %v2589 = vadd.f32 %v2545, %v2569
      %v2590 = vadd.f32 %v2546, %v2571
      %v2591 = vadd.f32 %v2547, %v2573
      %v2592 = vadd.f32 %v2583, %v1349
      %v2593 = vadd.f32 %v2584, %v1349
      %v2594 = vadd.f32 %v2585, %v1349
      %v2595 = vadd.f32 %v2586, %v1349
      %v2596 = vadd.f32 %v2587, %v1349
      %v2597 = vadd.f32 %v2588, %v1349
      %v2598 = vadd.f32 %v2589, %v1349
      %v2599 = vadd.f32 %v2590, %v1349
      %v2600 = vadd.f32 %v2591, %v1349
      %v2601 = vmul.f32 %v2592, 0.01
      %v2602 = vmul.f32 %v2593, 0.01
      %v2603 = vmul.f32 %v2594, 0.01
      %v2604 = vmul.f32 %v2595, 0.01
      %v2605 = vmul.f32 %v2596, 0.01
      %v2606 = vmul.f32 %v2597, 0.01
      %v2607 = vmul.f32 %v2598, 0.01
      %v2608 = vmul.f32 %v2599, 0.01
      %v2609 = vmul.f32 %v2600, 0.01
      %v2610 = vmax.f32 %v2592, %v2601
      %v2611 = vmax.f32 %v2593, %v2602
      %v2612 = vmax.f32 %v2594, %v2603
      %v2613 = vmax.f32 %v2595, %v2604
      %v2614 = vmax.f32 %v2596, %v2605
      %v2615 = vmax.f32 %v2597, %v2606
      %v2616 = vmax.f32 %v2598, %v2607
      %v2617 = vmax.f32 %v2599, %v2608
      %v2618 = vmax.f32 %v2600, %v2609
      %v2619 = vld [vmem:[%s1 + $0x40] sm:$0xff]
      %v2620 = vld [vmem:[%s1 + $0x48] sm:$0xff]
      %v2621 = vld [vmem:[%s1 + $0x50] sm:$0xff]
      %v2622 = vld [vmem:[%s1 + $0x58] sm:$0xff]
      %v2623 = vld [vmem:[%s1 + $0x60] sm:$0xff]
      %v2624 = vld [vmem:[%s1 + $0x68] sm:$0xff]
      %v2625 = vld [vmem:[%s1 + $0x70] sm:$0xff]
      %v2626 = vld [vmem:[%s1 + $0x78] sm:$0xff]
      %2628 = vset.pattern.permute.xlu0 0
      %2629 = vperm.xlu0 %2628, %v2619
      %v2630 = vpop.permute.xlu0 %2629
      %2632 = vset.pattern.permute.xlu0 0
      %2633 = vperm.xlu0 %2632, %v2620
      %v2634 = vpop.permute.xlu0 %2633
      %2636 = vset.pattern.permute.xlu0 0
      %2637 = vperm.xlu0 %2636, %v2621
      %v2638 = vpop.permute.xlu0 %2637
      %2640 = vset.pattern.permute.xlu0 0
      %2641 = vperm.xlu0 %2640, %v2622
      %v2642 = vpop.permute.xlu0 %2641
      %2644 = vset.pattern.permute.xlu0 0
      %2645 = vperm.xlu0 %2644, %v2623
      %v2646 = vpop.permute.xlu0 %2645
      %2648 = vset.pattern.permute.xlu0 0
      %2649 = vperm.xlu0 %2648, %v2624
      %v2650 = vpop.permute.xlu0 %2649
      %2652 = vset.pattern.permute.xlu0 0
      %2653 = vperm.xlu0 %2652, %v2625
      %v2654 = vpop.permute.xlu0 %2653
      %2656 = vset.pattern.permute.xlu0 0
      %2657 = vperm.xlu0 %2656, %v2626
      %v2658 = vpop.permute.xlu0 %2657
      %v2659 = vrot.slane %v2630, 3
      %v2660 = vrot.slane %v2634, 3
      %v2661 = vsel %vm841, %v2659, %v2660
      %v2662 = vrot.slane %v2638, 3
      %v2663 = vsel %vm841, %v2660, %v2662
      %v2664 = vrot.slane %v2642, 3
      %v2665 = vsel %vm841, %v2662, %v2664
      %v2666 = vrot.slane %v2646, 3
      %v2667 = vsel %vm841, %v2664, %v2666
      %v2668 = vrot.slane %v2650, 3
      %v2669 = vsel %vm841, %v2666, %v2668
      %v2670 = vrot.slane %v2654, 3
      %v2671 = vsel %vm841, %v2668, %v2670
      %v2672 = vrot.slane %v2658, 3
      %v2673 = vsel %vm841, %v2670, %v2672
      %v2683 = vmul.f32 %v2610, %v2659
      %v2684 = vmul.f32 %v2611, %v2661
      %v2685 = vmul.f32 %v2612, %v2663
      %v2686 = vmul.f32 %v2613, %v2665
      %v2687 = vmul.f32 %v2614, %v2667
      %v2688 = vmul.f32 %v2615, %v2669
      %v2689 = vmul.f32 %v2616, %v2671
      %v2690 = vmul.f32 %v2617, %v2673
      %v2691 = vmul.f32 %v2618, %v2672
      %v2692 = vpack.c.bf16 %v2684, %v2683
      %v2693 = vpack.c.bf16 %v2686, %v2685
      %v2694 = vpack.c.bf16 %v2688, %v2687
      %v2695 = vpack.c.bf16 %v2690, %v2689
      %v2696 = vpack.c.bf16 %v2691, %v2691
      %v2702 = vunpack.c.l.b16 %v2692
      %v2703 = vunpack.c.h.b16 %v2692
      %v2704 = vunpack.c.l.b16 %v2693
      %v2705 = vunpack.c.h.b16 %v2693
      %v2706 = vunpack.c.l.b16 %v2694
      %v2707 = vunpack.c.h.b16 %v2694
      %v2708 = vunpack.c.l.b16 %v2695
      %v2709 = vunpack.c.h.b16 %v2695
      %v2710 = vunpack.c.l.b16 %v2696
      %v2711 = vpack.c.b16 %v2702, %v2702
      %v2712 = vpack.c.b16 %v2703, %v2703
      %v2713 = vpack.c.b16 %v2704, %v2704
      %v2714 = vpack.c.b16 %v2705, %v2705
      %v2715 = vpack.c.b16 %v2706, %v2706
      %v2716 = vpack.c.b16 %v2707, %v2707
      %v2717 = vpack.c.b16 %v2708, %v2708
      %v2718 = vpack.c.b16 %v2709, %v2709
      %v2719 = vpack.c.b16 %v2710, %v2710
      %v2721 = vshrl.u32 %v2711, 16
      %v2723 = vrot.slane %v2721, 6
      %v2724 = vshll.u32 %v2711, 16
      %v2726 = vrot.slane %v2724, 7
      %v2727 = vor.u32 %v2723, %v2726
      %v2728 = vrot.slane %v2727, 4
      %v2730 = vshrl.u32 %v2712, 16
      %v2732 = vrot.slane %v2730, 6
      %v2733 = vshll.u32 %v2712, 16
      %v2735 = vrot.slane %v2733, 7
      %v2736 = vor.u32 %v2732, %v2735
      %v2737 = vsel %vm1481, %v2728, %v2736
      %v2738 = vrot.slane %v2736, 4
      %v2740 = vshrl.u32 %v2713, 16
      %v2742 = vrot.slane %v2740, 6
      %v2743 = vshll.u32 %v2713, 16
      %v2745 = vrot.slane %v2743, 7
      %v2746 = vor.u32 %v2742, %v2745
      %v2747 = vsel %vm1481, %v2738, %v2746
      %v2748 = vrot.slane %v2746, 4
      %v2750 = vshrl.u32 %v2714, 16
      %v2752 = vrot.slane %v2750, 6
      %v2753 = vshll.u32 %v2714, 16
      %v2755 = vrot.slane %v2753, 7
      %v2756 = vor.u32 %v2752, %v2755
      %v2757 = vsel %vm1481, %v2748, %v2756
      %v2758 = vrot.slane %v2756, 4
      %v2760 = vshrl.u32 %v2715, 16
      %v2762 = vrot.slane %v2760, 6
      %v2763 = vshll.u32 %v2715, 16
      %v2765 = vrot.slane %v2763, 7
      %v2766 = vor.u32 %v2762, %v2765
      %v2767 = vsel %vm1481, %v2758, %v2766
      %v2768 = vrot.slane %v2766, 4
      %v2770 = vshrl.u32 %v2716, 16
      %v2772 = vrot.slane %v2770, 6
      %v2773 = vshll.u32 %v2716, 16
      %v2775 = vrot.slane %v2773, 7
      %v2776 = vor.u32 %v2772, %v2775
      %v2777 = vsel %vm1481, %v2768, %v2776
      %v2778 = vrot.slane %v2776, 4
      %v2780 = vshrl.u32 %v2717, 16
      %v2782 = vrot.slane %v2780, 6
      %v2783 = vshll.u32 %v2717, 16
      %v2785 = vrot.slane %v2783, 7
      %v2786 = vor.u32 %v2782, %v2785
      %v2787 = vsel %vm1481, %v2778, %v2786
      %v2788 = vrot.slane %v2786, 4
      %v2790 = vshrl.u32 %v2718, 16
      %v2792 = vrot.slane %v2790, 6
      %v2793 = vshll.u32 %v2718, 16
      %v2795 = vrot.slane %v2793, 7
      %v2796 = vor.u32 %v2792, %v2795
      %v2797 = vsel %vm1481, %v2788, %v2796
      %v2798 = vrot.slane %v2796, 4
      %v2800 = vshrl.u32 %v2719, 16
      %v2802 = vrot.slane %v2800, 6
      %v2803 = vshll.u32 %v2719, 16
      %v2805 = vrot.slane %v2803, 7
      %v2806 = vor.u32 %v2802, %v2805
      %v2807 = vsel %vm1481, %v2798, %v2806
      %2816 = vst.msk [vmem:[#allocation2 + $0x34] sm:$0xf] %vm307, %v2737
      %2817 = vst.msk [vmem:[#allocation2 + $0x38] sm:$0xf] %vm307, %v2747
      %2818 = vst.msk [vmem:[#allocation2 + $0x3c] sm:$0xf] %vm307, %v2757
      %2819 = vst.msk [vmem:[#allocation2 + $0x40] sm:$0xf] %vm307, %v2767
      %2820 = vst.msk [vmem:[#allocation2 + $0x44] sm:$0xf] %vm307, %v2777
      %2821 = vst.msk [vmem:[#allocation2 + $0x48] sm:$0xf] %vm307, %v2787
      %2822 = vst.msk [vmem:[#allocation2 + $0x4c] sm:$0xf] %vm307, %v2797
      %2823 = vst.msk [vmem:[#allocation2 + $0x50] sm:$0xf] %vm307, %v2807
      %v2824 = vld [vmem:[%s300 + $0x40] sm:$0xf]
      %v2825 = vld [vmem:[%s300 + $0x44] sm:$0xf]
      %v2826 = vld [vmem:[%s300 + $0x48] sm:$0xf]
      %v2827 = vld [vmem:[%s300 + $0x4c] sm:$0xf]
      %v2828 = vld [vmem:[%s300 + $0x50] sm:$0xf]
      %v2829 = vld [vmem:[%s300 + $0x54] sm:$0xf]
      %v2830 = vld [vmem:[%s300 + $0x58] sm:$0xf]
      %v2831 = vld [vmem:[%s300 + $0x5c] sm:$0xf]
      %v2832 = vld [vmem:[%s300 + $0x60] sm:$0xf]
      %v2833 = vld [vmem:[%s300 + $0x64] sm:$0xf]
      %v2834 = vld [vmem:[%s300 + $0x68] sm:$0xf]
      %v2835 = vld [vmem:[%s300 + $0x6c] sm:$0xf]
      %v2836 = vld [vmem:[%s300 + $0x70] sm:$0xf]
      %v2837 = vld [vmem:[%s300 + $0x74] sm:$0xf]
      %v2838 = vld [vmem:[%s300 + $0x78] sm:$0xf]
      %v2839 = vld [vmem:[%s300 + $0x7c] sm:$0xf]
      %v2840 = vld [vmem:[%s300 + $0x80] sm:$0xf]
      %v2841 = vld [vmem:[%s300 + $0x84] sm:$0xf]
      %v2842 = vld [vmem:[%s2] sm:$0xf]
      %v2843 = vld [vmem:[%s349] sm:$0xf]
      %v2854 = vunpack.c.l.b16 %v2828
      %v2855 = vunpack.c.l.b16 %v2829
      %v2856 = vunpack.c.l.b16 %v2830
      %v2857 = vunpack.c.l.b16 %v2831
      %v2858 = vunpack.c.l.b16 %v2832
      %v2859 = vunpack.c.l.b16 %v2833
      %v2860 = vunpack.c.l.b16 %v2834
      %v2861 = vunpack.c.l.b16 %v2835
      %v2862 = vunpack.c.l.b16 %v2836
      %v2863 = vunpack.c.l.b16 %v2837
      %v2864 = vpack.c.b16 %v2855, %v2854
      %v2865 = vpack.c.b16 %v2857, %v2856
      %v2866 = vpack.c.b16 %v2859, %v2858
      %v2867 = vpack.c.b16 %v2861, %v2860
      %v2868 = vpack.c.b16 %v2863, %v2862
      %v2871 = vunpack.c.l.s4 1983009808
      %v2872 = vunpack.c.0.s8 %v2871
      %v2873 = vlaneseq
      %v2874 = vshrl.u32 %v2873, 7
      %v2875 = vsub.s32 %v2872, %v2874
      %v2876 = vrot.slane %v2843, %v2875
      %v2877 = vcombine.high %v2876, %v2876
      %v2879 = vsel %vm385, %v2864, 0
      %v2882 = vsel %vm385, %v2865, 0
      %v2885 = vsel %vm385, %v2866, 0
      %v2888 = vsel %vm385, %v2867, 0
      %v2891 = vsel %vm385, %v2868, 0
      %v2894 = vsel %vm401, %v2876, 0
      %v2897 = vsel %vm401, %v2877, 0
      %2899 = vmatprep.subr.bf16.mxu0 0
      %2900 = vmatpush1.bf16.msra.mxu0 0
      %2901 = vmatprep.subr.bf16.mxu0 0
      %2902 = vmatpush1.bf16.msra.mxu0 0
      %2903 = vmatprep.subr.bf16.mxu0 0
      %2904 = vmatpush1.bf16.msra.mxu0 0
      %2905 = vmatprep.subr.bf16.mxu0 0
      %2906 = vmatpush1.bf16.msra.mxu0 0
      %2907 = vmatprep.subr.bf16.mxu0 0
      %2908 = vmatpush1.bf16.msra.mxu0 0
      %2909 = vmatprep.subr.bf16.mxu0 0
      %2910 = vmatpush1.bf16.msra.mxu0 0
      %2911 = vmatprep.subr.bf16.mxu0 0
      %2912 = vmatpush1.bf16.msra.mxu0 0
      %2913 = vmatprep.subr.bf16.mxu0 %v2897
      %2914 = vmatpush1.bf16.msra.mxu0 %v2894
      %2915 = vmatprep.subr.bf16.mxu0 0
      %2916 = vmatpush2.bf16.msra.mxu0 0
      %2917 = vmatprep.subr.bf16.mxu0 0
      %2918 = vmatpush2.bf16.msra.mxu0 0
      %2919 = vmatprep.subr.bf16.mxu0 0
      %2920 = vmatpush2.bf16.msra.mxu0 0
      %2921 = vmatprep.subr.bf16.mxu0 0
      %2922 = vmatpush2.bf16.msra.mxu0 0
      %2923 = vmatprep.subr.bf16.mxu0 0
      %2924 = vmatpush2.bf16.msra.mxu0 0
      %2925 = vmatprep.subr.bf16.mxu0 0
      %2926 = vmatpush2.bf16.msra.mxu0 0
      %2927 = vmatprep.subr.bf16.mxu0 0
      %2928 = vmatpush2.bf16.msra.mxu0 0
      %2929 = vmatprep.subr.bf16.mxu0 0
      %2930 = vmatpush2.bf16.msra.mxu0 0
      %2931 = vmatprep.mubr.bf16.mxu0 0
      %2932 = vmatmul.mubr.bf16.gmra.mxu0 %v2879
      %v2933 = vpop.f32.mrf.mxu0
      %v2934 = vadd.f32 0.0, %v2933
      %v2935 = vpop.f32.mrf.mxu0
      %v2936 = vadd.f32 0.0, %v2935
      %v2937 = vpop.f32.mrf.mxu0
      %v2938 = vadd.f32 0.0, %v2937
      %v2939 = vpop.f32.mrf.mxu0
      %v2940 = vadd.f32 0.0, %v2939
      %2941 = vmatprep.mubr.bf16.mxu0 0
      %2942 = vmatmul.mubr.bf16.gmra.mxu0 %v2882
      %v2943 = vpop.f32.mrf.mxu0
      %v2944 = vadd.f32 0.0, %v2943
      %v2945 = vpop.f32.mrf.mxu0
      %v2946 = vadd.f32 0.0, %v2945
      %v2947 = vpop.f32.mrf.mxu0
      %v2948 = vadd.f32 0.0, %v2947
      %v2949 = vpop.f32.mrf.mxu0
      %v2950 = vadd.f32 0.0, %v2949
      %2951 = vmatprep.mubr.bf16.mxu0 0
      %2952 = vmatmul.mubr.bf16.gmra.mxu0 %v2885
      %v2953 = vpop.f32.mrf.mxu0
      %v2954 = vadd.f32 0.0, %v2953
      %v2955 = vpop.f32.mrf.mxu0
      %v2956 = vadd.f32 0.0, %v2955
      %v2957 = vpop.f32.mrf.mxu0
      %v2958 = vadd.f32 0.0, %v2957
      %v2959 = vpop.f32.mrf.mxu0
      %v2960 = vadd.f32 0.0, %v2959
      %2961 = vmatprep.mubr.bf16.mxu0 0
      %2962 = vmatmul.mubr.bf16.gmra.mxu0 %v2888
      %v2963 = vpop.f32.mrf.mxu0
      %v2964 = vadd.f32 0.0, %v2963
      %v2965 = vpop.f32.mrf.mxu0
      %v2966 = vadd.f32 0.0, %v2965
      %v2967 = vpop.f32.mrf.mxu0
      %v2968 = vadd.f32 0.0, %v2967
      %v2969 = vpop.f32.mrf.mxu0
      %v2970 = vadd.f32 0.0, %v2969
      %2971 = vmatprep.mubr.bf16.mxu0 0
      %2972 = vmatmul.mubr.bf16.gmra.mxu0 %v2891
      %v2973 = vpop.f32.mrf.mxu0
      %v2974 = vadd.f32 0.0, %v2973
      %v2975 = vpop.f32.mrf.mxu0
      %v2976 = vadd.f32 0.0, %v2975
      %v2977 = vpop.f32.mrf.mxu0
      %v2978 = vpop.f32.mrf.mxu0
      %2979 = vdwg.mxu0
      %v2984 = vunpack.c.l.b16 %v2824
      %v2985 = vunpack.c.l.b16 %v2825
      %v2986 = vunpack.c.l.b16 %v2826
      %v2987 = vunpack.c.l.b16 %v2827
      %v2988 = vpack.c.b16 %v2985, %v2984
      %v2989 = vpack.c.b16 %v2987, %v2986
      %v2992 = vunpack.c.l.s4 1983009808
      %v2993 = vunpack.c.0.s8 %v2992
      %v2994 = vlaneseq
      %v2995 = vshrl.u32 %v2994, 7
      %v2996 = vsub.s32 %v2993, %v2995
      %v2997 = vrot.slane %v2842, %v2996
      %v2998 = vcombine.high %v2997, %v2997
      %v3000 = vsel %vm385, %v2988, 0
      %v3003 = vsel %vm385, %v2989, 0
      %v3006 = vsel %vm401, %v2997, 0
      %v3009 = vsel %vm401, %v2998, 0
      %3011 = vmatprep.subr.bf16.mxu0 0
      %3012 = vmatpush1.bf16.msra.mxu0 0
      %3013 = vmatprep.subr.bf16.mxu0 0
      %3014 = vmatpush1.bf16.msra.mxu0 0
      %3015 = vmatprep.subr.bf16.mxu0 0
      %3016 = vmatpush1.bf16.msra.mxu0 0
      %3017 = vmatprep.subr.bf16.mxu0 0
      %3018 = vmatpush1.bf16.msra.mxu0 0
      %3019 = vmatprep.subr.bf16.mxu0 0
      %3020 = vmatpush1.bf16.msra.mxu0 0
      %3021 = vmatprep.subr.bf16.mxu0 0
      %3022 = vmatpush1.bf16.msra.mxu0 0
      %3023 = vmatprep.subr.bf16.mxu0 0
      %3024 = vmatpush1.bf16.msra.mxu0 0
      %3025 = vmatprep.subr.bf16.mxu0 %v3009
      %3026 = vmatpush1.bf16.msra.mxu0 %v3006
      %3027 = vmatprep.subr.bf16.mxu0 0
      %3028 = vmatpush2.bf16.msra.mxu0 0
      %3029 = vmatprep.subr.bf16.mxu0 0
      %3030 = vmatpush2.bf16.msra.mxu0 0
      %3031 = vmatprep.subr.bf16.mxu0 0
      %3032 = vmatpush2.bf16.msra.mxu0 0
      %3033 = vmatprep.subr.bf16.mxu0 0
      %3034 = vmatpush2.bf16.msra.mxu0 0
      %3035 = vmatprep.subr.bf16.mxu0 0
      %3036 = vmatpush2.bf16.msra.mxu0 0
      %3037 = vmatprep.subr.bf16.mxu0 0
      %3038 = vmatpush2.bf16.msra.mxu0 0
      %3039 = vmatprep.subr.bf16.mxu0 0
      %3040 = vmatpush2.bf16.msra.mxu0 0
      %3041 = vmatprep.subr.bf16.mxu0 0
      %3042 = vmatpush2.bf16.msra.mxu0 0
      %3043 = vmatprep.mubr.bf16.mxu0 0
      %3044 = vmatmul.mubr.bf16.gmra.mxu0 %v3000
      %v3045 = vpop.f32.mrf.mxu0
      %v3046 = vadd.f32 %v2934, %v3045
      %v3047 = vpop.f32.mrf.mxu0
      %v3048 = vadd.f32 %v2936, %v3047
      %v3049 = vpop.f32.mrf.mxu0
      %v3050 = vadd.f32 %v2938, %v3049
      %v3051 = vpop.f32.mrf.mxu0
      %v3052 = vadd.f32 %v2940, %v3051
      %3053 = vmatprep.mubr.bf16.mxu0 0
      %3054 = vmatmul.mubr.bf16.gmra.mxu0 %v3003
      %v3055 = vpop.f32.mrf.mxu0
      %v3056 = vadd.f32 %v2944, %v3055
      %v3057 = vpop.f32.mrf.mxu0
      %v3058 = vadd.f32 %v2946, %v3057
      %v3059 = vpop.f32.mrf.mxu0
      %v3060 = vadd.f32 %v2948, %v3059
      %v3061 = vpop.f32.mrf.mxu0
      %v3062 = vadd.f32 %v2950, %v3061
      %3063 = vmatprep.mubr.bf16.mxu0 0
      %3064 = vmatmul.mubr.bf16.gmra.mxu0 %v2879
      %v3065 = vpop.f32.mrf.mxu0
      %v3066 = vadd.f32 %v2954, %v3065
      %v3067 = vpop.f32.mrf.mxu0
      %v3068 = vadd.f32 %v2956, %v3067
      %v3069 = vpop.f32.mrf.mxu0
      %v3070 = vadd.f32 %v2958, %v3069
      %v3071 = vpop.f32.mrf.mxu0
      %v3072 = vadd.f32 %v2960, %v3071
      %3073 = vmatprep.mubr.bf16.mxu0 0
      %3074 = vmatmul.mubr.bf16.gmra.mxu0 %v2882
      %v3075 = vpop.f32.mrf.mxu0
      %v3076 = vadd.f32 %v2964, %v3075
      %v3077 = vpop.f32.mrf.mxu0
      %v3078 = vadd.f32 %v2966, %v3077
      %v3079 = vpop.f32.mrf.mxu0
      %v3080 = vadd.f32 %v2968, %v3079
      %v3081 = vpop.f32.mrf.mxu0
      %v3082 = vadd.f32 %v2970, %v3081
      %3083 = vmatprep.mubr.bf16.mxu0 0
      %3084 = vmatmul.mubr.bf16.gmra.mxu0 %v2885
      %v3085 = vpop.f32.mrf.mxu0
      %v3086 = vadd.f32 %v2974, %v3085
      %v3087 = vpop.f32.mrf.mxu0
      %v3088 = vadd.f32 %v2976, %v3087
      %v3089 = vpop.f32.mrf.mxu0
      %v3090 = vpop.f32.mrf.mxu0
      %3091 = vdwg.mxu0
      %v3092 = vld [vmem:[%s601] sm:$0xf]
      %v3097 = vunpack.c.l.b16 %v2838
      %v3098 = vunpack.c.l.b16 %v2839
      %v3099 = vunpack.c.l.b16 %v2840
      %v3100 = vunpack.c.l.b16 %v2841
      %v3101 = vpack.c.b16 %v3098, %v3097
      %v3102 = vpack.c.b16 %v3100, %v3099
      %v3105 = vunpack.c.l.s4 1983009808
      %v3106 = vunpack.c.0.s8 %v3105
      %v3107 = vlaneseq
      %v3108 = vshrl.u32 %v3107, 7
      %v3109 = vsub.s32 %v3106, %v3108
      %v3110 = vrot.slane %v3092, %v3109
      %v3111 = vcombine.high %v3110, %v3110
      %v3113 = vsel %vm385, %v3101, 0
      %v3116 = vsel %vm385, %v3102, 0
      %v3119 = vsel %vm401, %v3110, 0
      %v3122 = vsel %vm401, %v3111, 0
      %3124 = vmatprep.subr.bf16.mxu0 0
      %3125 = vmatpush1.bf16.msra.mxu0 0
      %3126 = vmatprep.subr.bf16.mxu0 0
      %3127 = vmatpush1.bf16.msra.mxu0 0
      %3128 = vmatprep.subr.bf16.mxu0 0
      %3129 = vmatpush1.bf16.msra.mxu0 0
      %3130 = vmatprep.subr.bf16.mxu0 0
      %3131 = vmatpush1.bf16.msra.mxu0 0
      %3132 = vmatprep.subr.bf16.mxu0 0
      %3133 = vmatpush1.bf16.msra.mxu0 0
      %3134 = vmatprep.subr.bf16.mxu0 0
      %3135 = vmatpush1.bf16.msra.mxu0 0
      %3136 = vmatprep.subr.bf16.mxu0 0
      %3137 = vmatpush1.bf16.msra.mxu0 0
      %3138 = vmatprep.subr.bf16.mxu0 %v3122
      %3139 = vmatpush1.bf16.msra.mxu0 %v3119
      %3140 = vmatprep.subr.bf16.mxu0 0
      %3141 = vmatpush2.bf16.msra.mxu0 0
      %3142 = vmatprep.subr.bf16.mxu0 0
      %3143 = vmatpush2.bf16.msra.mxu0 0
      %3144 = vmatprep.subr.bf16.mxu0 0
      %3145 = vmatpush2.bf16.msra.mxu0 0
      %3146 = vmatprep.subr.bf16.mxu0 0
      %3147 = vmatpush2.bf16.msra.mxu0 0
      %3148 = vmatprep.subr.bf16.mxu0 0
      %3149 = vmatpush2.bf16.msra.mxu0 0
      %3150 = vmatprep.subr.bf16.mxu0 0
      %3151 = vmatpush2.bf16.msra.mxu0 0
      %3152 = vmatprep.subr.bf16.mxu0 0
      %3153 = vmatpush2.bf16.msra.mxu0 0
      %3154 = vmatprep.subr.bf16.mxu0 0
      %3155 = vmatpush2.bf16.msra.mxu0 0
      %3156 = vmatprep.mubr.bf16.mxu0 0
      %3157 = vmatmul.mubr.bf16.gmra.mxu0 %v2885
      %v3158 = vpop.f32.mrf.mxu0
      %v3159 = vadd.f32 0.0, %v3158
      %v3160 = vpop.f32.mrf.mxu0
      %v3161 = vadd.f32 0.0, %v3160
      %v3162 = vpop.f32.mrf.mxu0
      %v3163 = vadd.f32 0.0, %v3162
      %v3164 = vpop.f32.mrf.mxu0
      %v3165 = vadd.f32 0.0, %v3164
      %3166 = vmatprep.mubr.bf16.mxu0 0
      %3167 = vmatmul.mubr.bf16.gmra.mxu0 %v2888
      %v3168 = vpop.f32.mrf.mxu0
      %v3169 = vadd.f32 0.0, %v3168
      %v3170 = vpop.f32.mrf.mxu0
      %v3171 = vadd.f32 0.0, %v3170
      %v3172 = vpop.f32.mrf.mxu0
      %v3173 = vadd.f32 0.0, %v3172
      %v3174 = vpop.f32.mrf.mxu0
      %v3175 = vadd.f32 0.0, %v3174
      %3176 = vmatprep.mubr.bf16.mxu0 0
      %3177 = vmatmul.mubr.bf16.gmra.mxu0 %v2891
      %v3178 = vpop.f32.mrf.mxu0
      %v3179 = vadd.f32 0.0, %v3178
      %v3180 = vpop.f32.mrf.mxu0
      %v3181 = vadd.f32 0.0, %v3180
      %v3182 = vpop.f32.mrf.mxu0
      %v3183 = vadd.f32 0.0, %v3182
      %v3184 = vpop.f32.mrf.mxu0
      %v3185 = vadd.f32 0.0, %v3184
      %3186 = vmatprep.mubr.bf16.mxu0 0
      %3187 = vmatmul.mubr.bf16.gmra.mxu0 %v3113
      %v3188 = vpop.f32.mrf.mxu0
      %v3189 = vadd.f32 0.0, %v3188
      %v3190 = vpop.f32.mrf.mxu0
      %v3191 = vadd.f32 0.0, %v3190
      %v3192 = vpop.f32.mrf.mxu0
      %v3193 = vadd.f32 0.0, %v3192
      %v3194 = vpop.f32.mrf.mxu0
      %v3195 = vadd.f32 0.0, %v3194
      %3196 = vmatprep.mubr.bf16.mxu0 0
      %3197 = vmatmul.mubr.bf16.gmra.mxu0 %v3116
      %v3198 = vpop.f32.mrf.mxu0
      %v3199 = vadd.f32 0.0, %v3198
      %v3200 = vpop.f32.mrf.mxu0
      %v3201 = vadd.f32 0.0, %v3200
      %v3202 = vpop.f32.mrf.mxu0
      %v3203 = vpop.f32.mrf.mxu0
      %3204 = vdwg.mxu0
      %v3205 = vadd.f32 %v3046, %v3159
      %v3206 = vadd.f32 %v3048, %v3161
      %v3207 = vadd.f32 %v3050, %v3163
      %v3208 = vadd.f32 %v3052, %v3165
      %v3209 = vadd.f32 %v3056, %v3169
      %v3210 = vadd.f32 %v3058, %v3171
      %v3211 = vadd.f32 %v3060, %v3173
      %v3212 = vadd.f32 %v3062, %v3175
      %v3213 = vadd.f32 %v3066, %v3179
      %v3214 = vadd.f32 %v3068, %v3181
      %v3215 = vadd.f32 %v3070, %v3183
      %v3216 = vadd.f32 %v3072, %v3185
      %v3217 = vadd.f32 %v3076, %v3189
      %v3218 = vadd.f32 %v3078, %v3191
      %v3219 = vadd.f32 %v3080, %v3193
      %v3220 = vadd.f32 %v3082, %v3195
      %v3221 = vadd.f32 %v3086, %v3199
      %v3222 = vadd.f32 %v3088, %v3201
      %v3232 = vrot.slane %v3205, 1
      %v3233 = vrot.slane %v3207, 1
      %v3234 = vsel %vm742, %v3232, %v3233
      %v3235 = vrot.slane %v3209, 1
      %v3236 = vsel %vm742, %v3233, %v3235
      %v3237 = vrot.slane %v3211, 1
      %v3238 = vsel %vm742, %v3235, %v3237
      %v3239 = vrot.slane %v3213, 1
      %v3240 = vsel %vm742, %v3237, %v3239
      %v3241 = vrot.slane %v3215, 1
      %v3242 = vsel %vm742, %v3239, %v3241
      %v3243 = vrot.slane %v3217, 1
      %v3244 = vsel %vm742, %v3241, %v3243
      %v3245 = vrot.slane %v3219, 1
      %v3246 = vsel %vm742, %v3243, %v3245
      %v3247 = vrot.slane %v3221, 1
      %v3248 = vsel %vm742, %v3245, %v3247
      %3249 = vrot.lane.b32.xlu0 %v3234, 64
      %v3250 = vpop.permute.xlu0 %3249
      %3251 = vrot.lane.b32.xlu0 %v3236, 64
      %v3252 = vpop.permute.xlu0 %3251
      %3253 = vrot.lane.b32.xlu0 %v3238, 64
      %v3254 = vpop.permute.xlu0 %3253
      %3255 = vrot.lane.b32.xlu0 %v3240, 64
      %v3256 = vpop.permute.xlu0 %3255
      %3257 = vrot.lane.b32.xlu0 %v3242, 64
      %v3258 = vpop.permute.xlu0 %3257
      %3259 = vrot.lane.b32.xlu0 %v3244, 64
      %v3260 = vpop.permute.xlu0 %3259
      %3261 = vrot.lane.b32.xlu0 %v3246, 64
      %v3262 = vpop.permute.xlu0 %3261
      %3263 = vrot.lane.b32.xlu0 %v3248, 64
      %v3264 = vpop.permute.xlu0 %3263
      %3265 = vrot.lane.b32.xlu0 %v3247, 64
      %v3266 = vpop.permute.xlu0 %3265
      %v3276 = vadd.f32 %v3205, %v3250
      %v3277 = vadd.f32 %v3207, %v3252
      %v3278 = vadd.f32 %v3209, %v3254
      %v3279 = vadd.f32 %v3211, %v3256
      %v3280 = vadd.f32 %v3213, %v3258
      %v3281 = vadd.f32 %v3215, %v3260
      %v3282 = vadd.f32 %v3217, %v3262
      %v3283 = vadd.f32 %v3219, %v3264
      %v3284 = vadd.f32 %v3221, %v3266
      %v3294 = vrot.slane %v3206, 2
      %v3295 = vrot.slane %v3208, 2
      %v3296 = vsel %vm805, %v3294, %v3295
      %v3297 = vrot.slane %v3210, 2
      %v3298 = vsel %vm805, %v3295, %v3297
      %v3299 = vrot.slane %v3212, 2
      %v3300 = vsel %vm805, %v3297, %v3299
      %v3301 = vrot.slane %v3214, 2
      %v3302 = vsel %vm805, %v3299, %v3301
      %v3303 = vrot.slane %v3216, 2
      %v3304 = vsel %vm805, %v3301, %v3303
      %v3305 = vrot.slane %v3218, 2
      %v3306 = vsel %vm805, %v3303, %v3305
      %v3307 = vrot.slane %v3220, 2
      %v3308 = vsel %vm805, %v3305, %v3307
      %v3309 = vrot.slane %v3222, 2
      %v3310 = vsel %vm805, %v3307, %v3309
      %v3320 = vadd.f32 %v3276, %v3296
      %v3321 = vadd.f32 %v3277, %v3298
      %v3322 = vadd.f32 %v3278, %v3300
      %v3323 = vadd.f32 %v3279, %v3302
      %v3324 = vadd.f32 %v3280, %v3304
      %v3325 = vadd.f32 %v3281, %v3306
      %v3326 = vadd.f32 %v3282, %v3308
      %v3327 = vadd.f32 %v3283, %v3310
      %v3328 = vadd.f32 %v3284, %v3309
      %v3329 = vrot.slane %v3208, 3
      %v3330 = vrot.slane %v3210, 3
      %v3331 = vsel %vm841, %v3329, %v3330
      %v3332 = vrot.slane %v3212, 3
      %v3333 = vsel %vm841, %v3330, %v3332
      %v3334 = vrot.slane %v3214, 3
      %v3335 = vsel %vm841, %v3332, %v3334
      %v3336 = vrot.slane %v3216, 3
      %v3337 = vsel %vm841, %v3334, %v3336
      %v3338 = vrot.slane %v3218, 3
      %v3339 = vsel %vm841, %v3336, %v3338
      %v3340 = vrot.slane %v3220, 3
      %v3341 = vsel %vm841, %v3338, %v3340
      %v3342 = vrot.slane %v3222, 3
      %v3343 = vsel %vm841, %v3340, %v3342
      %3344 = vrot.lane.b32.xlu0 %v3329, 64
      %v3345 = vpop.permute.xlu0 %3344
      %3346 = vrot.lane.b32.xlu0 %v3331, 64
      %v3347 = vpop.permute.xlu0 %3346
      %3348 = vrot.lane.b32.xlu0 %v3333, 64
      %v3349 = vpop.permute.xlu0 %3348
      %3350 = vrot.lane.b32.xlu0 %v3335, 64
      %v3351 = vpop.permute.xlu0 %3350
      %3352 = vrot.lane.b32.xlu0 %v3337, 64
      %v3353 = vpop.permute.xlu0 %3352
      %3354 = vrot.lane.b32.xlu0 %v3339, 64
      %v3355 = vpop.permute.xlu0 %3354
      %3356 = vrot.lane.b32.xlu0 %v3341, 64
      %v3357 = vpop.permute.xlu0 %3356
      %3358 = vrot.lane.b32.xlu0 %v3343, 64
      %v3359 = vpop.permute.xlu0 %3358
      %3360 = vrot.lane.b32.xlu0 %v3342, 64
      %v3361 = vpop.permute.xlu0 %3360
      %v3371 = vadd.f32 %v3320, %v3345
      %v3372 = vadd.f32 %v3321, %v3347
      %v3373 = vadd.f32 %v3322, %v3349
      %v3374 = vadd.f32 %v3323, %v3351
      %v3375 = vadd.f32 %v3324, %v3353
      %v3376 = vadd.f32 %v3325, %v3355
      %v3377 = vadd.f32 %v3326, %v3357
      %v3378 = vadd.f32 %v3327, %v3359
      %v3379 = vadd.f32 %v3328, %v3361
      %v3380 = vld [vmem:[%s2 + $0x4] sm:$0xf]
      %v3381 = vld [vmem:[%s349 + $0x4] sm:$0xf]
      %v3384 = vunpack.c.l.s4 1983009808
      %v3385 = vunpack.c.0.s8 %v3384
      %v3386 = vlaneseq
      %v3387 = vshrl.u32 %v3386, 7
      %v3388 = vsub.s32 %v3385, %v3387
      %v3389 = vrot.slane %v3381, %v3388
      %v3390 = vcombine.high %v3389, %v3389
      %v3392 = vsel %vm401, %v3389, 0
      %v3395 = vsel %vm401, %v3390, 0
      %3397 = vmatprep.subr.bf16.mxu0 0
      %3398 = vmatpush1.bf16.msra.mxu0 0
      %3399 = vmatprep.subr.bf16.mxu0 0
      %3400 = vmatpush1.bf16.msra.mxu0 0
      %3401 = vmatprep.subr.bf16.mxu0 0
      %3402 = vmatpush1.bf16.msra.mxu0 0
      %3403 = vmatprep.subr.bf16.mxu0 0
      %3404 = vmatpush1.bf16.msra.mxu0 0
      %3405 = vmatprep.subr.bf16.mxu0 0
      %3406 = vmatpush1.bf16.msra.mxu0 0
      %3407 = vmatprep.subr.bf16.mxu0 0
      %3408 = vmatpush1.bf16.msra.mxu0 0
      %3409 = vmatprep.subr.bf16.mxu0 0
      %3410 = vmatpush1.bf16.msra.mxu0 0
      %3411 = vmatprep.subr.bf16.mxu0 %v3395
      %3412 = vmatpush1.bf16.msra.mxu0 %v3392
      %3413 = vmatprep.subr.bf16.mxu0 0
      %3414 = vmatpush2.bf16.msra.mxu0 0
      %3415 = vmatprep.subr.bf16.mxu0 0
      %3416 = vmatpush2.bf16.msra.mxu0 0
      %3417 = vmatprep.subr.bf16.mxu0 0
      %3418 = vmatpush2.bf16.msra.mxu0 0
      %3419 = vmatprep.subr.bf16.mxu0 0
      %3420 = vmatpush2.bf16.msra.mxu0 0
      %3421 = vmatprep.subr.bf16.mxu0 0
      %3422 = vmatpush2.bf16.msra.mxu0 0
      %3423 = vmatprep.subr.bf16.mxu0 0
      %3424 = vmatpush2.bf16.msra.mxu0 0
      %3425 = vmatprep.subr.bf16.mxu0 0
      %3426 = vmatpush2.bf16.msra.mxu0 0
      %3427 = vmatprep.subr.bf16.mxu0 0
      %3428 = vmatpush2.bf16.msra.mxu0 0
      %3429 = vmatprep.mubr.bf16.mxu0 0
      %3430 = vmatmul.mubr.bf16.gmra.mxu0 %v2879
      %v3431 = vpop.f32.mrf.mxu0
      %v3432 = vpop.f32.mrf.mxu0
      %v3433 = vpop.f32.mrf.mxu0
      %v3434 = vadd.f32 0.0, %v3433
      %v3435 = vpop.f32.mrf.mxu0
      %v3436 = vadd.f32 0.0, %v3435
      %3437 = vmatprep.mubr.bf16.mxu0 0
      %3438 = vmatmul.mubr.bf16.gmra.mxu0 %v2882
      %v3439 = vpop.f32.mrf.mxu0
      %v3440 = vadd.f32 0.0, %v3439
      %v3441 = vpop.f32.mrf.mxu0
      %v3442 = vadd.f32 0.0, %v3441
      %v3443 = vpop.f32.mrf.mxu0
      %v3444 = vadd.f32 0.0, %v3443
      %v3445 = vpop.f32.mrf.mxu0
      %v3446 = vadd.f32 0.0, %v3445
      %3447 = vmatprep.mubr.bf16.mxu0 0
      %3448 = vmatmul.mubr.bf16.gmra.mxu0 %v2885
      %v3449 = vpop.f32.mrf.mxu0
      %v3450 = vadd.f32 0.0, %v3449
      %v3451 = vpop.f32.mrf.mxu0
      %v3452 = vadd.f32 0.0, %v3451
      %v3453 = vpop.f32.mrf.mxu0
      %v3454 = vadd.f32 0.0, %v3453
      %v3455 = vpop.f32.mrf.mxu0
      %v3456 = vadd.f32 0.0, %v3455
      %3457 = vmatprep.mubr.bf16.mxu0 0
      %3458 = vmatmul.mubr.bf16.gmra.mxu0 %v2888
      %v3459 = vpop.f32.mrf.mxu0
      %v3460 = vadd.f32 0.0, %v3459
      %v3461 = vpop.f32.mrf.mxu0
      %v3462 = vadd.f32 0.0, %v3461
      %v3463 = vpop.f32.mrf.mxu0
      %v3464 = vadd.f32 0.0, %v3463
      %v3465 = vpop.f32.mrf.mxu0
      %v3466 = vadd.f32 0.0, %v3465
      %3467 = vmatprep.mubr.bf16.mxu0 0
      %3468 = vmatmul.mubr.bf16.gmra.mxu0 %v2891
      %v3469 = vpop.f32.mrf.mxu0
      %v3470 = vadd.f32 0.0, %v3469
      %v3471 = vpop.f32.mrf.mxu0
      %v3472 = vadd.f32 0.0, %v3471
      %v3473 = vpop.f32.mrf.mxu0
      %v3474 = vadd.f32 0.0, %v3473
      %v3475 = vpop.f32.mrf.mxu0
      %v3476 = vadd.f32 0.0, %v3475
      %3477 = vdwg.mxu0
      %v3480 = vunpack.c.l.s4 1983009808
      %v3481 = vunpack.c.0.s8 %v3480
      %v3482 = vlaneseq
      %v3483 = vshrl.u32 %v3482, 7
      %v3484 = vsub.s32 %v3481, %v3483
      %v3485 = vrot.slane %v3380, %v3484
      %v3486 = vcombine.high %v3485, %v3485
      %v3488 = vsel %vm401, %v3485, 0
      %v3491 = vsel %vm401, %v3486, 0
      %3493 = vmatprep.subr.bf16.mxu0 0
      %3494 = vmatpush1.bf16.msra.mxu0 0
      %3495 = vmatprep.subr.bf16.mxu0 0
      %3496 = vmatpush1.bf16.msra.mxu0 0
      %3497 = vmatprep.subr.bf16.mxu0 0
      %3498 = vmatpush1.bf16.msra.mxu0 0
      %3499 = vmatprep.subr.bf16.mxu0 0
      %3500 = vmatpush1.bf16.msra.mxu0 0
      %3501 = vmatprep.subr.bf16.mxu0 0
      %3502 = vmatpush1.bf16.msra.mxu0 0
      %3503 = vmatprep.subr.bf16.mxu0 0
      %3504 = vmatpush1.bf16.msra.mxu0 0
      %3505 = vmatprep.subr.bf16.mxu0 0
      %3506 = vmatpush1.bf16.msra.mxu0 0
      %3507 = vmatprep.subr.bf16.mxu0 %v3491
      %3508 = vmatpush1.bf16.msra.mxu0 %v3488
      %3509 = vmatprep.subr.bf16.mxu0 0
      %3510 = vmatpush2.bf16.msra.mxu0 0
      %3511 = vmatprep.subr.bf16.mxu0 0
      %3512 = vmatpush2.bf16.msra.mxu0 0
      %3513 = vmatprep.subr.bf16.mxu0 0
      %3514 = vmatpush2.bf16.msra.mxu0 0
      %3515 = vmatprep.subr.bf16.mxu0 0
      %3516 = vmatpush2.bf16.msra.mxu0 0
      %3517 = vmatprep.subr.bf16.mxu0 0
      %3518 = vmatpush2.bf16.msra.mxu0 0
      %3519 = vmatprep.subr.bf16.mxu0 0
      %3520 = vmatpush2.bf16.msra.mxu0 0
      %3521 = vmatprep.subr.bf16.mxu0 0
      %3522 = vmatpush2.bf16.msra.mxu0 0
      %3523 = vmatprep.subr.bf16.mxu0 0
      %3524 = vmatpush2.bf16.msra.mxu0 0
      %3525 = vmatprep.mubr.bf16.mxu0 0
      %3526 = vmatmul.mubr.bf16.gmra.mxu0 %v3000
      %v3527 = vpop.f32.mrf.mxu0
      %v3528 = vpop.f32.mrf.mxu0
      %v3529 = vpop.f32.mrf.mxu0
      %v3530 = vadd.f32 %v3434, %v3529
      %v3531 = vpop.f32.mrf.mxu0
      %v3532 = vadd.f32 %v3436, %v3531
      %3533 = vmatprep.mubr.bf16.mxu0 0
      %3534 = vmatmul.mubr.bf16.gmra.mxu0 %v3003
      %v3535 = vpop.f32.mrf.mxu0
      %v3536 = vadd.f32 %v3440, %v3535
      %v3537 = vpop.f32.mrf.mxu0
      %v3538 = vadd.f32 %v3442, %v3537
      %v3539 = vpop.f32.mrf.mxu0
      %v3540 = vadd.f32 %v3444, %v3539
      %v3541 = vpop.f32.mrf.mxu0
      %v3542 = vadd.f32 %v3446, %v3541
      %3543 = vmatprep.mubr.bf16.mxu0 0
      %3544 = vmatmul.mubr.bf16.gmra.mxu0 %v2879
      %v3545 = vpop.f32.mrf.mxu0
      %v3546 = vadd.f32 %v3450, %v3545
      %v3547 = vpop.f32.mrf.mxu0
      %v3548 = vadd.f32 %v3452, %v3547
      %v3549 = vpop.f32.mrf.mxu0
      %v3550 = vadd.f32 %v3454, %v3549
      %v3551 = vpop.f32.mrf.mxu0
      %v3552 = vadd.f32 %v3456, %v3551
      %3553 = vmatprep.mubr.bf16.mxu0 0
      %3554 = vmatmul.mubr.bf16.gmra.mxu0 %v2882
      %v3555 = vpop.f32.mrf.mxu0
      %v3556 = vadd.f32 %v3460, %v3555
      %v3557 = vpop.f32.mrf.mxu0
      %v3558 = vadd.f32 %v3462, %v3557
      %v3559 = vpop.f32.mrf.mxu0
      %v3560 = vadd.f32 %v3464, %v3559
      %v3561 = vpop.f32.mrf.mxu0
      %v3562 = vadd.f32 %v3466, %v3561
      %3563 = vmatprep.mubr.bf16.mxu0 0
      %3564 = vmatmul.mubr.bf16.gmra.mxu0 %v2885
      %v3565 = vpop.f32.mrf.mxu0
      %v3566 = vadd.f32 %v3470, %v3565
      %v3567 = vpop.f32.mrf.mxu0
      %v3568 = vadd.f32 %v3472, %v3567
      %v3569 = vpop.f32.mrf.mxu0
      %v3570 = vadd.f32 %v3474, %v3569
      %v3571 = vpop.f32.mrf.mxu0
      %v3572 = vadd.f32 %v3476, %v3571
      %3573 = vdwg.mxu0
      %v3574 = vld [vmem:[%s601 + $0x4] sm:$0xf]
      %v3577 = vunpack.c.l.s4 1983009808
      %v3578 = vunpack.c.0.s8 %v3577
      %v3579 = vlaneseq
      %v3580 = vshrl.u32 %v3579, 7
      %v3581 = vsub.s32 %v3578, %v3580
      %v3582 = vrot.slane %v3574, %v3581
      %v3583 = vcombine.high %v3582, %v3582
      %v3585 = vsel %vm401, %v3582, 0
      %v3588 = vsel %vm401, %v3583, 0
      %3590 = vmatprep.subr.bf16.mxu0 0
      %3591 = vmatpush1.bf16.msra.mxu0 0
      %3592 = vmatprep.subr.bf16.mxu0 0
      %3593 = vmatpush1.bf16.msra.mxu0 0
      %3594 = vmatprep.subr.bf16.mxu0 0
      %3595 = vmatpush1.bf16.msra.mxu0 0
      %3596 = vmatprep.subr.bf16.mxu0 0
      %3597 = vmatpush1.bf16.msra.mxu0 0
      %3598 = vmatprep.subr.bf16.mxu0 0
      %3599 = vmatpush1.bf16.msra.mxu0 0
      %3600 = vmatprep.subr.bf16.mxu0 0
      %3601 = vmatpush1.bf16.msra.mxu0 0
      %3602 = vmatprep.subr.bf16.mxu0 0
      %3603 = vmatpush1.bf16.msra.mxu0 0
      %3604 = vmatprep.subr.bf16.mxu0 %v3588
      %3605 = vmatpush1.bf16.msra.mxu0 %v3585
      %3606 = vmatprep.subr.bf16.mxu0 0
      %3607 = vmatpush2.bf16.msra.mxu0 0
      %3608 = vmatprep.subr.bf16.mxu0 0
      %3609 = vmatpush2.bf16.msra.mxu0 0
      %3610 = vmatprep.subr.bf16.mxu0 0
      %3611 = vmatpush2.bf16.msra.mxu0 0
      %3612 = vmatprep.subr.bf16.mxu0 0
      %3613 = vmatpush2.bf16.msra.mxu0 0
      %3614 = vmatprep.subr.bf16.mxu0 0
      %3615 = vmatpush2.bf16.msra.mxu0 0
      %3616 = vmatprep.subr.bf16.mxu0 0
      %3617 = vmatpush2.bf16.msra.mxu0 0
      %3618 = vmatprep.subr.bf16.mxu0 0
      %3619 = vmatpush2.bf16.msra.mxu0 0
      %3620 = vmatprep.subr.bf16.mxu0 0
      %3621 = vmatpush2.bf16.msra.mxu0 0
      %3622 = vmatprep.mubr.bf16.mxu0 0
      %3623 = vmatmul.mubr.bf16.gmra.mxu0 %v2885
      %v3624 = vpop.f32.mrf.mxu0
      %v3625 = vpop.f32.mrf.mxu0
      %v3626 = vpop.f32.mrf.mxu0
      %v3627 = vadd.f32 0.0, %v3626
      %v3628 = vpop.f32.mrf.mxu0
      %v3629 = vadd.f32 0.0, %v3628
      %3630 = vmatprep.mubr.bf16.mxu0 0
      %3631 = vmatmul.mubr.bf16.gmra.mxu0 %v2888
      %v3632 = vpop.f32.mrf.mxu0
      %v3633 = vadd.f32 0.0, %v3632
      %v3634 = vpop.f32.mrf.mxu0
      %v3635 = vadd.f32 0.0, %v3634
      %v3636 = vpop.f32.mrf.mxu0
      %v3637 = vadd.f32 0.0, %v3636
      %v3638 = vpop.f32.mrf.mxu0
      %v3639 = vadd.f32 0.0, %v3638
      %3640 = vmatprep.mubr.bf16.mxu0 0
      %3641 = vmatmul.mubr.bf16.gmra.mxu0 %v2891
      %v3642 = vpop.f32.mrf.mxu0
      %v3643 = vadd.f32 0.0, %v3642
      %v3644 = vpop.f32.mrf.mxu0
      %v3645 = vadd.f32 0.0, %v3644
      %v3646 = vpop.f32.mrf.mxu0
      %v3647 = vadd.f32 0.0, %v3646
      %v3648 = vpop.f32.mrf.mxu0
      %v3649 = vadd.f32 0.0, %v3648
      %3650 = vmatprep.mubr.bf16.mxu0 0
      %3651 = vmatmul.mubr.bf16.gmra.mxu0 %v3113
      %v3652 = vpop.f32.mrf.mxu0
      %v3653 = vadd.f32 0.0, %v3652
      %v3654 = vpop.f32.mrf.mxu0
      %v3655 = vadd.f32 0.0, %v3654
      %v3656 = vpop.f32.mrf.mxu0
      %v3657 = vadd.f32 0.0, %v3656
      %v3658 = vpop.f32.mrf.mxu0
      %v3659 = vadd.f32 0.0, %v3658
      %3660 = vmatprep.mubr.bf16.mxu0 0
      %3661 = vmatmul.mubr.bf16.gmra.mxu0 %v3116
      %v3662 = vpop.f32.mrf.mxu0
      %v3663 = vadd.f32 0.0, %v3662
      %v3664 = vpop.f32.mrf.mxu0
      %v3665 = vadd.f32 0.0, %v3664
      %v3666 = vpop.f32.mrf.mxu0
      %v3667 = vadd.f32 0.0, %v3666
      %v3668 = vpop.f32.mrf.mxu0
      %v3669 = vadd.f32 0.0, %v3668
      %3670 = vdwg.mxu0
      %v3671 = vadd.f32 %v3530, %v3627
      %v3672 = vadd.f32 %v3532, %v3629
      %v3673 = vadd.f32 %v3536, %v3633
      %v3674 = vadd.f32 %v3538, %v3635
      %v3675 = vadd.f32 %v3540, %v3637
      %v3676 = vadd.f32 %v3542, %v3639
      %v3677 = vadd.f32 %v3546, %v3643
      %v3678 = vadd.f32 %v3548, %v3645
      %v3679 = vadd.f32 %v3550, %v3647
      %v3680 = vadd.f32 %v3552, %v3649
      %v3681 = vadd.f32 %v3556, %v3653
      %v3682 = vadd.f32 %v3558, %v3655
      %v3683 = vadd.f32 %v3560, %v3657
      %v3684 = vadd.f32 %v3562, %v3659
      %v3685 = vadd.f32 %v3566, %v3663
      %v3686 = vadd.f32 %v3568, %v3665
      %v3687 = vadd.f32 %v3570, %v3667
      %v3688 = vadd.f32 %v3572, %v3669
      %v3698 = vrot.slane %v3671, 4
      %v3699 = vrot.slane %v3673, 4
      %v3700 = vsel %vm1211, %v3698, %v3699
      %v3701 = vrot.slane %v3675, 4
      %v3702 = vsel %vm1211, %v3699, %v3701
      %v3703 = vrot.slane %v3677, 4
      %v3704 = vsel %vm1211, %v3701, %v3703
      %v3705 = vrot.slane %v3679, 4
      %v3706 = vsel %vm1211, %v3703, %v3705
      %v3707 = vrot.slane %v3681, 4
      %v3708 = vsel %vm1211, %v3705, %v3707
      %v3709 = vrot.slane %v3683, 4
      %v3710 = vsel %vm1211, %v3707, %v3709
      %v3711 = vrot.slane %v3685, 4
      %v3712 = vsel %vm1211, %v3709, %v3711
      %v3713 = vrot.slane %v3687, 4
      %v3714 = vsel %vm1211, %v3711, %v3713
      %v3724 = vadd.f32 %v3371, %v3698
      %v3725 = vadd.f32 %v3372, %v3700
      %v3726 = vadd.f32 %v3373, %v3702
      %v3727 = vadd.f32 %v3374, %v3704
      %v3728 = vadd.f32 %v3375, %v3706
      %v3729 = vadd.f32 %v3376, %v3708
      %v3730 = vadd.f32 %v3377, %v3710
      %v3731 = vadd.f32 %v3378, %v3712
      %v3732 = vadd.f32 %v3379, %v3714
      %v3733 = vrot.slane %v3671, 5
      %v3734 = vrot.slane %v3673, 5
      %v3735 = vsel %vm1247, %v3733, %v3734
      %v3736 = vrot.slane %v3675, 5
      %v3737 = vsel %vm1247, %v3734, %v3736
      %v3738 = vrot.slane %v3677, 5
      %v3739 = vsel %vm1247, %v3736, %v3738
      %v3740 = vrot.slane %v3679, 5
      %v3741 = vsel %vm1247, %v3738, %v3740
      %v3742 = vrot.slane %v3681, 5
      %v3743 = vsel %vm1247, %v3740, %v3742
      %v3744 = vrot.slane %v3683, 5
      %v3745 = vsel %vm1247, %v3742, %v3744
      %v3746 = vrot.slane %v3685, 5
      %v3747 = vsel %vm1247, %v3744, %v3746
      %v3748 = vrot.slane %v3687, 5
      %v3749 = vsel %vm1247, %v3746, %v3748
      %3750 = vrot.lane.b32.xlu0 %v3733, 64
      %v3751 = vpop.permute.xlu0 %3750
      %3752 = vrot.lane.b32.xlu0 %v3735, 64
      %v3753 = vpop.permute.xlu0 %3752
      %3754 = vrot.lane.b32.xlu0 %v3737, 64
      %v3755 = vpop.permute.xlu0 %3754
      %3756 = vrot.lane.b32.xlu0 %v3739, 64
      %v3757 = vpop.permute.xlu0 %3756
      %3758 = vrot.lane.b32.xlu0 %v3741, 64
      %v3759 = vpop.permute.xlu0 %3758
      %3760 = vrot.lane.b32.xlu0 %v3743, 64
      %v3761 = vpop.permute.xlu0 %3760
      %3762 = vrot.lane.b32.xlu0 %v3745, 64
      %v3763 = vpop.permute.xlu0 %3762
      %3764 = vrot.lane.b32.xlu0 %v3747, 64
      %v3765 = vpop.permute.xlu0 %3764
      %3766 = vrot.lane.b32.xlu0 %v3749, 64
      %v3767 = vpop.permute.xlu0 %3766
      %v3777 = vadd.f32 %v3724, %v3751
      %v3778 = vadd.f32 %v3725, %v3753
      %v3779 = vadd.f32 %v3726, %v3755
      %v3780 = vadd.f32 %v3727, %v3757
      %v3781 = vadd.f32 %v3728, %v3759
      %v3782 = vadd.f32 %v3729, %v3761
      %v3783 = vadd.f32 %v3730, %v3763
      %v3784 = vadd.f32 %v3731, %v3765
      %v3785 = vadd.f32 %v3732, %v3767
      %v3795 = vrot.slane %v3672, 6
      %v3796 = vrot.slane %v3674, 6
      %v3797 = vsel %vm401, %v3795, %v3796
      %v3798 = vrot.slane %v3676, 6
      %v3799 = vsel %vm401, %v3796, %v3798
      %v3800 = vrot.slane %v3678, 6
      %v3801 = vsel %vm401, %v3798, %v3800
      %v3802 = vrot.slane %v3680, 6
      %v3803 = vsel %vm401, %v3800, %v3802
      %v3804 = vrot.slane %v3682, 6
      %v3805 = vsel %vm401, %v3802, %v3804
      %v3806 = vrot.slane %v3684, 6
      %v3807 = vsel %vm401, %v3804, %v3806
      %v3808 = vrot.slane %v3686, 6
      %v3809 = vsel %vm401, %v3806, %v3808
      %v3810 = vrot.slane %v3688, 6
      %v3811 = vsel %vm401, %v3808, %v3810
      %v3821 = vadd.f32 %v3777, %v3795
      %v3822 = vadd.f32 %v3778, %v3797
      %v3823 = vadd.f32 %v3779, %v3799
      %v3824 = vadd.f32 %v3780, %v3801
      %v3825 = vadd.f32 %v3781, %v3803
      %v3826 = vadd.f32 %v3782, %v3805
      %v3827 = vadd.f32 %v3783, %v3807
      %v3828 = vadd.f32 %v3784, %v3809
      %v3829 = vadd.f32 %v3785, %v3811
      %v3830 = vadd.f32 %v3821, %v1349
      %v3831 = vadd.f32 %v3822, %v1349
      %v3832 = vadd.f32 %v3823, %v1349
      %v3833 = vadd.f32 %v3824, %v1349
      %v3834 = vadd.f32 %v3825, %v1349
      %v3835 = vadd.f32 %v3826, %v1349
      %v3836 = vadd.f32 %v3827, %v1349
      %v3837 = vadd.f32 %v3828, %v1349
      %v3838 = vadd.f32 %v3829, %v1349
      %v3839 = vmul.f32 %v3830, 0.01
      %v3840 = vmul.f32 %v3831, 0.01
      %v3841 = vmul.f32 %v3832, 0.01
      %v3842 = vmul.f32 %v3833, 0.01
      %v3843 = vmul.f32 %v3834, 0.01
      %v3844 = vmul.f32 %v3835, 0.01
      %v3845 = vmul.f32 %v3836, 0.01
      %v3846 = vmul.f32 %v3837, 0.01
      %v3847 = vmul.f32 %v3838, 0.01
      %v3848 = vmax.f32 %v3830, %v3839
      %v3849 = vmax.f32 %v3831, %v3840
      %v3850 = vmax.f32 %v3832, %v3841
      %v3851 = vmax.f32 %v3833, %v3842
      %v3852 = vmax.f32 %v3834, %v3843
      %v3853 = vmax.f32 %v3835, %v3844
      %v3854 = vmax.f32 %v3836, %v3845
      %v3855 = vmax.f32 %v3837, %v3846
      %v3856 = vmax.f32 %v3838, %v3847
      %v3857 = vld [vmem:[%s1 + $0x80] sm:$0xff]
      %v3858 = vld [vmem:[%s1 + $0x88] sm:$0xff]
      %v3859 = vld [vmem:[%s1 + $0x90] sm:$0xff]
      %v3860 = vld [vmem:[%s1 + $0x98] sm:$0xff]
      %v3861 = vld [vmem:[%s1 + $0xa0] sm:$0xff]
      %v3862 = vld [vmem:[%s1 + $0xa8] sm:$0xff]
      %v3863 = vld [vmem:[%s1 + $0xb0] sm:$0xff]
      %v3864 = vld [vmem:[%s1 + $0xb8] sm:$0xff]
      %3866 = vset.pattern.permute.xlu0 0
      %3867 = vperm.xlu0 %3866, %v3857
      %v3868 = vpop.permute.xlu0 %3867
      %3870 = vset.pattern.permute.xlu0 0
      %3871 = vperm.xlu0 %3870, %v3858
      %v3872 = vpop.permute.xlu0 %3871
      %3874 = vset.pattern.permute.xlu0 0
      %3875 = vperm.xlu0 %3874, %v3859
      %v3876 = vpop.permute.xlu0 %3875
      %3878 = vset.pattern.permute.xlu0 0
      %3879 = vperm.xlu0 %3878, %v3860
      %v3880 = vpop.permute.xlu0 %3879
      %3882 = vset.pattern.permute.xlu0 0
      %3883 = vperm.xlu0 %3882, %v3861
      %v3884 = vpop.permute.xlu0 %3883
      %3886 = vset.pattern.permute.xlu0 0
      %3887 = vperm.xlu0 %3886, %v3862
      %v3888 = vpop.permute.xlu0 %3887
      %3890 = vset.pattern.permute.xlu0 0
      %3891 = vperm.xlu0 %3890, %v3863
      %v3892 = vpop.permute.xlu0 %3891
      %3894 = vset.pattern.permute.xlu0 0
      %3895 = vperm.xlu0 %3894, %v3864
      %v3896 = vpop.permute.xlu0 %3895
      %v3897 = vrot.slane %v3868, 3
      %v3898 = vrot.slane %v3872, 3
      %v3899 = vsel %vm841, %v3897, %v3898
      %v3900 = vrot.slane %v3876, 3
      %v3901 = vsel %vm841, %v3898, %v3900
      %v3902 = vrot.slane %v3880, 3
      %v3903 = vsel %vm841, %v3900, %v3902
      %v3904 = vrot.slane %v3884, 3
      %v3905 = vsel %vm841, %v3902, %v3904
      %v3906 = vrot.slane %v3888, 3
      %v3907 = vsel %vm841, %v3904, %v3906
      %v3908 = vrot.slane %v3892, 3
      %v3909 = vsel %vm841, %v3906, %v3908
      %v3910 = vrot.slane %v3896, 3
      %v3911 = vsel %vm841, %v3908, %v3910
      %v3921 = vmul.f32 %v3848, %v3897
      %v3922 = vmul.f32 %v3849, %v3899
      %v3923 = vmul.f32 %v3850, %v3901
      %v3924 = vmul.f32 %v3851, %v3903
      %v3925 = vmul.f32 %v3852, %v3905
      %v3926 = vmul.f32 %v3853, %v3907
      %v3927 = vmul.f32 %v3854, %v3909
      %v3928 = vmul.f32 %v3855, %v3911
      %v3929 = vmul.f32 %v3856, %v3910
      %v3930 = vpack.c.bf16 %v3922, %v3921
      %v3931 = vpack.c.bf16 %v3924, %v3923
      %v3932 = vpack.c.bf16 %v3926, %v3925
      %v3933 = vpack.c.bf16 %v3928, %v3927
      %v3934 = vpack.c.bf16 %v3929, %v3929
      %v3940 = vunpack.c.l.b16 %v3930
      %v3941 = vunpack.c.h.b16 %v3930
      %v3942 = vunpack.c.l.b16 %v3931
      %v3943 = vunpack.c.h.b16 %v3931
      %v3944 = vunpack.c.l.b16 %v3932
      %v3945 = vunpack.c.h.b16 %v3932
      %v3946 = vunpack.c.l.b16 %v3933
      %v3947 = vunpack.c.h.b16 %v3933
      %v3948 = vunpack.c.l.b16 %v3934
      %v3949 = vpack.c.b16 %v3940, %v3940
      %v3950 = vpack.c.b16 %v3941, %v3941
      %v3951 = vpack.c.b16 %v3942, %v3942
      %v3952 = vpack.c.b16 %v3943, %v3943
      %v3953 = vpack.c.b16 %v3944, %v3944
      %v3954 = vpack.c.b16 %v3945, %v3945
      %v3955 = vpack.c.b16 %v3946, %v3946
      %v3956 = vpack.c.b16 %v3947, %v3947
      %v3957 = vpack.c.b16 %v3948, %v3948
      %v3959 = vshrl.u32 %v3949, 16
      %v3961 = vrot.slane %v3959, 6
      %v3962 = vshll.u32 %v3949, 16
      %v3964 = vrot.slane %v3962, 7
      %v3965 = vor.u32 %v3961, %v3964
      %v3966 = vrot.slane %v3965, 4
      %v3968 = vshrl.u32 %v3950, 16
      %v3970 = vrot.slane %v3968, 6
      %v3971 = vshll.u32 %v3950, 16
      %v3973 = vrot.slane %v3971, 7
      %v3974 = vor.u32 %v3970, %v3973
      %v3975 = vsel %vm1481, %v3966, %v3974
      %v3976 = vrot.slane %v3974, 4
      %v3978 = vshrl.u32 %v3951, 16
      %v3980 = vrot.slane %v3978, 6
      %v3981 = vshll.u32 %v3951, 16
      %v3983 = vrot.slane %v3981, 7
      %v3984 = vor.u32 %v3980, %v3983
      %v3985 = vsel %vm1481, %v3976, %v3984
      %v3986 = vrot.slane %v3984, 4
      %v3988 = vshrl.u32 %v3952, 16
      %v3990 = vrot.slane %v3988, 6
      %v3991 = vshll.u32 %v3952, 16
      %v3993 = vrot.slane %v3991, 7
      %v3994 = vor.u32 %v3990, %v3993
      %v3995 = vsel %vm1481, %v3986, %v3994
      %v3996 = vrot.slane %v3994, 4
      %v3998 = vshrl.u32 %v3953, 16
      %v4000 = vrot.slane %v3998, 6
      %v4001 = vshll.u32 %v3953, 16
      %v4003 = vrot.slane %v4001, 7
      %v4004 = vor.u32 %v4000, %v4003
      %v4005 = vsel %vm1481, %v3996, %v4004
      %v4006 = vrot.slane %v4004, 4
      %v4008 = vshrl.u32 %v3954, 16
      %v4010 = vrot.slane %v4008, 6
      %v4011 = vshll.u32 %v3954, 16
      %v4013 = vrot.slane %v4011, 7
      %v4014 = vor.u32 %v4010, %v4013
      %v4015 = vsel %vm1481, %v4006, %v4014
      %v4016 = vrot.slane %v4014, 4
      %v4018 = vshrl.u32 %v3955, 16
      %v4020 = vrot.slane %v4018, 6
      %v4021 = vshll.u32 %v3955, 16
      %v4023 = vrot.slane %v4021, 7
      %v4024 = vor.u32 %v4020, %v4023
      %v4025 = vsel %vm1481, %v4016, %v4024
      %v4026 = vrot.slane %v4024, 4
      %v4028 = vshrl.u32 %v3956, 16
      %v4030 = vrot.slane %v4028, 6
      %v4031 = vshll.u32 %v3956, 16
      %v4033 = vrot.slane %v4031, 7
      %v4034 = vor.u32 %v4030, %v4033
      %v4035 = vsel %vm1481, %v4026, %v4034
      %v4036 = vrot.slane %v4034, 4
      %v4038 = vshrl.u32 %v3957, 16
      %v4040 = vrot.slane %v4038, 6
      %v4041 = vshll.u32 %v3957, 16
      %v4043 = vrot.slane %v4041, 7
      %v4044 = vor.u32 %v4040, %v4043
      %v4045 = vsel %vm1481, %v4036, %v4044
      %4054 = vst.msk [vmem:[#allocation2 + $0x54] sm:$0xf] %vm307, %v3975
      %4055 = vst.msk [vmem:[#allocation2 + $0x58] sm:$0xf] %vm307, %v3985
      %4056 = vst.msk [vmem:[#allocation2 + $0x5c] sm:$0xf] %vm307, %v3995
      %4057 = vst.msk [vmem:[#allocation2 + $0x60] sm:$0xf] %vm307, %v4005
      %4058 = vst.msk [vmem:[#allocation2 + $0x64] sm:$0xf] %vm307, %v4015
      %4059 = vst.msk [vmem:[#allocation2 + $0x68] sm:$0xf] %vm307, %v4025
      %4060 = vst.msk [vmem:[#allocation2 + $0x6c] sm:$0xf] %vm307, %v4035
      %4061 = vst.msk [vmem:[#allocation2 + $0x70] sm:$0xf] %vm307, %v4045
      %v4062 = vld [vmem:[%s300 + $0x60] sm:$0xf]
      %v4063 = vld [vmem:[%s300 + $0x64] sm:$0xf]
      %v4064 = vld [vmem:[%s300 + $0x68] sm:$0xf]
      %v4065 = vld [vmem:[%s300 + $0x6c] sm:$0xf]
      %v4066 = vld [vmem:[%s300 + $0x70] sm:$0xf]
      %v4067 = vld [vmem:[%s300 + $0x74] sm:$0xf]
      %v4068 = vld [vmem:[%s300 + $0x78] sm:$0xf]
      %v4069 = vld [vmem:[%s300 + $0x7c] sm:$0xf]
      %v4070 = vld [vmem:[%s300 + $0x80] sm:$0xf]
      %v4071 = vld [vmem:[%s300 + $0x84] sm:$0xf]
      %v4072 = vld [vmem:[%s300 + $0x88] sm:$0xf]
      %v4073 = vld [vmem:[%s300 + $0x8c] sm:$0xf]
      %v4074 = vld [vmem:[%s300 + $0x90] sm:$0xf]
      %v4075 = vld [vmem:[%s300 + $0x94] sm:$0xf]
      %v4076 = vld [vmem:[%s300 + $0x98] sm:$0xf]
      %v4077 = vld [vmem:[%s300 + $0x9c] sm:$0xf]
      %v4078 = vld [vmem:[%s300 + $0xa0] sm:$0xf]
      %v4079 = vld [vmem:[%s300 + $0xa4] sm:$0xf]
      %v4080 = vld [vmem:[%s2] sm:$0xf]
      %v4081 = vld [vmem:[%s349] sm:$0xf]
      %v4092 = vunpack.c.l.b16 %v4066
      %v4093 = vunpack.c.l.b16 %v4067
      %v4094 = vunpack.c.l.b16 %v4068
      %v4095 = vunpack.c.l.b16 %v4069
      %v4096 = vunpack.c.l.b16 %v4070
      %v4097 = vunpack.c.l.b16 %v4071
      %v4098 = vunpack.c.l.b16 %v4072
      %v4099 = vunpack.c.l.b16 %v4073
      %v4100 = vunpack.c.l.b16 %v4074
      %v4101 = vunpack.c.l.b16 %v4075
      %v4102 = vpack.c.b16 %v4093, %v4092
      %v4103 = vpack.c.b16 %v4095, %v4094
      %v4104 = vpack.c.b16 %v4097, %v4096
      %v4105 = vpack.c.b16 %v4099, %v4098
      %v4106 = vpack.c.b16 %v4101, %v4100
      %v4109 = vunpack.c.l.s4 1983009808
      %v4110 = vunpack.c.0.s8 %v4109
      %v4111 = vlaneseq
      %v4112 = vshrl.u32 %v4111, 7
      %v4113 = vsub.s32 %v4110, %v4112
      %v4114 = vrot.slane %v4081, %v4113
      %v4115 = vcombine.high %v4114, %v4114
      %v4117 = vsel %vm385, %v4102, 0
      %v4120 = vsel %vm385, %v4103, 0
      %v4123 = vsel %vm385, %v4104, 0
      %v4126 = vsel %vm385, %v4105, 0
      %v4129 = vsel %vm385, %v4106, 0
      %v4132 = vsel %vm401, %v4114, 0
      %v4135 = vsel %vm401, %v4115, 0
      %4137 = vmatprep.subr.bf16.mxu0 0
      %4138 = vmatpush1.bf16.msra.mxu0 0
      %4139 = vmatprep.subr.bf16.mxu0 0
      %4140 = vmatpush1.bf16.msra.mxu0 0
      %4141 = vmatprep.subr.bf16.mxu0 0
      %4142 = vmatpush1.bf16.msra.mxu0 0
      %4143 = vmatprep.subr.bf16.mxu0 0
      %4144 = vmatpush1.bf16.msra.mxu0 0
      %4145 = vmatprep.subr.bf16.mxu0 0
      %4146 = vmatpush1.bf16.msra.mxu0 0
      %4147 = vmatprep.subr.bf16.mxu0 0
      %4148 = vmatpush1.bf16.msra.mxu0 0
      %4149 = vmatprep.subr.bf16.mxu0 0
      %4150 = vmatpush1.bf16.msra.mxu0 0
      %4151 = vmatprep.subr.bf16.mxu0 %v4135
      %4152 = vmatpush1.bf16.msra.mxu0 %v4132
      %4153 = vmatprep.subr.bf16.mxu0 0
      %4154 = vmatpush2.bf16.msra.mxu0 0
      %4155 = vmatprep.subr.bf16.mxu0 0
      %4156 = vmatpush2.bf16.msra.mxu0 0
      %4157 = vmatprep.subr.bf16.mxu0 0
      %4158 = vmatpush2.bf16.msra.mxu0 0
      %4159 = vmatprep.subr.bf16.mxu0 0
      %4160 = vmatpush2.bf16.msra.mxu0 0
      %4161 = vmatprep.subr.bf16.mxu0 0
      %4162 = vmatpush2.bf16.msra.mxu0 0
      %4163 = vmatprep.subr.bf16.mxu0 0
      %4164 = vmatpush2.bf16.msra.mxu0 0
      %4165 = vmatprep.subr.bf16.mxu0 0
      %4166 = vmatpush2.bf16.msra.mxu0 0
      %4167 = vmatprep.subr.bf16.mxu0 0
      %4168 = vmatpush2.bf16.msra.mxu0 0
      %4169 = vmatprep.mubr.bf16.mxu0 0
      %4170 = vmatmul.mubr.bf16.gmra.mxu0 %v4117
      %v4171 = vpop.f32.mrf.mxu0
      %v4172 = vadd.f32 0.0, %v4171
      %v4173 = vpop.f32.mrf.mxu0
      %v4174 = vadd.f32 0.0, %v4173
      %v4175 = vpop.f32.mrf.mxu0
      %v4176 = vadd.f32 0.0, %v4175
      %v4177 = vpop.f32.mrf.mxu0
      %v4178 = vadd.f32 0.0, %v4177
      %4179 = vmatprep.mubr.bf16.mxu0 0
      %4180 = vmatmul.mubr.bf16.gmra.mxu0 %v4120
      %v4181 = vpop.f32.mrf.mxu0
      %v4182 = vadd.f32 0.0, %v4181
      %v4183 = vpop.f32.mrf.mxu0
      %v4184 = vadd.f32 0.0, %v4183
      %v4185 = vpop.f32.mrf.mxu0
      %v4186 = vadd.f32 0.0, %v4185
      %v4187 = vpop.f32.mrf.mxu0
      %v4188 = vadd.f32 0.0, %v4187
      %4189 = vmatprep.mubr.bf16.mxu0 0
      %4190 = vmatmul.mubr.bf16.gmra.mxu0 %v4123
      %v4191 = vpop.f32.mrf.mxu0
      %v4192 = vadd.f32 0.0, %v4191
      %v4193 = vpop.f32.mrf.mxu0
      %v4194 = vadd.f32 0.0, %v4193
      %v4195 = vpop.f32.mrf.mxu0
      %v4196 = vadd.f32 0.0, %v4195
      %v4197 = vpop.f32.mrf.mxu0
      %v4198 = vadd.f32 0.0, %v4197
      %4199 = vmatprep.mubr.bf16.mxu0 0
      %4200 = vmatmul.mubr.bf16.gmra.mxu0 %v4126
      %v4201 = vpop.f32.mrf.mxu0
      %v4202 = vadd.f32 0.0, %v4201
      %v4203 = vpop.f32.mrf.mxu0
      %v4204 = vadd.f32 0.0, %v4203
      %v4205 = vpop.f32.mrf.mxu0
      %v4206 = vadd.f32 0.0, %v4205
      %v4207 = vpop.f32.mrf.mxu0
      %v4208 = vadd.f32 0.0, %v4207
      %4209 = vmatprep.mubr.bf16.mxu0 0
      %4210 = vmatmul.mubr.bf16.gmra.mxu0 %v4129
      %v4211 = vpop.f32.mrf.mxu0
      %v4212 = vadd.f32 0.0, %v4211
      %v4213 = vpop.f32.mrf.mxu0
      %v4214 = vadd.f32 0.0, %v4213
      %v4215 = vpop.f32.mrf.mxu0
      %v4216 = vpop.f32.mrf.mxu0
      %4217 = vdwg.mxu0
      %v4222 = vunpack.c.l.b16 %v4062
      %v4223 = vunpack.c.l.b16 %v4063
      %v4224 = vunpack.c.l.b16 %v4064
      %v4225 = vunpack.c.l.b16 %v4065
      %v4226 = vpack.c.b16 %v4223, %v4222
      %v4227 = vpack.c.b16 %v4225, %v4224
      %v4230 = vunpack.c.l.s4 1983009808
      %v4231 = vunpack.c.0.s8 %v4230
      %v4232 = vlaneseq
      %v4233 = vshrl.u32 %v4232, 7
      %v4234 = vsub.s32 %v4231, %v4233
      %v4235 = vrot.slane %v4080, %v4234
      %v4236 = vcombine.high %v4235, %v4235
      %v4238 = vsel %vm385, %v4226, 0
      %v4241 = vsel %vm385, %v4227, 0
      %v4244 = vsel %vm401, %v4235, 0
      %v4247 = vsel %vm401, %v4236, 0
      %4249 = vmatprep.subr.bf16.mxu0 0
      %4250 = vmatpush1.bf16.msra.mxu0 0
      %4251 = vmatprep.subr.bf16.mxu0 0
      %4252 = vmatpush1.bf16.msra.mxu0 0
      %4253 = vmatprep.subr.bf16.mxu0 0
      %4254 = vmatpush1.bf16.msra.mxu0 0
      %4255 = vmatprep.subr.bf16.mxu0 0
      %4256 = vmatpush1.bf16.msra.mxu0 0
      %4257 = vmatprep.subr.bf16.mxu0 0
      %4258 = vmatpush1.bf16.msra.mxu0 0
      %4259 = vmatprep.subr.bf16.mxu0 0
      %4260 = vmatpush1.bf16.msra.mxu0 0
      %4261 = vmatprep.subr.bf16.mxu0 0
      %4262 = vmatpush1.bf16.msra.mxu0 0
      %4263 = vmatprep.subr.bf16.mxu0 %v4247
      %4264 = vmatpush1.bf16.msra.mxu0 %v4244
      %4265 = vmatprep.subr.bf16.mxu0 0
      %4266 = vmatpush2.bf16.msra.mxu0 0
      %4267 = vmatprep.subr.bf16.mxu0 0
      %4268 = vmatpush2.bf16.msra.mxu0 0
      %4269 = vmatprep.subr.bf16.mxu0 0
      %4270 = vmatpush2.bf16.msra.mxu0 0
      %4271 = vmatprep.subr.bf16.mxu0 0
      %4272 = vmatpush2.bf16.msra.mxu0 0
      %4273 = vmatprep.subr.bf16.mxu0 0
      %4274 = vmatpush2.bf16.msra.mxu0 0
      %4275 = vmatprep.subr.bf16.mxu0 0
      %4276 = vmatpush2.bf16.msra.mxu0 0
      %4277 = vmatprep.subr.bf16.mxu0 0
      %4278 = vmatpush2.bf16.msra.mxu0 0
      %4279 = vmatprep.subr.bf16.mxu0 0
      %4280 = vmatpush2.bf16.msra.mxu0 0
      %4281 = vmatprep.mubr.bf16.mxu0 0
      %4282 = vmatmul.mubr.bf16.gmra.mxu0 %v4238
      %v4283 = vpop.f32.mrf.mxu0
      %v4284 = vadd.f32 %v4172, %v4283
      %v4285 = vpop.f32.mrf.mxu0
      %v4286 = vadd.f32 %v4174, %v4285
      %v4287 = vpop.f32.mrf.mxu0
      %v4288 = vadd.f32 %v4176, %v4287
      %v4289 = vpop.f32.mrf.mxu0
      %v4290 = vadd.f32 %v4178, %v4289
      %4291 = vmatprep.mubr.bf16.mxu0 0
      %4292 = vmatmul.mubr.bf16.gmra.mxu0 %v4241
      %v4293 = vpop.f32.mrf.mxu0
      %v4294 = vadd.f32 %v4182, %v4293
      %v4295 = vpop.f32.mrf.mxu0
      %v4296 = vadd.f32 %v4184, %v4295
      %v4297 = vpop.f32.mrf.mxu0
      %v4298 = vadd.f32 %v4186, %v4297
      %v4299 = vpop.f32.mrf.mxu0
      %v4300 = vadd.f32 %v4188, %v4299
      %4301 = vmatprep.mubr.bf16.mxu0 0
      %4302 = vmatmul.mubr.bf16.gmra.mxu0 %v4117
      %v4303 = vpop.f32.mrf.mxu0
      %v4304 = vadd.f32 %v4192, %v4303
      %v4305 = vpop.f32.mrf.mxu0
      %v4306 = vadd.f32 %v4194, %v4305
      %v4307 = vpop.f32.mrf.mxu0
      %v4308 = vadd.f32 %v4196, %v4307
      %v4309 = vpop.f32.mrf.mxu0
      %v4310 = vadd.f32 %v4198, %v4309
      %4311 = vmatprep.mubr.bf16.mxu0 0
      %4312 = vmatmul.mubr.bf16.gmra.mxu0 %v4120
      %v4313 = vpop.f32.mrf.mxu0
      %v4314 = vadd.f32 %v4202, %v4313
      %v4315 = vpop.f32.mrf.mxu0
      %v4316 = vadd.f32 %v4204, %v4315
      %v4317 = vpop.f32.mrf.mxu0
      %v4318 = vadd.f32 %v4206, %v4317
      %v4319 = vpop.f32.mrf.mxu0
      %v4320 = vadd.f32 %v4208, %v4319
      %4321 = vmatprep.mubr.bf16.mxu0 0
      %4322 = vmatmul.mubr.bf16.gmra.mxu0 %v4123
      %v4323 = vpop.f32.mrf.mxu0
      %v4324 = vadd.f32 %v4212, %v4323
      %v4325 = vpop.f32.mrf.mxu0
      %v4326 = vadd.f32 %v4214, %v4325
      %v4327 = vpop.f32.mrf.mxu0
      %v4328 = vpop.f32.mrf.mxu0
      %4329 = vdwg.mxu0
      %v4330 = vld [vmem:[%s601] sm:$0xf]
      %v4335 = vunpack.c.l.b16 %v4076
      %v4336 = vunpack.c.l.b16 %v4077
      %v4337 = vunpack.c.l.b16 %v4078
      %v4338 = vunpack.c.l.b16 %v4079
      %v4339 = vpack.c.b16 %v4336, %v4335
      %v4340 = vpack.c.b16 %v4338, %v4337
      %v4343 = vunpack.c.l.s4 1983009808
      %v4344 = vunpack.c.0.s8 %v4343
      %v4345 = vlaneseq
      %v4346 = vshrl.u32 %v4345, 7
      %v4347 = vsub.s32 %v4344, %v4346
      %v4348 = vrot.slane %v4330, %v4347
      %v4349 = vcombine.high %v4348, %v4348
      %v4351 = vsel %vm385, %v4339, 0
      %v4354 = vsel %vm385, %v4340, 0
      %v4357 = vsel %vm401, %v4348, 0
      %v4360 = vsel %vm401, %v4349, 0
      %4362 = vmatprep.subr.bf16.mxu0 0
      %4363 = vmatpush1.bf16.msra.mxu0 0
      %4364 = vmatprep.subr.bf16.mxu0 0
      %4365 = vmatpush1.bf16.msra.mxu0 0
      %4366 = vmatprep.subr.bf16.mxu0 0
      %4367 = vmatpush1.bf16.msra.mxu0 0
      %4368 = vmatprep.subr.bf16.mxu0 0
      %4369 = vmatpush1.bf16.msra.mxu0 0
      %4370 = vmatprep.subr.bf16.mxu0 0
      %4371 = vmatpush1.bf16.msra.mxu0 0
      %4372 = vmatprep.subr.bf16.mxu0 0
      %4373 = vmatpush1.bf16.msra.mxu0 0
      %4374 = vmatprep.subr.bf16.mxu0 0
      %4375 = vmatpush1.bf16.msra.mxu0 0
      %4376 = vmatprep.subr.bf16.mxu0 %v4360
      %4377 = vmatpush1.bf16.msra.mxu0 %v4357
      %4378 = vmatprep.subr.bf16.mxu0 0
      %4379 = vmatpush2.bf16.msra.mxu0 0
      %4380 = vmatprep.subr.bf16.mxu0 0
      %4381 = vmatpush2.bf16.msra.mxu0 0
      %4382 = vmatprep.subr.bf16.mxu0 0
      %4383 = vmatpush2.bf16.msra.mxu0 0
      %4384 = vmatprep.subr.bf16.mxu0 0
      %4385 = vmatpush2.bf16.msra.mxu0 0
      %4386 = vmatprep.subr.bf16.mxu0 0
      %4387 = vmatpush2.bf16.msra.mxu0 0
      %4388 = vmatprep.subr.bf16.mxu0 0
      %4389 = vmatpush2.bf16.msra.mxu0 0
      %4390 = vmatprep.subr.bf16.mxu0 0
      %4391 = vmatpush2.bf16.msra.mxu0 0
      %4392 = vmatprep.subr.bf16.mxu0 0
      %4393 = vmatpush2.bf16.msra.mxu0 0
      %4394 = vmatprep.mubr.bf16.mxu0 0
      %4395 = vmatmul.mubr.bf16.gmra.mxu0 %v4123
      %v4396 = vpop.f32.mrf.mxu0
      %v4397 = vadd.f32 0.0, %v4396
      %v4398 = vpop.f32.mrf.mxu0
      %v4399 = vadd.f32 0.0, %v4398
      %v4400 = vpop.f32.mrf.mxu0
      %v4401 = vadd.f32 0.0, %v4400
      %v4402 = vpop.f32.mrf.mxu0
      %v4403 = vadd.f32 0.0, %v4402
      %4404 = vmatprep.mubr.bf16.mxu0 0
      %4405 = vmatmul.mubr.bf16.gmra.mxu0 %v4126
      %v4406 = vpop.f32.mrf.mxu0
      %v4407 = vadd.f32 0.0, %v4406
      %v4408 = vpop.f32.mrf.mxu0
      %v4409 = vadd.f32 0.0, %v4408
      %v4410 = vpop.f32.mrf.mxu0
      %v4411 = vadd.f32 0.0, %v4410
      %v4412 = vpop.f32.mrf.mxu0
      %v4413 = vadd.f32 0.0, %v4412
      %4414 = vmatprep.mubr.bf16.mxu0 0
      %4415 = vmatmul.mubr.bf16.gmra.mxu0 %v4129
      %v4416 = vpop.f32.mrf.mxu0
      %v4417 = vadd.f32 0.0, %v4416
      %v4418 = vpop.f32.mrf.mxu0
      %v4419 = vadd.f32 0.0, %v4418
      %v4420 = vpop.f32.mrf.mxu0
      %v4421 = vadd.f32 0.0, %v4420
      %v4422 = vpop.f32.mrf.mxu0
      %v4423 = vadd.f32 0.0, %v4422
      %4424 = vmatprep.mubr.bf16.mxu0 0
      %4425 = vmatmul.mubr.bf16.gmra.mxu0 %v4351
      %v4426 = vpop.f32.mrf.mxu0
      %v4427 = vadd.f32 0.0, %v4426
      %v4428 = vpop.f32.mrf.mxu0
      %v4429 = vadd.f32 0.0, %v4428
      %v4430 = vpop.f32.mrf.mxu0
      %v4431 = vadd.f32 0.0, %v4430
      %v4432 = vpop.f32.mrf.mxu0
      %v4433 = vadd.f32 0.0, %v4432
      %4434 = vmatprep.mubr.bf16.mxu0 0
      %4435 = vmatmul.mubr.bf16.gmra.mxu0 %v4354
      %v4436 = vpop.f32.mrf.mxu0
      %v4437 = vadd.f32 0.0, %v4436
      %v4438 = vpop.f32.mrf.mxu0
      %v4439 = vadd.f32 0.0, %v4438
      %v4440 = vpop.f32.mrf.mxu0
      %v4441 = vpop.f32.mrf.mxu0
      %4442 = vdwg.mxu0
      %v4443 = vadd.f32 %v4284, %v4397
      %v4444 = vadd.f32 %v4286, %v4399
      %v4445 = vadd.f32 %v4288, %v4401
      %v4446 = vadd.f32 %v4290, %v4403
      %v4447 = vadd.f32 %v4294, %v4407
      %v4448 = vadd.f32 %v4296, %v4409
      %v4449 = vadd.f32 %v4298, %v4411
      %v4450 = vadd.f32 %v4300, %v4413
      %v4451 = vadd.f32 %v4304, %v4417
      %v4452 = vadd.f32 %v4306, %v4419
      %v4453 = vadd.f32 %v4308, %v4421
      %v4454 = vadd.f32 %v4310, %v4423
      %v4455 = vadd.f32 %v4314, %v4427
      %v4456 = vadd.f32 %v4316, %v4429
      %v4457 = vadd.f32 %v4318, %v4431
      %v4458 = vadd.f32 %v4320, %v4433
      %v4459 = vadd.f32 %v4324, %v4437
      %v4460 = vadd.f32 %v4326, %v4439
      %v4470 = vrot.slane %v4443, 1
      %v4471 = vrot.slane %v4445, 1
      %v4472 = vsel %vm742, %v4470, %v4471
      %v4473 = vrot.slane %v4447, 1
      %v4474 = vsel %vm742, %v4471, %v4473
      %v4475 = vrot.slane %v4449, 1
      %v4476 = vsel %vm742, %v4473, %v4475
      %v4477 = vrot.slane %v4451, 1
      %v4478 = vsel %vm742, %v4475, %v4477
      %v4479 = vrot.slane %v4453, 1
      %v4480 = vsel %vm742, %v4477, %v4479
      %v4481 = vrot.slane %v4455, 1
      %v4482 = vsel %vm742, %v4479, %v4481
      %v4483 = vrot.slane %v4457, 1
      %v4484 = vsel %vm742, %v4481, %v4483
      %v4485 = vrot.slane %v4459, 1
      %v4486 = vsel %vm742, %v4483, %v4485
      %4487 = vrot.lane.b32.xlu0 %v4472, 64
      %v4488 = vpop.permute.xlu0 %4487
      %4489 = vrot.lane.b32.xlu0 %v4474, 64
      %v4490 = vpop.permute.xlu0 %4489
      %4491 = vrot.lane.b32.xlu0 %v4476, 64
      %v4492 = vpop.permute.xlu0 %4491
      %4493 = vrot.lane.b32.xlu0 %v4478, 64
      %v4494 = vpop.permute.xlu0 %4493
      %4495 = vrot.lane.b32.xlu0 %v4480, 64
      %v4496 = vpop.permute.xlu0 %4495
      %4497 = vrot.lane.b32.xlu0 %v4482, 64
      %v4498 = vpop.permute.xlu0 %4497
      %4499 = vrot.lane.b32.xlu0 %v4484, 64
      %v4500 = vpop.permute.xlu0 %4499
      %4501 = vrot.lane.b32.xlu0 %v4486, 64
      %v4502 = vpop.permute.xlu0 %4501
      %4503 = vrot.lane.b32.xlu0 %v4485, 64
      %v4504 = vpop.permute.xlu0 %4503
      %v4514 = vadd.f32 %v4443, %v4488
      %v4515 = vadd.f32 %v4445, %v4490
      %v4516 = vadd.f32 %v4447, %v4492
      %v4517 = vadd.f32 %v4449, %v4494
      %v4518 = vadd.f32 %v4451, %v4496
      %v4519 = vadd.f32 %v4453, %v4498
      %v4520 = vadd.f32 %v4455, %v4500
      %v4521 = vadd.f32 %v4457, %v4502
      %v4522 = vadd.f32 %v4459, %v4504
      %v4532 = vrot.slane %v4444, 2
      %v4533 = vrot.slane %v4446, 2
      %v4534 = vsel %vm805, %v4532, %v4533
      %v4535 = vrot.slane %v4448, 2
      %v4536 = vsel %vm805, %v4533, %v4535
      %v4537 = vrot.slane %v4450, 2
      %v4538 = vsel %vm805, %v4535, %v4537
      %v4539 = vrot.slane %v4452, 2
      %v4540 = vsel %vm805, %v4537, %v4539
      %v4541 = vrot.slane %v4454, 2
      %v4542 = vsel %vm805, %v4539, %v4541
      %v4543 = vrot.slane %v4456, 2
      %v4544 = vsel %vm805, %v4541, %v4543
      %v4545 = vrot.slane %v4458, 2
      %v4546 = vsel %vm805, %v4543, %v4545
      %v4547 = vrot.slane %v4460, 2
      %v4548 = vsel %vm805, %v4545, %v4547
      %v4558 = vadd.f32 %v4514, %v4534
      %v4559 = vadd.f32 %v4515, %v4536
      %v4560 = vadd.f32 %v4516, %v4538
      %v4561 = vadd.f32 %v4517, %v4540
      %v4562 = vadd.f32 %v4518, %v4542
      %v4563 = vadd.f32 %v4519, %v4544
      %v4564 = vadd.f32 %v4520, %v4546
      %v4565 = vadd.f32 %v4521, %v4548
      %v4566 = vadd.f32 %v4522, %v4547
      %v4567 = vrot.slane %v4446, 3
      %v4568 = vrot.slane %v4448, 3
      %v4569 = vsel %vm841, %v4567, %v4568
      %v4570 = vrot.slane %v4450, 3
      %v4571 = vsel %vm841, %v4568, %v4570
      %v4572 = vrot.slane %v4452, 3
      %v4573 = vsel %vm841, %v4570, %v4572
      %v4574 = vrot.slane %v4454, 3
      %v4575 = vsel %vm841, %v4572, %v4574
      %v4576 = vrot.slane %v4456, 3
      %v4577 = vsel %vm841, %v4574, %v4576
      %v4578 = vrot.slane %v4458, 3
      %v4579 = vsel %vm841, %v4576, %v4578
      %v4580 = vrot.slane %v4460, 3
      %v4581 = vsel %vm841, %v4578, %v4580
      %4582 = vrot.lane.b32.xlu0 %v4567, 64
      %v4583 = vpop.permute.xlu0 %4582
      %4584 = vrot.lane.b32.xlu0 %v4569, 64
      %v4585 = vpop.permute.xlu0 %4584
      %4586 = vrot.lane.b32.xlu0 %v4571, 64
      %v4587 = vpop.permute.xlu0 %4586
      %4588 = vrot.lane.b32.xlu0 %v4573, 64
      %v4589 = vpop.permute.xlu0 %4588
      %4590 = vrot.lane.b32.xlu0 %v4575, 64
      %v4591 = vpop.permute.xlu0 %4590
      %4592 = vrot.lane.b32.xlu0 %v4577, 64
      %v4593 = vpop.permute.xlu0 %4592
      %4594 = vrot.lane.b32.xlu0 %v4579, 64
      %v4595 = vpop.permute.xlu0 %4594
      %4596 = vrot.lane.b32.xlu0 %v4581, 64
      %v4597 = vpop.permute.xlu0 %4596
      %4598 = vrot.lane.b32.xlu0 %v4580, 64
      %v4599 = vpop.permute.xlu0 %4598
      %v4609 = vadd.f32 %v4558, %v4583
      %v4610 = vadd.f32 %v4559, %v4585
      %v4611 = vadd.f32 %v4560, %v4587
      %v4612 = vadd.f32 %v4561, %v4589
      %v4613 = vadd.f32 %v4562, %v4591
      %v4614 = vadd.f32 %v4563, %v4593
      %v4615 = vadd.f32 %v4564, %v4595
      %v4616 = vadd.f32 %v4565, %v4597
      %v4617 = vadd.f32 %v4566, %v4599
      %v4618 = vld [vmem:[%s2 + $0x4] sm:$0xf]
      %v4619 = vld [vmem:[%s349 + $0x4] sm:$0xf]
      %v4622 = vunpack.c.l.s4 1983009808
      %v4623 = vunpack.c.0.s8 %v4622
      %v4624 = vlaneseq
      %v4625 = vshrl.u32 %v4624, 7
      %v4626 = vsub.s32 %v4623, %v4625
      %v4627 = vrot.slane %v4619, %v4626
      %v4628 = vcombine.high %v4627, %v4627
      %v4630 = vsel %vm401, %v4627, 0
      %v4633 = vsel %vm401, %v4628, 0
      %4635 = vmatprep.subr.bf16.mxu0 0
      %4636 = vmatpush1.bf16.msra.mxu0 0
      %4637 = vmatprep.subr.bf16.mxu0 0
      %4638 = vmatpush1.bf16.msra.mxu0 0
      %4639 = vmatprep.subr.bf16.mxu0 0
      %4640 = vmatpush1.bf16.msra.mxu0 0
      %4641 = vmatprep.subr.bf16.mxu0 0
      %4642 = vmatpush1.bf16.msra.mxu0 0
      %4643 = vmatprep.subr.bf16.mxu0 0
      %4644 = vmatpush1.bf16.msra.mxu0 0
      %4645 = vmatprep.subr.bf16.mxu0 0
      %4646 = vmatpush1.bf16.msra.mxu0 0
      %4647 = vmatprep.subr.bf16.mxu0 0
      %4648 = vmatpush1.bf16.msra.mxu0 0
      %4649 = vmatprep.subr.bf16.mxu0 %v4633
      %4650 = vmatpush1.bf16.msra.mxu0 %v4630
      %4651 = vmatprep.subr.bf16.mxu0 0
      %4652 = vmatpush2.bf16.msra.mxu0 0
      %4653 = vmatprep.subr.bf16.mxu0 0
      %4654 = vmatpush2.bf16.msra.mxu0 0
      %4655 = vmatprep.subr.bf16.mxu0 0
      %4656 = vmatpush2.bf16.msra.mxu0 0
      %4657 = vmatprep.subr.bf16.mxu0 0
      %4658 = vmatpush2.bf16.msra.mxu0 0
      %4659 = vmatprep.subr.bf16.mxu0 0
      %4660 = vmatpush2.bf16.msra.mxu0 0
      %4661 = vmatprep.subr.bf16.mxu0 0
      %4662 = vmatpush2.bf16.msra.mxu0 0
      %4663 = vmatprep.subr.bf16.mxu0 0
      %4664 = vmatpush2.bf16.msra.mxu0 0
      %4665 = vmatprep.subr.bf16.mxu0 0
      %4666 = vmatpush2.bf16.msra.mxu0 0
      %4667 = vmatprep.mubr.bf16.mxu0 0
      %4668 = vmatmul.mubr.bf16.gmra.mxu0 %v4117
      %v4669 = vpop.f32.mrf.mxu0
      %v4670 = vpop.f32.mrf.mxu0
      %v4671 = vpop.f32.mrf.mxu0
      %v4672 = vadd.f32 0.0, %v4671
      %v4673 = vpop.f32.mrf.mxu0
      %v4674 = vadd.f32 0.0, %v4673
      %4675 = vmatprep.mubr.bf16.mxu0 0
      %4676 = vmatmul.mubr.bf16.gmra.mxu0 %v4120
      %v4677 = vpop.f32.mrf.mxu0
      %v4678 = vadd.f32 0.0, %v4677
      %v4679 = vpop.f32.mrf.mxu0
      %v4680 = vadd.f32 0.0, %v4679
      %v4681 = vpop.f32.mrf.mxu0
      %v4682 = vadd.f32 0.0, %v4681
      %v4683 = vpop.f32.mrf.mxu0
      %v4684 = vadd.f32 0.0, %v4683
      %4685 = vmatprep.mubr.bf16.mxu0 0
      %4686 = vmatmul.mubr.bf16.gmra.mxu0 %v4123
      %v4687 = vpop.f32.mrf.mxu0
      %v4688 = vadd.f32 0.0, %v4687
      %v4689 = vpop.f32.mrf.mxu0
      %v4690 = vadd.f32 0.0, %v4689
      %v4691 = vpop.f32.mrf.mxu0
      %v4692 = vadd.f32 0.0, %v4691
      %v4693 = vpop.f32.mrf.mxu0
      %v4694 = vadd.f32 0.0, %v4693
      %4695 = vmatprep.mubr.bf16.mxu0 0
      %4696 = vmatmul.mubr.bf16.gmra.mxu0 %v4126
      %v4697 = vpop.f32.mrf.mxu0
      %v4698 = vadd.f32 0.0, %v4697
      %v4699 = vpop.f32.mrf.mxu0
      %v4700 = vadd.f32 0.0, %v4699
      %v4701 = vpop.f32.mrf.mxu0
      %v4702 = vadd.f32 0.0, %v4701
      %v4703 = vpop.f32.mrf.mxu0
      %v4704 = vadd.f32 0.0, %v4703
      %4705 = vmatprep.mubr.bf16.mxu0 0
      %4706 = vmatmul.mubr.bf16.gmra.mxu0 %v4129
      %v4707 = vpop.f32.mrf.mxu0
      %v4708 = vadd.f32 0.0, %v4707
      %v4709 = vpop.f32.mrf.mxu0
      %v4710 = vadd.f32 0.0, %v4709
      %v4711 = vpop.f32.mrf.mxu0
      %v4712 = vadd.f32 0.0, %v4711
      %v4713 = vpop.f32.mrf.mxu0
      %v4714 = vadd.f32 0.0, %v4713
      %4715 = vdwg.mxu0
      %v4718 = vunpack.c.l.s4 1983009808
      %v4719 = vunpack.c.0.s8 %v4718
      %v4720 = vlaneseq
      %v4721 = vshrl.u32 %v4720, 7
      %v4722 = vsub.s32 %v4719, %v4721
      %v4723 = vrot.slane %v4618, %v4722
      %v4724 = vcombine.high %v4723, %v4723
      %v4726 = vsel %vm401, %v4723, 0
      %v4729 = vsel %vm401, %v4724, 0
      %4731 = vmatprep.subr.bf16.mxu0 0
      %4732 = vmatpush1.bf16.msra.mxu0 0
      %4733 = vmatprep.subr.bf16.mxu0 0
      %4734 = vmatpush1.bf16.msra.mxu0 0
      %4735 = vmatprep.subr.bf16.mxu0 0
      %4736 = vmatpush1.bf16.msra.mxu0 0
      %4737 = vmatprep.subr.bf16.mxu0 0
      %4738 = vmatpush1.bf16.msra.mxu0 0
      %4739 = vmatprep.subr.bf16.mxu0 0
      %4740 = vmatpush1.bf16.msra.mxu0 0
      %4741 = vmatprep.subr.bf16.mxu0 0
      %4742 = vmatpush1.bf16.msra.mxu0 0
      %4743 = vmatprep.subr.bf16.mxu0 0
      %4744 = vmatpush1.bf16.msra.mxu0 0
      %4745 = vmatprep.subr.bf16.mxu0 %v4729
      %4746 = vmatpush1.bf16.msra.mxu0 %v4726
      %4747 = vmatprep.subr.bf16.mxu0 0
      %4748 = vmatpush2.bf16.msra.mxu0 0
      %4749 = vmatprep.subr.bf16.mxu0 0
      %4750 = vmatpush2.bf16.msra.mxu0 0
      %4751 = vmatprep.subr.bf16.mxu0 0
      %4752 = vmatpush2.bf16.msra.mxu0 0
      %4753 = vmatprep.subr.bf16.mxu0 0
      %4754 = vmatpush2.bf16.msra.mxu0 0
      %4755 = vmatprep.subr.bf16.mxu0 0
      %4756 = vmatpush2.bf16.msra.mxu0 0
      %4757 = vmatprep.subr.bf16.mxu0 0
      %4758 = vmatpush2.bf16.msra.mxu0 0
      %4759 = vmatprep.subr.bf16.mxu0 0
      %4760 = vmatpush2.bf16.msra.mxu0 0
      %4761 = vmatprep.subr.bf16.mxu0 0
      %4762 = vmatpush2.bf16.msra.mxu0 0
      %4763 = vmatprep.mubr.bf16.mxu0 0
      %4764 = vmatmul.mubr.bf16.gmra.mxu0 %v4238
      %v4765 = vpop.f32.mrf.mxu0
      %v4766 = vpop.f32.mrf.mxu0
      %v4767 = vpop.f32.mrf.mxu0
      %v4768 = vadd.f32 %v4672, %v4767
      %v4769 = vpop.f32.mrf.mxu0
      %v4770 = vadd.f32 %v4674, %v4769
      %4771 = vmatprep.mubr.bf16.mxu0 0
      %4772 = vmatmul.mubr.bf16.gmra.mxu0 %v4241
      %v4773 = vpop.f32.mrf.mxu0
      %v4774 = vadd.f32 %v4678, %v4773
      %v4775 = vpop.f32.mrf.mxu0
      %v4776 = vadd.f32 %v4680, %v4775
      %v4777 = vpop.f32.mrf.mxu0
      %v4778 = vadd.f32 %v4682, %v4777
      %v4779 = vpop.f32.mrf.mxu0
      %v4780 = vadd.f32 %v4684, %v4779
      %4781 = vmatprep.mubr.bf16.mxu0 0
      %4782 = vmatmul.mubr.bf16.gmra.mxu0 %v4117
      %v4783 = vpop.f32.mrf.mxu0
      %v4784 = vadd.f32 %v4688, %v4783
      %v4785 = vpop.f32.mrf.mxu0
      %v4786 = vadd.f32 %v4690, %v4785
      %v4787 = vpop.f32.mrf.mxu0
      %v4788 = vadd.f32 %v4692, %v4787
      %v4789 = vpop.f32.mrf.mxu0
      %v4790 = vadd.f32 %v4694, %v4789
      %4791 = vmatprep.mubr.bf16.mxu0 0
      %4792 = vmatmul.mubr.bf16.gmra.mxu0 %v4120
      %v4793 = vpop.f32.mrf.mxu0
      %v4794 = vadd.f32 %v4698, %v4793
      %v4795 = vpop.f32.mrf.mxu0
      %v4796 = vadd.f32 %v4700, %v4795
      %v4797 = vpop.f32.mrf.mxu0
      %v4798 = vadd.f32 %v4702, %v4797
      %v4799 = vpop.f32.mrf.mxu0
      %v4800 = vadd.f32 %v4704, %v4799
      %4801 = vmatprep.mubr.bf16.mxu0 0
      %4802 = vmatmul.mubr.bf16.gmra.mxu0 %v4123
      %v4803 = vpop.f32.mrf.mxu0
      %v4804 = vadd.f32 %v4708, %v4803
      %v4805 = vpop.f32.mrf.mxu0
      %v4806 = vadd.f32 %v4710, %v4805
      %v4807 = vpop.f32.mrf.mxu0
      %v4808 = vadd.f32 %v4712, %v4807
      %v4809 = vpop.f32.mrf.mxu0
      %v4810 = vadd.f32 %v4714, %v4809
      %4811 = vdwg.mxu0
      %v4812 = vld [vmem:[%s601 + $0x4] sm:$0xf]
      %v4815 = vunpack.c.l.s4 1983009808
      %v4816 = vunpack.c.0.s8 %v4815
      %v4817 = vlaneseq
      %v4818 = vshrl.u32 %v4817, 7
      %v4819 = vsub.s32 %v4816, %v4818
      %v4820 = vrot.slane %v4812, %v4819
      %v4821 = vcombine.high %v4820, %v4820
      %v4823 = vsel %vm401, %v4820, 0
      %v4826 = vsel %vm401, %v4821, 0
      %4828 = vmatprep.subr.bf16.mxu0 0
      %4829 = vmatpush1.bf16.msra.mxu0 0
      %4830 = vmatprep.subr.bf16.mxu0 0
      %4831 = vmatpush1.bf16.msra.mxu0 0
      %4832 = vmatprep.subr.bf16.mxu0 0
      %4833 = vmatpush1.bf16.msra.mxu0 0
      %4834 = vmatprep.subr.bf16.mxu0 0
      %4835 = vmatpush1.bf16.msra.mxu0 0
      %4836 = vmatprep.subr.bf16.mxu0 0
      %4837 = vmatpush1.bf16.msra.mxu0 0
      %4838 = vmatprep.subr.bf16.mxu0 0
      %4839 = vmatpush1.bf16.msra.mxu0 0
      %4840 = vmatprep.subr.bf16.mxu0 0
      %4841 = vmatpush1.bf16.msra.mxu0 0
      %4842 = vmatprep.subr.bf16.mxu0 %v4826
      %4843 = vmatpush1.bf16.msra.mxu0 %v4823
      %4844 = vmatprep.subr.bf16.mxu0 0
      %4845 = vmatpush2.bf16.msra.mxu0 0
      %4846 = vmatprep.subr.bf16.mxu0 0
      %4847 = vmatpush2.bf16.msra.mxu0 0
      %4848 = vmatprep.subr.bf16.mxu0 0
      %4849 = vmatpush2.bf16.msra.mxu0 0
      %4850 = vmatprep.subr.bf16.mxu0 0
      %4851 = vmatpush2.bf16.msra.mxu0 0
      %4852 = vmatprep.subr.bf16.mxu0 0
      %4853 = vmatpush2.bf16.msra.mxu0 0
      %4854 = vmatprep.subr.bf16.mxu0 0
      %4855 = vmatpush2.bf16.msra.mxu0 0
      %4856 = vmatprep.subr.bf16.mxu0 0
      %4857 = vmatpush2.bf16.msra.mxu0 0
      %4858 = vmatprep.subr.bf16.mxu0 0
      %4859 = vmatpush2.bf16.msra.mxu0 0
      %4860 = vmatprep.mubr.bf16.mxu0 0
      %4861 = vmatmul.mubr.bf16.gmra.mxu0 %v4123
      %v4862 = vpop.f32.mrf.mxu0
      %v4863 = vpop.f32.mrf.mxu0
      %v4864 = vpop.f32.mrf.mxu0
      %v4865 = vadd.f32 0.0, %v4864
      %v4866 = vpop.f32.mrf.mxu0
      %v4867 = vadd.f32 0.0, %v4866
      %4868 = vmatprep.mubr.bf16.mxu0 0
      %4869 = vmatmul.mubr.bf16.gmra.mxu0 %v4126
      %v4870 = vpop.f32.mrf.mxu0
      %v4871 = vadd.f32 0.0, %v4870
      %v4872 = vpop.f32.mrf.mxu0
      %v4873 = vadd.f32 0.0, %v4872
      %v4874 = vpop.f32.mrf.mxu0
      %v4875 = vadd.f32 0.0, %v4874
      %v4876 = vpop.f32.mrf.mxu0
      %v4877 = vadd.f32 0.0, %v4876
      %4878 = vmatprep.mubr.bf16.mxu0 0
      %4879 = vmatmul.mubr.bf16.gmra.mxu0 %v4129
      %v4880 = vpop.f32.mrf.mxu0
      %v4881 = vadd.f32 0.0, %v4880
      %v4882 = vpop.f32.mrf.mxu0
      %v4883 = vadd.f32 0.0, %v4882
      %v4884 = vpop.f32.mrf.mxu0
      %v4885 = vadd.f32 0.0, %v4884
      %v4886 = vpop.f32.mrf.mxu0
      %v4887 = vadd.f32 0.0, %v4886
      %4888 = vmatprep.mubr.bf16.mxu0 0
      %4889 = vmatmul.mubr.bf16.gmra.mxu0 %v4351
      %v4890 = vpop.f32.mrf.mxu0
      %v4891 = vadd.f32 0.0, %v4890
      %v4892 = vpop.f32.mrf.mxu0
      %v4893 = vadd.f32 0.0, %v4892
      %v4894 = vpop.f32.mrf.mxu0
      %v4895 = vadd.f32 0.0, %v4894
      %v4896 = vpop.f32.mrf.mxu0
      %v4897 = vadd.f32 0.0, %v4896
      %4898 = vmatprep.mubr.bf16.mxu0 0
      %4899 = vmatmul.mubr.bf16.gmra.mxu0 %v4354
      %v4900 = vpop.f32.mrf.mxu0
      %v4901 = vadd.f32 0.0, %v4900
      %v4902 = vpop.f32.mrf.mxu0
      %v4903 = vadd.f32 0.0, %v4902
      %v4904 = vpop.f32.mrf.mxu0
      %v4905 = vadd.f32 0.0, %v4904
      %v4906 = vpop.f32.mrf.mxu0
      %v4907 = vadd.f32 0.0, %v4906
      %4908 = vdwg.mxu0
      %v4909 = vadd.f32 %v4768, %v4865
      %v4910 = vadd.f32 %v4770, %v4867
      %v4911 = vadd.f32 %v4774, %v4871
      %v4912 = vadd.f32 %v4776, %v4873
      %v4913 = vadd.f32 %v4778, %v4875
      %v4914 = vadd.f32 %v4780, %v4877
      %v4915 = vadd.f32 %v4784, %v4881
      %v4916 = vadd.f32 %v4786, %v4883
      %v4917 = vadd.f32 %v4788, %v4885
      %v4918 = vadd.f32 %v4790, %v4887
      %v4919 = vadd.f32 %v4794, %v4891
      %v4920 = vadd.f32 %v4796, %v4893
      %v4921 = vadd.f32 %v4798, %v4895
      %v4922 = vadd.f32 %v4800, %v4897
      %v4923 = vadd.f32 %v4804, %v4901
      %v4924 = vadd.f32 %v4806, %v4903
      %v4925 = vadd.f32 %v4808, %v4905
      %v4926 = vadd.f32 %v4810, %v4907
      %v4936 = vrot.slane %v4909, 4
      %v4937 = vrot.slane %v4911, 4
      %v4938 = vsel %vm1211, %v4936, %v4937
      %v4939 = vrot.slane %v4913, 4
      %v4940 = vsel %vm1211, %v4937, %v4939
      %v4941 = vrot.slane %v4915, 4
      %v4942 = vsel %vm1211, %v4939, %v4941
      %v4943 = vrot.slane %v4917, 4
      %v4944 = vsel %vm1211, %v4941, %v4943
      %v4945 = vrot.slane %v4919, 4
      %v4946 = vsel %vm1211, %v4943, %v4945
      %v4947 = vrot.slane %v4921, 4
      %v4948 = vsel %vm1211, %v4945, %v4947
      %v4949 = vrot.slane %v4923, 4
      %v4950 = vsel %vm1211, %v4947, %v4949
      %v4951 = vrot.slane %v4925, 4
      %v4952 = vsel %vm1211, %v4949, %v4951
      %v4962 = vadd.f32 %v4609, %v4936
      %v4963 = vadd.f32 %v4610, %v4938
      %v4964 = vadd.f32 %v4611, %v4940
      %v4965 = vadd.f32 %v4612, %v4942
      %v4966 = vadd.f32 %v4613, %v4944
      %v4967 = vadd.f32 %v4614, %v4946
      %v4968 = vadd.f32 %v4615, %v4948
      %v4969 = vadd.f32 %v4616, %v4950
      %v4970 = vadd.f32 %v4617, %v4952
      %v4971 = vrot.slane %v4909, 5
      %v4972 = vrot.slane %v4911, 5
      %v4973 = vsel %vm1247, %v4971, %v4972
      %v4974 = vrot.slane %v4913, 5
      %v4975 = vsel %vm1247, %v4972, %v4974
      %v4976 = vrot.slane %v4915, 5
      %v4977 = vsel %vm1247, %v4974, %v4976
      %v4978 = vrot.slane %v4917, 5
      %v4979 = vsel %vm1247, %v4976, %v4978
      %v4980 = vrot.slane %v4919, 5
      %v4981 = vsel %vm1247, %v4978, %v4980
      %v4982 = vrot.slane %v4921, 5
      %v4983 = vsel %vm1247, %v4980, %v4982
      %v4984 = vrot.slane %v4923, 5
      %v4985 = vsel %vm1247, %v4982, %v4984
      %v4986 = vrot.slane %v4925, 5
      %v4987 = vsel %vm1247, %v4984, %v4986
      %4988 = vrot.lane.b32.xlu0 %v4971, 64
      %v4989 = vpop.permute.xlu0 %4988
      %4990 = vrot.lane.b32.xlu0 %v4973, 64
      %v4991 = vpop.permute.xlu0 %4990
      %4992 = vrot.lane.b32.xlu0 %v4975, 64
      %v4993 = vpop.permute.xlu0 %4992
      %4994 = vrot.lane.b32.xlu0 %v4977, 64
      %v4995 = vpop.permute.xlu0 %4994
      %4996 = vrot.lane.b32.xlu0 %v4979, 64
      %v4997 = vpop.permute.xlu0 %4996
      %4998 = vrot.lane.b32.xlu0 %v4981, 64
      %v4999 = vpop.permute.xlu0 %4998
      %5000 = vrot.lane.b32.xlu0 %v4983, 64
      %v5001 = vpop.permute.xlu0 %5000
      %5002 = vrot.lane.b32.xlu0 %v4985, 64
      %v5003 = vpop.permute.xlu0 %5002
      %5004 = vrot.lane.b32.xlu0 %v4987, 64
      %v5005 = vpop.permute.xlu0 %5004
      %v5015 = vadd.f32 %v4962, %v4989
      %v5016 = vadd.f32 %v4963, %v4991
      %v5017 = vadd.f32 %v4964, %v4993
      %v5018 = vadd.f32 %v4965, %v4995
      %v5019 = vadd.f32 %v4966, %v4997
      %v5020 = vadd.f32 %v4967, %v4999
      %v5021 = vadd.f32 %v4968, %v5001
      %v5022 = vadd.f32 %v4969, %v5003
      %v5023 = vadd.f32 %v4970, %v5005
      %v5033 = vrot.slane %v4910, 6
      %v5034 = vrot.slane %v4912, 6
      %v5035 = vsel %vm401, %v5033, %v5034
      %v5036 = vrot.slane %v4914, 6
      %v5037 = vsel %vm401, %v5034, %v5036
      %v5038 = vrot.slane %v4916, 6
      %v5039 = vsel %vm401, %v5036, %v5038
      %v5040 = vrot.slane %v4918, 6
      %v5041 = vsel %vm401, %v5038, %v5040
      %v5042 = vrot.slane %v4920, 6
      %v5043 = vsel %vm401, %v5040, %v5042
      %v5044 = vrot.slane %v4922, 6
      %v5045 = vsel %vm401, %v5042, %v5044
      %v5046 = vrot.slane %v4924, 6
      %v5047 = vsel %vm401, %v5044, %v5046
      %v5048 = vrot.slane %v4926, 6
      %v5049 = vsel %vm401, %v5046, %v5048
      %v5059 = vadd.f32 %v5015, %v5033
      %v5060 = vadd.f32 %v5016, %v5035
      %v5061 = vadd.f32 %v5017, %v5037
      %v5062 = vadd.f32 %v5018, %v5039
      %v5063 = vadd.f32 %v5019, %v5041
      %v5064 = vadd.f32 %v5020, %v5043
      %v5065 = vadd.f32 %v5021, %v5045
      %v5066 = vadd.f32 %v5022, %v5047
      %v5067 = vadd.f32 %v5023, %v5049
      %v5068 = vadd.f32 %v5059, %v1349
      %v5069 = vadd.f32 %v5060, %v1349
      %v5070 = vadd.f32 %v5061, %v1349
      %v5071 = vadd.f32 %v5062, %v1349
      %v5072 = vadd.f32 %v5063, %v1349
      %v5073 = vadd.f32 %v5064, %v1349
      %v5074 = vadd.f32 %v5065, %v1349
      %v5075 = vadd.f32 %v5066, %v1349
      %v5076 = vadd.f32 %v5067, %v1349
      %v5077 = vmul.f32 %v5068, 0.01
      %v5078 = vmul.f32 %v5069, 0.01
      %v5079 = vmul.f32 %v5070, 0.01
      %v5080 = vmul.f32 %v5071, 0.01
      %v5081 = vmul.f32 %v5072, 0.01
      %v5082 = vmul.f32 %v5073, 0.01
      %v5083 = vmul.f32 %v5074, 0.01
      %v5084 = vmul.f32 %v5075, 0.01
      %v5085 = vmul.f32 %v5076, 0.01
      %v5086 = vmax.f32 %v5068, %v5077
      %v5087 = vmax.f32 %v5069, %v5078
      %v5088 = vmax.f32 %v5070, %v5079
      %v5089 = vmax.f32 %v5071, %v5080
      %v5090 = vmax.f32 %v5072, %v5081
      %v5091 = vmax.f32 %v5073, %v5082
      %v5092 = vmax.f32 %v5074, %v5083
      %v5093 = vmax.f32 %v5075, %v5084
      %v5094 = vmax.f32 %v5076, %v5085
      %v5095 = vld [vmem:[%s1 + $0xc0] sm:$0xff]
      %v5096 = vld [vmem:[%s1 + $0xc8] sm:$0xff]
      %v5097 = vld [vmem:[%s1 + $0xd0] sm:$0xff]
      %v5098 = vld [vmem:[%s1 + $0xd8] sm:$0xff]
      %v5099 = vld [vmem:[%s1 + $0xe0] sm:$0xff]
      %v5100 = vld [vmem:[%s1 + $0xe8] sm:$0xff]
      %v5101 = vld [vmem:[%s1 + $0xf0] sm:$0xff]
      %v5102 = vld [vmem:[%s1 + $0xf8] sm:$0xff]
      %5104 = vset.pattern.permute.xlu0 0
      %5105 = vperm.xlu0 %5104, %v5095
      %v5106 = vpop.permute.xlu0 %5105
      %5108 = vset.pattern.permute.xlu0 0
      %5109 = vperm.xlu0 %5108, %v5096
      %v5110 = vpop.permute.xlu0 %5109
      %5112 = vset.pattern.permute.xlu0 0
      %5113 = vperm.xlu0 %5112, %v5097
      %v5114 = vpop.permute.xlu0 %5113
      %5116 = vset.pattern.permute.xlu0 0
      %5117 = vperm.xlu0 %5116, %v5098
      %v5118 = vpop.permute.xlu0 %5117
      %5120 = vset.pattern.permute.xlu0 0
      %5121 = vperm.xlu0 %5120, %v5099
      %v5122 = vpop.permute.xlu0 %5121
      %5124 = vset.pattern.permute.xlu0 0
      %5125 = vperm.xlu0 %5124, %v5100
      %v5126 = vpop.permute.xlu0 %5125
      %5128 = vset.pattern.permute.xlu0 0
      %5129 = vperm.xlu0 %5128, %v5101
      %v5130 = vpop.permute.xlu0 %5129
      %5132 = vset.pattern.permute.xlu0 0
      %5133 = vperm.xlu0 %5132, %v5102
      %v5134 = vpop.permute.xlu0 %5133
      %v5135 = vrot.slane %v5106, 3
      %v5136 = vrot.slane %v5110, 3
      %v5137 = vsel %vm841, %v5135, %v5136
      %v5138 = vrot.slane %v5114, 3
      %v5139 = vsel %vm841, %v5136, %v5138
      %v5140 = vrot.slane %v5118, 3
      %v5141 = vsel %vm841, %v5138, %v5140
      %v5142 = vrot.slane %v5122, 3
      %v5143 = vsel %vm841, %v5140, %v5142
      %v5144 = vrot.slane %v5126, 3
      %v5145 = vsel %vm841, %v5142, %v5144
      %v5146 = vrot.slane %v5130, 3
      %v5147 = vsel %vm841, %v5144, %v5146
      %v5148 = vrot.slane %v5134, 3
      %v5149 = vsel %vm841, %v5146, %v5148
      %v5159 = vmul.f32 %v5086, %v5135
      %v5160 = vmul.f32 %v5087, %v5137
      %v5161 = vmul.f32 %v5088, %v5139
      %v5162 = vmul.f32 %v5089, %v5141
      %v5163 = vmul.f32 %v5090, %v5143
      %v5164 = vmul.f32 %v5091, %v5145
      %v5165 = vmul.f32 %v5092, %v5147
      %v5166 = vmul.f32 %v5093, %v5149
      %v5167 = vmul.f32 %v5094, %v5148
      %v5168 = vpack.c.bf16 %v5160, %v5159
      %v5169 = vpack.c.bf16 %v5162, %v5161
      %v5170 = vpack.c.bf16 %v5164, %v5163
      %v5171 = vpack.c.bf16 %v5166, %v5165
      %v5172 = vpack.c.bf16 %v5167, %v5167
      %v5178 = vunpack.c.l.b16 %v5168
      %v5179 = vunpack.c.h.b16 %v5168
      %v5180 = vunpack.c.l.b16 %v5169
      %v5181 = vunpack.c.h.b16 %v5169
      %v5182 = vunpack.c.l.b16 %v5170
      %v5183 = vunpack.c.h.b16 %v5170
      %v5184 = vunpack.c.l.b16 %v5171
      %v5185 = vunpack.c.h.b16 %v5171
      %v5186 = vunpack.c.l.b16 %v5172
      %v5187 = vpack.c.b16 %v5178, %v5178
      %v5188 = vpack.c.b16 %v5179, %v5179
      %v5189 = vpack.c.b16 %v5180, %v5180
      %v5190 = vpack.c.b16 %v5181, %v5181
      %v5191 = vpack.c.b16 %v5182, %v5182
      %v5192 = vpack.c.b16 %v5183, %v5183
      %v5193 = vpack.c.b16 %v5184, %v5184
      %v5194 = vpack.c.b16 %v5185, %v5185
      %v5195 = vpack.c.b16 %v5186, %v5186
      %v5197 = vshrl.u32 %v5187, 16
      %v5199 = vrot.slane %v5197, 6
      %v5200 = vshll.u32 %v5187, 16
      %v5202 = vrot.slane %v5200, 7
      %v5203 = vor.u32 %v5199, %v5202
      %v5204 = vrot.slane %v5203, 4
      %v5206 = vshrl.u32 %v5188, 16
      %v5208 = vrot.slane %v5206, 6
      %v5209 = vshll.u32 %v5188, 16
      %v5211 = vrot.slane %v5209, 7
      %v5212 = vor.u32 %v5208, %v5211
      %v5213 = vsel %vm1481, %v5204, %v5212
      %v5214 = vrot.slane %v5212, 4
      %v5216 = vshrl.u32 %v5189, 16
      %v5218 = vrot.slane %v5216, 6
      %v5219 = vshll.u32 %v5189, 16
      %v5221 = vrot.slane %v5219, 7
      %v5222 = vor.u32 %v5218, %v5221
      %v5223 = vsel %vm1481, %v5214, %v5222
      %v5224 = vrot.slane %v5222, 4
      %v5226 = vshrl.u32 %v5190, 16
      %v5228 = vrot.slane %v5226, 6
      %v5229 = vshll.u32 %v5190, 16
      %v5231 = vrot.slane %v5229, 7
      %v5232 = vor.u32 %v5228, %v5231
      %v5233 = vsel %vm1481, %v5224, %v5232
      %v5234 = vrot.slane %v5232, 4
      %v5236 = vshrl.u32 %v5191, 16
      %v5238 = vrot.slane %v5236, 6
      %v5239 = vshll.u32 %v5191, 16
      %v5241 = vrot.slane %v5239, 7
      %v5242 = vor.u32 %v5238, %v5241
      %v5243 = vsel %vm1481, %v5234, %v5242
      %v5244 = vrot.slane %v5242, 4
      %v5246 = vshrl.u32 %v5192, 16
      %v5248 = vrot.slane %v5246, 6
      %v5249 = vshll.u32 %v5192, 16
      %v5251 = vrot.slane %v5249, 7
      %v5252 = vor.u32 %v5248, %v5251
      %v5253 = vsel %vm1481, %v5244, %v5252
      %v5254 = vrot.slane %v5252, 4
      %v5256 = vshrl.u32 %v5193, 16
      %v5258 = vrot.slane %v5256, 6
      %v5259 = vshll.u32 %v5193, 16
      %v5261 = vrot.slane %v5259, 7
      %v5262 = vor.u32 %v5258, %v5261
      %v5263 = vsel %vm1481, %v5254, %v5262
      %v5264 = vrot.slane %v5262, 4
      %v5266 = vshrl.u32 %v5194, 16
      %v5268 = vrot.slane %v5266, 6
      %v5269 = vshll.u32 %v5194, 16
      %v5271 = vrot.slane %v5269, 7
      %v5272 = vor.u32 %v5268, %v5271
      %v5273 = vsel %vm1481, %v5264, %v5272
      %v5274 = vrot.slane %v5272, 4
      %v5276 = vshrl.u32 %v5195, 16
      %v5278 = vrot.slane %v5276, 6
      %v5279 = vshll.u32 %v5195, 16
      %v5281 = vrot.slane %v5279, 7
      %v5282 = vor.u32 %v5278, %v5281
      %v5283 = vsel %vm1481, %v5274, %v5282
      %5292 = vst.msk [vmem:[#allocation2 + $0x74] sm:$0xf] %vm307, %v5213
      %5293 = vst.msk [vmem:[#allocation2 + $0x78] sm:$0xf] %vm307, %v5223
      %5294 = vst.msk [vmem:[#allocation2 + $0x7c] sm:$0xf] %vm307, %v5233
      %5295 = vst.msk [vmem:[#allocation2 + $0x80] sm:$0xf] %vm307, %v5243
      %5296 = vst.msk [vmem:[#allocation2 + $0x84] sm:$0xf] %vm307, %v5253
      %5297 = vst.msk [vmem:[#allocation2 + $0x88] sm:$0xf] %vm307, %v5263
      %5298 = vst.msk [vmem:[#allocation2 + $0x8c] sm:$0xf] %vm307, %v5273
      %5299 = vst.msk [vmem:[#allocation2 + $0x90] sm:$0xf] %vm307, %v5283
      %v5300 = vld [vmem:[%s5] sm:$0x1]
      %v5301 = vld [vmem:[#allocation2] sm:$0xf]
      %v5302 = vld [vmem:[#allocation2 + $0x4] sm:$0xf]
      %v5303 = vld [vmem:[#allocation2 + $0x8] sm:$0xf]
      %v5304 = vld [vmem:[#allocation2 + $0xc] sm:$0xf]
      %v5305 = vld [vmem:[#allocation2 + $0x10] sm:$0xf]
      %v5306 = vld [vmem:[#allocation2 + $0x14] sm:$0xf]
      %v5307 = vld [vmem:[#allocation2 + $0x18] sm:$0xf]
      %v5308 = vld [vmem:[#allocation2 + $0x1c] sm:$0xf]
      %v5309 = vld [vmem:[#allocation2 + $0x20] sm:$0xf]
      %v5310 = vld [vmem:[#allocation2 + $0x24] sm:$0xf]
      %v5311 = vld [vmem:[#allocation2 + $0x28] sm:$0xf]
      %v5312 = vld [vmem:[#allocation2 + $0x2c] sm:$0xf]
      %v5313 = vld [vmem:[#allocation2 + $0x30] sm:$0xf]
      %v5314 = vld [vmem:[#allocation2 + $0x34] sm:$0xf]
      %v5315 = vld [vmem:[#allocation2 + $0x38] sm:$0xf]
      %v5316 = vld [vmem:[#allocation2 + $0x3c] sm:$0xf]
      %v5317 = vld [vmem:[#allocation2 + $0x40] sm:$0xf]
      %v5318 = vld [vmem:[#allocation2 + $0x44] sm:$0xf]
      %v5319 = vld [vmem:[#allocation2 + $0x48] sm:$0xf]
      %v5320 = vld [vmem:[#allocation2 + $0x4c] sm:$0xf]
      %v5321 = vld [vmem:[#allocation2 + $0x50] sm:$0xf]
      %v5322 = vld [vmem:[#allocation2 + $0x54] sm:$0xf]
      %v5323 = vld [vmem:[#allocation2 + $0x58] sm:$0xf]
      %v5324 = vld [vmem:[#allocation2 + $0x5c] sm:$0xf]
      %v5325 = vld [vmem:[#allocation2 + $0x60] sm:$0xf]
      %v5326 = vld [vmem:[#allocation2 + $0x64] sm:$0xf]
      %v5345 = vunpack.c.l.b16 %v5301
      %v5346 = vunpack.c.l.b16 %v5302
      %v5347 = vunpack.c.l.b16 %v5303
      %v5348 = vunpack.c.l.b16 %v5304
      %v5349 = vunpack.c.l.b16 %v5305
      %v5350 = vunpack.c.l.b16 %v5306
      %v5351 = vunpack.c.l.b16 %v5307
      %v5352 = vunpack.c.l.b16 %v5308
      %v5353 = vunpack.c.l.b16 %v5309
      %v5354 = vunpack.c.l.b16 %v5310
      %v5355 = vunpack.c.l.b16 %v5311
      %v5356 = vunpack.c.l.b16 %v5312
      %v5357 = vunpack.c.l.b16 %v5313
      %v5358 = vunpack.c.l.b16 %v5314
      %v5359 = vunpack.c.l.b16 %v5315
      %v5360 = vunpack.c.l.b16 %v5316
      %v5361 = vunpack.c.l.b16 %v5317
      %v5362 = vunpack.c.l.b16 %v5318
      %v5363 = vpack.c.b16 %v5346, %v5345
      %v5364 = vpack.c.b16 %v5348, %v5347
      %v5365 = vpack.c.b16 %v5350, %v5349
      %v5366 = vpack.c.b16 %v5352, %v5351
      %v5367 = vpack.c.b16 %v5354, %v5353
      %v5368 = vpack.c.b16 %v5356, %v5355
      %v5369 = vpack.c.b16 %v5358, %v5357
      %v5370 = vpack.c.b16 %v5360, %v5359
      %v5371 = vpack.c.b16 %v5362, %v5361
      %v5376 = vunpack.c.l.b16 %v5319
      %v5377 = vunpack.c.l.b16 %v5320
      %v5378 = vunpack.c.l.b16 %v5321
      %v5379 = vunpack.c.l.b16 %v5322
      %v5380 = vpack.c.b16 %v5377, %v5376
      %v5381 = vpack.c.b16 %v5379, %v5378
      %5382 = vrot.lane.b32.xlu0 %v5365, 64
      %v5383 = vpop.permute.xlu0 %5382
      %5384 = vrot.lane.b32.xlu0 %v5366, 64
      %v5385 = vpop.permute.xlu0 %5384
      %5386 = vrot.lane.b32.xlu0 %v5367, 64
      %v5387 = vpop.permute.xlu0 %5386
      %5388 = vrot.lane.b32.xlu0 %v5368, 64
      %v5389 = vpop.permute.xlu0 %5388
      %5390 = vrot.lane.b32.xlu0 %v5369, 64
      %v5391 = vpop.permute.xlu0 %5390
      %5392 = vrot.lane.b32.xlu0 %v5370, 64
      %v5393 = vpop.permute.xlu0 %5392
      %5394 = vrot.lane.b32.xlu0 %v5371, 64
      %v5395 = vpop.permute.xlu0 %5394
      %5396 = vrot.lane.b32.xlu0 %v5380, 64
      %v5397 = vpop.permute.xlu0 %5396
      %5398 = vrot.lane.b32.xlu0 %v5381, 64
      %v5399 = vpop.permute.xlu0 %5398
      %v5404 = vunpack.c.l.b16 %v5323
      %v5405 = vunpack.c.l.b16 %v5324
      %v5406 = vunpack.c.l.b16 %v5325
      %v5407 = vunpack.c.l.b16 %v5326
      %v5408 = vpack.c.b16 %v5405, %v5404
      %v5409 = vpack.c.b16 %v5407, %v5406
      %vm5410 = vcmask 523264
      %v5413 = vsel %vm5410, %v5363, %v5383
      %v5417 = vsel %vm5410, %v5364, %v5385
      %v5421 = vsel %vm5410, %v5365, %v5387
      %v5425 = vsel %vm5410, %v5366, %v5389
      %v5429 = vsel %vm5410, %v5367, %v5391
      %v5433 = vsel %vm5410, %v5368, %v5393
      %v5437 = vsel %vm5410, %v5369, %v5395
      %v5441 = vsel %vm5410, %v5370, %v5397
      %v5445 = vsel %vm5410, %v5371, %v5399
      %v5447 = vld [vmem:[%s4] sm:$0xff]
      %v5448 = vld [vmem:[%s4 + $0x8] sm:$0xff]
      %v5449 = vld [vmem:[%s4 + $0x10] sm:$0xff]
      %v5450 = vld [vmem:[%s4 + $0x18] sm:$0xff]
      %v5451 = vld [vmem:[%s4 + $0x20] sm:$0xff]
      %v5452 = vld [vmem:[%s4 + $0x28] sm:$0xff]
      %v5453 = vld [vmem:[%s4 + $0x30] sm:$0xff]
      %v5454 = vld [vmem:[%s4 + $0x38] sm:$0xff]
      %v5455 = vld [vmem:[%s4 + $0x40] sm:$0xff]
      %v5456 = vld [vmem:[%s4 + $0x48] sm:$0xff]
      %v5457 = vld [vmem:[%s4 + $0x50] sm:$0xff]
      %v5458 = vld [vmem:[%s4 + $0x58] sm:$0xff]
      %v5459 = vld [vmem:[%s4 + $0x60] sm:$0xff]
      %v5460 = vld [vmem:[%s4 + $0x68] sm:$0xff]
      %v5461 = vld [vmem:[%s4 + $0x70] sm:$0xff]
      %v5462 = vld [vmem:[%s4 + $0x78] sm:$0xff]
      %v5463 = vld [vmem:[%s4 + $0x80] sm:$0xff]
      %v5464 = vld [vmem:[%s4 + $0x88] sm:$0xff]
      %v5465 = vld [vmem:[%s4 + $0x90] sm:$0xff]
      %v5466 = vld [vmem:[%s4 + $0x98] sm:$0xff]
      %v5467 = vld [vmem:[%s4 + $0xa0] sm:$0xff]
      %v5468 = vld [vmem:[%s4 + $0xa8] sm:$0xff]
      %v5469 = vld [vmem:[%s4 + $0xb0] sm:$0xff]
      %v5470 = vld [vmem:[%s4 + $0xb8] sm:$0xff]
      %v5495 = vunpack.c.l.b16 %v5447
      %v5496 = vunpack.c.h.b16 %v5447
      %v5497 = vunpack.c.l.b16 %v5448
      %v5498 = vunpack.c.h.b16 %v5448
      %v5499 = vunpack.c.l.b16 %v5449
      %v5500 = vunpack.c.h.b16 %v5449
      %v5501 = vunpack.c.l.b16 %v5450
      %v5502 = vunpack.c.h.b16 %v5450
      %v5503 = vunpack.c.l.b16 %v5451
      %v5504 = vunpack.c.h.b16 %v5451
      %v5505 = vunpack.c.l.b16 %v5452
      %v5506 = vunpack.c.h.b16 %v5452
      %v5507 = vunpack.c.l.b16 %v5453
      %v5508 = vunpack.c.h.b16 %v5453
      %v5509 = vunpack.c.l.b16 %v5454
      %v5510 = vunpack.c.h.b16 %v5454
      %v5511 = vunpack.c.l.b16 %v5455
      %v5512 = vunpack.c.h.b16 %v5455
      %v5513 = vunpack.c.l.b16 %v5456
      %v5514 = vunpack.c.h.b16 %v5456
      %v5515 = vunpack.c.l.b16 %v5457
      %v5516 = vunpack.c.h.b16 %v5457
      %v5517 = vunpack.c.l.b16 %v5458
      %v5518 = vunpack.c.h.b16 %v5458
      %v5519 = vunpack.c.l.b16 %v5459
      %v5520 = vunpack.c.h.b16 %v5459
      %v5521 = vunpack.c.l.b16 %v5460
      %v5522 = vunpack.c.h.b16 %v5460
      %v5523 = vunpack.c.l.b16 %v5461
      %v5524 = vunpack.c.h.b16 %v5461
      %v5525 = vunpack.c.l.b16 %v5462
      %v5526 = vunpack.c.h.b16 %v5462
      %v5527 = vunpack.c.l.b16 %v5463
      %v5528 = vunpack.c.h.b16 %v5463
      %v5529 = vunpack.c.l.b16 %v5464
      %v5530 = vunpack.c.h.b16 %v5464
      %v5531 = vunpack.c.l.b16 %v5465
      %v5532 = vunpack.c.h.b16 %v5465
      %v5533 = vunpack.c.l.b16 %v5466
      %v5534 = vunpack.c.h.b16 %v5466
      %v5535 = vunpack.c.l.b16 %v5467
      %v5536 = vunpack.c.h.b16 %v5467
      %v5537 = vunpack.c.l.b16 %v5468
      %v5538 = vunpack.c.h.b16 %v5468
      %v5539 = vunpack.c.l.b16 %v5469
      %v5540 = vunpack.c.h.b16 %v5469
      %v5541 = vunpack.c.l.b16 %v5470
      %v5542 = vunpack.c.h.b16 %v5470
      %v5543 = vpack.c.b16 %v5497, %v5495
      %v5544 = vpack.c.b16 %v5498, %v5496
      %v5545 = vpack.c.b16 %v5501, %v5499
      %v5546 = vpack.c.b16 %v5502, %v5500
      %v5547 = vpack.c.b16 %v5505, %v5503
      %v5548 = vpack.c.b16 %v5506, %v5504
      %v5549 = vpack.c.b16 %v5509, %v5507
      %v5550 = vpack.c.b16 %v5510, %v5508
      %v5551 = vpack.c.b16 %v5513, %v5511
      %v5552 = vpack.c.b16 %v5514, %v5512
      %v5553 = vpack.c.b16 %v5517, %v5515
      %v5554 = vpack.c.b16 %v5518, %v5516
      %v5555 = vpack.c.b16 %v5521, %v5519
      %v5556 = vpack.c.b16 %v5522, %v5520
      %v5557 = vpack.c.b16 %v5525, %v5523
      %v5558 = vpack.c.b16 %v5526, %v5524
      %v5559 = vpack.c.b16 %v5529, %v5527
      %v5560 = vpack.c.b16 %v5530, %v5528
      %v5561 = vpack.c.b16 %v5533, %v5531
      %v5562 = vpack.c.b16 %v5534, %v5532
      %v5563 = vpack.c.b16 %v5537, %v5535
      %v5564 = vpack.c.b16 %v5538, %v5536
      %v5565 = vpack.c.b16 %v5541, %v5539
      %v5566 = vpack.c.b16 %v5542, %v5540
      %v5591 = vsel %vm5410, %v5367, 0
      %v5593 = vsel %vm5410, %v5368, 0
      %v5595 = vsel %vm5410, %v5369, 0
      %v5597 = vsel %vm5410, %v5370, 0
      %v5599 = vsel %vm5410, %v5371, 0
      %v5602 = vsel %vm5410, %v5380, 0
      %v5605 = vsel %vm5410, %v5381, 0
      %v5608 = vsel %vm5410, %v5408, 0
      %v5611 = vsel %vm5410, %v5409, 0
      %5613 = vmatprep.subr.bf16.mxu0 %v5558
      %5614 = vmatpush1.bf16.msra.mxu0 %v5557
      %5615 = vmatprep.subr.bf16.mxu0 %v5556
      %5616 = vmatpush1.bf16.msra.mxu0 %v5555
      %5617 = vmatprep.subr.bf16.mxu0 %v5554
      %5618 = vmatpush1.bf16.msra.mxu0 %v5553
      %5619 = vmatprep.subr.bf16.mxu0 %v5552
      %5620 = vmatpush1.bf16.msra.mxu0 %v5551
      %5621 = vmatprep.subr.bf16.mxu0 %v5550
      %5622 = vmatpush1.bf16.msra.mxu0 %v5549
      %5623 = vmatprep.subr.bf16.mxu0 %v5548
      %5624 = vmatpush1.bf16.msra.mxu0 %v5547
      %5625 = vmatprep.subr.bf16.mxu0 %v5546
      %5626 = vmatpush1.bf16.msra.mxu0 %v5545
      %5627 = vmatprep.subr.bf16.mxu0 %v5544
      %5628 = vmatpush1.bf16.msra.mxu0 %v5543
      %5629 = vmatprep.subr.bf16.mxu0 0
      %5630 = vmatpush2.bf16.msra.mxu0 0
      %5631 = vmatprep.subr.bf16.mxu0 0
      %5632 = vmatpush2.bf16.msra.mxu0 0
      %5633 = vmatprep.subr.bf16.mxu0 0
      %5634 = vmatpush2.bf16.msra.mxu0 0
      %5635 = vmatprep.subr.bf16.mxu0 0
      %5636 = vmatpush2.bf16.msra.mxu0 0
      %5637 = vmatprep.subr.bf16.mxu0 %v5566
      %5638 = vmatpush2.bf16.msra.mxu0 %v5565
      %5639 = vmatprep.subr.bf16.mxu0 %v5564
      %5640 = vmatpush2.bf16.msra.mxu0 %v5563
      %5641 = vmatprep.subr.bf16.mxu0 %v5562
      %5642 = vmatpush2.bf16.msra.mxu0 %v5561
      %5643 = vmatprep.subr.bf16.mxu0 %v5560
      %5644 = vmatpush2.bf16.msra.mxu0 %v5559
      %5645 = vmatprep.mubr.bf16.mxu0 %v5591
      %5646 = vmatmul.mubr.bf16.gmra.mxu0 %v5413
      %v5647 = vpop.f32.mrf.mxu0
      %v5648 = vadd.f32 0.0, %v5647
      %v5649 = vpop.f32.mrf.mxu0
      %v5650 = vpop.f32.mrf.mxu0
      %v5651 = vadd.f32 0.0, %v5650
      %v5652 = vpop.f32.mrf.mxu0
      %v5653 = vadd.f32 0.0, %v5652
      %5654 = vmatprep.mubr.bf16.mxu0 %v5593
      %5655 = vmatmul.mubr.bf16.gmra.mxu0 %v5417
      %v5656 = vpop.f32.mrf.mxu0
      %v5657 = vadd.f32 0.0, %v5656
      %v5658 = vpop.f32.mrf.mxu0
      %v5659 = vadd.f32 0.0, %v5658
      %v5660 = vpop.f32.mrf.mxu0
      %v5661 = vadd.f32 0.0, %v5660
      %v5662 = vpop.f32.mrf.mxu0
      %v5663 = vadd.f32 0.0, %v5662
      %5664 = vmatprep.mubr.bf16.mxu0 %v5595
      %5665 = vmatmul.mubr.bf16.gmra.mxu0 %v5421
      %v5666 = vpop.f32.mrf.mxu0
      %v5667 = vadd.f32 0.0, %v5666
      %v5668 = vpop.f32.mrf.mxu0
      %v5669 = vadd.f32 0.0, %v5668
      %v5670 = vpop.f32.mrf.mxu0
      %v5671 = vadd.f32 0.0, %v5670
      %v5672 = vpop.f32.mrf.mxu0
      %v5673 = vadd.f32 0.0, %v5672
      %5674 = vmatprep.mubr.bf16.mxu0 %v5597
      %5675 = vmatmul.mubr.bf16.gmra.mxu0 %v5425
      %v5676 = vpop.f32.mrf.mxu0
      %v5677 = vadd.f32 0.0, %v5676
      %v5678 = vpop.f32.mrf.mxu0
      %v5679 = vadd.f32 0.0, %v5678
      %v5680 = vpop.f32.mrf.mxu0
      %v5681 = vadd.f32 0.0, %v5680
      %v5682 = vpop.f32.mrf.mxu0
      %v5683 = vadd.f32 0.0, %v5682
      %5684 = vmatprep.mubr.bf16.mxu0 %v5599
      %5685 = vmatmul.mubr.bf16.gmra.mxu0 %v5429
      %v5686 = vpop.f32.mrf.mxu0
      %v5687 = vadd.f32 0.0, %v5686
      %v5688 = vpop.f32.mrf.mxu0
      %v5689 = vadd.f32 0.0, %v5688
      %v5690 = vpop.f32.mrf.mxu0
      %v5691 = vadd.f32 0.0, %v5690
      %v5692 = vpop.f32.mrf.mxu0
      %v5693 = vadd.f32 0.0, %v5692
      %5694 = vmatprep.mubr.bf16.mxu0 %v5602
      %5695 = vmatmul.mubr.bf16.gmra.mxu0 %v5433
      %v5696 = vpop.f32.mrf.mxu0
      %v5697 = vadd.f32 0.0, %v5696
      %v5698 = vpop.f32.mrf.mxu0
      %v5699 = vadd.f32 0.0, %v5698
      %v5700 = vpop.f32.mrf.mxu0
      %v5701 = vadd.f32 0.0, %v5700
      %v5702 = vpop.f32.mrf.mxu0
      %v5703 = vadd.f32 0.0, %v5702
      %5704 = vmatprep.mubr.bf16.mxu0 %v5605
      %5705 = vmatmul.mubr.bf16.gmra.mxu0 %v5437
      %v5706 = vpop.f32.mrf.mxu0
      %v5707 = vadd.f32 0.0, %v5706
      %v5708 = vpop.f32.mrf.mxu0
      %v5709 = vadd.f32 0.0, %v5708
      %v5710 = vpop.f32.mrf.mxu0
      %v5711 = vadd.f32 0.0, %v5710
      %v5712 = vpop.f32.mrf.mxu0
      %v5713 = vadd.f32 0.0, %v5712
      %5714 = vmatprep.mubr.bf16.mxu0 %v5608
      %5715 = vmatmul.mubr.bf16.gmra.mxu0 %v5441
      %v5716 = vpop.f32.mrf.mxu0
      %v5717 = vadd.f32 0.0, %v5716
      %v5718 = vpop.f32.mrf.mxu0
      %v5719 = vadd.f32 0.0, %v5718
      %v5720 = vpop.f32.mrf.mxu0
      %v5721 = vadd.f32 0.0, %v5720
      %v5722 = vpop.f32.mrf.mxu0
      %v5723 = vadd.f32 0.0, %v5722
      %5724 = vmatprep.mubr.bf16.mxu0 %v5611
      %5725 = vmatmul.mubr.bf16.gmra.mxu0 %v5445
      %v5726 = vpop.f32.mrf.mxu0
      %v5727 = vadd.f32 0.0, %v5726
      %v5728 = vpop.f32.mrf.mxu0
      %v5729 = vadd.f32 0.0, %v5728
      %v5730 = vpop.f32.mrf.mxu0
      %v5731 = vpop.f32.mrf.mxu0
      %v5732 = vadd.f32 0.0, %v5731
      %5733 = vdwg.mxu0
      %v5751 = vrot.slane %v5648, 1
      %v5752 = vrot.slane %v5651, 1
      %v5753 = vsel %vm742, %v5751, %v5752
      %v5754 = vrot.slane %v5657, 1
      %v5755 = vsel %vm742, %v5752, %v5754
      %v5756 = vrot.slane %v5661, 1
      %v5757 = vsel %vm742, %v5754, %v5756
      %v5758 = vrot.slane %v5667, 1
      %v5759 = vsel %vm742, %v5756, %v5758
      %v5760 = vrot.slane %v5671, 1
      %v5761 = vsel %vm742, %v5758, %v5760
      %v5762 = vrot.slane %v5677, 1
      %v5763 = vsel %vm742, %v5760, %v5762
      %v5764 = vrot.slane %v5681, 1
      %v5765 = vsel %vm742, %v5762, %v5764
      %v5766 = vrot.slane %v5687, 1
      %v5767 = vsel %vm742, %v5764, %v5766
      %v5768 = vrot.slane %v5691, 1
      %v5769 = vsel %vm742, %v5766, %v5768
      %v5770 = vrot.slane %v5697, 1
      %v5771 = vsel %vm742, %v5768, %v5770
      %v5772 = vrot.slane %v5701, 1
      %v5773 = vsel %vm742, %v5770, %v5772
      %v5774 = vrot.slane %v5707, 1
      %v5775 = vsel %vm742, %v5772, %v5774
      %v5776 = vrot.slane %v5711, 1
      %v5777 = vsel %vm742, %v5774, %v5776
      %v5778 = vrot.slane %v5717, 1
      %v5779 = vsel %vm742, %v5776, %v5778
      %v5780 = vrot.slane %v5721, 1
      %v5781 = vsel %vm742, %v5778, %v5780
      %v5782 = vrot.slane %v5727, 1
      %v5783 = vsel %vm742, %v5780, %v5782
      %5784 = vrot.lane.b32.xlu0 %v5753, 96
      %v5785 = vpop.permute.xlu0 %5784
      %5786 = vrot.lane.b32.xlu0 %v5755, 96
      %v5787 = vpop.permute.xlu0 %5786
      %5788 = vrot.lane.b32.xlu0 %v5757, 96
      %v5789 = vpop.permute.xlu0 %5788
      %5790 = vrot.lane.b32.xlu0 %v5759, 96
      %v5791 = vpop.permute.xlu0 %5790
      %5792 = vrot.lane.b32.xlu0 %v5761, 96
      %v5793 = vpop.permute.xlu0 %5792
      %5794 = vrot.lane.b32.xlu0 %v5763, 96
      %v5795 = vpop.permute.xlu0 %5794
      %5796 = vrot.lane.b32.xlu0 %v5765, 96
      %v5797 = vpop.permute.xlu0 %5796
      %5798 = vrot.lane.b32.xlu0 %v5767, 96
      %v5799 = vpop.permute.xlu0 %5798
      %5800 = vrot.lane.b32.xlu0 %v5769, 96
      %v5801 = vpop.permute.xlu0 %5800
      %5802 = vrot.lane.b32.xlu0 %v5771, 96
      %v5803 = vpop.permute.xlu0 %5802
      %5804 = vrot.lane.b32.xlu0 %v5773, 96
      %v5805 = vpop.permute.xlu0 %5804
      %5806 = vrot.lane.b32.xlu0 %v5775, 96
      %v5807 = vpop.permute.xlu0 %5806
      %5808 = vrot.lane.b32.xlu0 %v5777, 96
      %v5809 = vpop.permute.xlu0 %5808
      %5810 = vrot.lane.b32.xlu0 %v5779, 96
      %v5811 = vpop.permute.xlu0 %5810
      %5812 = vrot.lane.b32.xlu0 %v5781, 96
      %v5813 = vpop.permute.xlu0 %5812
      %5814 = vrot.lane.b32.xlu0 %v5783, 96
      %v5815 = vpop.permute.xlu0 %5814
      %5816 = vrot.lane.b32.xlu0 %v5782, 96
      %v5817 = vpop.permute.xlu0 %5816
      %v5835 = vadd.f32 %v5648, %v5785
      %v5836 = vadd.f32 %v5651, %v5787
      %v5837 = vadd.f32 %v5657, %v5789
      %v5838 = vadd.f32 %v5661, %v5791
      %v5839 = vadd.f32 %v5667, %v5793
      %v5840 = vadd.f32 %v5671, %v5795
      %v5841 = vadd.f32 %v5677, %v5797
      %v5842 = vadd.f32 %v5681, %v5799
      %v5843 = vadd.f32 %v5687, %v5801
      %v5844 = vadd.f32 %v5691, %v5803
      %v5845 = vadd.f32 %v5697, %v5805
      %v5846 = vadd.f32 %v5701, %v5807
      %v5847 = vadd.f32 %v5707, %v5809
      %v5848 = vadd.f32 %v5711, %v5811
      %v5849 = vadd.f32 %v5717, %v5813
      %v5850 = vadd.f32 %v5721, %v5815
      %v5851 = vadd.f32 %v5727, %v5817
      %v5852 = vrot.slane %v5648, 2
      %v5853 = vrot.slane %v5651, 2
      %v5854 = vsel %vm805, %v5852, %v5853
      %v5855 = vrot.slane %v5657, 2
      %v5856 = vsel %vm805, %v5853, %v5855
      %v5857 = vrot.slane %v5661, 2
      %v5858 = vsel %vm805, %v5855, %v5857
      %v5859 = vrot.slane %v5667, 2
      %v5860 = vsel %vm805, %v5857, %v5859
      %v5861 = vrot.slane %v5671, 2
      %v5862 = vsel %vm805, %v5859, %v5861
      %v5863 = vrot.slane %v5677, 2
      %v5864 = vsel %vm805, %v5861, %v5863
      %v5865 = vrot.slane %v5681, 2
      %v5866 = vsel %vm805, %v5863, %v5865
      %v5867 = vrot.slane %v5687, 2
      %v5868 = vsel %vm805, %v5865, %v5867
      %v5869 = vrot.slane %v5691, 2
      %v5870 = vsel %vm805, %v5867, %v5869
      %v5871 = vrot.slane %v5697, 2
      %v5872 = vsel %vm805, %v5869, %v5871
      %v5873 = vrot.slane %v5701, 2
      %v5874 = vsel %vm805, %v5871, %v5873
      %v5875 = vrot.slane %v5707, 2
      %v5876 = vsel %vm805, %v5873, %v5875
      %v5877 = vrot.slane %v5711, 2
      %v5878 = vsel %vm805, %v5875, %v5877
      %v5879 = vrot.slane %v5717, 2
      %v5880 = vsel %vm805, %v5877, %v5879
      %v5881 = vrot.slane %v5721, 2
      %v5882 = vsel %vm805, %v5879, %v5881
      %v5883 = vrot.slane %v5727, 2
      %v5884 = vsel %vm805, %v5881, %v5883
      %5885 = vrot.lane.b32.xlu0 %v5854, 64
      %v5886 = vpop.permute.xlu0 %5885
      %5887 = vrot.lane.b32.xlu0 %v5856, 64
      %v5888 = vpop.permute.xlu0 %5887
      %5889 = vrot.lane.b32.xlu0 %v5858, 64
      %v5890 = vpop.permute.xlu0 %5889
      %5891 = vrot.lane.b32.xlu0 %v5860, 64
      %v5892 = vpop.permute.xlu0 %5891
      %5893 = vrot.lane.b32.xlu0 %v5862, 64
      %v5894 = vpop.permute.xlu0 %5893
      %5895 = vrot.lane.b32.xlu0 %v5864, 64
      %v5896 = vpop.permute.xlu0 %5895
      %5897 = vrot.lane.b32.xlu0 %v5866, 64
      %v5898 = vpop.permute.xlu0 %5897
      %5899 = vrot.lane.b32.xlu0 %v5868, 64
      %v5900 = vpop.permute.xlu0 %5899
      %5901 = vrot.lane.b32.xlu0 %v5870, 64
      %v5902 = vpop.permute.xlu0 %5901
      %5903 = vrot.lane.b32.xlu0 %v5872, 64
      %v5904 = vpop.permute.xlu0 %5903
      %5905 = vrot.lane.b32.xlu0 %v5874, 64
      %v5906 = vpop.permute.xlu0 %5905
      %5907 = vrot.lane.b32.xlu0 %v5876, 64
      %v5908 = vpop.permute.xlu0 %5907
      %5909 = vrot.lane.b32.xlu0 %v5878, 64
      %v5910 = vpop.permute.xlu0 %5909
      %5911 = vrot.lane.b32.xlu0 %v5880, 64
      %v5912 = vpop.permute.xlu0 %5911
      %5913 = vrot.lane.b32.xlu0 %v5882, 64
      %v5914 = vpop.permute.xlu0 %5913
      %5915 = vrot.lane.b32.xlu0 %v5884, 64
      %v5916 = vpop.permute.xlu0 %5915
      %5917 = vrot.lane.b32.xlu0 %v5883, 64
      %v5918 = vpop.permute.xlu0 %5917
      %v5936 = vadd.f32 %v5835, %v5886
      %v5937 = vadd.f32 %v5836, %v5888
      %v5938 = vadd.f32 %v5837, %v5890
      %v5939 = vadd.f32 %v5838, %v5892
      %v5940 = vadd.f32 %v5839, %v5894
      %v5941 = vadd.f32 %v5840, %v5896
      %v5942 = vadd.f32 %v5841, %v5898
      %v5943 = vadd.f32 %v5842, %v5900
      %v5944 = vadd.f32 %v5843, %v5902
      %v5945 = vadd.f32 %v5844, %v5904
      %v5946 = vadd.f32 %v5845, %v5906
      %v5947 = vadd.f32 %v5846, %v5908
      %v5948 = vadd.f32 %v5847, %v5910
      %v5949 = vadd.f32 %v5848, %v5912
      %v5950 = vadd.f32 %v5849, %v5914
      %v5951 = vadd.f32 %v5850, %v5916
      %v5952 = vadd.f32 %v5851, %v5918
      %v5953 = vrot.slane %v5651, 3
      %v5954 = vrot.slane %v5657, 3
      %v5955 = vsel %vm841, %v5953, %v5954
      %v5956 = vrot.slane %v5661, 3
      %v5957 = vsel %vm841, %v5954, %v5956
      %v5958 = vrot.slane %v5667, 3
      %v5959 = vsel %vm841, %v5956, %v5958
      %v5960 = vrot.slane %v5671, 3
      %v5961 = vsel %vm841, %v5958, %v5960
      %v5962 = vrot.slane %v5677, 3
      %v5963 = vsel %vm841, %v5960, %v5962
      %v5964 = vrot.slane %v5681, 3
      %v5965 = vsel %vm841, %v5962, %v5964
      %v5966 = vrot.slane %v5687, 3
      %v5967 = vsel %vm841, %v5964, %v5966
      %v5968 = vrot.slane %v5691, 3
      %v5969 = vsel %vm841, %v5966, %v5968
      %v5970 = vrot.slane %v5697, 3
      %v5971 = vsel %vm841, %v5968, %v5970
      %v5972 = vrot.slane %v5701, 3
      %v5973 = vsel %vm841, %v5970, %v5972
      %v5974 = vrot.slane %v5707, 3
      %v5975 = vsel %vm841, %v5972, %v5974
      %v5976 = vrot.slane %v5711, 3
      %v5977 = vsel %vm841, %v5974, %v5976
      %v5978 = vrot.slane %v5717, 3
      %v5979 = vsel %vm841, %v5976, %v5978
      %v5980 = vrot.slane %v5721, 3
      %v5981 = vsel %vm841, %v5978, %v5980
      %v5982 = vrot.slane %v5727, 3
      %v5983 = vsel %vm841, %v5980, %v5982
      %5984 = vrot.lane.b32.xlu0 %v5953, 32
      %v5985 = vpop.permute.xlu0 %5984
      %5986 = vrot.lane.b32.xlu0 %v5955, 32
      %v5987 = vpop.permute.xlu0 %5986
      %5988 = vrot.lane.b32.xlu0 %v5957, 32
      %v5989 = vpop.permute.xlu0 %5988
      %5990 = vrot.lane.b32.xlu0 %v5959, 32
      %v5991 = vpop.permute.xlu0 %5990
      %5992 = vrot.lane.b32.xlu0 %v5961, 32
      %v5993 = vpop.permute.xlu0 %5992
      %5994 = vrot.lane.b32.xlu0 %v5963, 32
      %v5995 = vpop.permute.xlu0 %5994
      %5996 = vrot.lane.b32.xlu0 %v5965, 32
      %v5997 = vpop.permute.xlu0 %5996
      %5998 = vrot.lane.b32.xlu0 %v5967, 32
      %v5999 = vpop.permute.xlu0 %5998
      %6000 = vrot.lane.b32.xlu0 %v5969, 32
      %v6001 = vpop.permute.xlu0 %6000
      %6002 = vrot.lane.b32.xlu0 %v5971, 32
      %v6003 = vpop.permute.xlu0 %6002
      %6004 = vrot.lane.b32.xlu0 %v5973, 32
      %v6005 = vpop.permute.xlu0 %6004
      %6006 = vrot.lane.b32.xlu0 %v5975, 32
      %v6007 = vpop.permute.xlu0 %6006
      %6008 = vrot.lane.b32.xlu0 %v5977, 32
      %v6009 = vpop.permute.xlu0 %6008
      %6010 = vrot.lane.b32.xlu0 %v5979, 32
      %v6011 = vpop.permute.xlu0 %6010
      %6012 = vrot.lane.b32.xlu0 %v5981, 32
      %v6013 = vpop.permute.xlu0 %6012
      %6014 = vrot.lane.b32.xlu0 %v5983, 32
      %v6015 = vpop.permute.xlu0 %6014
      %6016 = vrot.lane.b32.xlu0 %v5982, 32
      %v6017 = vpop.permute.xlu0 %6016
      %v6035 = vadd.f32 %v5936, %v5985
      %v6036 = vadd.f32 %v5937, %v5987
      %v6037 = vadd.f32 %v5938, %v5989
      %v6038 = vadd.f32 %v5939, %v5991
      %v6039 = vadd.f32 %v5940, %v5993
      %v6040 = vadd.f32 %v5941, %v5995
      %v6041 = vadd.f32 %v5942, %v5997
      %v6042 = vadd.f32 %v5943, %v5999
      %v6043 = vadd.f32 %v5944, %v6001
      %v6044 = vadd.f32 %v5945, %v6003
      %v6045 = vadd.f32 %v5946, %v6005
      %v6046 = vadd.f32 %v5947, %v6007
      %v6047 = vadd.f32 %v5948, %v6009
      %v6048 = vadd.f32 %v5949, %v6011
      %v6049 = vadd.f32 %v5950, %v6013
      %v6050 = vadd.f32 %v5951, %v6015
      %v6051 = vadd.f32 %v5952, %v6017
      %v6069 = vrot.slane %v5653, 4
      %v6070 = vrot.slane %v5659, 4
      %v6071 = vsel %vm1211, %v6069, %v6070
      %v6072 = vrot.slane %v5663, 4
      %v6073 = vsel %vm1211, %v6070, %v6072
      %v6074 = vrot.slane %v5669, 4
      %v6075 = vsel %vm1211, %v6072, %v6074
      %v6076 = vrot.slane %v5673, 4
      %v6077 = vsel %vm1211, %v6074, %v6076
      %v6078 = vrot.slane %v5679, 4
      %v6079 = vsel %vm1211, %v6076, %v6078
      %v6080 = vrot.slane %v5683, 4
      %v6081 = vsel %vm1211, %v6078, %v6080
      %v6082 = vrot.slane %v5689, 4
      %v6083 = vsel %vm1211, %v6080, %v6082
      %v6084 = vrot.slane %v5693, 4
      %v6085 = vsel %vm1211, %v6082, %v6084
      %v6086 = vrot.slane %v5699, 4
      %v6087 = vsel %vm1211, %v6084, %v6086
      %v6088 = vrot.slane %v5703, 4
      %v6089 = vsel %vm1211, %v6086, %v6088
      %v6090 = vrot.slane %v5709, 4
      %v6091 = vsel %vm1211, %v6088, %v6090
      %v6092 = vrot.slane %v5713, 4
      %v6093 = vsel %vm1211, %v6090, %v6092
      %v6094 = vrot.slane %v5719, 4
      %v6095 = vsel %vm1211, %v6092, %v6094
      %v6096 = vrot.slane %v5723, 4
      %v6097 = vsel %vm1211, %v6094, %v6096
      %v6098 = vrot.slane %v5729, 4
      %v6099 = vsel %vm1211, %v6096, %v6098
      %v6100 = vrot.slane %v5732, 4
      %v6101 = vsel %vm1211, %v6098, %v6100
      %v6119 = vadd.f32 %v6035, %v6069
      %v6120 = vadd.f32 %v6036, %v6071
      %v6121 = vadd.f32 %v6037, %v6073
      %v6122 = vadd.f32 %v6038, %v6075
      %v6123 = vadd.f32 %v6039, %v6077
      %v6124 = vadd.f32 %v6040, %v6079
      %v6125 = vadd.f32 %v6041, %v6081
      %v6126 = vadd.f32 %v6042, %v6083
      %v6127 = vadd.f32 %v6043, %v6085
      %v6128 = vadd.f32 %v6044, %v6087
      %v6129 = vadd.f32 %v6045, %v6089
      %v6130 = vadd.f32 %v6046, %v6091
      %v6131 = vadd.f32 %v6047, %v6093
      %v6132 = vadd.f32 %v6048, %v6095
      %v6133 = vadd.f32 %v6049, %v6097
      %v6134 = vadd.f32 %v6050, %v6099
      %v6135 = vadd.f32 %v6051, %v6101
      %v6136 = vrot.slane %v5653, 5
      %v6137 = vrot.slane %v5659, 5
      %v6138 = vsel %vm1247, %v6136, %v6137
      %v6139 = vrot.slane %v5663, 5
      %v6140 = vsel %vm1247, %v6137, %v6139
      %v6141 = vrot.slane %v5669, 5
      %v6142 = vsel %vm1247, %v6139, %v6141
      %v6143 = vrot.slane %v5673, 5
      %v6144 = vsel %vm1247, %v6141, %v6143
      %v6145 = vrot.slane %v5679, 5
      %v6146 = vsel %vm1247, %v6143, %v6145
      %v6147 = vrot.slane %v5683, 5
      %v6148 = vsel %vm1247, %v6145, %v6147
      %v6149 = vrot.slane %v5689, 5
      %v6150 = vsel %vm1247, %v6147, %v6149
      %v6151 = vrot.slane %v5693, 5
      %v6152 = vsel %vm1247, %v6149, %v6151
      %v6153 = vrot.slane %v5699, 5
      %v6154 = vsel %vm1247, %v6151, %v6153
      %v6155 = vrot.slane %v5703, 5
      %v6156 = vsel %vm1247, %v6153, %v6155
      %v6157 = vrot.slane %v5709, 5
      %v6158 = vsel %vm1247, %v6155, %v6157
      %v6159 = vrot.slane %v5713, 5
      %v6160 = vsel %vm1247, %v6157, %v6159
      %v6161 = vrot.slane %v5719, 5
      %v6162 = vsel %vm1247, %v6159, %v6161
      %v6163 = vrot.slane %v5723, 5
      %v6164 = vsel %vm1247, %v6161, %v6163
      %v6165 = vrot.slane %v5729, 5
      %v6166 = vsel %vm1247, %v6163, %v6165
      %v6167 = vrot.slane %v5732, 5
      %v6168 = vsel %vm1247, %v6165, %v6167
      %6169 = vrot.lane.b32.xlu0 %v6136, 96
      %v6170 = vpop.permute.xlu0 %6169
      %6171 = vrot.lane.b32.xlu0 %v6138, 96
      %v6172 = vpop.permute.xlu0 %6171
      %6173 = vrot.lane.b32.xlu0 %v6140, 96
      %v6174 = vpop.permute.xlu0 %6173
      %6175 = vrot.lane.b32.xlu0 %v6142, 96
      %v6176 = vpop.permute.xlu0 %6175
      %6177 = vrot.lane.b32.xlu0 %v6144, 96
      %v6178 = vpop.permute.xlu0 %6177
      %6179 = vrot.lane.b32.xlu0 %v6146, 96
      %v6180 = vpop.permute.xlu0 %6179
      %6181 = vrot.lane.b32.xlu0 %v6148, 96
      %v6182 = vpop.permute.xlu0 %6181
      %6183 = vrot.lane.b32.xlu0 %v6150, 96
      %v6184 = vpop.permute.xlu0 %6183
      %6185 = vrot.lane.b32.xlu0 %v6152, 96
      %v6186 = vpop.permute.xlu0 %6185
      %6187 = vrot.lane.b32.xlu0 %v6154, 96
      %v6188 = vpop.permute.xlu0 %6187
      %6189 = vrot.lane.b32.xlu0 %v6156, 96
      %v6190 = vpop.permute.xlu0 %6189
      %6191 = vrot.lane.b32.xlu0 %v6158, 96
      %v6192 = vpop.permute.xlu0 %6191
      %6193 = vrot.lane.b32.xlu0 %v6160, 96
      %v6194 = vpop.permute.xlu0 %6193
      %6195 = vrot.lane.b32.xlu0 %v6162, 96
      %v6196 = vpop.permute.xlu0 %6195
      %6197 = vrot.lane.b32.xlu0 %v6164, 96
      %v6198 = vpop.permute.xlu0 %6197
      %6199 = vrot.lane.b32.xlu0 %v6166, 96
      %v6200 = vpop.permute.xlu0 %6199
      %6201 = vrot.lane.b32.xlu0 %v6168, 96
      %v6202 = vpop.permute.xlu0 %6201
      %v6220 = vadd.f32 %v6119, %v6170
      %v6221 = vadd.f32 %v6120, %v6172
      %v6222 = vadd.f32 %v6121, %v6174
      %v6223 = vadd.f32 %v6122, %v6176
      %v6224 = vadd.f32 %v6123, %v6178
      %v6225 = vadd.f32 %v6124, %v6180
      %v6226 = vadd.f32 %v6125, %v6182
      %v6227 = vadd.f32 %v6126, %v6184
      %v6228 = vadd.f32 %v6127, %v6186
      %v6229 = vadd.f32 %v6128, %v6188
      %v6230 = vadd.f32 %v6129, %v6190
      %v6231 = vadd.f32 %v6130, %v6192
      %v6232 = vadd.f32 %v6131, %v6194
      %v6233 = vadd.f32 %v6132, %v6196
      %v6234 = vadd.f32 %v6133, %v6198
      %v6235 = vadd.f32 %v6134, %v6200
      %v6236 = vadd.f32 %v6135, %v6202
      %v6237 = vrot.slane %v5653, 6
      %v6238 = vrot.slane %v5659, 6
      %v6239 = vsel %vm401, %v6237, %v6238
      %v6240 = vrot.slane %v5663, 6
      %v6241 = vsel %vm401, %v6238, %v6240
      %v6242 = vrot.slane %v5669, 6
      %v6243 = vsel %vm401, %v6240, %v6242
      %v6244 = vrot.slane %v5673, 6
      %v6245 = vsel %vm401, %v6242, %v6244
      %v6246 = vrot.slane %v5679, 6
      %v6247 = vsel %vm401, %v6244, %v6246
      %v6248 = vrot.slane %v5683, 6
      %v6249 = vsel %vm401, %v6246, %v6248
      %v6250 = vrot.slane %v5689, 6
      %v6251 = vsel %vm401, %v6248, %v6250
      %v6252 = vrot.slane %v5693, 6
      %v6253 = vsel %vm401, %v6250, %v6252
      %v6254 = vrot.slane %v5699, 6
      %v6255 = vsel %vm401, %v6252, %v6254
      %v6256 = vrot.slane %v5703, 6
      %v6257 = vsel %vm401, %v6254, %v6256
      %v6258 = vrot.slane %v5709, 6
      %v6259 = vsel %vm401, %v6256, %v6258
      %v6260 = vrot.slane %v5713, 6
      %v6261 = vsel %vm401, %v6258, %v6260
      %v6262 = vrot.slane %v5719, 6
      %v6263 = vsel %vm401, %v6260, %v6262
      %v6264 = vrot.slane %v5723, 6
      %v6265 = vsel %vm401, %v6262, %v6264
      %v6266 = vrot.slane %v5729, 6
      %v6267 = vsel %vm401, %v6264, %v6266
      %v6268 = vrot.slane %v5732, 6
      %v6269 = vsel %vm401, %v6266, %v6268
      %6270 = vrot.lane.b32.xlu0 %v6237, 64
      %v6271 = vpop.permute.xlu0 %6270
      %6272 = vrot.lane.b32.xlu0 %v6239, 64
      %v6273 = vpop.permute.xlu0 %6272
      %6274 = vrot.lane.b32.xlu0 %v6241, 64
      %v6275 = vpop.permute.xlu0 %6274
      %6276 = vrot.lane.b32.xlu0 %v6243, 64
      %v6277 = vpop.permute.xlu0 %6276
      %6278 = vrot.lane.b32.xlu0 %v6245, 64
      %v6279 = vpop.permute.xlu0 %6278
      %6280 = vrot.lane.b32.xlu0 %v6247, 64
      %v6281 = vpop.permute.xlu0 %6280
      %6282 = vrot.lane.b32.xlu0 %v6249, 64
      %v6283 = vpop.permute.xlu0 %6282
      %6284 = vrot.lane.b32.xlu0 %v6251, 64
      %v6285 = vpop.permute.xlu0 %6284
      %6286 = vrot.lane.b32.xlu0 %v6253, 64
      %v6287 = vpop.permute.xlu0 %6286
      %6288 = vrot.lane.b32.xlu0 %v6255, 64
      %v6289 = vpop.permute.xlu0 %6288
      %6290 = vrot.lane.b32.xlu0 %v6257, 64
      %v6291 = vpop.permute.xlu0 %6290
      %6292 = vrot.lane.b32.xlu0 %v6259, 64
      %v6293 = vpop.permute.xlu0 %6292
      %6294 = vrot.lane.b32.xlu0 %v6261, 64
      %v6295 = vpop.permute.xlu0 %6294
      %6296 = vrot.lane.b32.xlu0 %v6263, 64
      %v6297 = vpop.permute.xlu0 %6296
      %6298 = vrot.lane.b32.xlu0 %v6265, 64
      %v6299 = vpop.permute.xlu0 %6298
      %6300 = vrot.lane.b32.xlu0 %v6267, 64
      %v6301 = vpop.permute.xlu0 %6300
      %6302 = vrot.lane.b32.xlu0 %v6269, 64
      %v6303 = vpop.permute.xlu0 %6302
      %v6321 = vadd.f32 %v6220, %v6271
      %v6322 = vadd.f32 %v6221, %v6273
      %v6323 = vadd.f32 %v6222, %v6275
      %v6324 = vadd.f32 %v6223, %v6277
      %v6325 = vadd.f32 %v6224, %v6279
      %v6326 = vadd.f32 %v6225, %v6281
      %v6327 = vadd.f32 %v6226, %v6283
      %v6328 = vadd.f32 %v6227, %v6285
      %v6329 = vadd.f32 %v6228, %v6287
      %v6330 = vadd.f32 %v6229, %v6289
      %v6331 = vadd.f32 %v6230, %v6291
      %v6332 = vadd.f32 %v6231, %v6293
      %v6333 = vadd.f32 %v6232, %v6295
      %v6334 = vadd.f32 %v6233, %v6297
      %v6335 = vadd.f32 %v6234, %v6299
      %v6336 = vadd.f32 %v6235, %v6301
      %v6337 = vadd.f32 %v6236, %v6303
      %v6339 = vlaneseq
      %v6340 = vshrl.u32 %v6339, 7
      %v6341 = vsub.s32 0, %v6340
      %v6342 = vrot.slane %v5300, %v6341
      %v6344 = vadd.f32 %v6321, %v6342
      %v6345 = vadd.f32 %v6322, %v6342
      %v6346 = vadd.f32 %v6323, %v6342
      %v6347 = vadd.f32 %v6324, %v6342
      %v6348 = vadd.f32 %v6325, %v6342
      %v6349 = vadd.f32 %v6326, %v6342
      %v6350 = vadd.f32 %v6327, %v6342
      %v6351 = vadd.f32 %v6328, %v6342
      %v6352 = vadd.f32 %v6329, %v6342
      %v6353 = vadd.f32 %v6330, %v6342
      %v6354 = vadd.f32 %v6331, %v6342
      %v6355 = vadd.f32 %v6332, %v6342
      %v6356 = vadd.f32 %v6333, %v6342
      %v6357 = vadd.f32 %v6334, %v6342
      %v6358 = vadd.f32 %v6335, %v6342
      %v6359 = vadd.f32 %v6336, %v6342
      %v6360 = vadd.f32 %v6337, %v6342
      %v6361 = vmul.f32 %v6344, 0.01
      %v6362 = vmul.f32 %v6345, 0.01
      %v6363 = vmul.f32 %v6346, 0.01
      %v6364 = vmul.f32 %v6347, 0.01
      %v6365 = vmul.f32 %v6348, 0.01
      %v6366 = vmul.f32 %v6349, 0.01
      %v6367 = vmul.f32 %v6350, 0.01
      %v6368 = vmul.f32 %v6351, 0.01
      %v6369 = vmul.f32 %v6352, 0.01
      %v6370 = vmul.f32 %v6353, 0.01
      %v6371 = vmul.f32 %v6354, 0.01
      %v6372 = vmul.f32 %v6355, 0.01
      %v6373 = vmul.f32 %v6356, 0.01
      %v6374 = vmul.f32 %v6357, 0.01
      %v6375 = vmul.f32 %v6358, 0.01
      %v6376 = vmul.f32 %v6359, 0.01
      %v6377 = vmul.f32 %v6360, 0.01
      %v6378 = vmax.f32 %v6344, %v6361
      %v6379 = vmax.f32 %v6345, %v6362
      %v6380 = vmax.f32 %v6346, %v6363
      %v6381 = vmax.f32 %v6347, %v6364
      %v6382 = vmax.f32 %v6348, %v6365
      %v6383 = vmax.f32 %v6349, %v6366
      %v6384 = vmax.f32 %v6350, %v6367
      %v6385 = vmax.f32 %v6351, %v6368
      %v6386 = vmax.f32 %v6352, %v6369
      %v6387 = vmax.f32 %v6353, %v6370
      %v6388 = vmax.f32 %v6354, %v6371
      %v6389 = vmax.f32 %v6355, %v6372
      %v6390 = vmax.f32 %v6356, %v6373
      %v6391 = vmax.f32 %v6357, %v6374
      %v6392 = vmax.f32 %v6358, %v6375
      %v6393 = vmax.f32 %v6359, %v6376
      %v6394 = vmax.f32 %v6360, %v6377
      %v6395 = vld [vmem:[%s1] sm:$0xff]
      %v6396 = vld [vmem:[%s1 + $0x8] sm:$0xff]
      %v6397 = vld [vmem:[%s1 + $0x10] sm:$0xff]
      %v6398 = vld [vmem:[%s1 + $0x18] sm:$0xff]
      %v6399 = vld [vmem:[%s1 + $0x20] sm:$0xff]
      %v6400 = vld [vmem:[%s1 + $0x28] sm:$0xff]
      %v6401 = vld [vmem:[%s1 + $0x30] sm:$0xff]
      %v6402 = vld [vmem:[%s1 + $0x38] sm:$0xff]
      %v6403 = vld [vmem:[%s1 + $0x40] sm:$0xff]
      %v6404 = vld [vmem:[%s1 + $0x48] sm:$0xff]
      %v6405 = vld [vmem:[%s1 + $0x50] sm:$0xff]
      %v6406 = vld [vmem:[%s1 + $0x58] sm:$0xff]
      %v6407 = vld [vmem:[%s1 + $0x60] sm:$0xff]
      %v6408 = vld [vmem:[%s1 + $0x68] sm:$0xff]
      %v6409 = vld [vmem:[%s1 + $0x70] sm:$0xff]
      %v6410 = vld [vmem:[%s1 + $0x78] sm:$0xff]
      %6412 = vset.pattern.permute.xlu0 0
      %6413 = vperm.xlu0 %6412, %v6395
      %v6414 = vpop.permute.xlu0 %6413
      %6416 = vset.pattern.permute.xlu0 0
      %6417 = vperm.xlu0 %6416, %v6396
      %v6418 = vpop.permute.xlu0 %6417
      %6420 = vset.pattern.permute.xlu0 0
      %6421 = vperm.xlu0 %6420, %v6397
      %v6422 = vpop.permute.xlu0 %6421
      %6424 = vset.pattern.permute.xlu0 0
      %6425 = vperm.xlu0 %6424, %v6398
      %v6426 = vpop.permute.xlu0 %6425
      %6428 = vset.pattern.permute.xlu0 0
      %6429 = vperm.xlu0 %6428, %v6399
      %v6430 = vpop.permute.xlu0 %6429
      %6432 = vset.pattern.permute.xlu0 0
      %6433 = vperm.xlu0 %6432, %v6400
      %v6434 = vpop.permute.xlu0 %6433
      %6436 = vset.pattern.permute.xlu0 0
      %6437 = vperm.xlu0 %6436, %v6401
      %v6438 = vpop.permute.xlu0 %6437
      %6440 = vset.pattern.permute.xlu0 0
      %6441 = vperm.xlu0 %6440, %v6402
      %v6442 = vpop.permute.xlu0 %6441
      %6444 = vset.pattern.permute.xlu0 0
      %6445 = vperm.xlu0 %6444, %v6403
      %v6446 = vpop.permute.xlu0 %6445
      %6448 = vset.pattern.permute.xlu0 0
      %6449 = vperm.xlu0 %6448, %v6404
      %v6450 = vpop.permute.xlu0 %6449
      %6452 = vset.pattern.permute.xlu0 0
      %6453 = vperm.xlu0 %6452, %v6405
      %v6454 = vpop.permute.xlu0 %6453
      %6456 = vset.pattern.permute.xlu0 0
      %6457 = vperm.xlu0 %6456, %v6406
      %v6458 = vpop.permute.xlu0 %6457
      %6460 = vset.pattern.permute.xlu0 0
      %6461 = vperm.xlu0 %6460, %v6407
      %v6462 = vpop.permute.xlu0 %6461
      %6464 = vset.pattern.permute.xlu0 0
      %6465 = vperm.xlu0 %6464, %v6408
      %v6466 = vpop.permute.xlu0 %6465
      %6468 = vset.pattern.permute.xlu0 0
      %6469 = vperm.xlu0 %6468, %v6409
      %v6470 = vpop.permute.xlu0 %6469
      %6472 = vset.pattern.permute.xlu0 0
      %6473 = vperm.xlu0 %6472, %v6410
      %v6474 = vpop.permute.xlu0 %6473
      %v6475 = vrot.slane %v6414, 3
      %v6476 = vrot.slane %v6418, 3
      %v6477 = vsel %vm841, %v6475, %v6476
      %v6478 = vrot.slane %v6422, 3
      %v6479 = vsel %vm841, %v6476, %v6478
      %v6480 = vrot.slane %v6426, 3
      %v6481 = vsel %vm841, %v6478, %v6480
      %v6482 = vrot.slane %v6430, 3
      %v6483 = vsel %vm841, %v6480, %v6482
      %v6484 = vrot.slane %v6434, 3
      %v6485 = vsel %vm841, %v6482, %v6484
      %v6486 = vrot.slane %v6438, 3
      %v6487 = vsel %vm841, %v6484, %v6486
      %v6488 = vrot.slane %v6442, 3
      %v6489 = vsel %vm841, %v6486, %v6488
      %v6490 = vrot.slane %v6446, 3
      %v6491 = vsel %vm841, %v6488, %v6490
      %v6492 = vrot.slane %v6450, 3
      %v6493 = vsel %vm841, %v6490, %v6492
      %v6494 = vrot.slane %v6454, 3
      %v6495 = vsel %vm841, %v6492, %v6494
      %v6496 = vrot.slane %v6458, 3
      %v6497 = vsel %vm841, %v6494, %v6496
      %v6498 = vrot.slane %v6462, 3
      %v6499 = vsel %vm841, %v6496, %v6498
      %v6500 = vrot.slane %v6466, 3
      %v6501 = vsel %vm841, %v6498, %v6500
      %v6502 = vrot.slane %v6470, 3
      %v6503 = vsel %vm841, %v6500, %v6502
      %v6504 = vrot.slane %v6474, 3
      %v6505 = vsel %vm841, %v6502, %v6504
      %v6523 = vmul.f32 %v6378, %v6475
      %v6524 = vmul.f32 %v6379, %v6477
      %v6525 = vmul.f32 %v6380, %v6479
      %v6526 = vmul.f32 %v6381, %v6481
      %v6527 = vmul.f32 %v6382, %v6483
      %v6528 = vmul.f32 %v6383, %v6485
      %v6529 = vmul.f32 %v6384, %v6487
      %v6530 = vmul.f32 %v6385, %v6489
      %v6531 = vmul.f32 %v6386, %v6491
      %v6532 = vmul.f32 %v6387, %v6493
      %v6533 = vmul.f32 %v6388, %v6495
      %v6534 = vmul.f32 %v6389, %v6497
      %v6535 = vmul.f32 %v6390, %v6499
      %v6536 = vmul.f32 %v6391, %v6501
      %v6537 = vmul.f32 %v6392, %v6503
      %v6538 = vmul.f32 %v6393, %v6505
      %v6539 = vmul.f32 %v6394, %v6504
      %v6540 = vpack.c.bf16 %v6524, %v6523
      %v6541 = vpack.c.bf16 %v6526, %v6525
      %v6542 = vpack.c.bf16 %v6528, %v6527
      %v6543 = vpack.c.bf16 %v6530, %v6529
      %v6544 = vpack.c.bf16 %v6532, %v6531
      %v6545 = vpack.c.bf16 %v6534, %v6533
      %v6546 = vpack.c.bf16 %v6536, %v6535
      %v6547 = vpack.c.bf16 %v6538, %v6537
      %v6548 = vpack.c.bf16 %v6539, %v6539
      %v6558 = vunpack.c.l.b16 %v6540
      %v6559 = vunpack.c.h.b16 %v6540
      %v6560 = vunpack.c.l.b16 %v6541
      %v6561 = vunpack.c.h.b16 %v6541
      %v6562 = vunpack.c.l.b16 %v6542
      %v6563 = vunpack.c.h.b16 %v6542
      %v6564 = vunpack.c.l.b16 %v6543
      %v6565 = vunpack.c.h.b16 %v6543
      %v6566 = vunpack.c.l.b16 %v6544
      %v6567 = vunpack.c.h.b16 %v6544
      %v6568 = vunpack.c.l.b16 %v6545
      %v6569 = vunpack.c.h.b16 %v6545
      %v6570 = vunpack.c.l.b16 %v6546
      %v6571 = vunpack.c.h.b16 %v6546
      %v6572 = vunpack.c.l.b16 %v6547
      %v6573 = vunpack.c.h.b16 %v6547
      %v6574 = vunpack.c.l.b16 %v6548
      %v6575 = vpack.c.b16 %v6558, %v6558
      %v6576 = vpack.c.b16 %v6559, %v6559
      %v6577 = vpack.c.b16 %v6560, %v6560
      %v6578 = vpack.c.b16 %v6561, %v6561
      %v6579 = vpack.c.b16 %v6562, %v6562
      %v6580 = vpack.c.b16 %v6563, %v6563
      %v6581 = vpack.c.b16 %v6564, %v6564
      %v6582 = vpack.c.b16 %v6565, %v6565
      %v6583 = vpack.c.b16 %v6566, %v6566
      %v6584 = vpack.c.b16 %v6567, %v6567
      %v6585 = vpack.c.b16 %v6568, %v6568
      %v6586 = vpack.c.b16 %v6569, %v6569
      %v6587 = vpack.c.b16 %v6570, %v6570
      %v6588 = vpack.c.b16 %v6571, %v6571
      %v6589 = vpack.c.b16 %v6572, %v6572
      %v6590 = vpack.c.b16 %v6573, %v6573
      %v6591 = vpack.c.b16 %v6574, %v6574
      %v6593 = vshrl.u32 %v6575, 16
      %v6595 = vrot.slane %v6593, 6
      %v6596 = vshll.u32 %v6575, 16
      %v6598 = vrot.slane %v6596, 7
      %v6599 = vor.u32 %v6595, %v6598
      %v6600 = vrot.slane %v6599, 4
      %v6602 = vshrl.u32 %v6576, 16
      %v6604 = vrot.slane %v6602, 6
      %v6605 = vshll.u32 %v6576, 16
      %v6607 = vrot.slane %v6605, 7
      %v6608 = vor.u32 %v6604, %v6607
      %v6609 = vsel %vm1481, %v6600, %v6608
      %v6610 = vrot.slane %v6608, 4
      %v6612 = vshrl.u32 %v6577, 16
      %v6614 = vrot.slane %v6612, 6
      %v6615 = vshll.u32 %v6577, 16
      %v6617 = vrot.slane %v6615, 7
      %v6618 = vor.u32 %v6614, %v6617
      %v6619 = vsel %vm1481, %v6610, %v6618
      %v6620 = vrot.slane %v6618, 4
      %v6622 = vshrl.u32 %v6578, 16
      %v6624 = vrot.slane %v6622, 6
      %v6625 = vshll.u32 %v6578, 16
      %v6627 = vrot.slane %v6625, 7
      %v6628 = vor.u32 %v6624, %v6627
      %v6629 = vsel %vm1481, %v6620, %v6628
      %v6630 = vrot.slane %v6628, 4
      %v6632 = vshrl.u32 %v6579, 16
      %v6634 = vrot.slane %v6632, 6
      %v6635 = vshll.u32 %v6579, 16
      %v6637 = vrot.slane %v6635, 7
      %v6638 = vor.u32 %v6634, %v6637
      %v6639 = vsel %vm1481, %v6630, %v6638
      %v6640 = vrot.slane %v6638, 4
      %v6642 = vshrl.u32 %v6580, 16
      %v6644 = vrot.slane %v6642, 6
      %v6645 = vshll.u32 %v6580, 16
      %v6647 = vrot.slane %v6645, 7
      %v6648 = vor.u32 %v6644, %v6647
      %v6649 = vsel %vm1481, %v6640, %v6648
      %v6650 = vrot.slane %v6648, 4
      %v6652 = vshrl.u32 %v6581, 16
      %v6654 = vrot.slane %v6652, 6
      %v6655 = vshll.u32 %v6581, 16
      %v6657 = vrot.slane %v6655, 7
      %v6658 = vor.u32 %v6654, %v6657
      %v6659 = vsel %vm1481, %v6650, %v6658
      %v6660 = vrot.slane %v6658, 4
      %v6662 = vshrl.u32 %v6582, 16
      %v6664 = vrot.slane %v6662, 6
      %v6665 = vshll.u32 %v6582, 16
      %v6667 = vrot.slane %v6665, 7
      %v6668 = vor.u32 %v6664, %v6667
      %v6669 = vsel %vm1481, %v6660, %v6668
      %v6670 = vrot.slane %v6668, 4
      %v6672 = vshrl.u32 %v6583, 16
      %v6674 = vrot.slane %v6672, 6
      %v6675 = vshll.u32 %v6583, 16
      %v6677 = vrot.slane %v6675, 7
      %v6678 = vor.u32 %v6674, %v6677
      %v6679 = vsel %vm1481, %v6670, %v6678
      %v6680 = vrot.slane %v6678, 4
      %v6682 = vshrl.u32 %v6584, 16
      %v6684 = vrot.slane %v6682, 6
      %v6685 = vshll.u32 %v6584, 16
      %v6687 = vrot.slane %v6685, 7
      %v6688 = vor.u32 %v6684, %v6687
      %v6689 = vsel %vm1481, %v6680, %v6688
      %v6690 = vrot.slane %v6688, 4
      %v6692 = vshrl.u32 %v6585, 16
      %v6694 = vrot.slane %v6692, 6
      %v6695 = vshll.u32 %v6585, 16
      %v6697 = vrot.slane %v6695, 7
      %v6698 = vor.u32 %v6694, %v6697
      %v6699 = vsel %vm1481, %v6690, %v6698
      %v6700 = vrot.slane %v6698, 4
      %v6702 = vshrl.u32 %v6586, 16
      %v6704 = vrot.slane %v6702, 6
      %v6705 = vshll.u32 %v6586, 16
      %v6707 = vrot.slane %v6705, 7
      %v6708 = vor.u32 %v6704, %v6707
      %v6709 = vsel %vm1481, %v6700, %v6708
      %v6710 = vrot.slane %v6708, 4
      %v6712 = vshrl.u32 %v6587, 16
      %v6714 = vrot.slane %v6712, 6
      %v6715 = vshll.u32 %v6587, 16
      %v6717 = vrot.slane %v6715, 7
      %v6718 = vor.u32 %v6714, %v6717
      %v6719 = vsel %vm1481, %v6710, %v6718
      %v6720 = vrot.slane %v6718, 4
      %v6722 = vshrl.u32 %v6588, 16
      %v6724 = vrot.slane %v6722, 6
      %v6725 = vshll.u32 %v6588, 16
      %v6727 = vrot.slane %v6725, 7
      %v6728 = vor.u32 %v6724, %v6727
      %v6729 = vsel %vm1481, %v6720, %v6728
      %v6730 = vrot.slane %v6728, 4
      %v6732 = vshrl.u32 %v6589, 16
      %v6734 = vrot.slane %v6732, 6
      %v6735 = vshll.u32 %v6589, 16
      %v6737 = vrot.slane %v6735, 7
      %v6738 = vor.u32 %v6734, %v6737
      %v6739 = vsel %vm1481, %v6730, %v6738
      %v6740 = vrot.slane %v6738, 4
      %v6742 = vshrl.u32 %v6590, 16
      %v6744 = vrot.slane %v6742, 6
      %v6745 = vshll.u32 %v6590, 16
      %v6747 = vrot.slane %v6745, 7
      %v6748 = vor.u32 %v6744, %v6747
      %v6749 = vsel %vm1481, %v6740, %v6748
      %v6750 = vrot.slane %v6748, 4
      %v6752 = vshrl.u32 %v6591, 16
      %v6754 = vrot.slane %v6752, 6
      %v6755 = vshll.u32 %v6591, 16
      %v6757 = vrot.slane %v6755, 7
      %v6758 = vor.u32 %v6754, %v6757
      %v6759 = vsel %vm1481, %v6750, %v6758
      %6776 = vst.msk [vmem:[#allocation3 + $0x14] sm:$0xf] %vm313, %v6609
      %6777 = vst.msk [vmem:[#allocation3 + $0x18] sm:$0xf] %vm313, %v6619
      %6778 = vst.msk [vmem:[#allocation3 + $0x1c] sm:$0xf] %vm313, %v6629
      %6779 = vst.msk [vmem:[#allocation3 + $0x20] sm:$0xf] %vm313, %v6639
      %6780 = vst.msk [vmem:[#allocation3 + $0x24] sm:$0xf] %vm313, %v6649
      %6781 = vst.msk [vmem:[#allocation3 + $0x28] sm:$0xf] %vm313, %v6659
      %6782 = vst.msk [vmem:[#allocation3 + $0x2c] sm:$0xf] %vm313, %v6669
      %6783 = vst.msk [vmem:[#allocation3 + $0x30] sm:$0xf] %vm313, %v6679
      %6784 = vst.msk [vmem:[#allocation3 + $0x34] sm:$0xf] %vm313, %v6689
      %6785 = vst.msk [vmem:[#allocation3 + $0x38] sm:$0xf] %vm313, %v6699
      %6786 = vst.msk [vmem:[#allocation3 + $0x3c] sm:$0xf] %vm313, %v6709
      %6787 = vst.msk [vmem:[#allocation3 + $0x40] sm:$0xf] %vm313, %v6719
      %6788 = vst.msk [vmem:[#allocation3 + $0x44] sm:$0xf] %vm313, %v6729
      %6789 = vst.msk [vmem:[#allocation3 + $0x48] sm:$0xf] %vm313, %v6739
      %6790 = vst.msk [vmem:[#allocation3 + $0x4c] sm:$0xf] %vm313, %v6749
      %6791 = vst.msk [vmem:[#allocation3 + $0x50] sm:$0xf] %vm313, %v6759
      %v6792 = vld [vmem:[#allocation2 + $0x40] sm:$0xf]
      %v6793 = vld [vmem:[#allocation2 + $0x44] sm:$0xf]
      %v6794 = vld [vmem:[#allocation2 + $0x48] sm:$0xf]
      %v6795 = vld [vmem:[#allocation2 + $0x4c] sm:$0xf]
      %v6796 = vld [vmem:[#allocation2 + $0x50] sm:$0xf]
      %v6797 = vld [vmem:[#allocation2 + $0x54] sm:$0xf]
      %v6798 = vld [vmem:[#allocation2 + $0x58] sm:$0xf]
      %v6799 = vld [vmem:[#allocation2 + $0x5c] sm:$0xf]
      %v6800 = vld [vmem:[#allocation2 + $0x60] sm:$0xf]
      %v6801 = vld [vmem:[#allocation2 + $0x64] sm:$0xf]
      %v6802 = vld [vmem:[#allocation2 + $0x68] sm:$0xf]
      %v6803 = vld [vmem:[#allocation2 + $0x6c] sm:$0xf]
      %v6804 = vld [vmem:[#allocation2 + $0x70] sm:$0xf]
      %v6805 = vld [vmem:[#allocation2 + $0x74] sm:$0xf]
      %v6806 = vld [vmem:[#allocation2 + $0x78] sm:$0xf]
      %v6807 = vld [vmem:[#allocation2 + $0x7c] sm:$0xf]
      %v6808 = vld [vmem:[#allocation2 + $0x80] sm:$0xf]
      %v6809 = vld [vmem:[#allocation2 + $0x84] sm:$0xf]
      %v6810 = vld [vmem:[#allocation2 + $0x88] sm:$0xf]
      %v6811 = vld [vmem:[#allocation2 + $0x8c] sm:$0xf]
      %v6812 = vld [vmem:[#allocation2 + $0x90] sm:$0xf]
      %v6813 = vld [vmem:[#allocation2 + $0x94] sm:$0xf]
      %v6814 = vld [vmem:[#allocation2 + $0x98] sm:$0xf]
      %v6815 = vld [vmem:[#allocation2 + $0x9c] sm:$0xf]
      %v6816 = vld [vmem:[#allocation2 + $0xa0] sm:$0xf]
      %v6817 = vld [vmem:[#allocation2 + $0xa4] sm:$0xf]
      %v6836 = vunpack.c.l.b16 %v6792
      %v6837 = vunpack.c.l.b16 %v6793
      %v6838 = vunpack.c.l.b16 %v6794
      %v6839 = vunpack.c.l.b16 %v6795
      %v6840 = vunpack.c.l.b16 %v6796
      %v6841 = vunpack.c.l.b16 %v6797
      %v6842 = vunpack.c.l.b16 %v6798
      %v6843 = vunpack.c.l.b16 %v6799
      %v6844 = vunpack.c.l.b16 %v6800
      %v6845 = vunpack.c.l.b16 %v6801
      %v6846 = vunpack.c.l.b16 %v6802
      %v6847 = vunpack.c.l.b16 %v6803
      %v6848 = vunpack.c.l.b16 %v6804
      %v6849 = vunpack.c.l.b16 %v6805
      %v6850 = vunpack.c.l.b16 %v6806
      %v6851 = vunpack.c.l.b16 %v6807
      %v6852 = vunpack.c.l.b16 %v6808
      %v6853 = vunpack.c.l.b16 %v6809
      %v6854 = vpack.c.b16 %v6837, %v6836
      %v6855 = vpack.c.b16 %v6839, %v6838
      %v6856 = vpack.c.b16 %v6841, %v6840
      %v6857 = vpack.c.b16 %v6843, %v6842
      %v6858 = vpack.c.b16 %v6845, %v6844
      %v6859 = vpack.c.b16 %v6847, %v6846
      %v6860 = vpack.c.b16 %v6849, %v6848
      %v6861 = vpack.c.b16 %v6851, %v6850
      %v6862 = vpack.c.b16 %v6853, %v6852
      %v6867 = vunpack.c.l.b16 %v6810
      %v6868 = vunpack.c.l.b16 %v6811
      %v6869 = vunpack.c.l.b16 %v6812
      %v6870 = vunpack.c.l.b16 %v6813
      %v6871 = vpack.c.b16 %v6868, %v6867
      %v6872 = vpack.c.b16 %v6870, %v6869
      %6873 = vrot.lane.b32.xlu0 %v6856, 64
      %v6874 = vpop.permute.xlu0 %6873
      %6875 = vrot.lane.b32.xlu0 %v6857, 64
      %v6876 = vpop.permute.xlu0 %6875
      %6877 = vrot.lane.b32.xlu0 %v6858, 64
      %v6878 = vpop.permute.xlu0 %6877
      %6879 = vrot.lane.b32.xlu0 %v6859, 64
      %v6880 = vpop.permute.xlu0 %6879
      %6881 = vrot.lane.b32.xlu0 %v6860, 64
      %v6882 = vpop.permute.xlu0 %6881
      %6883 = vrot.lane.b32.xlu0 %v6861, 64
      %v6884 = vpop.permute.xlu0 %6883
      %6885 = vrot.lane.b32.xlu0 %v6862, 64
      %v6886 = vpop.permute.xlu0 %6885
      %6887 = vrot.lane.b32.xlu0 %v6871, 64
      %v6888 = vpop.permute.xlu0 %6887
      %6889 = vrot.lane.b32.xlu0 %v6872, 64
      %v6890 = vpop.permute.xlu0 %6889
      %v6895 = vunpack.c.l.b16 %v6814
      %v6896 = vunpack.c.l.b16 %v6815
      %v6897 = vunpack.c.l.b16 %v6816
      %v6898 = vunpack.c.l.b16 %v6817
      %v6899 = vpack.c.b16 %v6896, %v6895
      %v6900 = vpack.c.b16 %v6898, %v6897
      %v6903 = vsel %vm5410, %v6854, %v6874
      %v6907 = vsel %vm5410, %v6855, %v6876
      %v6911 = vsel %vm5410, %v6856, %v6878
      %v6915 = vsel %vm5410, %v6857, %v6880
      %v6919 = vsel %vm5410, %v6858, %v6882
      %v6923 = vsel %vm5410, %v6859, %v6884
      %v6927 = vsel %vm5410, %v6860, %v6886
      %v6931 = vsel %vm5410, %v6861, %v6888
      %v6935 = vsel %vm5410, %v6862, %v6890
      %v6937 = vld [vmem:[%s4] sm:$0xff]
      %v6938 = vld [vmem:[%s4 + $0x8] sm:$0xff]
      %v6939 = vld [vmem:[%s4 + $0x10] sm:$0xff]
      %v6940 = vld [vmem:[%s4 + $0x18] sm:$0xff]
      %v6941 = vld [vmem:[%s4 + $0x20] sm:$0xff]
      %v6942 = vld [vmem:[%s4 + $0x28] sm:$0xff]
      %v6943 = vld [vmem:[%s4 + $0x30] sm:$0xff]
      %v6944 = vld [vmem:[%s4 + $0x38] sm:$0xff]
      %v6945 = vld [vmem:[%s4 + $0x40] sm:$0xff]
      %v6946 = vld [vmem:[%s4 + $0x48] sm:$0xff]
      %v6947 = vld [vmem:[%s4 + $0x50] sm:$0xff]
      %v6948 = vld [vmem:[%s4 + $0x58] sm:$0xff]
      %v6949 = vld [vmem:[%s4 + $0x60] sm:$0xff]
      %v6950 = vld [vmem:[%s4 + $0x68] sm:$0xff]
      %v6951 = vld [vmem:[%s4 + $0x70] sm:$0xff]
      %v6952 = vld [vmem:[%s4 + $0x78] sm:$0xff]
      %v6953 = vld [vmem:[%s4 + $0x80] sm:$0xff]
      %v6954 = vld [vmem:[%s4 + $0x88] sm:$0xff]
      %v6955 = vld [vmem:[%s4 + $0x90] sm:$0xff]
      %v6956 = vld [vmem:[%s4 + $0x98] sm:$0xff]
      %v6957 = vld [vmem:[%s4 + $0xa0] sm:$0xff]
      %v6958 = vld [vmem:[%s4 + $0xa8] sm:$0xff]
      %v6959 = vld [vmem:[%s4 + $0xb0] sm:$0xff]
      %v6960 = vld [vmem:[%s4 + $0xb8] sm:$0xff]
      %v6985 = vunpack.c.l.b16 %v6937
      %v6986 = vunpack.c.h.b16 %v6937
      %v6987 = vunpack.c.l.b16 %v6938
      %v6988 = vunpack.c.h.b16 %v6938
      %v6989 = vunpack.c.l.b16 %v6939
      %v6990 = vunpack.c.h.b16 %v6939
      %v6991 = vunpack.c.l.b16 %v6940
      %v6992 = vunpack.c.h.b16 %v6940
      %v6993 = vunpack.c.l.b16 %v6941
      %v6994 = vunpack.c.h.b16 %v6941
      %v6995 = vunpack.c.l.b16 %v6942
      %v6996 = vunpack.c.h.b16 %v6942
      %v6997 = vunpack.c.l.b16 %v6943
      %v6998 = vunpack.c.h.b16 %v6943
      %v6999 = vunpack.c.l.b16 %v6944
      %v7000 = vunpack.c.h.b16 %v6944
      %v7001 = vunpack.c.l.b16 %v6945
      %v7002 = vunpack.c.h.b16 %v6945
      %v7003 = vunpack.c.l.b16 %v6946
      %v7004 = vunpack.c.h.b16 %v6946
      %v7005 = vunpack.c.l.b16 %v6947
      %v7006 = vunpack.c.h.b16 %v6947
      %v7007 = vunpack.c.l.b16 %v6948
      %v7008 = vunpack.c.h.b16 %v6948
      %v7009 = vunpack.c.l.b16 %v6949
      %v7010 = vunpack.c.h.b16 %v6949
      %v7011 = vunpack.c.l.b16 %v6950
      %v7012 = vunpack.c.h.b16 %v6950
      %v7013 = vunpack.c.l.b16 %v6951
      %v7014 = vunpack.c.h.b16 %v6951
      %v7015 = vunpack.c.l.b16 %v6952
      %v7016 = vunpack.c.h.b16 %v6952
      %v7017 = vunpack.c.l.b16 %v6953
      %v7018 = vunpack.c.h.b16 %v6953
      %v7019 = vunpack.c.l.b16 %v6954
      %v7020 = vunpack.c.h.b16 %v6954
      %v7021 = vunpack.c.l.b16 %v6955
      %v7022 = vunpack.c.h.b16 %v6955
      %v7023 = vunpack.c.l.b16 %v6956
      %v7024 = vunpack.c.h.b16 %v6956
      %v7025 = vunpack.c.l.b16 %v6957
      %v7026 = vunpack.c.h.b16 %v6957
      %v7027 = vunpack.c.l.b16 %v6958
      %v7028 = vunpack.c.h.b16 %v6958
      %v7029 = vunpack.c.l.b16 %v6959
      %v7030 = vunpack.c.h.b16 %v6959
      %v7031 = vunpack.c.l.b16 %v6960
      %v7032 = vunpack.c.h.b16 %v6960
      %v7033 = vpack.c.b16 %v6987, %v6985
      %v7034 = vpack.c.b16 %v6988, %v6986
      %v7035 = vpack.c.b16 %v6991, %v6989
      %v7036 = vpack.c.b16 %v6992, %v6990
      %v7037 = vpack.c.b16 %v6995, %v6993
      %v7038 = vpack.c.b16 %v6996, %v6994
      %v7039 = vpack.c.b16 %v6999, %v6997
      %v7040 = vpack.c.b16 %v7000, %v6998
      %v7041 = vpack.c.b16 %v7003, %v7001
      %v7042 = vpack.c.b16 %v7004, %v7002
      %v7043 = vpack.c.b16 %v7007, %v7005
      %v7044 = vpack.c.b16 %v7008, %v7006
      %v7045 = vpack.c.b16 %v7011, %v7009
      %v7046 = vpack.c.b16 %v7012, %v7010
      %v7047 = vpack.c.b16 %v7015, %v7013
      %v7048 = vpack.c.b16 %v7016, %v7014
      %v7049 = vpack.c.b16 %v7019, %v7017
      %v7050 = vpack.c.b16 %v7020, %v7018
      %v7051 = vpack.c.b16 %v7023, %v7021
      %v7052 = vpack.c.b16 %v7024, %v7022
      %v7053 = vpack.c.b16 %v7027, %v7025
      %v7054 = vpack.c.b16 %v7028, %v7026
      %v7055 = vpack.c.b16 %v7031, %v7029
      %v7056 = vpack.c.b16 %v7032, %v7030
      %v7081 = vsel %vm5410, %v6858, 0
      %v7083 = vsel %vm5410, %v6859, 0
      %v7085 = vsel %vm5410, %v6860, 0
      %v7087 = vsel %vm5410, %v6861, 0
      %v7089 = vsel %vm5410, %v6862, 0
      %v7092 = vsel %vm5410, %v6871, 0
      %v7095 = vsel %vm5410, %v6872, 0
      %v7098 = vsel %vm5410, %v6899, 0
      %v7101 = vsel %vm5410, %v6900, 0
      %7103 = vmatprep.subr.bf16.mxu0 %v7048
      %7104 = vmatpush1.bf16.msra.mxu0 %v7047
      %7105 = vmatprep.subr.bf16.mxu0 %v7046
      %7106 = vmatpush1.bf16.msra.mxu0 %v7045
      %7107 = vmatprep.subr.bf16.mxu0 %v7044
      %7108 = vmatpush1.bf16.msra.mxu0 %v7043
      %7109 = vmatprep.subr.bf16.mxu0 %v7042
      %7110 = vmatpush1.bf16.msra.mxu0 %v7041
      %7111 = vmatprep.subr.bf16.mxu0 %v7040
      %7112 = vmatpush1.bf16.msra.mxu0 %v7039
      %7113 = vmatprep.subr.bf16.mxu0 %v7038
      %7114 = vmatpush1.bf16.msra.mxu0 %v7037
      %7115 = vmatprep.subr.bf16.mxu0 %v7036
      %7116 = vmatpush1.bf16.msra.mxu0 %v7035
      %7117 = vmatprep.subr.bf16.mxu0 %v7034
      %7118 = vmatpush1.bf16.msra.mxu0 %v7033
      %7119 = vmatprep.subr.bf16.mxu0 0
      %7120 = vmatpush2.bf16.msra.mxu0 0
      %7121 = vmatprep.subr.bf16.mxu0 0
      %7122 = vmatpush2.bf16.msra.mxu0 0
      %7123 = vmatprep.subr.bf16.mxu0 0
      %7124 = vmatpush2.bf16.msra.mxu0 0
      %7125 = vmatprep.subr.bf16.mxu0 0
      %7126 = vmatpush2.bf16.msra.mxu0 0
      %7127 = vmatprep.subr.bf16.mxu0 %v7056
      %7128 = vmatpush2.bf16.msra.mxu0 %v7055
      %7129 = vmatprep.subr.bf16.mxu0 %v7054
      %7130 = vmatpush2.bf16.msra.mxu0 %v7053
      %7131 = vmatprep.subr.bf16.mxu0 %v7052
      %7132 = vmatpush2.bf16.msra.mxu0 %v7051
      %7133 = vmatprep.subr.bf16.mxu0 %v7050
      %7134 = vmatpush2.bf16.msra.mxu0 %v7049
      %7135 = vmatprep.mubr.bf16.mxu0 %v7081
      %7136 = vmatmul.mubr.bf16.gmra.mxu0 %v6903
      %v7137 = vpop.f32.mrf.mxu0
      %v7138 = vadd.f32 0.0, %v7137
      %v7139 = vpop.f32.mrf.mxu0
      %v7140 = vpop.f32.mrf.mxu0
      %v7141 = vadd.f32 0.0, %v7140
      %v7142 = vpop.f32.mrf.mxu0
      %v7143 = vadd.f32 0.0, %v7142
      %7144 = vmatprep.mubr.bf16.mxu0 %v7083
      %7145 = vmatmul.mubr.bf16.gmra.mxu0 %v6907
      %v7146 = vpop.f32.mrf.mxu0
      %v7147 = vadd.f32 0.0, %v7146
      %v7148 = vpop.f32.mrf.mxu0
      %v7149 = vadd.f32 0.0, %v7148
      %v7150 = vpop.f32.mrf.mxu0
      %v7151 = vadd.f32 0.0, %v7150
      %v7152 = vpop.f32.mrf.mxu0
      %v7153 = vadd.f32 0.0, %v7152
      %7154 = vmatprep.mubr.bf16.mxu0 %v7085
      %7155 = vmatmul.mubr.bf16.gmra.mxu0 %v6911
      %v7156 = vpop.f32.mrf.mxu0
      %v7157 = vadd.f32 0.0, %v7156
      %v7158 = vpop.f32.mrf.mxu0
      %v7159 = vadd.f32 0.0, %v7158
      %v7160 = vpop.f32.mrf.mxu0
      %v7161 = vadd.f32 0.0, %v7160
      %v7162 = vpop.f32.mrf.mxu0
      %v7163 = vadd.f32 0.0, %v7162
      %7164 = vmatprep.mubr.bf16.mxu0 %v7087
      %7165 = vmatmul.mubr.bf16.gmra.mxu0 %v6915
      %v7166 = vpop.f32.mrf.mxu0
      %v7167 = vadd.f32 0.0, %v7166
      %v7168 = vpop.f32.mrf.mxu0
      %v7169 = vadd.f32 0.0, %v7168
      %v7170 = vpop.f32.mrf.mxu0
      %v7171 = vadd.f32 0.0, %v7170
      %v7172 = vpop.f32.mrf.mxu0
      %v7173 = vadd.f32 0.0, %v7172
      %7174 = vmatprep.mubr.bf16.mxu0 %v7089
      %7175 = vmatmul.mubr.bf16.gmra.mxu0 %v6919
      %v7176 = vpop.f32.mrf.mxu0
      %v7177 = vadd.f32 0.0, %v7176
      %v7178 = vpop.f32.mrf.mxu0
      %v7179 = vadd.f32 0.0, %v7178
      %v7180 = vpop.f32.mrf.mxu0
      %v7181 = vadd.f32 0.0, %v7180
      %v7182 = vpop.f32.mrf.mxu0
      %v7183 = vadd.f32 0.0, %v7182
      %7184 = vmatprep.mubr.bf16.mxu0 %v7092
      %7185 = vmatmul.mubr.bf16.gmra.mxu0 %v6923
      %v7186 = vpop.f32.mrf.mxu0
      %v7187 = vadd.f32 0.0, %v7186
      %v7188 = vpop.f32.mrf.mxu0
      %v7189 = vadd.f32 0.0, %v7188
      %v7190 = vpop.f32.mrf.mxu0
      %v7191 = vadd.f32 0.0, %v7190
      %v7192 = vpop.f32.mrf.mxu0
      %v7193 = vadd.f32 0.0, %v7192
      %7194 = vmatprep.mubr.bf16.mxu0 %v7095
      %7195 = vmatmul.mubr.bf16.gmra.mxu0 %v6927
      %v7196 = vpop.f32.mrf.mxu0
      %v7197 = vadd.f32 0.0, %v7196
      %v7198 = vpop.f32.mrf.mxu0
      %v7199 = vadd.f32 0.0, %v7198
      %v7200 = vpop.f32.mrf.mxu0
      %v7201 = vadd.f32 0.0, %v7200
      %v7202 = vpop.f32.mrf.mxu0
      %v7203 = vadd.f32 0.0, %v7202
      %7204 = vmatprep.mubr.bf16.mxu0 %v7098
      %7205 = vmatmul.mubr.bf16.gmra.mxu0 %v6931
      %v7206 = vpop.f32.mrf.mxu0
      %v7207 = vadd.f32 0.0, %v7206
      %v7208 = vpop.f32.mrf.mxu0
      %v7209 = vadd.f32 0.0, %v7208
      %v7210 = vpop.f32.mrf.mxu0
      %v7211 = vadd.f32 0.0, %v7210
      %v7212 = vpop.f32.mrf.mxu0
      %v7213 = vadd.f32 0.0, %v7212
      %7214 = vmatprep.mubr.bf16.mxu0 %v7101
      %7215 = vmatmul.mubr.bf16.gmra.mxu0 %v6935
      %v7216 = vpop.f32.mrf.mxu0
      %v7217 = vadd.f32 0.0, %v7216
      %v7218 = vpop.f32.mrf.mxu0
      %v7219 = vadd.f32 0.0, %v7218
      %v7220 = vpop.f32.mrf.mxu0
      %v7221 = vpop.f32.mrf.mxu0
      %v7222 = vadd.f32 0.0, %v7221
      %7223 = vdwg.mxu0
      %v7241 = vrot.slane %v7138, 1
      %v7242 = vrot.slane %v7141, 1
      %v7243 = vsel %vm742, %v7241, %v7242
      %v7244 = vrot.slane %v7147, 1
      %v7245 = vsel %vm742, %v7242, %v7244
      %v7246 = vrot.slane %v7151, 1
      %v7247 = vsel %vm742, %v7244, %v7246
      %v7248 = vrot.slane %v7157, 1
      %v7249 = vsel %vm742, %v7246, %v7248
      %v7250 = vrot.slane %v7161, 1
      %v7251 = vsel %vm742, %v7248, %v7250
      %v7252 = vrot.slane %v7167, 1
      %v7253 = vsel %vm742, %v7250, %v7252
      %v7254 = vrot.slane %v7171, 1
      %v7255 = vsel %vm742, %v7252, %v7254
      %v7256 = vrot.slane %v7177, 1
      %v7257 = vsel %vm742, %v7254, %v7256
      %v7258 = vrot.slane %v7181, 1
      %v7259 = vsel %vm742, %v7256, %v7258
      %v7260 = vrot.slane %v7187, 1
      %v7261 = vsel %vm742, %v7258, %v7260
      %v7262 = vrot.slane %v7191, 1
      %v7263 = vsel %vm742, %v7260, %v7262
      %v7264 = vrot.slane %v7197, 1
      %v7265 = vsel %vm742, %v7262, %v7264
      %v7266 = vrot.slane %v7201, 1
      %v7267 = vsel %vm742, %v7264, %v7266
      %v7268 = vrot.slane %v7207, 1
      %v7269 = vsel %vm742, %v7266, %v7268
      %v7270 = vrot.slane %v7211, 1
      %v7271 = vsel %vm742, %v7268, %v7270
      %v7272 = vrot.slane %v7217, 1
      %v7273 = vsel %vm742, %v7270, %v7272
      %7274 = vrot.lane.b32.xlu0 %v7243, 96
      %v7275 = vpop.permute.xlu0 %7274
      %7276 = vrot.lane.b32.xlu0 %v7245, 96
      %v7277 = vpop.permute.xlu0 %7276
      %7278 = vrot.lane.b32.xlu0 %v7247, 96
      %v7279 = vpop.permute.xlu0 %7278
      %7280 = vrot.lane.b32.xlu0 %v7249, 96
      %v7281 = vpop.permute.xlu0 %7280
      %7282 = vrot.lane.b32.xlu0 %v7251, 96
      %v7283 = vpop.permute.xlu0 %7282
      %7284 = vrot.lane.b32.xlu0 %v7253, 96
      %v7285 = vpop.permute.xlu0 %7284
      %7286 = vrot.lane.b32.xlu0 %v7255, 96
      %v7287 = vpop.permute.xlu0 %7286
      %7288 = vrot.lane.b32.xlu0 %v7257, 96
      %v7289 = vpop.permute.xlu0 %7288
      %7290 = vrot.lane.b32.xlu0 %v7259, 96
      %v7291 = vpop.permute.xlu0 %7290
      %7292 = vrot.lane.b32.xlu0 %v7261, 96
      %v7293 = vpop.permute.xlu0 %7292
      %7294 = vrot.lane.b32.xlu0 %v7263, 96
      %v7295 = vpop.permute.xlu0 %7294
      %7296 = vrot.lane.b32.xlu0 %v7265, 96
      %v7297 = vpop.permute.xlu0 %7296
      %7298 = vrot.lane.b32.xlu0 %v7267, 96
      %v7299 = vpop.permute.xlu0 %7298
      %7300 = vrot.lane.b32.xlu0 %v7269, 96
      %v7301 = vpop.permute.xlu0 %7300
      %7302 = vrot.lane.b32.xlu0 %v7271, 96
      %v7303 = vpop.permute.xlu0 %7302
      %7304 = vrot.lane.b32.xlu0 %v7273, 96
      %v7305 = vpop.permute.xlu0 %7304
      %7306 = vrot.lane.b32.xlu0 %v7272, 96
      %v7307 = vpop.permute.xlu0 %7306
      %v7325 = vadd.f32 %v7138, %v7275
      %v7326 = vadd.f32 %v7141, %v7277
      %v7327 = vadd.f32 %v7147, %v7279
      %v7328 = vadd.f32 %v7151, %v7281
      %v7329 = vadd.f32 %v7157, %v7283
      %v7330 = vadd.f32 %v7161, %v7285
      %v7331 = vadd.f32 %v7167, %v7287
      %v7332 = vadd.f32 %v7171, %v7289
      %v7333 = vadd.f32 %v7177, %v7291
      %v7334 = vadd.f32 %v7181, %v7293
      %v7335 = vadd.f32 %v7187, %v7295
      %v7336 = vadd.f32 %v7191, %v7297
      %v7337 = vadd.f32 %v7197, %v7299
      %v7338 = vadd.f32 %v7201, %v7301
      %v7339 = vadd.f32 %v7207, %v7303
      %v7340 = vadd.f32 %v7211, %v7305
      %v7341 = vadd.f32 %v7217, %v7307
      %v7342 = vrot.slane %v7138, 2
      %v7343 = vrot.slane %v7141, 2
      %v7344 = vsel %vm805, %v7342, %v7343
      %v7345 = vrot.slane %v7147, 2
      %v7346 = vsel %vm805, %v7343, %v7345
      %v7347 = vrot.slane %v7151, 2
      %v7348 = vsel %vm805, %v7345, %v7347
      %v7349 = vrot.slane %v7157, 2
      %v7350 = vsel %vm805, %v7347, %v7349
      %v7351 = vrot.slane %v7161, 2
      %v7352 = vsel %vm805, %v7349, %v7351
      %v7353 = vrot.slane %v7167, 2
      %v7354 = vsel %vm805, %v7351, %v7353
      %v7355 = vrot.slane %v7171, 2
      %v7356 = vsel %vm805, %v7353, %v7355
      %v7357 = vrot.slane %v7177, 2
      %v7358 = vsel %vm805, %v7355, %v7357
      %v7359 = vrot.slane %v7181, 2
      %v7360 = vsel %vm805, %v7357, %v7359
      %v7361 = vrot.slane %v7187, 2
      %v7362 = vsel %vm805, %v7359, %v7361
      %v7363 = vrot.slane %v7191, 2
      %v7364 = vsel %vm805, %v7361, %v7363
      %v7365 = vrot.slane %v7197, 2
      %v7366 = vsel %vm805, %v7363, %v7365
      %v7367 = vrot.slane %v7201, 2
      %v7368 = vsel %vm805, %v7365, %v7367
      %v7369 = vrot.slane %v7207, 2
      %v7370 = vsel %vm805, %v7367, %v7369
      %v7371 = vrot.slane %v7211, 2
      %v7372 = vsel %vm805, %v7369, %v7371
      %v7373 = vrot.slane %v7217, 2
      %v7374 = vsel %vm805, %v7371, %v7373
      %7375 = vrot.lane.b32.xlu0 %v7344, 64
      %v7376 = vpop.permute.xlu0 %7375
      %7377 = vrot.lane.b32.xlu0 %v7346, 64
      %v7378 = vpop.permute.xlu0 %7377
      %7379 = vrot.lane.b32.xlu0 %v7348, 64
      %v7380 = vpop.permute.xlu0 %7379
      %7381 = vrot.lane.b32.xlu0 %v7350, 64
      %v7382 = vpop.permute.xlu0 %7381
      %7383 = vrot.lane.b32.xlu0 %v7352, 64
      %v7384 = vpop.permute.xlu0 %7383
      %7385 = vrot.lane.b32.xlu0 %v7354, 64
      %v7386 = vpop.permute.xlu0 %7385
      %7387 = vrot.lane.b32.xlu0 %v7356, 64
      %v7388 = vpop.permute.xlu0 %7387
      %7389 = vrot.lane.b32.xlu0 %v7358, 64
      %v7390 = vpop.permute.xlu0 %7389
      %7391 = vrot.lane.b32.xlu0 %v7360, 64
      %v7392 = vpop.permute.xlu0 %7391
      %7393 = vrot.lane.b32.xlu0 %v7362, 64
      %v7394 = vpop.permute.xlu0 %7393
      %7395 = vrot.lane.b32.xlu0 %v7364, 64
      %v7396 = vpop.permute.xlu0 %7395
      %7397 = vrot.lane.b32.xlu0 %v7366, 64
      %v7398 = vpop.permute.xlu0 %7397
      %7399 = vrot.lane.b32.xlu0 %v7368, 64
      %v7400 = vpop.permute.xlu0 %7399
      %7401 = vrot.lane.b32.xlu0 %v7370, 64
      %v7402 = vpop.permute.xlu0 %7401
      %7403 = vrot.lane.b32.xlu0 %v7372, 64
      %v7404 = vpop.permute.xlu0 %7403
      %7405 = vrot.lane.b32.xlu0 %v7374, 64
      %v7406 = vpop.permute.xlu0 %7405
      %7407 = vrot.lane.b32.xlu0 %v7373, 64
      %v7408 = vpop.permute.xlu0 %7407
      %v7426 = vadd.f32 %v7325, %v7376
      %v7427 = vadd.f32 %v7326, %v7378
      %v7428 = vadd.f32 %v7327, %v7380
      %v7429 = vadd.f32 %v7328, %v7382
      %v7430 = vadd.f32 %v7329, %v7384
      %v7431 = vadd.f32 %v7330, %v7386
      %v7432 = vadd.f32 %v7331, %v7388
      %v7433 = vadd.f32 %v7332, %v7390
      %v7434 = vadd.f32 %v7333, %v7392
      %v7435 = vadd.f32 %v7334, %v7394
      %v7436 = vadd.f32 %v7335, %v7396
      %v7437 = vadd.f32 %v7336, %v7398
      %v7438 = vadd.f32 %v7337, %v7400
      %v7439 = vadd.f32 %v7338, %v7402
      %v7440 = vadd.f32 %v7339, %v7404
      %v7441 = vadd.f32 %v7340, %v7406
      %v7442 = vadd.f32 %v7341, %v7408
      %v7443 = vrot.slane %v7141, 3
      %v7444 = vrot.slane %v7147, 3
      %v7445 = vsel %vm841, %v7443, %v7444
      %v7446 = vrot.slane %v7151, 3
      %v7447 = vsel %vm841, %v7444, %v7446
      %v7448 = vrot.slane %v7157, 3
      %v7449 = vsel %vm841, %v7446, %v7448
      %v7450 = vrot.slane %v7161, 3
      %v7451 = vsel %vm841, %v7448, %v7450
      %v7452 = vrot.slane %v7167, 3
      %v7453 = vsel %vm841, %v7450, %v7452
      %v7454 = vrot.slane %v7171, 3
      %v7455 = vsel %vm841, %v7452, %v7454
      %v7456 = vrot.slane %v7177, 3
      %v7457 = vsel %vm841, %v7454, %v7456
      %v7458 = vrot.slane %v7181, 3
      %v7459 = vsel %vm841, %v7456, %v7458
      %v7460 = vrot.slane %v7187, 3
      %v7461 = vsel %vm841, %v7458, %v7460
      %v7462 = vrot.slane %v7191, 3
      %v7463 = vsel %vm841, %v7460, %v7462
      %v7464 = vrot.slane %v7197, 3
      %v7465 = vsel %vm841, %v7462, %v7464
      %v7466 = vrot.slane %v7201, 3
      %v7467 = vsel %vm841, %v7464, %v7466
      %v7468 = vrot.slane %v7207, 3
      %v7469 = vsel %vm841, %v7466, %v7468
      %v7470 = vrot.slane %v7211, 3
      %v7471 = vsel %vm841, %v7468, %v7470
      %v7472 = vrot.slane %v7217, 3
      %v7473 = vsel %vm841, %v7470, %v7472
      %7474 = vrot.lane.b32.xlu0 %v7443, 32
      %v7475 = vpop.permute.xlu0 %7474
      %7476 = vrot.lane.b32.xlu0 %v7445, 32
      %v7477 = vpop.permute.xlu0 %7476
      %7478 = vrot.lane.b32.xlu0 %v7447, 32
      %v7479 = vpop.permute.xlu0 %7478
      %7480 = vrot.lane.b32.xlu0 %v7449, 32
      %v7481 = vpop.permute.xlu0 %7480
      %7482 = vrot.lane.b32.xlu0 %v7451, 32
      %v7483 = vpop.permute.xlu0 %7482
      %7484 = vrot.lane.b32.xlu0 %v7453, 32
      %v7485 = vpop.permute.xlu0 %7484
      %7486 = vrot.lane.b32.xlu0 %v7455, 32
      %v7487 = vpop.permute.xlu0 %7486
      %7488 = vrot.lane.b32.xlu0 %v7457, 32
      %v7489 = vpop.permute.xlu0 %7488
      %7490 = vrot.lane.b32.xlu0 %v7459, 32
      %v7491 = vpop.permute.xlu0 %7490
      %7492 = vrot.lane.b32.xlu0 %v7461, 32
      %v7493 = vpop.permute.xlu0 %7492
      %7494 = vrot.lane.b32.xlu0 %v7463, 32
      %v7495 = vpop.permute.xlu0 %7494
      %7496 = vrot.lane.b32.xlu0 %v7465, 32
      %v7497 = vpop.permute.xlu0 %7496
      %7498 = vrot.lane.b32.xlu0 %v7467, 32
      %v7499 = vpop.permute.xlu0 %7498
      %7500 = vrot.lane.b32.xlu0 %v7469, 32
      %v7501 = vpop.permute.xlu0 %7500
      %7502 = vrot.lane.b32.xlu0 %v7471, 32
      %v7503 = vpop.permute.xlu0 %7502
      %7504 = vrot.lane.b32.xlu0 %v7473, 32
      %v7505 = vpop.permute.xlu0 %7504
      %7506 = vrot.lane.b32.xlu0 %v7472, 32
      %v7507 = vpop.permute.xlu0 %7506
      %v7525 = vadd.f32 %v7426, %v7475
      %v7526 = vadd.f32 %v7427, %v7477
      %v7527 = vadd.f32 %v7428, %v7479
      %v7528 = vadd.f32 %v7429, %v7481
      %v7529 = vadd.f32 %v7430, %v7483
      %v7530 = vadd.f32 %v7431, %v7485
      %v7531 = vadd.f32 %v7432, %v7487
      %v7532 = vadd.f32 %v7433, %v7489
      %v7533 = vadd.f32 %v7434, %v7491
      %v7534 = vadd.f32 %v7435, %v7493
      %v7535 = vadd.f32 %v7436, %v7495
      %v7536 = vadd.f32 %v7437, %v7497
      %v7537 = vadd.f32 %v7438, %v7499
      %v7538 = vadd.f32 %v7439, %v7501
      %v7539 = vadd.f32 %v7440, %v7503
      %v7540 = vadd.f32 %v7441, %v7505
      %v7541 = vadd.f32 %v7442, %v7507
      %v7559 = vrot.slane %v7143, 4
      %v7560 = vrot.slane %v7149, 4
      %v7561 = vsel %vm1211, %v7559, %v7560
      %v7562 = vrot.slane %v7153, 4
      %v7563 = vsel %vm1211, %v7560, %v7562
      %v7564 = vrot.slane %v7159, 4
      %v7565 = vsel %vm1211, %v7562, %v7564
      %v7566 = vrot.slane %v7163, 4
      %v7567 = vsel %vm1211, %v7564, %v7566
      %v7568 = vrot.slane %v7169, 4
      %v7569 = vsel %vm1211, %v7566, %v7568
      %v7570 = vrot.slane %v7173, 4
      %v7571 = vsel %vm1211, %v7568, %v7570
      %v7572 = vrot.slane %v7179, 4
      %v7573 = vsel %vm1211, %v7570, %v7572
      %v7574 = vrot.slane %v7183, 4
      %v7575 = vsel %vm1211, %v7572, %v7574
      %v7576 = vrot.slane %v7189, 4
      %v7577 = vsel %vm1211, %v7574, %v7576
      %v7578 = vrot.slane %v7193, 4
      %v7579 = vsel %vm1211, %v7576, %v7578
      %v7580 = vrot.slane %v7199, 4
      %v7581 = vsel %vm1211, %v7578, %v7580
      %v7582 = vrot.slane %v7203, 4
      %v7583 = vsel %vm1211, %v7580, %v7582
      %v7584 = vrot.slane %v7209, 4
      %v7585 = vsel %vm1211, %v7582, %v7584
      %v7586 = vrot.slane %v7213, 4
      %v7587 = vsel %vm1211, %v7584, %v7586
      %v7588 = vrot.slane %v7219, 4
      %v7589 = vsel %vm1211, %v7586, %v7588
      %v7590 = vrot.slane %v7222, 4
      %v7591 = vsel %vm1211, %v7588, %v7590
      %v7609 = vadd.f32 %v7525, %v7559
      %v7610 = vadd.f32 %v7526, %v7561
      %v7611 = vadd.f32 %v7527, %v7563
      %v7612 = vadd.f32 %v7528, %v7565
      %v7613 = vadd.f32 %v7529, %v7567
      %v7614 = vadd.f32 %v7530, %v7569
      %v7615 = vadd.f32 %v7531, %v7571
      %v7616 = vadd.f32 %v7532, %v7573
      %v7617 = vadd.f32 %v7533, %v7575
      %v7618 = vadd.f32 %v7534, %v7577
      %v7619 = vadd.f32 %v7535, %v7579
      %v7620 = vadd.f32 %v7536, %v7581
      %v7621 = vadd.f32 %v7537, %v7583
      %v7622 = vadd.f32 %v7538, %v7585
      %v7623 = vadd.f32 %v7539, %v7587
      %v7624 = vadd.f32 %v7540, %v7589
      %v7625 = vadd.f32 %v7541, %v7591
      %v7626 = vrot.slane %v7143, 5
      %v7627 = vrot.slane %v7149, 5
      %v7628 = vsel %vm1247, %v7626, %v7627
      %v7629 = vrot.slane %v7153, 5
      %v7630 = vsel %vm1247, %v7627, %v7629
      %v7631 = vrot.slane %v7159, 5
      %v7632 = vsel %vm1247, %v7629, %v7631
      %v7633 = vrot.slane %v7163, 5
      %v7634 = vsel %vm1247, %v7631, %v7633
      %v7635 = vrot.slane %v7169, 5
      %v7636 = vsel %vm1247, %v7633, %v7635
      %v7637 = vrot.slane %v7173, 5
      %v7638 = vsel %vm1247, %v7635, %v7637
      %v7639 = vrot.slane %v7179, 5
      %v7640 = vsel %vm1247, %v7637, %v7639
      %v7641 = vrot.slane %v7183, 5
      %v7642 = vsel %vm1247, %v7639, %v7641
      %v7643 = vrot.slane %v7189, 5
      %v7644 = vsel %vm1247, %v7641, %v7643
      %v7645 = vrot.slane %v7193, 5
      %v7646 = vsel %vm1247, %v7643, %v7645
      %v7647 = vrot.slane %v7199, 5
      %v7648 = vsel %vm1247, %v7645, %v7647
      %v7649 = vrot.slane %v7203, 5
      %v7650 = vsel %vm1247, %v7647, %v7649
      %v7651 = vrot.slane %v7209, 5
      %v7652 = vsel %vm1247, %v7649, %v7651
      %v7653 = vrot.slane %v7213, 5
      %v7654 = vsel %vm1247, %v7651, %v7653
      %v7655 = vrot.slane %v7219, 5
      %v7656 = vsel %vm1247, %v7653, %v7655
      %v7657 = vrot.slane %v7222, 5
      %v7658 = vsel %vm1247, %v7655, %v7657
      %7659 = vrot.lane.b32.xlu0 %v7626, 96
      %v7660 = vpop.permute.xlu0 %7659
      %7661 = vrot.lane.b32.xlu0 %v7628, 96
      %v7662 = vpop.permute.xlu0 %7661
      %7663 = vrot.lane.b32.xlu0 %v7630, 96
      %v7664 = vpop.permute.xlu0 %7663
      %7665 = vrot.lane.b32.xlu0 %v7632, 96
      %v7666 = vpop.permute.xlu0 %7665
      %7667 = vrot.lane.b32.xlu0 %v7634, 96
      %v7668 = vpop.permute.xlu0 %7667
      %7669 = vrot.lane.b32.xlu0 %v7636, 96
      %v7670 = vpop.permute.xlu0 %7669
      %7671 = vrot.lane.b32.xlu0 %v7638, 96
      %v7672 = vpop.permute.xlu0 %7671
      %7673 = vrot.lane.b32.xlu0 %v7640, 96
      %v7674 = vpop.permute.xlu0 %7673
      %7675 = vrot.lane.b32.xlu0 %v7642, 96
      %v7676 = vpop.permute.xlu0 %7675
      %7677 = vrot.lane.b32.xlu0 %v7644, 96
      %v7678 = vpop.permute.xlu0 %7677
      %7679 = vrot.lane.b32.xlu0 %v7646, 96
      %v7680 = vpop.permute.xlu0 %7679
      %7681 = vrot.lane.b32.xlu0 %v7648, 96
      %v7682 = vpop.permute.xlu0 %7681
      %7683 = vrot.lane.b32.xlu0 %v7650, 96
      %v7684 = vpop.permute.xlu0 %7683
      %7685 = vrot.lane.b32.xlu0 %v7652, 96
      %v7686 = vpop.permute.xlu0 %7685
      %7687 = vrot.lane.b32.xlu0 %v7654, 96
      %v7688 = vpop.permute.xlu0 %7687
      %7689 = vrot.lane.b32.xlu0 %v7656, 96
      %v7690 = vpop.permute.xlu0 %7689
      %7691 = vrot.lane.b32.xlu0 %v7658, 96
      %v7692 = vpop.permute.xlu0 %7691
      %v7710 = vadd.f32 %v7609, %v7660
      %v7711 = vadd.f32 %v7610, %v7662
      %v7712 = vadd.f32 %v7611, %v7664
      %v7713 = vadd.f32 %v7612, %v7666
      %v7714 = vadd.f32 %v7613, %v7668
      %v7715 = vadd.f32 %v7614, %v7670
      %v7716 = vadd.f32 %v7615, %v7672
      %v7717 = vadd.f32 %v7616, %v7674
      %v7718 = vadd.f32 %v7617, %v7676
      %v7719 = vadd.f32 %v7618, %v7678
      %v7720 = vadd.f32 %v7619, %v7680
      %v7721 = vadd.f32 %v7620, %v7682
      %v7722 = vadd.f32 %v7621, %v7684
      %v7723 = vadd.f32 %v7622, %v7686
      %v7724 = vadd.f32 %v7623, %v7688
      %v7725 = vadd.f32 %v7624, %v7690
      %v7726 = vadd.f32 %v7625, %v7692
      %v7727 = vrot.slane %v7143, 6
      %v7728 = vrot.slane %v7149, 6
      %v7729 = vsel %vm401, %v7727, %v7728
      %v7730 = vrot.slane %v7153, 6
      %v7731 = vsel %vm401, %v7728, %v7730
      %v7732 = vrot.slane %v7159, 6
      %v7733 = vsel %vm401, %v7730, %v7732
      %v7734 = vrot.slane %v7163, 6
      %v7735 = vsel %vm401, %v7732, %v7734
      %v7736 = vrot.slane %v7169, 6
      %v7737 = vsel %vm401, %v7734, %v7736
      %v7738 = vrot.slane %v7173, 6
      %v7739 = vsel %vm401, %v7736, %v7738
      %v7740 = vrot.slane %v7179, 6
      %v7741 = vsel %vm401, %v7738, %v7740
      %v7742 = vrot.slane %v7183, 6
      %v7743 = vsel %vm401, %v7740, %v7742
      %v7744 = vrot.slane %v7189, 6
      %v7745 = vsel %vm401, %v7742, %v7744
      %v7746 = vrot.slane %v7193, 6
      %v7747 = vsel %vm401, %v7744, %v7746
      %v7748 = vrot.slane %v7199, 6
      %v7749 = vsel %vm401, %v7746, %v7748
      %v7750 = vrot.slane %v7203, 6
      %v7751 = vsel %vm401, %v7748, %v7750
      %v7752 = vrot.slane %v7209, 6
      %v7753 = vsel %vm401, %v7750, %v7752
      %v7754 = vrot.slane %v7213, 6
      %v7755 = vsel %vm401, %v7752, %v7754
      %v7756 = vrot.slane %v7219, 6
      %v7757 = vsel %vm401, %v7754, %v7756
      %v7758 = vrot.slane %v7222, 6
      %v7759 = vsel %vm401, %v7756, %v7758
      %7760 = vrot.lane.b32.xlu0 %v7727, 64
      %v7761 = vpop.permute.xlu0 %7760
      %7762 = vrot.lane.b32.xlu0 %v7729, 64
      %v7763 = vpop.permute.xlu0 %7762
      %7764 = vrot.lane.b32.xlu0 %v7731, 64
      %v7765 = vpop.permute.xlu0 %7764
      %7766 = vrot.lane.b32.xlu0 %v7733, 64
      %v7767 = vpop.permute.xlu0 %7766
      %7768 = vrot.lane.b32.xlu0 %v7735, 64
      %v7769 = vpop.permute.xlu0 %7768
      %7770 = vrot.lane.b32.xlu0 %v7737, 64
      %v7771 = vpop.permute.xlu0 %7770
      %7772 = vrot.lane.b32.xlu0 %v7739, 64
      %v7773 = vpop.permute.xlu0 %7772
      %7774 = vrot.lane.b32.xlu0 %v7741, 64
      %v7775 = vpop.permute.xlu0 %7774
      %7776 = vrot.lane.b32.xlu0 %v7743, 64
      %v7777 = vpop.permute.xlu0 %7776
      %7778 = vrot.lane.b32.xlu0 %v7745, 64
      %v7779 = vpop.permute.xlu0 %7778
      %7780 = vrot.lane.b32.xlu0 %v7747, 64
      %v7781 = vpop.permute.xlu0 %7780
      %7782 = vrot.lane.b32.xlu0 %v7749, 64
      %v7783 = vpop.permute.xlu0 %7782
      %7784 = vrot.lane.b32.xlu0 %v7751, 64
      %v7785 = vpop.permute.xlu0 %7784
      %7786 = vrot.lane.b32.xlu0 %v7753, 64
      %v7787 = vpop.permute.xlu0 %7786
      %7788 = vrot.lane.b32.xlu0 %v7755, 64
      %v7789 = vpop.permute.xlu0 %7788
      %7790 = vrot.lane.b32.xlu0 %v7757, 64
      %v7791 = vpop.permute.xlu0 %7790
      %7792 = vrot.lane.b32.xlu0 %v7759, 64
      %v7793 = vpop.permute.xlu0 %7792
      %v7811 = vadd.f32 %v7710, %v7761
      %v7812 = vadd.f32 %v7711, %v7763
      %v7813 = vadd.f32 %v7712, %v7765
      %v7814 = vadd.f32 %v7713, %v7767
      %v7815 = vadd.f32 %v7714, %v7769
      %v7816 = vadd.f32 %v7715, %v7771
      %v7817 = vadd.f32 %v7716, %v7773
      %v7818 = vadd.f32 %v7717, %v7775
      %v7819 = vadd.f32 %v7718, %v7777
      %v7820 = vadd.f32 %v7719, %v7779
      %v7821 = vadd.f32 %v7720, %v7781
      %v7822 = vadd.f32 %v7721, %v7783
      %v7823 = vadd.f32 %v7722, %v7785
      %v7824 = vadd.f32 %v7723, %v7787
      %v7825 = vadd.f32 %v7724, %v7789
      %v7826 = vadd.f32 %v7725, %v7791
      %v7827 = vadd.f32 %v7726, %v7793
      %v7828 = vadd.f32 %v7811, %v6342
      %v7829 = vadd.f32 %v7812, %v6342
      %v7830 = vadd.f32 %v7813, %v6342
      %v7831 = vadd.f32 %v7814, %v6342
      %v7832 = vadd.f32 %v7815, %v6342
      %v7833 = vadd.f32 %v7816, %v6342
      %v7834 = vadd.f32 %v7817, %v6342
      %v7835 = vadd.f32 %v7818, %v6342
      %v7836 = vadd.f32 %v7819, %v6342
      %v7837 = vadd.f32 %v7820, %v6342
      %v7838 = vadd.f32 %v7821, %v6342
      %v7839 = vadd.f32 %v7822, %v6342
      %v7840 = vadd.f32 %v7823, %v6342
      %v7841 = vadd.f32 %v7824, %v6342
      %v7842 = vadd.f32 %v7825, %v6342
      %v7843 = vadd.f32 %v7826, %v6342
      %v7844 = vadd.f32 %v7827, %v6342
      %v7845 = vmul.f32 %v7828, 0.01
      %v7846 = vmul.f32 %v7829, 0.01
      %v7847 = vmul.f32 %v7830, 0.01
      %v7848 = vmul.f32 %v7831, 0.01
      %v7849 = vmul.f32 %v7832, 0.01
      %v7850 = vmul.f32 %v7833, 0.01
      %v7851 = vmul.f32 %v7834, 0.01
      %v7852 = vmul.f32 %v7835, 0.01
      %v7853 = vmul.f32 %v7836, 0.01
      %v7854 = vmul.f32 %v7837, 0.01
      %v7855 = vmul.f32 %v7838, 0.01
      %v7856 = vmul.f32 %v7839, 0.01
      %v7857 = vmul.f32 %v7840, 0.01
      %v7858 = vmul.f32 %v7841, 0.01
      %v7859 = vmul.f32 %v7842, 0.01
      %v7860 = vmul.f32 %v7843, 0.01
      %v7861 = vmul.f32 %v7844, 0.01
      %v7862 = vmax.f32 %v7828, %v7845
      %v7863 = vmax.f32 %v7829, %v7846
      %v7864 = vmax.f32 %v7830, %v7847
      %v7865 = vmax.f32 %v7831, %v7848
      %v7866 = vmax.f32 %v7832, %v7849
      %v7867 = vmax.f32 %v7833, %v7850
      %v7868 = vmax.f32 %v7834, %v7851
      %v7869 = vmax.f32 %v7835, %v7852
      %v7870 = vmax.f32 %v7836, %v7853
      %v7871 = vmax.f32 %v7837, %v7854
      %v7872 = vmax.f32 %v7838, %v7855
      %v7873 = vmax.f32 %v7839, %v7856
      %v7874 = vmax.f32 %v7840, %v7857
      %v7875 = vmax.f32 %v7841, %v7858
      %v7876 = vmax.f32 %v7842, %v7859
      %v7877 = vmax.f32 %v7843, %v7860
      %v7878 = vmax.f32 %v7844, %v7861
      %v7879 = vld [vmem:[%s1 + $0x80] sm:$0xff]
      %v7880 = vld [vmem:[%s1 + $0x88] sm:$0xff]
      %v7881 = vld [vmem:[%s1 + $0x90] sm:$0xff]
      %v7882 = vld [vmem:[%s1 + $0x98] sm:$0xff]
      %v7883 = vld [vmem:[%s1 + $0xa0] sm:$0xff]
      %v7884 = vld [vmem:[%s1 + $0xa8] sm:$0xff]
      %v7885 = vld [vmem:[%s1 + $0xb0] sm:$0xff]
      %v7886 = vld [vmem:[%s1 + $0xb8] sm:$0xff]
      %v7887 = vld [vmem:[%s1 + $0xc0] sm:$0xff]
      %v7888 = vld [vmem:[%s1 + $0xc8] sm:$0xff]
      %v7889 = vld [vmem:[%s1 + $0xd0] sm:$0xff]
      %v7890 = vld [vmem:[%s1 + $0xd8] sm:$0xff]
      %v7891 = vld [vmem:[%s1 + $0xe0] sm:$0xff]
      %v7892 = vld [vmem:[%s1 + $0xe8] sm:$0xff]
      %v7893 = vld [vmem:[%s1 + $0xf0] sm:$0xff]
      %v7894 = vld [vmem:[%s1 + $0xf8] sm:$0xff]
      %7896 = vset.pattern.permute.xlu0 0
      %7897 = vperm.xlu0 %7896, %v7879
      %v7898 = vpop.permute.xlu0 %7897
      %7900 = vset.pattern.permute.xlu0 0
      %7901 = vperm.xlu0 %7900, %v7880
      %v7902 = vpop.permute.xlu0 %7901
      %7904 = vset.pattern.permute.xlu0 0
      %7905 = vperm.xlu0 %7904, %v7881
      %v7906 = vpop.permute.xlu0 %7905
      %7908 = vset.pattern.permute.xlu0 0
      %7909 = vperm.xlu0 %7908, %v7882
      %v7910 = vpop.permute.xlu0 %7909
      %7912 = vset.pattern.permute.xlu0 0
      %7913 = vperm.xlu0 %7912, %v7883
      %v7914 = vpop.permute.xlu0 %7913
      %7916 = vset.pattern.permute.xlu0 0
      %7917 = vperm.xlu0 %7916, %v7884
      %v7918 = vpop.permute.xlu0 %7917
      %7920 = vset.pattern.permute.xlu0 0
      %7921 = vperm.xlu0 %7920, %v7885
      %v7922 = vpop.permute.xlu0 %7921
      %7924 = vset.pattern.permute.xlu0 0
      %7925 = vperm.xlu0 %7924, %v7886
      %v7926 = vpop.permute.xlu0 %7925
      %7928 = vset.pattern.permute.xlu0 0
      %7929 = vperm.xlu0 %7928, %v7887
      %v7930 = vpop.permute.xlu0 %7929
      %7932 = vset.pattern.permute.xlu0 0
      %7933 = vperm.xlu0 %7932, %v7888
      %v7934 = vpop.permute.xlu0 %7933
      %7936 = vset.pattern.permute.xlu0 0
      %7937 = vperm.xlu0 %7936, %v7889
      %v7938 = vpop.permute.xlu0 %7937
      %7940 = vset.pattern.permute.xlu0 0
      %7941 = vperm.xlu0 %7940, %v7890
      %v7942 = vpop.permute.xlu0 %7941
      %7944 = vset.pattern.permute.xlu0 0
      %7945 = vperm.xlu0 %7944, %v7891
      %v7946 = vpop.permute.xlu0 %7945
      %7948 = vset.pattern.permute.xlu0 0
      %7949 = vperm.xlu0 %7948, %v7892
      %v7950 = vpop.permute.xlu0 %7949
      %7952 = vset.pattern.permute.xlu0 0
      %7953 = vperm.xlu0 %7952, %v7893
      %v7954 = vpop.permute.xlu0 %7953
      %7956 = vset.pattern.permute.xlu0 0
      %7957 = vperm.xlu0 %7956, %v7894
      %v7958 = vpop.permute.xlu0 %7957
      %v7959 = vrot.slane %v7898, 3
      %v7960 = vrot.slane %v7902, 3
      %v7961 = vsel %vm841, %v7959, %v7960
      %v7962 = vrot.slane %v7906, 3
      %v7963 = vsel %vm841, %v7960, %v7962
      %v7964 = vrot.slane %v7910, 3
      %v7965 = vsel %vm841, %v7962, %v7964
      %v7966 = vrot.slane %v7914, 3
      %v7967 = vsel %vm841, %v7964, %v7966
      %v7968 = vrot.slane %v7918, 3
      %v7969 = vsel %vm841, %v7966, %v7968
      %v7970 = vrot.slane %v7922, 3
      %v7971 = vsel %vm841, %v7968, %v7970
      %v7972 = vrot.slane %v7926, 3
      %v7973 = vsel %vm841, %v7970, %v7972
      %v7974 = vrot.slane %v7930, 3
      %v7975 = vsel %vm841, %v7972, %v7974
      %v7976 = vrot.slane %v7934, 3
      %v7977 = vsel %vm841, %v7974, %v7976
      %v7978 = vrot.slane %v7938, 3
      %v7979 = vsel %vm841, %v7976, %v7978
      %v7980 = vrot.slane %v7942, 3
      %v7981 = vsel %vm841, %v7978, %v7980
      %v7982 = vrot.slane %v7946, 3
      %v7983 = vsel %vm841, %v7980, %v7982
      %v7984 = vrot.slane %v7950, 3
      %v7985 = vsel %vm841, %v7982, %v7984
      %v7986 = vrot.slane %v7954, 3
      %v7987 = vsel %vm841, %v7984, %v7986
      %v7988 = vrot.slane %v7958, 3
      %v7989 = vsel %vm841, %v7986, %v7988
      %v8007 = vmul.f32 %v7862, %v7959
      %v8008 = vmul.f32 %v7863, %v7961
      %v8009 = vmul.f32 %v7864, %v7963
      %v8010 = vmul.f32 %v7865, %v7965
      %v8011 = vmul.f32 %v7866, %v7967
      %v8012 = vmul.f32 %v7867, %v7969
      %v8013 = vmul.f32 %v7868, %v7971
      %v8014 = vmul.f32 %v7869, %v7973
      %v8015 = vmul.f32 %v7870, %v7975
      %v8016 = vmul.f32 %v7871, %v7977
      %v8017 = vmul.f32 %v7872, %v7979
      %v8018 = vmul.f32 %v7873, %v7981
      %v8019 = vmul.f32 %v7874, %v7983
      %v8020 = vmul.f32 %v7875, %v7985
      %v8021 = vmul.f32 %v7876, %v7987
      %v8022 = vmul.f32 %v7877, %v7989
      %v8023 = vmul.f32 %v7878, %v7988
      %v8024 = vpack.c.bf16 %v8008, %v8007
      %v8025 = vpack.c.bf16 %v8010, %v8009
      %v8026 = vpack.c.bf16 %v8012, %v8011
      %v8027 = vpack.c.bf16 %v8014, %v8013
      %v8028 = vpack.c.bf16 %v8016, %v8015
      %v8029 = vpack.c.bf16 %v8018, %v8017
      %v8030 = vpack.c.bf16 %v8020, %v8019
      %v8031 = vpack.c.bf16 %v8022, %v8021
      %v8032 = vpack.c.bf16 %v8023, %v8023
      %v8042 = vunpack.c.l.b16 %v8024
      %v8043 = vunpack.c.h.b16 %v8024
      %v8044 = vunpack.c.l.b16 %v8025
      %v8045 = vunpack.c.h.b16 %v8025
      %v8046 = vunpack.c.l.b16 %v8026
      %v8047 = vunpack.c.h.b16 %v8026
      %v8048 = vunpack.c.l.b16 %v8027
      %v8049 = vunpack.c.h.b16 %v8027
      %v8050 = vunpack.c.l.b16 %v8028
      %v8051 = vunpack.c.h.b16 %v8028
      %v8052 = vunpack.c.l.b16 %v8029
      %v8053 = vunpack.c.h.b16 %v8029
      %v8054 = vunpack.c.l.b16 %v8030
      %v8055 = vunpack.c.h.b16 %v8030
      %v8056 = vunpack.c.l.b16 %v8031
      %v8057 = vunpack.c.h.b16 %v8031
      %v8058 = vunpack.c.l.b16 %v8032
      %v8059 = vpack.c.b16 %v8042, %v8042
      %v8060 = vpack.c.b16 %v8043, %v8043
      %v8061 = vpack.c.b16 %v8044, %v8044
      %v8062 = vpack.c.b16 %v8045, %v8045
      %v8063 = vpack.c.b16 %v8046, %v8046
      %v8064 = vpack.c.b16 %v8047, %v8047
      %v8065 = vpack.c.b16 %v8048, %v8048
      %v8066 = vpack.c.b16 %v8049, %v8049
      %v8067 = vpack.c.b16 %v8050, %v8050
      %v8068 = vpack.c.b16 %v8051, %v8051
      %v8069 = vpack.c.b16 %v8052, %v8052
      %v8070 = vpack.c.b16 %v8053, %v8053
      %v8071 = vpack.c.b16 %v8054, %v8054
      %v8072 = vpack.c.b16 %v8055, %v8055
      %v8073 = vpack.c.b16 %v8056, %v8056
      %v8074 = vpack.c.b16 %v8057, %v8057
      %v8075 = vpack.c.b16 %v8058, %v8058
      %v8077 = vshrl.u32 %v8059, 16
      %v8079 = vrot.slane %v8077, 6
      %v8080 = vshll.u32 %v8059, 16
      %v8082 = vrot.slane %v8080, 7
      %v8083 = vor.u32 %v8079, %v8082
      %v8084 = vrot.slane %v8083, 4
      %v8086 = vshrl.u32 %v8060, 16
      %v8088 = vrot.slane %v8086, 6
      %v8089 = vshll.u32 %v8060, 16
      %v8091 = vrot.slane %v8089, 7
      %v8092 = vor.u32 %v8088, %v8091
      %v8093 = vsel %vm1481, %v8084, %v8092
      %v8094 = vrot.slane %v8092, 4
      %v8096 = vshrl.u32 %v8061, 16
      %v8098 = vrot.slane %v8096, 6
      %v8099 = vshll.u32 %v8061, 16
      %v8101 = vrot.slane %v8099, 7
      %v8102 = vor.u32 %v8098, %v8101
      %v8103 = vsel %vm1481, %v8094, %v8102
      %v8104 = vrot.slane %v8102, 4
      %v8106 = vshrl.u32 %v8062, 16
      %v8108 = vrot.slane %v8106, 6
      %v8109 = vshll.u32 %v8062, 16
      %v8111 = vrot.slane %v8109, 7
      %v8112 = vor.u32 %v8108, %v8111
      %v8113 = vsel %vm1481, %v8104, %v8112
      %v8114 = vrot.slane %v8112, 4
      %v8116 = vshrl.u32 %v8063, 16
      %v8118 = vrot.slane %v8116, 6
      %v8119 = vshll.u32 %v8063, 16
      %v8121 = vrot.slane %v8119, 7
      %v8122 = vor.u32 %v8118, %v8121
      %v8123 = vsel %vm1481, %v8114, %v8122
      %v8124 = vrot.slane %v8122, 4
      %v8126 = vshrl.u32 %v8064, 16
      %v8128 = vrot.slane %v8126, 6
      %v8129 = vshll.u32 %v8064, 16
      %v8131 = vrot.slane %v8129, 7
      %v8132 = vor.u32 %v8128, %v8131
      %v8133 = vsel %vm1481, %v8124, %v8132
      %v8134 = vrot.slane %v8132, 4
      %v8136 = vshrl.u32 %v8065, 16
      %v8138 = vrot.slane %v8136, 6
      %v8139 = vshll.u32 %v8065, 16
      %v8141 = vrot.slane %v8139, 7
      %v8142 = vor.u32 %v8138, %v8141
      %v8143 = vsel %vm1481, %v8134, %v8142
      %v8144 = vrot.slane %v8142, 4
      %v8146 = vshrl.u32 %v8066, 16
      %v8148 = vrot.slane %v8146, 6
      %v8149 = vshll.u32 %v8066, 16
      %v8151 = vrot.slane %v8149, 7
      %v8152 = vor.u32 %v8148, %v8151
      %v8153 = vsel %vm1481, %v8144, %v8152
      %v8154 = vrot.slane %v8152, 4
      %v8156 = vshrl.u32 %v8067, 16
      %v8158 = vrot.slane %v8156, 6
      %v8159 = vshll.u32 %v8067, 16
      %v8161 = vrot.slane %v8159, 7
      %v8162 = vor.u32 %v8158, %v8161
      %v8163 = vsel %vm1481, %v8154, %v8162
      %v8164 = vrot.slane %v8162, 4
      %v8166 = vshrl.u32 %v8068, 16
      %v8168 = vrot.slane %v8166, 6
      %v8169 = vshll.u32 %v8068, 16
      %v8171 = vrot.slane %v8169, 7
      %v8172 = vor.u32 %v8168, %v8171
      %v8173 = vsel %vm1481, %v8164, %v8172
      %v8174 = vrot.slane %v8172, 4
      %v8176 = vshrl.u32 %v8069, 16
      %v8178 = vrot.slane %v8176, 6
      %v8179 = vshll.u32 %v8069, 16
      %v8181 = vrot.slane %v8179, 7
      %v8182 = vor.u32 %v8178, %v8181
      %v8183 = vsel %vm1481, %v8174, %v8182
      %v8184 = vrot.slane %v8182, 4
      %v8186 = vshrl.u32 %v8070, 16
      %v8188 = vrot.slane %v8186, 6
      %v8189 = vshll.u32 %v8070, 16
      %v8191 = vrot.slane %v8189, 7
      %v8192 = vor.u32 %v8188, %v8191
      %v8193 = vsel %vm1481, %v8184, %v8192
      %v8194 = vrot.slane %v8192, 4
      %v8196 = vshrl.u32 %v8071, 16
      %v8198 = vrot.slane %v8196, 6
      %v8199 = vshll.u32 %v8071, 16
      %v8201 = vrot.slane %v8199, 7
      %v8202 = vor.u32 %v8198, %v8201
      %v8203 = vsel %vm1481, %v8194, %v8202
      %v8204 = vrot.slane %v8202, 4
      %v8206 = vshrl.u32 %v8072, 16
      %v8208 = vrot.slane %v8206, 6
      %v8209 = vshll.u32 %v8072, 16
      %v8211 = vrot.slane %v8209, 7
      %v8212 = vor.u32 %v8208, %v8211
      %v8213 = vsel %vm1481, %v8204, %v8212
      %v8214 = vrot.slane %v8212, 4
      %v8216 = vshrl.u32 %v8073, 16
      %v8218 = vrot.slane %v8216, 6
      %v8219 = vshll.u32 %v8073, 16
      %v8221 = vrot.slane %v8219, 7
      %v8222 = vor.u32 %v8218, %v8221
      %v8223 = vsel %vm1481, %v8214, %v8222
      %v8224 = vrot.slane %v8222, 4
      %v8226 = vshrl.u32 %v8074, 16
      %v8228 = vrot.slane %v8226, 6
      %v8229 = vshll.u32 %v8074, 16
      %v8231 = vrot.slane %v8229, 7
      %v8232 = vor.u32 %v8228, %v8231
      %v8233 = vsel %vm1481, %v8224, %v8232
      %v8234 = vrot.slane %v8232, 4
      %v8236 = vshrl.u32 %v8075, 16
      %v8238 = vrot.slane %v8236, 6
      %v8239 = vshll.u32 %v8075, 16
      %v8241 = vrot.slane %v8239, 7
      %v8242 = vor.u32 %v8238, %v8241
      %v8243 = vsel %vm1481, %v8234, %v8242
      %8260 = vst.msk [vmem:[#allocation3 + $0x54] sm:$0xf] %vm313, %v8093
      %8261 = vst.msk [vmem:[#allocation3 + $0x58] sm:$0xf] %vm313, %v8103
      %8262 = vst.msk [vmem:[#allocation3 + $0x5c] sm:$0xf] %vm313, %v8113
      %8263 = vst.msk [vmem:[#allocation3 + $0x60] sm:$0xf] %vm313, %v8123
      %8264 = vst.msk [vmem:[#allocation3 + $0x64] sm:$0xf] %vm313, %v8133
      %8265 = vst.msk [vmem:[#allocation3 + $0x68] sm:$0xf] %vm313, %v8143
      %8266 = vst.msk [vmem:[#allocation3 + $0x6c] sm:$0xf] %vm313, %v8153
      %8267 = vst.msk [vmem:[#allocation3 + $0x70] sm:$0xf] %vm313, %v8163
      %8268 = vst.msk [vmem:[#allocation3 + $0x74] sm:$0xf] %vm313, %v8173
      %8269 = vst.msk [vmem:[#allocation3 + $0x78] sm:$0xf] %vm313, %v8183
      %8270 = vst.msk [vmem:[#allocation3 + $0x7c] sm:$0xf] %vm313, %v8193
      %8271 = vst.msk [vmem:[#allocation3 + $0x80] sm:$0xf] %vm313, %v8203
      %8272 = vst.msk [vmem:[#allocation3 + $0x84] sm:$0xf] %vm313, %v8213
      %8273 = vst.msk [vmem:[#allocation3 + $0x88] sm:$0xf] %vm313, %v8223
      %8274 = vst.msk [vmem:[#allocation3 + $0x8c] sm:$0xf] %vm313, %v8233
      %8275 = vst.msk [vmem:[#allocation3 + $0x90] sm:$0xf] %vm313, %v8243
      %v8276 = vld [vmem:[%s7] sm:$0x1]
      %v8277 = vld [vmem:[#allocation3] sm:$0xf]
      %v8278 = vld [vmem:[#allocation3 + $0x4] sm:$0xf]
      %v8279 = vld [vmem:[#allocation3 + $0x8] sm:$0xf]
      %v8280 = vld [vmem:[#allocation3 + $0xc] sm:$0xf]
      %v8281 = vld [vmem:[#allocation3 + $0x10] sm:$0xf]
      %v8282 = vld [vmem:[#allocation3 + $0x14] sm:$0xf]
      %v8283 = vld [vmem:[#allocation3 + $0x18] sm:$0xf]
      %v8284 = vld [vmem:[#allocation3 + $0x1c] sm:$0xf]
      %v8285 = vld [vmem:[#allocation3 + $0x20] sm:$0xf]
      %v8286 = vld [vmem:[#allocation3 + $0x24] sm:$0xf]
      %v8287 = vld [vmem:[#allocation3 + $0x28] sm:$0xf]
      %v8288 = vld [vmem:[#allocation3 + $0x2c] sm:$0xf]
      %v8289 = vld [vmem:[#allocation3 + $0x30] sm:$0xf]
      %v8290 = vld [vmem:[#allocation3 + $0x34] sm:$0xf]
      %v8291 = vld [vmem:[#allocation3 + $0x38] sm:$0xf]
      %v8292 = vld [vmem:[#allocation3 + $0x3c] sm:$0xf]
      %v8293 = vld [vmem:[#allocation3 + $0x40] sm:$0xf]
      %v8294 = vld [vmem:[#allocation3 + $0x44] sm:$0xf]
      %v8295 = vld [vmem:[#allocation3 + $0x48] sm:$0xf]
      %v8296 = vld [vmem:[#allocation3 + $0x4c] sm:$0xf]
      %v8297 = vld [vmem:[#allocation3 + $0x50] sm:$0xf]
      %v8298 = vld [vmem:[#allocation3 + $0x54] sm:$0xf]
      %v8299 = vld [vmem:[#allocation3 + $0x58] sm:$0xf]
      %v8300 = vld [vmem:[#allocation3 + $0x5c] sm:$0xf]
      %v8301 = vld [vmem:[#allocation3 + $0x60] sm:$0xf]
      %v8302 = vld [vmem:[#allocation3 + $0x64] sm:$0xf]
      %v8321 = vunpack.c.l.b16 %v8277
      %v8322 = vunpack.c.l.b16 %v8278
      %v8323 = vunpack.c.l.b16 %v8279
      %v8324 = vunpack.c.l.b16 %v8280
      %v8325 = vunpack.c.l.b16 %v8281
      %v8326 = vunpack.c.l.b16 %v8282
      %v8327 = vunpack.c.l.b16 %v8283
      %v8328 = vunpack.c.l.b16 %v8284
      %v8329 = vunpack.c.l.b16 %v8285
      %v8330 = vunpack.c.l.b16 %v8286
      %v8331 = vunpack.c.l.b16 %v8287
      %v8332 = vunpack.c.l.b16 %v8288
      %v8333 = vunpack.c.l.b16 %v8289
      %v8334 = vunpack.c.l.b16 %v8290
      %v8335 = vunpack.c.l.b16 %v8291
      %v8336 = vunpack.c.l.b16 %v8292
      %v8337 = vunpack.c.l.b16 %v8293
      %v8338 = vunpack.c.l.b16 %v8294
      %v8339 = vpack.c.b16 %v8322, %v8321
      %v8340 = vpack.c.b16 %v8324, %v8323
      %v8341 = vpack.c.b16 %v8326, %v8325
      %v8342 = vpack.c.b16 %v8328, %v8327
      %v8343 = vpack.c.b16 %v8330, %v8329
      %v8344 = vpack.c.b16 %v8332, %v8331
      %v8345 = vpack.c.b16 %v8334, %v8333
      %v8346 = vpack.c.b16 %v8336, %v8335
      %v8347 = vpack.c.b16 %v8338, %v8337
      %v8352 = vunpack.c.l.b16 %v8295
      %v8353 = vunpack.c.l.b16 %v8296
      %v8354 = vunpack.c.l.b16 %v8297
      %v8355 = vunpack.c.l.b16 %v8298
      %v8356 = vpack.c.b16 %v8353, %v8352
      %v8357 = vpack.c.b16 %v8355, %v8354
      %8358 = vrot.lane.b32.xlu0 %v8341, 32
      %v8359 = vpop.permute.xlu0 %8358
      %8360 = vrot.lane.b32.xlu0 %v8342, 32
      %v8361 = vpop.permute.xlu0 %8360
      %8362 = vrot.lane.b32.xlu0 %v8343, 32
      %v8363 = vpop.permute.xlu0 %8362
      %8364 = vrot.lane.b32.xlu0 %v8344, 32
      %v8365 = vpop.permute.xlu0 %8364
      %8366 = vrot.lane.b32.xlu0 %v8345, 32
      %v8367 = vpop.permute.xlu0 %8366
      %8368 = vrot.lane.b32.xlu0 %v8346, 32
      %v8369 = vpop.permute.xlu0 %8368
      %8370 = vrot.lane.b32.xlu0 %v8347, 32
      %v8371 = vpop.permute.xlu0 %8370
      %8372 = vrot.lane.b32.xlu0 %v8356, 32
      %v8373 = vpop.permute.xlu0 %8372
      %8374 = vrot.lane.b32.xlu0 %v8357, 32
      %v8375 = vpop.permute.xlu0 %8374
      %v8380 = vunpack.c.l.b16 %v8299
      %v8381 = vunpack.c.l.b16 %v8300
      %v8382 = vunpack.c.l.b16 %v8301
      %v8383 = vunpack.c.l.b16 %v8302
      %v8384 = vpack.c.b16 %v8381, %v8380
      %v8385 = vpack.c.b16 %v8383, %v8382
      %8386 = vrot.lane.b32.xlu0 %v8343, 64
      %v8387 = vpop.permute.xlu0 %8386
      %8388 = vrot.lane.b32.xlu0 %v8344, 64
      %v8389 = vpop.permute.xlu0 %8388
      %8390 = vrot.lane.b32.xlu0 %v8345, 64
      %v8391 = vpop.permute.xlu0 %8390
      %8392 = vrot.lane.b32.xlu0 %v8346, 64
      %v8393 = vpop.permute.xlu0 %8392
      %8394 = vrot.lane.b32.xlu0 %v8347, 64
      %v8395 = vpop.permute.xlu0 %8394
      %8396 = vrot.lane.b32.xlu0 %v8356, 64
      %v8397 = vpop.permute.xlu0 %8396
      %8398 = vrot.lane.b32.xlu0 %v8357, 64
      %v8399 = vpop.permute.xlu0 %8398
      %8400 = vrot.lane.b32.xlu0 %v8384, 64
      %v8401 = vpop.permute.xlu0 %8400
      %8402 = vrot.lane.b32.xlu0 %v8385, 64
      %v8403 = vpop.permute.xlu0 %8402
      %vm8404 = vcmask 261120
      %v8407 = vsel %vm8404, %v8339, %v8359
      %v8410 = vsel %vm8404, %v8340, %v8361
      %v8413 = vsel %vm8404, %v8341, %v8363
      %v8416 = vsel %vm8404, %v8342, %v8365
      %v8419 = vsel %vm8404, %v8343, %v8367
      %v8422 = vsel %vm8404, %v8344, %v8369
      %v8425 = vsel %vm8404, %v8345, %v8371
      %v8428 = vsel %vm8404, %v8346, %v8373
      %v8431 = vsel %vm8404, %v8347, %v8375
      %v8433 = vsel %vm5410, %v8407, %v8387
      %v8435 = vsel %vm5410, %v8410, %v8389
      %v8437 = vsel %vm5410, %v8413, %v8391
      %v8439 = vsel %vm5410, %v8416, %v8393
      %v8441 = vsel %vm5410, %v8419, %v8395
      %v8443 = vsel %vm5410, %v8422, %v8397
      %v8445 = vsel %vm5410, %v8425, %v8399
      %v8447 = vsel %vm5410, %v8428, %v8401
      %v8449 = vsel %vm5410, %v8431, %v8403
      %v8450 = vld [vmem:[%s6] sm:$0xf]
      %v8451 = vld [vmem:[%s6 + $0x4] sm:$0xf]
      %v8452 = vld [vmem:[%s6 + $0x8] sm:$0xf]
      %v8453 = vld [vmem:[%s6 + $0xc] sm:$0xf]
      %v8454 = vld [vmem:[%s6 + $0x10] sm:$0xf]
      %v8455 = vld [vmem:[%s6 + $0x14] sm:$0xf]
      %v8456 = vld [vmem:[%s6 + $0x18] sm:$0xf]
      %v8457 = vld [vmem:[%s6 + $0x1c] sm:$0xf]
      %v8458 = vld [vmem:[%s6 + $0x20] sm:$0xf]
      %v8459 = vld [vmem:[%s6 + $0x24] sm:$0xf]
      %v8460 = vld [vmem:[%s6 + $0x28] sm:$0xf]
      %v8461 = vld [vmem:[%s6 + $0x2c] sm:$0xf]
      %v8474 = vunpack.c.l.b16 %v8450
      %v8475 = vunpack.c.l.b16 %v8451
      %v8476 = vunpack.c.l.b16 %v8452
      %v8477 = vunpack.c.l.b16 %v8453
      %v8478 = vunpack.c.l.b16 %v8454
      %v8479 = vunpack.c.l.b16 %v8455
      %v8480 = vunpack.c.l.b16 %v8456
      %v8481 = vunpack.c.l.b16 %v8457
      %v8482 = vunpack.c.l.b16 %v8458
      %v8483 = vunpack.c.l.b16 %v8459
      %v8484 = vunpack.c.l.b16 %v8460
      %v8485 = vunpack.c.l.b16 %v8461
      %v8486 = vpack.c.b16 %v8475, %v8474
      %v8487 = vpack.c.b16 %v8477, %v8476
      %v8488 = vpack.c.b16 %v8479, %v8478
      %v8489 = vpack.c.b16 %v8481, %v8480
      %v8490 = vpack.c.b16 %v8483, %v8482
      %v8491 = vpack.c.b16 %v8485, %v8484
      %vm8498 = vcmask 785408
      %v8499 = vsel %vm8498, %v8433, 0
      %v8501 = vsel %vm8498, %v8435, 0
      %v8503 = vsel %vm8498, %v8437, 0
      %v8505 = vsel %vm8498, %v8439, 0
      %v8507 = vsel %vm8498, %v8441, 0
      %v8509 = vsel %vm8498, %v8443, 0
      %v8511 = vsel %vm8498, %v8445, 0
      %v8513 = vsel %vm8498, %v8447, 0
      %v8515 = vsel %vm8498, %v8449, 0
      %8517 = vmatprep.subr.bf16.mxu0 0
      %8518 = vmatpush1.bf16.msra.mxu0 0
      %8519 = vmatprep.subr.bf16.mxu0 0
      %8520 = vmatpush1.bf16.msra.mxu0 0
      %8521 = vmatprep.subr.bf16.mxu0 0
      %8522 = vmatpush1.bf16.msra.mxu0 %v8491
      %8523 = vmatprep.subr.bf16.mxu0 0
      %8524 = vmatpush1.bf16.msra.mxu0 %v8490
      %8525 = vmatprep.subr.bf16.mxu0 0
      %8526 = vmatpush1.bf16.msra.mxu0 %v8489
      %8527 = vmatprep.subr.bf16.mxu0 0
      %8528 = vmatpush1.bf16.msra.mxu0 %v8488
      %8529 = vmatprep.subr.bf16.mxu0 0
      %8530 = vmatpush1.bf16.msra.mxu0 %v8487
      %8531 = vmatprep.subr.bf16.mxu0 0
      %8532 = vmatpush1.bf16.msra.mxu0 %v8486
      %8533 = vmatprep.subr.bf16.mxu0 0
      %8534 = vmatpush2.bf16.msra.mxu0 0
      %8535 = vmatprep.subr.bf16.mxu0 0
      %8536 = vmatpush2.bf16.msra.mxu0 0
      %8537 = vmatprep.subr.bf16.mxu0 0
      %8538 = vmatpush2.bf16.msra.mxu0 0
      %8539 = vmatprep.subr.bf16.mxu0 0
      %8540 = vmatpush2.bf16.msra.mxu0 0
      %8541 = vmatprep.subr.bf16.mxu0 0
      %8542 = vmatpush2.bf16.msra.mxu0 0
      %8543 = vmatprep.subr.bf16.mxu0 0
      %8544 = vmatpush2.bf16.msra.mxu0 0
      %8545 = vmatprep.subr.bf16.mxu0 0
      %8546 = vmatpush2.bf16.msra.mxu0 0
      %8547 = vmatprep.subr.bf16.mxu0 0
      %8548 = vmatpush2.bf16.msra.mxu0 0
      %8549 = vmatprep.mubr.bf16.mxu0 0
      %8550 = vmatmul.mubr.bf16.gmra.mxu0 %v8499
      %v8551 = vpop.f32.mrf.mxu0
      %v8552 = vadd.f32 0.0, %v8551
      %v8553 = vpop.f32.mrf.mxu0
      %v8554 = vpop.f32.mrf.mxu0
      %v8555 = vadd.f32 0.0, %v8554
      %v8556 = vpop.f32.mrf.mxu0
      %8557 = vmatprep.mubr.bf16.mxu0 0
      %8558 = vmatmul.mubr.bf16.gmra.mxu0 %v8501
      %v8559 = vpop.f32.mrf.mxu0
      %v8560 = vadd.f32 0.0, %v8559
      %v8561 = vpop.f32.mrf.mxu0
      %v8562 = vpop.f32.mrf.mxu0
      %v8563 = vadd.f32 0.0, %v8562
      %v8564 = vpop.f32.mrf.mxu0
      %8565 = vmatprep.mubr.bf16.mxu0 0
      %8566 = vmatmul.mubr.bf16.gmra.mxu0 %v8503
      %v8567 = vpop.f32.mrf.mxu0
      %v8568 = vadd.f32 0.0, %v8567
      %v8569 = vpop.f32.mrf.mxu0
      %v8570 = vpop.f32.mrf.mxu0
      %v8571 = vadd.f32 0.0, %v8570
      %v8572 = vpop.f32.mrf.mxu0
      %8573 = vmatprep.mubr.bf16.mxu0 0
      %8574 = vmatmul.mubr.bf16.gmra.mxu0 %v8505
      %v8575 = vpop.f32.mrf.mxu0
      %v8576 = vadd.f32 0.0, %v8575
      %v8577 = vpop.f32.mrf.mxu0
      %v8578 = vpop.f32.mrf.mxu0
      %v8579 = vadd.f32 0.0, %v8578
      %v8580 = vpop.f32.mrf.mxu0
      %8581 = vmatprep.mubr.bf16.mxu0 0
      %8582 = vmatmul.mubr.bf16.gmra.mxu0 %v8507
      %v8583 = vpop.f32.mrf.mxu0
      %v8584 = vadd.f32 0.0, %v8583
      %v8585 = vpop.f32.mrf.mxu0
      %v8586 = vpop.f32.mrf.mxu0
      %v8587 = vadd.f32 0.0, %v8586
      %v8588 = vpop.f32.mrf.mxu0
      %8589 = vmatprep.mubr.bf16.mxu0 0
      %8590 = vmatmul.mubr.bf16.gmra.mxu0 %v8509
      %v8591 = vpop.f32.mrf.mxu0
      %v8592 = vadd.f32 0.0, %v8591
      %v8593 = vpop.f32.mrf.mxu0
      %v8594 = vpop.f32.mrf.mxu0
      %v8595 = vadd.f32 0.0, %v8594
      %v8596 = vpop.f32.mrf.mxu0
      %8597 = vmatprep.mubr.bf16.mxu0 0
      %8598 = vmatmul.mubr.bf16.gmra.mxu0 %v8511
      %v8599 = vpop.f32.mrf.mxu0
      %v8600 = vadd.f32 0.0, %v8599
      %v8601 = vpop.f32.mrf.mxu0
      %v8602 = vpop.f32.mrf.mxu0
      %v8603 = vadd.f32 0.0, %v8602
      %v8604 = vpop.f32.mrf.mxu0
      %8605 = vmatprep.mubr.bf16.mxu0 0
      %8606 = vmatmul.mubr.bf16.gmra.mxu0 %v8513
      %v8607 = vpop.f32.mrf.mxu0
      %v8608 = vadd.f32 0.0, %v8607
      %v8609 = vpop.f32.mrf.mxu0
      %v8610 = vpop.f32.mrf.mxu0
      %v8611 = vadd.f32 0.0, %v8610
      %v8612 = vpop.f32.mrf.mxu0
      %8613 = vmatprep.mubr.bf16.mxu0 0
      %8614 = vmatmul.mubr.bf16.gmra.mxu0 %v8515
      %v8615 = vpop.f32.mrf.mxu0
      %v8616 = vadd.f32 0.0, %v8615
      %v8617 = vpop.f32.mrf.mxu0
      %v8618 = vpop.f32.mrf.mxu0
      %v8619 = vadd.f32 0.0, %v8618
      %v8620 = vpop.f32.mrf.mxu0
      %8621 = vdwg.mxu0
      %v8639 = vrot.slane %v8552, 1
      %v8640 = vrot.slane %v8555, 1
      %v8641 = vsel %vm742, %v8639, %v8640
      %v8642 = vrot.slane %v8560, 1
      %v8643 = vsel %vm742, %v8640, %v8642
      %v8644 = vrot.slane %v8563, 1
      %v8645 = vsel %vm742, %v8642, %v8644
      %v8646 = vrot.slane %v8568, 1
      %v8647 = vsel %vm742, %v8644, %v8646
      %v8648 = vrot.slane %v8571, 1
      %v8649 = vsel %vm742, %v8646, %v8648
      %v8650 = vrot.slane %v8576, 1
      %v8651 = vsel %vm742, %v8648, %v8650
      %v8652 = vrot.slane %v8579, 1
      %v8653 = vsel %vm742, %v8650, %v8652
      %v8654 = vrot.slane %v8584, 1
      %v8655 = vsel %vm742, %v8652, %v8654
      %v8656 = vrot.slane %v8587, 1
      %v8657 = vsel %vm742, %v8654, %v8656
      %v8658 = vrot.slane %v8592, 1
      %v8659 = vsel %vm742, %v8656, %v8658
      %v8660 = vrot.slane %v8595, 1
      %v8661 = vsel %vm742, %v8658, %v8660
      %v8662 = vrot.slane %v8600, 1
      %v8663 = vsel %vm742, %v8660, %v8662
      %v8664 = vrot.slane %v8603, 1
      %v8665 = vsel %vm742, %v8662, %v8664
      %v8666 = vrot.slane %v8608, 1
      %v8667 = vsel %vm742, %v8664, %v8666
      %v8668 = vrot.slane %v8611, 1
      %v8669 = vsel %vm742, %v8666, %v8668
      %v8670 = vrot.slane %v8616, 1
      %v8671 = vsel %vm742, %v8668, %v8670
      %8672 = vrot.lane.b32.xlu0 %v8641, 120
      %v8673 = vpop.permute.xlu0 %8672
      %8674 = vrot.lane.b32.xlu0 %v8643, 120
      %v8675 = vpop.permute.xlu0 %8674
      %8676 = vrot.lane.b32.xlu0 %v8645, 120
      %v8677 = vpop.permute.xlu0 %8676
      %8678 = vrot.lane.b32.xlu0 %v8647, 120
      %v8679 = vpop.permute.xlu0 %8678
      %8680 = vrot.lane.b32.xlu0 %v8649, 120
      %v8681 = vpop.permute.xlu0 %8680
      %8682 = vrot.lane.b32.xlu0 %v8651, 120
      %v8683 = vpop.permute.xlu0 %8682
      %8684 = vrot.lane.b32.xlu0 %v8653, 120
      %v8685 = vpop.permute.xlu0 %8684
      %8686 = vrot.lane.b32.xlu0 %v8655, 120
      %v8687 = vpop.permute.xlu0 %8686
      %8688 = vrot.lane.b32.xlu0 %v8657, 120
      %v8689 = vpop.permute.xlu0 %8688
      %8690 = vrot.lane.b32.xlu0 %v8659, 120
      %v8691 = vpop.permute.xlu0 %8690
      %8692 = vrot.lane.b32.xlu0 %v8661, 120
      %v8693 = vpop.permute.xlu0 %8692
      %8694 = vrot.lane.b32.xlu0 %v8663, 120
      %v8695 = vpop.permute.xlu0 %8694
      %8696 = vrot.lane.b32.xlu0 %v8665, 120
      %v8697 = vpop.permute.xlu0 %8696
      %8698 = vrot.lane.b32.xlu0 %v8667, 120
      %v8699 = vpop.permute.xlu0 %8698
      %8700 = vrot.lane.b32.xlu0 %v8669, 120
      %v8701 = vpop.permute.xlu0 %8700
      %8702 = vrot.lane.b32.xlu0 %v8671, 120
      %v8703 = vpop.permute.xlu0 %8702
      %8704 = vrot.lane.b32.xlu0 %v8670, 120
      %v8705 = vpop.permute.xlu0 %8704
      %v8723 = vadd.f32 %v8552, %v8673
      %v8724 = vadd.f32 %v8555, %v8675
      %v8725 = vadd.f32 %v8560, %v8677
      %v8726 = vadd.f32 %v8563, %v8679
      %v8727 = vadd.f32 %v8568, %v8681
      %v8728 = vadd.f32 %v8571, %v8683
      %v8729 = vadd.f32 %v8576, %v8685
      %v8730 = vadd.f32 %v8579, %v8687
      %v8731 = vadd.f32 %v8584, %v8689
      %v8732 = vadd.f32 %v8587, %v8691
      %v8733 = vadd.f32 %v8592, %v8693
      %v8734 = vadd.f32 %v8595, %v8695
      %v8735 = vadd.f32 %v8600, %v8697
      %v8736 = vadd.f32 %v8603, %v8699
      %v8737 = vadd.f32 %v8608, %v8701
      %v8738 = vadd.f32 %v8611, %v8703
      %v8739 = vadd.f32 %v8616, %v8705
      %v8740 = vrot.slane %v8552, 2
      %v8741 = vrot.slane %v8555, 2
      %v8742 = vsel %vm805, %v8740, %v8741
      %v8743 = vrot.slane %v8560, 2
      %v8744 = vsel %vm805, %v8741, %v8743
      %v8745 = vrot.slane %v8563, 2
      %v8746 = vsel %vm805, %v8743, %v8745
      %v8747 = vrot.slane %v8568, 2
      %v8748 = vsel %vm805, %v8745, %v8747
      %v8749 = vrot.slane %v8571, 2
      %v8750 = vsel %vm805, %v8747, %v8749
      %v8751 = vrot.slane %v8576, 2
      %v8752 = vsel %vm805, %v8749, %v8751
      %v8753 = vrot.slane %v8579, 2
      %v8754 = vsel %vm805, %v8751, %v8753
      %v8755 = vrot.slane %v8584, 2
      %v8756 = vsel %vm805, %v8753, %v8755
      %v8757 = vrot.slane %v8587, 2
      %v8758 = vsel %vm805, %v8755, %v8757
      %v8759 = vrot.slane %v8592, 2
      %v8760 = vsel %vm805, %v8757, %v8759
      %v8761 = vrot.slane %v8595, 2
      %v8762 = vsel %vm805, %v8759, %v8761
      %v8763 = vrot.slane %v8600, 2
      %v8764 = vsel %vm805, %v8761, %v8763
      %v8765 = vrot.slane %v8603, 2
      %v8766 = vsel %vm805, %v8763, %v8765
      %v8767 = vrot.slane %v8608, 2
      %v8768 = vsel %vm805, %v8765, %v8767
      %v8769 = vrot.slane %v8611, 2
      %v8770 = vsel %vm805, %v8767, %v8769
      %v8771 = vrot.slane %v8616, 2
      %v8772 = vsel %vm805, %v8769, %v8771
      %8773 = vrot.lane.b32.xlu0 %v8742, 112
      %v8774 = vpop.permute.xlu0 %8773
      %8775 = vrot.lane.b32.xlu0 %v8744, 112
      %v8776 = vpop.permute.xlu0 %8775
      %8777 = vrot.lane.b32.xlu0 %v8746, 112
      %v8778 = vpop.permute.xlu0 %8777
      %8779 = vrot.lane.b32.xlu0 %v8748, 112
      %v8780 = vpop.permute.xlu0 %8779
      %8781 = vrot.lane.b32.xlu0 %v8750, 112
      %v8782 = vpop.permute.xlu0 %8781
      %8783 = vrot.lane.b32.xlu0 %v8752, 112
      %v8784 = vpop.permute.xlu0 %8783
      %8785 = vrot.lane.b32.xlu0 %v8754, 112
      %v8786 = vpop.permute.xlu0 %8785
      %8787 = vrot.lane.b32.xlu0 %v8756, 112
      %v8788 = vpop.permute.xlu0 %8787
      %8789 = vrot.lane.b32.xlu0 %v8758, 112
      %v8790 = vpop.permute.xlu0 %8789
      %8791 = vrot.lane.b32.xlu0 %v8760, 112
      %v8792 = vpop.permute.xlu0 %8791
      %8793 = vrot.lane.b32.xlu0 %v8762, 112
      %v8794 = vpop.permute.xlu0 %8793
      %8795 = vrot.lane.b32.xlu0 %v8764, 112
      %v8796 = vpop.permute.xlu0 %8795
      %8797 = vrot.lane.b32.xlu0 %v8766, 112
      %v8798 = vpop.permute.xlu0 %8797
      %8799 = vrot.lane.b32.xlu0 %v8768, 112
      %v8800 = vpop.permute.xlu0 %8799
      %8801 = vrot.lane.b32.xlu0 %v8770, 112
      %v8802 = vpop.permute.xlu0 %8801
      %8803 = vrot.lane.b32.xlu0 %v8772, 112
      %v8804 = vpop.permute.xlu0 %8803
      %8805 = vrot.lane.b32.xlu0 %v8771, 112
      %v8806 = vpop.permute.xlu0 %8805
      %v8824 = vadd.f32 %v8723, %v8774
      %v8825 = vadd.f32 %v8724, %v8776
      %v8826 = vadd.f32 %v8725, %v8778
      %v8827 = vadd.f32 %v8726, %v8780
      %v8828 = vadd.f32 %v8727, %v8782
      %v8829 = vadd.f32 %v8728, %v8784
      %v8830 = vadd.f32 %v8729, %v8786
      %v8831 = vadd.f32 %v8730, %v8788
      %v8832 = vadd.f32 %v8731, %v8790
      %v8833 = vadd.f32 %v8732, %v8792
      %v8834 = vadd.f32 %v8733, %v8794
      %v8835 = vadd.f32 %v8734, %v8796
      %v8836 = vadd.f32 %v8735, %v8798
      %v8837 = vadd.f32 %v8736, %v8800
      %v8838 = vadd.f32 %v8737, %v8802
      %v8839 = vadd.f32 %v8738, %v8804
      %v8840 = vadd.f32 %v8739, %v8806
      %v8841 = vrot.slane %v8555, 3
      %v8842 = vrot.slane %v8560, 3
      %v8843 = vsel %vm841, %v8841, %v8842
      %v8844 = vrot.slane %v8563, 3
      %v8845 = vsel %vm841, %v8842, %v8844
      %v8846 = vrot.slane %v8568, 3
      %v8847 = vsel %vm841, %v8844, %v8846
      %v8848 = vrot.slane %v8571, 3
      %v8849 = vsel %vm841, %v8846, %v8848
      %v8850 = vrot.slane %v8576, 3
      %v8851 = vsel %vm841, %v8848, %v8850
      %v8852 = vrot.slane %v8579, 3
      %v8853 = vsel %vm841, %v8850, %v8852
      %v8854 = vrot.slane %v8584, 3
      %v8855 = vsel %vm841, %v8852, %v8854
      %v8856 = vrot.slane %v8587, 3
      %v8857 = vsel %vm841, %v8854, %v8856
      %v8858 = vrot.slane %v8592, 3
      %v8859 = vsel %vm841, %v8856, %v8858
      %v8860 = vrot.slane %v8595, 3
      %v8861 = vsel %vm841, %v8858, %v8860
      %v8862 = vrot.slane %v8600, 3
      %v8863 = vsel %vm841, %v8860, %v8862
      %v8864 = vrot.slane %v8603, 3
      %v8865 = vsel %vm841, %v8862, %v8864
      %v8866 = vrot.slane %v8608, 3
      %v8867 = vsel %vm841, %v8864, %v8866
      %v8868 = vrot.slane %v8611, 3
      %v8869 = vsel %vm841, %v8866, %v8868
      %v8870 = vrot.slane %v8616, 3
      %v8871 = vsel %vm841, %v8868, %v8870
      %8872 = vrot.lane.b32.xlu0 %v8841, 104
      %v8873 = vpop.permute.xlu0 %8872
      %8874 = vrot.lane.b32.xlu0 %v8843, 104
      %v8875 = vpop.permute.xlu0 %8874
      %8876 = vrot.lane.b32.xlu0 %v8845, 104
      %v8877 = vpop.permute.xlu0 %8876
      %8878 = vrot.lane.b32.xlu0 %v8847, 104
      %v8879 = vpop.permute.xlu0 %8878
      %8880 = vrot.lane.b32.xlu0 %v8849, 104
      %v8881 = vpop.permute.xlu0 %8880
      %8882 = vrot.lane.b32.xlu0 %v8851, 104
      %v8883 = vpop.permute.xlu0 %8882
      %8884 = vrot.lane.b32.xlu0 %v8853, 104
      %v8885 = vpop.permute.xlu0 %8884
      %8886 = vrot.lane.b32.xlu0 %v8855, 104
      %v8887 = vpop.permute.xlu0 %8886
      %8888 = vrot.lane.b32.xlu0 %v8857, 104
      %v8889 = vpop.permute.xlu0 %8888
      %8890 = vrot.lane.b32.xlu0 %v8859, 104
      %v8891 = vpop.permute.xlu0 %8890
      %8892 = vrot.lane.b32.xlu0 %v8861, 104
      %v8893 = vpop.permute.xlu0 %8892
      %8894 = vrot.lane.b32.xlu0 %v8863, 104
      %v8895 = vpop.permute.xlu0 %8894
      %8896 = vrot.lane.b32.xlu0 %v8865, 104
      %v8897 = vpop.permute.xlu0 %8896
      %8898 = vrot.lane.b32.xlu0 %v8867, 104
      %v8899 = vpop.permute.xlu0 %8898
      %8900 = vrot.lane.b32.xlu0 %v8869, 104
      %v8901 = vpop.permute.xlu0 %8900
      %8902 = vrot.lane.b32.xlu0 %v8871, 104
      %v8903 = vpop.permute.xlu0 %8902
      %8904 = vrot.lane.b32.xlu0 %v8870, 104
      %v8905 = vpop.permute.xlu0 %8904
      %v8923 = vadd.f32 %v8824, %v8873
      %v8924 = vadd.f32 %v8825, %v8875
      %v8925 = vadd.f32 %v8826, %v8877
      %v8926 = vadd.f32 %v8827, %v8879
      %v8927 = vadd.f32 %v8828, %v8881
      %v8928 = vadd.f32 %v8829, %v8883
      %v8929 = vadd.f32 %v8830, %v8885
      %v8930 = vadd.f32 %v8831, %v8887
      %v8931 = vadd.f32 %v8832, %v8889
      %v8932 = vadd.f32 %v8833, %v8891
      %v8933 = vadd.f32 %v8834, %v8893
      %v8934 = vadd.f32 %v8835, %v8895
      %v8935 = vadd.f32 %v8836, %v8897
      %v8936 = vadd.f32 %v8837, %v8899
      %v8937 = vadd.f32 %v8838, %v8901
      %v8938 = vadd.f32 %v8839, %v8903
      %v8939 = vadd.f32 %v8840, %v8905
      %v8941 = vrot.slane %v8555, 4
      %v8942 = vrot.slane %v8560, 4
      %v8943 = vsel %vm1211, %v8941, %v8942
      %v8944 = vrot.slane %v8563, 4
      %v8945 = vsel %vm1211, %v8942, %v8944
      %v8946 = vrot.slane %v8568, 4
      %v8947 = vsel %vm1211, %v8944, %v8946
      %v8948 = vrot.slane %v8571, 4
      %v8949 = vsel %vm1211, %v8946, %v8948
      %v8950 = vrot.slane %v8576, 4
      %v8951 = vsel %vm1211, %v8948, %v8950
      %v8952 = vrot.slane %v8579, 4
      %v8953 = vsel %vm1211, %v8950, %v8952
      %v8954 = vrot.slane %v8584, 4
      %v8955 = vsel %vm1211, %v8952, %v8954
      %v8956 = vrot.slane %v8587, 4
      %v8957 = vsel %vm1211, %v8954, %v8956
      %v8958 = vrot.slane %v8592, 4
      %v8959 = vsel %vm1211, %v8956, %v8958
      %v8960 = vrot.slane %v8595, 4
      %v8961 = vsel %vm1211, %v8958, %v8960
      %v8962 = vrot.slane %v8600, 4
      %v8963 = vsel %vm1211, %v8960, %v8962
      %v8964 = vrot.slane %v8603, 4
      %v8965 = vsel %vm1211, %v8962, %v8964
      %v8966 = vrot.slane %v8608, 4
      %v8967 = vsel %vm1211, %v8964, %v8966
      %v8968 = vrot.slane %v8611, 4
      %v8969 = vsel %vm1211, %v8966, %v8968
      %v8970 = vrot.slane %v8616, 4
      %v8971 = vsel %vm1211, %v8968, %v8970
      %v8972 = vrot.slane %v8619, 4
      %v8973 = vsel %vm1211, %v8970, %v8972
      %8974 = vrot.lane.b32.xlu0 %v8941, 96
      %v8975 = vpop.permute.xlu0 %8974
      %8976 = vrot.lane.b32.xlu0 %v8943, 96
      %v8977 = vpop.permute.xlu0 %8976
      %8978 = vrot.lane.b32.xlu0 %v8945, 96
      %v8979 = vpop.permute.xlu0 %8978
      %8980 = vrot.lane.b32.xlu0 %v8947, 96
      %v8981 = vpop.permute.xlu0 %8980
      %8982 = vrot.lane.b32.xlu0 %v8949, 96
      %v8983 = vpop.permute.xlu0 %8982
      %8984 = vrot.lane.b32.xlu0 %v8951, 96
      %v8985 = vpop.permute.xlu0 %8984
      %8986 = vrot.lane.b32.xlu0 %v8953, 96
      %v8987 = vpop.permute.xlu0 %8986
      %8988 = vrot.lane.b32.xlu0 %v8955, 96
      %v8989 = vpop.permute.xlu0 %8988
      %8990 = vrot.lane.b32.xlu0 %v8957, 96
      %v8991 = vpop.permute.xlu0 %8990
      %8992 = vrot.lane.b32.xlu0 %v8959, 96
      %v8993 = vpop.permute.xlu0 %8992
      %8994 = vrot.lane.b32.xlu0 %v8961, 96
      %v8995 = vpop.permute.xlu0 %8994
      %8996 = vrot.lane.b32.xlu0 %v8963, 96
      %v8997 = vpop.permute.xlu0 %8996
      %8998 = vrot.lane.b32.xlu0 %v8965, 96
      %v8999 = vpop.permute.xlu0 %8998
      %9000 = vrot.lane.b32.xlu0 %v8967, 96
      %v9001 = vpop.permute.xlu0 %9000
      %9002 = vrot.lane.b32.xlu0 %v8969, 96
      %v9003 = vpop.permute.xlu0 %9002
      %9004 = vrot.lane.b32.xlu0 %v8971, 96
      %v9005 = vpop.permute.xlu0 %9004
      %9006 = vrot.lane.b32.xlu0 %v8973, 96
      %v9007 = vpop.permute.xlu0 %9006
      %v9025 = vadd.f32 %v8923, %v8975
      %v9026 = vadd.f32 %v8924, %v8977
      %v9027 = vadd.f32 %v8925, %v8979
      %v9028 = vadd.f32 %v8926, %v8981
      %v9029 = vadd.f32 %v8927, %v8983
      %v9030 = vadd.f32 %v8928, %v8985
      %v9031 = vadd.f32 %v8929, %v8987
      %v9032 = vadd.f32 %v8930, %v8989
      %v9033 = vadd.f32 %v8931, %v8991
      %v9034 = vadd.f32 %v8932, %v8993
      %v9035 = vadd.f32 %v8933, %v8995
      %v9036 = vadd.f32 %v8934, %v8997
      %v9037 = vadd.f32 %v8935, %v8999
      %v9038 = vadd.f32 %v8936, %v9001
      %v9039 = vadd.f32 %v8937, %v9003
      %v9040 = vadd.f32 %v8938, %v9005
      %v9041 = vadd.f32 %v8939, %v9007
      %v9042 = vrot.slane %v8555, 5
      %v9043 = vrot.slane %v8560, 5
      %v9044 = vsel %vm1247, %v9042, %v9043
      %v9045 = vrot.slane %v8563, 5
      %v9046 = vsel %vm1247, %v9043, %v9045
      %v9047 = vrot.slane %v8568, 5
      %v9048 = vsel %vm1247, %v9045, %v9047
      %v9049 = vrot.slane %v8571, 5
      %v9050 = vsel %vm1247, %v9047, %v9049
      %v9051 = vrot.slane %v8576, 5
      %v9052 = vsel %vm1247, %v9049, %v9051
      %v9053 = vrot.slane %v8579, 5
      %v9054 = vsel %vm1247, %v9051, %v9053
      %v9055 = vrot.slane %v8584, 5
      %v9056 = vsel %vm1247, %v9053, %v9055
      %v9057 = vrot.slane %v8587, 5
      %v9058 = vsel %vm1247, %v9055, %v9057
      %v9059 = vrot.slane %v8592, 5
      %v9060 = vsel %vm1247, %v9057, %v9059
      %v9061 = vrot.slane %v8595, 5
      %v9062 = vsel %vm1247, %v9059, %v9061
      %v9063 = vrot.slane %v8600, 5
      %v9064 = vsel %vm1247, %v9061, %v9063
      %v9065 = vrot.slane %v8603, 5
      %v9066 = vsel %vm1247, %v9063, %v9065
      %v9067 = vrot.slane %v8608, 5
      %v9068 = vsel %vm1247, %v9065, %v9067
      %v9069 = vrot.slane %v8611, 5
      %v9070 = vsel %vm1247, %v9067, %v9069
      %v9071 = vrot.slane %v8616, 5
      %v9072 = vsel %vm1247, %v9069, %v9071
      %v9073 = vrot.slane %v8619, 5
      %v9074 = vsel %vm1247, %v9071, %v9073
      %9075 = vrot.lane.b32.xlu0 %v9042, 88
      %v9076 = vpop.permute.xlu0 %9075
      %9077 = vrot.lane.b32.xlu0 %v9044, 88
      %v9078 = vpop.permute.xlu0 %9077
      %9079 = vrot.lane.b32.xlu0 %v9046, 88
      %v9080 = vpop.permute.xlu0 %9079
      %9081 = vrot.lane.b32.xlu0 %v9048, 88
      %v9082 = vpop.permute.xlu0 %9081
      %9083 = vrot.lane.b32.xlu0 %v9050, 88
      %v9084 = vpop.permute.xlu0 %9083
      %9085 = vrot.lane.b32.xlu0 %v9052, 88
      %v9086 = vpop.permute.xlu0 %9085
      %9087 = vrot.lane.b32.xlu0 %v9054, 88
      %v9088 = vpop.permute.xlu0 %9087
      %9089 = vrot.lane.b32.xlu0 %v9056, 88
      %v9090 = vpop.permute.xlu0 %9089
      %9091 = vrot.lane.b32.xlu0 %v9058, 88
      %v9092 = vpop.permute.xlu0 %9091
      %9093 = vrot.lane.b32.xlu0 %v9060, 88
      %v9094 = vpop.permute.xlu0 %9093
      %9095 = vrot.lane.b32.xlu0 %v9062, 88
      %v9096 = vpop.permute.xlu0 %9095
      %9097 = vrot.lane.b32.xlu0 %v9064, 88
      %v9098 = vpop.permute.xlu0 %9097
      %9099 = vrot.lane.b32.xlu0 %v9066, 88
      %v9100 = vpop.permute.xlu0 %9099
      %9101 = vrot.lane.b32.xlu0 %v9068, 88
      %v9102 = vpop.permute.xlu0 %9101
      %9103 = vrot.lane.b32.xlu0 %v9070, 88
      %v9104 = vpop.permute.xlu0 %9103
      %9105 = vrot.lane.b32.xlu0 %v9072, 88
      %v9106 = vpop.permute.xlu0 %9105
      %9107 = vrot.lane.b32.xlu0 %v9074, 88
      %v9108 = vpop.permute.xlu0 %9107
      %v9126 = vadd.f32 %v9025, %v9076
      %v9127 = vadd.f32 %v9026, %v9078
      %v9128 = vadd.f32 %v9027, %v9080
      %v9129 = vadd.f32 %v9028, %v9082
      %v9130 = vadd.f32 %v9029, %v9084
      %v9131 = vadd.f32 %v9030, %v9086
      %v9132 = vadd.f32 %v9031, %v9088
      %v9133 = vadd.f32 %v9032, %v9090
      %v9134 = vadd.f32 %v9033, %v9092
      %v9135 = vadd.f32 %v9034, %v9094
      %v9136 = vadd.f32 %v9035, %v9096
      %v9137 = vadd.f32 %v9036, %v9098
      %v9138 = vadd.f32 %v9037, %v9100
      %v9139 = vadd.f32 %v9038, %v9102
      %v9140 = vadd.f32 %v9039, %v9104
      %v9141 = vadd.f32 %v9040, %v9106
      %v9142 = vadd.f32 %v9041, %v9108
      %v9143 = vrot.slane %v8555, 6
      %v9144 = vrot.slane %v8560, 6
      %v9145 = vsel %vm401, %v9143, %v9144
      %v9146 = vrot.slane %v8563, 6
      %v9147 = vsel %vm401, %v9144, %v9146
      %v9148 = vrot.slane %v8568, 6
      %v9149 = vsel %vm401, %v9146, %v9148
      %v9150 = vrot.slane %v8571, 6
      %v9151 = vsel %vm401, %v9148, %v9150
      %v9152 = vrot.slane %v8576, 6
      %v9153 = vsel %vm401, %v9150, %v9152
      %v9154 = vrot.slane %v8579, 6
      %v9155 = vsel %vm401, %v9152, %v9154
      %v9156 = vrot.slane %v8584, 6
      %v9157 = vsel %vm401, %v9154, %v9156
      %v9158 = vrot.slane %v8587, 6
      %v9159 = vsel %vm401, %v9156, %v9158
      %v9160 = vrot.slane %v8592, 6
      %v9161 = vsel %vm401, %v9158, %v9160
      %v9162 = vrot.slane %v8595, 6
      %v9163 = vsel %vm401, %v9160, %v9162
      %v9164 = vrot.slane %v8600, 6
      %v9165 = vsel %vm401, %v9162, %v9164
      %v9166 = vrot.slane %v8603, 6
      %v9167 = vsel %vm401, %v9164, %v9166
      %v9168 = vrot.slane %v8608, 6
      %v9169 = vsel %vm401, %v9166, %v9168
      %v9170 = vrot.slane %v8611, 6
      %v9171 = vsel %vm401, %v9168, %v9170
      %v9172 = vrot.slane %v8616, 6
      %v9173 = vsel %vm401, %v9170, %v9172
      %v9174 = vrot.slane %v8619, 6
      %v9175 = vsel %vm401, %v9172, %v9174
      %9176 = vrot.lane.b32.xlu0 %v9143, 80
      %v9177 = vpop.permute.xlu0 %9176
      %9178 = vrot.lane.b32.xlu0 %v9145, 80
      %v9179 = vpop.permute.xlu0 %9178
      %9180 = vrot.lane.b32.xlu0 %v9147, 80
      %v9181 = vpop.permute.xlu0 %9180
      %9182 = vrot.lane.b32.xlu0 %v9149, 80
      %v9183 = vpop.permute.xlu0 %9182
      %9184 = vrot.lane.b32.xlu0 %v9151, 80
      %v9185 = vpop.permute.xlu0 %9184
      %9186 = vrot.lane.b32.xlu0 %v9153, 80
      %v9187 = vpop.permute.xlu0 %9186
      %9188 = vrot.lane.b32.xlu0 %v9155, 80
      %v9189 = vpop.permute.xlu0 %9188
      %9190 = vrot.lane.b32.xlu0 %v9157, 80
      %v9191 = vpop.permute.xlu0 %9190
      %9192 = vrot.lane.b32.xlu0 %v9159, 80
      %v9193 = vpop.permute.xlu0 %9192
      %9194 = vrot.lane.b32.xlu0 %v9161, 80
      %v9195 = vpop.permute.xlu0 %9194
      %9196 = vrot.lane.b32.xlu0 %v9163, 80
      %v9197 = vpop.permute.xlu0 %9196
      %9198 = vrot.lane.b32.xlu0 %v9165, 80
      %v9199 = vpop.permute.xlu0 %9198
      %9200 = vrot.lane.b32.xlu0 %v9167, 80
      %v9201 = vpop.permute.xlu0 %9200
      %9202 = vrot.lane.b32.xlu0 %v9169, 80
      %v9203 = vpop.permute.xlu0 %9202
      %9204 = vrot.lane.b32.xlu0 %v9171, 80
      %v9205 = vpop.permute.xlu0 %9204
      %9206 = vrot.lane.b32.xlu0 %v9173, 80
      %v9207 = vpop.permute.xlu0 %9206
      %9208 = vrot.lane.b32.xlu0 %v9175, 80
      %v9209 = vpop.permute.xlu0 %9208
      %v9227 = vadd.f32 %v9126, %v9177
      %v9228 = vadd.f32 %v9127, %v9179
      %v9229 = vadd.f32 %v9128, %v9181
      %v9230 = vadd.f32 %v9129, %v9183
      %v9231 = vadd.f32 %v9130, %v9185
      %v9232 = vadd.f32 %v9131, %v9187
      %v9233 = vadd.f32 %v9132, %v9189
      %v9234 = vadd.f32 %v9133, %v9191
      %v9235 = vadd.f32 %v9134, %v9193
      %v9236 = vadd.f32 %v9135, %v9195
      %v9237 = vadd.f32 %v9136, %v9197
      %v9238 = vadd.f32 %v9137, %v9199
      %v9239 = vadd.f32 %v9138, %v9201
      %v9240 = vadd.f32 %v9139, %v9203
      %v9241 = vadd.f32 %v9140, %v9205
      %v9242 = vadd.f32 %v9141, %v9207
      %v9243 = vadd.f32 %v9142, %v9209
      %v9245 = vlaneseq
      %v9246 = vshrl.u32 %v9245, 7
      %v9247 = vsub.s32 0, %v9246
      %v9248 = vrot.slane %v8276, %v9247
      %v9250 = vadd.f32 %v9227, %v9248
      %v9251 = vadd.f32 %v9228, %v9248
      %v9252 = vadd.f32 %v9229, %v9248
      %v9253 = vadd.f32 %v9230, %v9248
      %v9254 = vadd.f32 %v9231, %v9248
      %v9255 = vadd.f32 %v9232, %v9248
      %v9256 = vadd.f32 %v9233, %v9248
      %v9257 = vadd.f32 %v9234, %v9248
      %v9258 = vadd.f32 %v9235, %v9248
      %v9259 = vadd.f32 %v9236, %v9248
      %v9260 = vadd.f32 %v9237, %v9248
      %v9261 = vadd.f32 %v9238, %v9248
      %v9262 = vadd.f32 %v9239, %v9248
      %v9263 = vadd.f32 %v9240, %v9248
      %v9264 = vadd.f32 %v9241, %v9248
      %v9265 = vadd.f32 %v9242, %v9248
      %v9266 = vadd.f32 %v9243, %v9248
      %vm9267 = vcmask 64517
      %9268 = vst.msk [vmem:[%s305 - $0x5] sm:$0xe0] %vm9267, %v9250
      %vm9269 = vcmask 64512
      %9270 = vst.msk [vmem:[%s305 + $0x3] sm:$0xff] %vm9269, %v9251
      %9271 = vst.msk [vmem:[%s305 + $0xb] sm:$0xff] %vm9269, %v9252
      %9272 = vst.msk [vmem:[%s305 + $0x13] sm:$0xff] %vm9269, %v9253
      %9273 = vst.msk [vmem:[%s305 + $0x1b] sm:$0xff] %vm9269, %v9254
      %9274 = vst.msk [vmem:[%s305 + $0x23] sm:$0xff] %vm9269, %v9255
      %9275 = vst.msk [vmem:[%s305 + $0x2b] sm:$0xff] %vm9269, %v9256
      %9276 = vst.msk [vmem:[%s305 + $0x33] sm:$0xff] %vm9269, %v9257
      %9277 = vst.msk [vmem:[%s305 + $0x3b] sm:$0xff] %vm9269, %v9258
      %9278 = vst.msk [vmem:[%s305 + $0x43] sm:$0xff] %vm9269, %v9259
      %9279 = vst.msk [vmem:[%s305 + $0x4b] sm:$0xff] %vm9269, %v9260
      %9280 = vst.msk [vmem:[%s305 + $0x53] sm:$0xff] %vm9269, %v9261
      %9281 = vst.msk [vmem:[%s305 + $0x5b] sm:$0xff] %vm9269, %v9262
      %9282 = vst.msk [vmem:[%s305 + $0x63] sm:$0xff] %vm9269, %v9263
      %9283 = vst.msk [vmem:[%s305 + $0x6b] sm:$0xff] %vm9269, %v9264
      %9284 = vst.msk [vmem:[%s305 + $0x73] sm:$0xff] %vm9269, %v9265
      %vm9285 = vcmask 61440
      %9286 = vst.msk [vmem:[%s305 + $0x7b] sm:$0x1f] %vm9285, %v9266
      %v9287 = vld [vmem:[#allocation3 + $0x40] sm:$0xf]
      %v9288 = vld [vmem:[#allocation3 + $0x44] sm:$0xf]
      %v9289 = vld [vmem:[#allocation3 + $0x48] sm:$0xf]
      %v9290 = vld [vmem:[#allocation3 + $0x4c] sm:$0xf]
      %v9291 = vld [vmem:[#allocation3 + $0x50] sm:$0xf]
      %v9292 = vld [vmem:[#allocation3 + $0x54] sm:$0xf]
      %v9293 = vld [vmem:[#allocation3 + $0x58] sm:$0xf]
      %v9294 = vld [vmem:[#allocation3 + $0x5c] sm:$0xf]
      %v9295 = vld [vmem:[#allocation3 + $0x60] sm:$0xf]
      %v9296 = vld [vmem:[#allocation3 + $0x64] sm:$0xf]
      %v9297 = vld [vmem:[#allocation3 + $0x68] sm:$0xf]
      %v9298 = vld [vmem:[#allocation3 + $0x6c] sm:$0xf]
      %v9299 = vld [vmem:[#allocation3 + $0x70] sm:$0xf]
      %v9300 = vld [vmem:[#allocation3 + $0x74] sm:$0xf]
      %v9301 = vld [vmem:[#allocation3 + $0x78] sm:$0xf]
      %v9302 = vld [vmem:[#allocation3 + $0x7c] sm:$0xf]
      %v9303 = vld [vmem:[#allocation3 + $0x80] sm:$0xf]
      %v9304 = vld [vmem:[#allocation3 + $0x84] sm:$0xf]
      %v9305 = vld [vmem:[#allocation3 + $0x88] sm:$0xf]
      %v9306 = vld [vmem:[#allocation3 + $0x8c] sm:$0xf]
      %v9307 = vld [vmem:[#allocation3 + $0x90] sm:$0xf]
      %v9308 = vld [vmem:[#allocation3 + $0x94] sm:$0xf]
      %v9309 = vld [vmem:[#allocation3 + $0x98] sm:$0xf]
      %v9310 = vld [vmem:[#allocation3 + $0x9c] sm:$0xf]
      %v9311 = vld [vmem:[#allocation3 + $0xa0] sm:$0xf]
      %v9312 = vld [vmem:[#allocation3 + $0xa4] sm:$0xf]
      %v9331 = vunpack.c.l.b16 %v9287
      %v9332 = vunpack.c.l.b16 %v9288
      %v9333 = vunpack.c.l.b16 %v9289
      %v9334 = vunpack.c.l.b16 %v9290
      %v9335 = vunpack.c.l.b16 %v9291
      %v9336 = vunpack.c.l.b16 %v9292
      %v9337 = vunpack.c.l.b16 %v9293
      %v9338 = vunpack.c.l.b16 %v9294
      %v9339 = vunpack.c.l.b16 %v9295
      %v9340 = vunpack.c.l.b16 %v9296
      %v9341 = vunpack.c.l.b16 %v9297
      %v9342 = vunpack.c.l.b16 %v9298
      %v9343 = vunpack.c.l.b16 %v9299
      %v9344 = vunpack.c.l.b16 %v9300
      %v9345 = vunpack.c.l.b16 %v9301
      %v9346 = vunpack.c.l.b16 %v9302
      %v9347 = vunpack.c.l.b16 %v9303
      %v9348 = vunpack.c.l.b16 %v9304
      %v9349 = vpack.c.b16 %v9332, %v9331
      %v9350 = vpack.c.b16 %v9334, %v9333
      %v9351 = vpack.c.b16 %v9336, %v9335
      %v9352 = vpack.c.b16 %v9338, %v9337
      %v9353 = vpack.c.b16 %v9340, %v9339
      %v9354 = vpack.c.b16 %v9342, %v9341
      %v9355 = vpack.c.b16 %v9344, %v9343
      %v9356 = vpack.c.b16 %v9346, %v9345
      %v9357 = vpack.c.b16 %v9348, %v9347
      %v9362 = vunpack.c.l.b16 %v9305
      %v9363 = vunpack.c.l.b16 %v9306
      %v9364 = vunpack.c.l.b16 %v9307
      %v9365 = vunpack.c.l.b16 %v9308
      %v9366 = vpack.c.b16 %v9363, %v9362
      %v9367 = vpack.c.b16 %v9365, %v9364
      %9368 = vrot.lane.b32.xlu0 %v9351, 32
      %v9369 = vpop.permute.xlu0 %9368
      %9370 = vrot.lane.b32.xlu0 %v9352, 32
      %v9371 = vpop.permute.xlu0 %9370
      %9372 = vrot.lane.b32.xlu0 %v9353, 32
      %v9373 = vpop.permute.xlu0 %9372
      %9374 = vrot.lane.b32.xlu0 %v9354, 32
      %v9375 = vpop.permute.xlu0 %9374
      %9376 = vrot.lane.b32.xlu0 %v9355, 32
      %v9377 = vpop.permute.xlu0 %9376
      %9378 = vrot.lane.b32.xlu0 %v9356, 32
      %v9379 = vpop.permute.xlu0 %9378
      %9380 = vrot.lane.b32.xlu0 %v9357, 32
      %v9381 = vpop.permute.xlu0 %9380
      %9382 = vrot.lane.b32.xlu0 %v9366, 32
      %v9383 = vpop.permute.xlu0 %9382
      %9384 = vrot.lane.b32.xlu0 %v9367, 32
      %v9385 = vpop.permute.xlu0 %9384
      %v9390 = vunpack.c.l.b16 %v9309
      %v9391 = vunpack.c.l.b16 %v9310
      %v9392 = vunpack.c.l.b16 %v9311
      %v9393 = vunpack.c.l.b16 %v9312
      %v9394 = vpack.c.b16 %v9391, %v9390
      %v9395 = vpack.c.b16 %v9393, %v9392
      %9396 = vrot.lane.b32.xlu0 %v9353, 64
      %v9397 = vpop.permute.xlu0 %9396
      %9398 = vrot.lane.b32.xlu0 %v9354, 64
      %v9399 = vpop.permute.xlu0 %9398
      %9400 = vrot.lane.b32.xlu0 %v9355, 64
      %v9401 = vpop.permute.xlu0 %9400
      %9402 = vrot.lane.b32.xlu0 %v9356, 64
      %v9403 = vpop.permute.xlu0 %9402
      %9404 = vrot.lane.b32.xlu0 %v9357, 64
      %v9405 = vpop.permute.xlu0 %9404
      %9406 = vrot.lane.b32.xlu0 %v9366, 64
      %v9407 = vpop.permute.xlu0 %9406
      %9408 = vrot.lane.b32.xlu0 %v9367, 64
      %v9409 = vpop.permute.xlu0 %9408
      %9410 = vrot.lane.b32.xlu0 %v9394, 64
      %v9411 = vpop.permute.xlu0 %9410
      %9412 = vrot.lane.b32.xlu0 %v9395, 64
      %v9413 = vpop.permute.xlu0 %9412
      %v9416 = vsel %vm8404, %v9349, %v9369
      %v9419 = vsel %vm8404, %v9350, %v9371
      %v9422 = vsel %vm8404, %v9351, %v9373
      %v9425 = vsel %vm8404, %v9352, %v9375
      %v9428 = vsel %vm8404, %v9353, %v9377
      %v9431 = vsel %vm8404, %v9354, %v9379
      %v9434 = vsel %vm8404, %v9355, %v9381
      %v9437 = vsel %vm8404, %v9356, %v9383
      %v9440 = vsel %vm8404, %v9357, %v9385
      %v9442 = vsel %vm5410, %v9416, %v9397
      %v9444 = vsel %vm5410, %v9419, %v9399
      %v9446 = vsel %vm5410, %v9422, %v9401
      %v9448 = vsel %vm5410, %v9425, %v9403
      %v9450 = vsel %vm5410, %v9428, %v9405
      %v9452 = vsel %vm5410, %v9431, %v9407
      %v9454 = vsel %vm5410, %v9434, %v9409
      %v9456 = vsel %vm5410, %v9437, %v9411
      %v9458 = vsel %vm5410, %v9440, %v9413
      %v9459 = vld [vmem:[%s6] sm:$0xf]
      %v9460 = vld [vmem:[%s6 + $0x4] sm:$0xf]
      %v9461 = vld [vmem:[%s6 + $0x8] sm:$0xf]
      %v9462 = vld [vmem:[%s6 + $0xc] sm:$0xf]
      %v9463 = vld [vmem:[%s6 + $0x10] sm:$0xf]
      %v9464 = vld [vmem:[%s6 + $0x14] sm:$0xf]
      %v9465 = vld [vmem:[%s6 + $0x18] sm:$0xf]
      %v9466 = vld [vmem:[%s6 + $0x1c] sm:$0xf]
      %v9467 = vld [vmem:[%s6 + $0x20] sm:$0xf]
      %v9468 = vld [vmem:[%s6 + $0x24] sm:$0xf]
      %v9469 = vld [vmem:[%s6 + $0x28] sm:$0xf]
      %v9470 = vld [vmem:[%s6 + $0x2c] sm:$0xf]
      %v9483 = vunpack.c.l.b16 %v9459
      %v9484 = vunpack.c.l.b16 %v9460
      %v9485 = vunpack.c.l.b16 %v9461
      %v9486 = vunpack.c.l.b16 %v9462
      %v9487 = vunpack.c.l.b16 %v9463
      %v9488 = vunpack.c.l.b16 %v9464
      %v9489 = vunpack.c.l.b16 %v9465
      %v9490 = vunpack.c.l.b16 %v9466
      %v9491 = vunpack.c.l.b16 %v9467
      %v9492 = vunpack.c.l.b16 %v9468
      %v9493 = vunpack.c.l.b16 %v9469
      %v9494 = vunpack.c.l.b16 %v9470
      %v9495 = vpack.c.b16 %v9484, %v9483
      %v9496 = vpack.c.b16 %v9486, %v9485
      %v9497 = vpack.c.b16 %v9488, %v9487
      %v9498 = vpack.c.b16 %v9490, %v9489
      %v9499 = vpack.c.b16 %v9492, %v9491
      %v9500 = vpack.c.b16 %v9494, %v9493
      %v9507 = vsel %vm8498, %v9442, 0
      %v9509 = vsel %vm8498, %v9444, 0
      %v9511 = vsel %vm8498, %v9446, 0
      %v9513 = vsel %vm8498, %v9448, 0
      %v9515 = vsel %vm8498, %v9450, 0
      %v9517 = vsel %vm8498, %v9452, 0
      %v9519 = vsel %vm8498, %v9454, 0
      %v9521 = vsel %vm8498, %v9456, 0
      %v9523 = vsel %vm8498, %v9458, 0
      %9525 = vmatprep.subr.bf16.mxu0 0
      %9526 = vmatpush1.bf16.msra.mxu0 0
      %9527 = vmatprep.subr.bf16.mxu0 0
      %9528 = vmatpush1.bf16.msra.mxu0 0
      %9529 = vmatprep.subr.bf16.mxu0 0
      %9530 = vmatpush1.bf16.msra.mxu0 %v9500
      %9531 = vmatprep.subr.bf16.mxu0 0
      %9532 = vmatpush1.bf16.msra.mxu0 %v9499
      %9533 = vmatprep.subr.bf16.mxu0 0
      %9534 = vmatpush1.bf16.msra.mxu0 %v9498
      %9535 = vmatprep.subr.bf16.mxu0 0
      %9536 = vmatpush1.bf16.msra.mxu0 %v9497
      %9537 = vmatprep.subr.bf16.mxu0 0
      %9538 = vmatpush1.bf16.msra.mxu0 %v9496
      %9539 = vmatprep.subr.bf16.mxu0 0
      %9540 = vmatpush1.bf16.msra.mxu0 %v9495
      %9541 = vmatprep.subr.bf16.mxu0 0
      %9542 = vmatpush2.bf16.msra.mxu0 0
      %9543 = vmatprep.subr.bf16.mxu0 0
      %9544 = vmatpush2.bf16.msra.mxu0 0
      %9545 = vmatprep.subr.bf16.mxu0 0
      %9546 = vmatpush2.bf16.msra.mxu0 0
      %9547 = vmatprep.subr.bf16.mxu0 0
      %9548 = vmatpush2.bf16.msra.mxu0 0
      %9549 = vmatprep.subr.bf16.mxu0 0
      %9550 = vmatpush2.bf16.msra.mxu0 0
      %9551 = vmatprep.subr.bf16.mxu0 0
      %9552 = vmatpush2.bf16.msra.mxu0 0
      %9553 = vmatprep.subr.bf16.mxu0 0
      %9554 = vmatpush2.bf16.msra.mxu0 0
      %9555 = vmatprep.subr.bf16.mxu0 0
      %9556 = vmatpush2.bf16.msra.mxu0 0
      %9557 = vmatprep.mubr.bf16.mxu0 0
      %9558 = vmatmul.mubr.bf16.gmra.mxu0 %v9507
      %v9559 = vpop.f32.mrf.mxu0
      %v9560 = vadd.f32 0.0, %v9559
      %v9561 = vpop.f32.mrf.mxu0
      %v9562 = vpop.f32.mrf.mxu0
      %v9563 = vadd.f32 0.0, %v9562
      %v9564 = vpop.f32.mrf.mxu0
      %9565 = vmatprep.mubr.bf16.mxu0 0
      %9566 = vmatmul.mubr.bf16.gmra.mxu0 %v9509
      %v9567 = vpop.f32.mrf.mxu0
      %v9568 = vadd.f32 0.0, %v9567
      %v9569 = vpop.f32.mrf.mxu0
      %v9570 = vpop.f32.mrf.mxu0
      %v9571 = vadd.f32 0.0, %v9570
      %v9572 = vpop.f32.mrf.mxu0
      %9573 = vmatprep.mubr.bf16.mxu0 0
      %9574 = vmatmul.mubr.bf16.gmra.mxu0 %v9511
      %v9575 = vpop.f32.mrf.mxu0
      %v9576 = vadd.f32 0.0, %v9575
      %v9577 = vpop.f32.mrf.mxu0
      %v9578 = vpop.f32.mrf.mxu0
      %v9579 = vadd.f32 0.0, %v9578
      %v9580 = vpop.f32.mrf.mxu0
      %9581 = vmatprep.mubr.bf16.mxu0 0
      %9582 = vmatmul.mubr.bf16.gmra.mxu0 %v9513
      %v9583 = vpop.f32.mrf.mxu0
      %v9584 = vadd.f32 0.0, %v9583
      %v9585 = vpop.f32.mrf.mxu0
      %v9586 = vpop.f32.mrf.mxu0
      %v9587 = vadd.f32 0.0, %v9586
      %v9588 = vpop.f32.mrf.mxu0
      %9589 = vmatprep.mubr.bf16.mxu0 0
      %9590 = vmatmul.mubr.bf16.gmra.mxu0 %v9515
      %v9591 = vpop.f32.mrf.mxu0
      %v9592 = vadd.f32 0.0, %v9591
      %v9593 = vpop.f32.mrf.mxu0
      %v9594 = vpop.f32.mrf.mxu0
      %v9595 = vadd.f32 0.0, %v9594
      %v9596 = vpop.f32.mrf.mxu0
      %9597 = vmatprep.mubr.bf16.mxu0 0
      %9598 = vmatmul.mubr.bf16.gmra.mxu0 %v9517
      %v9599 = vpop.f32.mrf.mxu0
      %v9600 = vadd.f32 0.0, %v9599
      %v9601 = vpop.f32.mrf.mxu0
      %v9602 = vpop.f32.mrf.mxu0
      %v9603 = vadd.f32 0.0, %v9602
      %v9604 = vpop.f32.mrf.mxu0
      %9605 = vmatprep.mubr.bf16.mxu0 0
      %9606 = vmatmul.mubr.bf16.gmra.mxu0 %v9519
      %v9607 = vpop.f32.mrf.mxu0
      %v9608 = vadd.f32 0.0, %v9607
      %v9609 = vpop.f32.mrf.mxu0
      %v9610 = vpop.f32.mrf.mxu0
      %v9611 = vadd.f32 0.0, %v9610
      %v9612 = vpop.f32.mrf.mxu0
      %9613 = vmatprep.mubr.bf16.mxu0 0
      %9614 = vmatmul.mubr.bf16.gmra.mxu0 %v9521
      %v9615 = vpop.f32.mrf.mxu0
      %v9616 = vadd.f32 0.0, %v9615
      %v9617 = vpop.f32.mrf.mxu0
      %v9618 = vpop.f32.mrf.mxu0
      %v9619 = vadd.f32 0.0, %v9618
      %v9620 = vpop.f32.mrf.mxu0
      %9621 = vmatprep.mubr.bf16.mxu0 0
      %9622 = vmatmul.mubr.bf16.gmra.mxu0 %v9523
      %v9623 = vpop.f32.mrf.mxu0
      %v9624 = vadd.f32 0.0, %v9623
      %v9625 = vpop.f32.mrf.mxu0
      %v9626 = vpop.f32.mrf.mxu0
      %v9627 = vadd.f32 0.0, %v9626
      %v9628 = vpop.f32.mrf.mxu0
      %9629 = vdwg.mxu0
      %v9647 = vrot.slane %v9560, 1
      %v9648 = vrot.slane %v9563, 1
      %v9649 = vsel %vm742, %v9647, %v9648
      %v9650 = vrot.slane %v9568, 1
      %v9651 = vsel %vm742, %v9648, %v9650
      %v9652 = vrot.slane %v9571, 1
      %v9653 = vsel %vm742, %v9650, %v9652
      %v9654 = vrot.slane %v9576, 1
      %v9655 = vsel %vm742, %v9652, %v9654
      %v9656 = vrot.slane %v9579, 1
      %v9657 = vsel %vm742, %v9654, %v9656
      %v9658 = vrot.slane %v9584, 1
      %v9659 = vsel %vm742, %v9656, %v9658
      %v9660 = vrot.slane %v9587, 1
      %v9661 = vsel %vm742, %v9658, %v9660
      %v9662 = vrot.slane %v9592, 1
      %v9663 = vsel %vm742, %v9660, %v9662
      %v9664 = vrot.slane %v9595, 1
      %v9665 = vsel %vm742, %v9662, %v9664
      %v9666 = vrot.slane %v9600, 1
      %v9667 = vsel %vm742, %v9664, %v9666
      %v9668 = vrot.slane %v9603, 1
      %v9669 = vsel %vm742, %v9666, %v9668
      %v9670 = vrot.slane %v9608, 1
      %v9671 = vsel %vm742, %v9668, %v9670
      %v9672 = vrot.slane %v9611, 1
      %v9673 = vsel %vm742, %v9670, %v9672
      %v9674 = vrot.slane %v9616, 1
      %v9675 = vsel %vm742, %v9672, %v9674
      %v9676 = vrot.slane %v9619, 1
      %v9677 = vsel %vm742, %v9674, %v9676
      %v9678 = vrot.slane %v9624, 1
      %v9679 = vsel %vm742, %v9676, %v9678
      %9680 = vrot.lane.b32.xlu0 %v9649, 120
      %v9681 = vpop.permute.xlu0 %9680
      %9682 = vrot.lane.b32.xlu0 %v9651, 120
      %v9683 = vpop.permute.xlu0 %9682
      %9684 = vrot.lane.b32.xlu0 %v9653, 120
      %v9685 = vpop.permute.xlu0 %9684
      %9686 = vrot.lane.b32.xlu0 %v9655, 120
      %v9687 = vpop.permute.xlu0 %9686
      %9688 = vrot.lane.b32.xlu0 %v9657, 120
      %v9689 = vpop.permute.xlu0 %9688
      %9690 = vrot.lane.b32.xlu0 %v9659, 120
      %v9691 = vpop.permute.xlu0 %9690
      %9692 = vrot.lane.b32.xlu0 %v9661, 120
      %v9693 = vpop.permute.xlu0 %9692
      %9694 = vrot.lane.b32.xlu0 %v9663, 120
      %v9695 = vpop.permute.xlu0 %9694
      %9696 = vrot.lane.b32.xlu0 %v9665, 120
      %v9697 = vpop.permute.xlu0 %9696
      %9698 = vrot.lane.b32.xlu0 %v9667, 120
      %v9699 = vpop.permute.xlu0 %9698
      %9700 = vrot.lane.b32.xlu0 %v9669, 120
      %v9701 = vpop.permute.xlu0 %9700
      %9702 = vrot.lane.b32.xlu0 %v9671, 120
      %v9703 = vpop.permute.xlu0 %9702
      %9704 = vrot.lane.b32.xlu0 %v9673, 120
      %v9705 = vpop.permute.xlu0 %9704
      %9706 = vrot.lane.b32.xlu0 %v9675, 120
      %v9707 = vpop.permute.xlu0 %9706
      %9708 = vrot.lane.b32.xlu0 %v9677, 120
      %v9709 = vpop.permute.xlu0 %9708
      %9710 = vrot.lane.b32.xlu0 %v9679, 120
      %v9711 = vpop.permute.xlu0 %9710
      %9712 = vrot.lane.b32.xlu0 %v9678, 120
      %v9713 = vpop.permute.xlu0 %9712
      %v9731 = vadd.f32 %v9560, %v9681
      %v9732 = vadd.f32 %v9563, %v9683
      %v9733 = vadd.f32 %v9568, %v9685
      %v9734 = vadd.f32 %v9571, %v9687
      %v9735 = vadd.f32 %v9576, %v9689
      %v9736 = vadd.f32 %v9579, %v9691
      %v9737 = vadd.f32 %v9584, %v9693
      %v9738 = vadd.f32 %v9587, %v9695
      %v9739 = vadd.f32 %v9592, %v9697
      %v9740 = vadd.f32 %v9595, %v9699
      %v9741 = vadd.f32 %v9600, %v9701
      %v9742 = vadd.f32 %v9603, %v9703
      %v9743 = vadd.f32 %v9608, %v9705
      %v9744 = vadd.f32 %v9611, %v9707
      %v9745 = vadd.f32 %v9616, %v9709
      %v9746 = vadd.f32 %v9619, %v9711
      %v9747 = vadd.f32 %v9624, %v9713
      %v9748 = vrot.slane %v9560, 2
      %v9749 = vrot.slane %v9563, 2
      %v9750 = vsel %vm805, %v9748, %v9749
      %v9751 = vrot.slane %v9568, 2
      %v9752 = vsel %vm805, %v9749, %v9751
      %v9753 = vrot.slane %v9571, 2
      %v9754 = vsel %vm805, %v9751, %v9753
      %v9755 = vrot.slane %v9576, 2
      %v9756 = vsel %vm805, %v9753, %v9755
      %v9757 = vrot.slane %v9579, 2
      %v9758 = vsel %vm805, %v9755, %v9757
      %v9759 = vrot.slane %v9584, 2
      %v9760 = vsel %vm805, %v9757, %v9759
      %v9761 = vrot.slane %v9587, 2
      %v9762 = vsel %vm805, %v9759, %v9761
      %v9763 = vrot.slane %v9592, 2
      %v9764 = vsel %vm805, %v9761, %v9763
      %v9765 = vrot.slane %v9595, 2
      %v9766 = vsel %vm805, %v9763, %v9765
      %v9767 = vrot.slane %v9600, 2
      %v9768 = vsel %vm805, %v9765, %v9767
      %v9769 = vrot.slane %v9603, 2
      %v9770 = vsel %vm805, %v9767, %v9769
      %v9771 = vrot.slane %v9608, 2
      %v9772 = vsel %vm805, %v9769, %v9771
      %v9773 = vrot.slane %v9611, 2
      %v9774 = vsel %vm805, %v9771, %v9773
      %v9775 = vrot.slane %v9616, 2
      %v9776 = vsel %vm805, %v9773, %v9775
      %v9777 = vrot.slane %v9619, 2
      %v9778 = vsel %vm805, %v9775, %v9777
      %v9779 = vrot.slane %v9624, 2
      %v9780 = vsel %vm805, %v9777, %v9779
      %9781 = vrot.lane.b32.xlu0 %v9750, 112
      %v9782 = vpop.permute.xlu0 %9781
      %9783 = vrot.lane.b32.xlu0 %v9752, 112
      %v9784 = vpop.permute.xlu0 %9783
      %9785 = vrot.lane.b32.xlu0 %v9754, 112
      %v9786 = vpop.permute.xlu0 %9785
      %9787 = vrot.lane.b32.xlu0 %v9756, 112
      %v9788 = vpop.permute.xlu0 %9787
      %9789 = vrot.lane.b32.xlu0 %v9758, 112
      %v9790 = vpop.permute.xlu0 %9789
      %9791 = vrot.lane.b32.xlu0 %v9760, 112
      %v9792 = vpop.permute.xlu0 %9791
      %9793 = vrot.lane.b32.xlu0 %v9762, 112
      %v9794 = vpop.permute.xlu0 %9793
      %9795 = vrot.lane.b32.xlu0 %v9764, 112
      %v9796 = vpop.permute.xlu0 %9795
      %9797 = vrot.lane.b32.xlu0 %v9766, 112
      %v9798 = vpop.permute.xlu0 %9797
      %9799 = vrot.lane.b32.xlu0 %v9768, 112
      %v9800 = vpop.permute.xlu0 %9799
      %9801 = vrot.lane.b32.xlu0 %v9770, 112
      %v9802 = vpop.permute.xlu0 %9801
      %9803 = vrot.lane.b32.xlu0 %v9772, 112
      %v9804 = vpop.permute.xlu0 %9803
      %9805 = vrot.lane.b32.xlu0 %v9774, 112
      %v9806 = vpop.permute.xlu0 %9805
      %9807 = vrot.lane.b32.xlu0 %v9776, 112
      %v9808 = vpop.permute.xlu0 %9807
      %9809 = vrot.lane.b32.xlu0 %v9778, 112
      %v9810 = vpop.permute.xlu0 %9809
      %9811 = vrot.lane.b32.xlu0 %v9780, 112
      %v9812 = vpop.permute.xlu0 %9811
      %9813 = vrot.lane.b32.xlu0 %v9779, 112
      %v9814 = vpop.permute.xlu0 %9813
      %v9832 = vadd.f32 %v9731, %v9782
      %v9833 = vadd.f32 %v9732, %v9784
      %v9834 = vadd.f32 %v9733, %v9786
      %v9835 = vadd.f32 %v9734, %v9788
      %v9836 = vadd.f32 %v9735, %v9790
      %v9837 = vadd.f32 %v9736, %v9792
      %v9838 = vadd.f32 %v9737, %v9794
      %v9839 = vadd.f32 %v9738, %v9796
      %v9840 = vadd.f32 %v9739, %v9798
      %v9841 = vadd.f32 %v9740, %v9800
      %v9842 = vadd.f32 %v9741, %v9802
      %v9843 = vadd.f32 %v9742, %v9804
      %v9844 = vadd.f32 %v9743, %v9806
      %v9845 = vadd.f32 %v9744, %v9808
      %v9846 = vadd.f32 %v9745, %v9810
      %v9847 = vadd.f32 %v9746, %v9812
      %v9848 = vadd.f32 %v9747, %v9814
      %v9849 = vrot.slane %v9563, 3
      %v9850 = vrot.slane %v9568, 3
      %v9851 = vsel %vm841, %v9849, %v9850
      %v9852 = vrot.slane %v9571, 3
      %v9853 = vsel %vm841, %v9850, %v9852
      %v9854 = vrot.slane %v9576, 3
      %v9855 = vsel %vm841, %v9852, %v9854
      %v9856 = vrot.slane %v9579, 3
      %v9857 = vsel %vm841, %v9854, %v9856
      %v9858 = vrot.slane %v9584, 3
      %v9859 = vsel %vm841, %v9856, %v9858
      %v9860 = vrot.slane %v9587, 3
      %v9861 = vsel %vm841, %v9858, %v9860
      %v9862 = vrot.slane %v9592, 3
      %v9863 = vsel %vm841, %v9860, %v9862
      %v9864 = vrot.slane %v9595, 3
      %v9865 = vsel %vm841, %v9862, %v9864
      %v9866 = vrot.slane %v9600, 3
      %v9867 = vsel %vm841, %v9864, %v9866
      %v9868 = vrot.slane %v9603, 3
      %v9869 = vsel %vm841, %v9866, %v9868
      %v9870 = vrot.slane %v9608, 3
      %v9871 = vsel %vm841, %v9868, %v9870
      %v9872 = vrot.slane %v9611, 3
      %v9873 = vsel %vm841, %v9870, %v9872
      %v9874 = vrot.slane %v9616, 3
      %v9875 = vsel %vm841, %v9872, %v9874
      %v9876 = vrot.slane %v9619, 3
      %v9877 = vsel %vm841, %v9874, %v9876
      %v9878 = vrot.slane %v9624, 3
      %v9879 = vsel %vm841, %v9876, %v9878
      %9880 = vrot.lane.b32.xlu0 %v9849, 104
      %v9881 = vpop.permute.xlu0 %9880
      %9882 = vrot.lane.b32.xlu0 %v9851, 104
      %v9883 = vpop.permute.xlu0 %9882
      %9884 = vrot.lane.b32.xlu0 %v9853, 104
      %v9885 = vpop.permute.xlu0 %9884
      %9886 = vrot.lane.b32.xlu0 %v9855, 104
      %v9887 = vpop.permute.xlu0 %9886
      %9888 = vrot.lane.b32.xlu0 %v9857, 104
      %v9889 = vpop.permute.xlu0 %9888
      %9890 = vrot.lane.b32.xlu0 %v9859, 104
      %v9891 = vpop.permute.xlu0 %9890
      %9892 = vrot.lane.b32.xlu0 %v9861, 104
      %v9893 = vpop.permute.xlu0 %9892
      %9894 = vrot.lane.b32.xlu0 %v9863, 104
      %v9895 = vpop.permute.xlu0 %9894
      %9896 = vrot.lane.b32.xlu0 %v9865, 104
      %v9897 = vpop.permute.xlu0 %9896
      %9898 = vrot.lane.b32.xlu0 %v9867, 104
      %v9899 = vpop.permute.xlu0 %9898
      %9900 = vrot.lane.b32.xlu0 %v9869, 104
      %v9901 = vpop.permute.xlu0 %9900
      %9902 = vrot.lane.b32.xlu0 %v9871, 104
      %v9903 = vpop.permute.xlu0 %9902
      %9904 = vrot.lane.b32.xlu0 %v9873, 104
      %v9905 = vpop.permute.xlu0 %9904
      %9906 = vrot.lane.b32.xlu0 %v9875, 104
      %v9907 = vpop.permute.xlu0 %9906
      %9908 = vrot.lane.b32.xlu0 %v9877, 104
      %v9909 = vpop.permute.xlu0 %9908
      %9910 = vrot.lane.b32.xlu0 %v9879, 104
      %v9911 = vpop.permute.xlu0 %9910
      %9912 = vrot.lane.b32.xlu0 %v9878, 104
      %v9913 = vpop.permute.xlu0 %9912
      %v9931 = vadd.f32 %v9832, %v9881
      %v9932 = vadd.f32 %v9833, %v9883
      %v9933 = vadd.f32 %v9834, %v9885
      %v9934 = vadd.f32 %v9835, %v9887
      %v9935 = vadd.f32 %v9836, %v9889
      %v9936 = vadd.f32 %v9837, %v9891
      %v9937 = vadd.f32 %v9838, %v9893
      %v9938 = vadd.f32 %v9839, %v9895
      %v9939 = vadd.f32 %v9840, %v9897
      %v9940 = vadd.f32 %v9841, %v9899
      %v9941 = vadd.f32 %v9842, %v9901
      %v9942 = vadd.f32 %v9843, %v9903
      %v9943 = vadd.f32 %v9844, %v9905
      %v9944 = vadd.f32 %v9845, %v9907
      %v9945 = vadd.f32 %v9846, %v9909
      %v9946 = vadd.f32 %v9847, %v9911
      %v9947 = vadd.f32 %v9848, %v9913
      %v9949 = vrot.slane %v9563, 4
      %v9950 = vrot.slane %v9568, 4
      %v9951 = vsel %vm1211, %v9949, %v9950
      %v9952 = vrot.slane %v9571, 4
      %v9953 = vsel %vm1211, %v9950, %v9952
      %v9954 = vrot.slane %v9576, 4
      %v9955 = vsel %vm1211, %v9952, %v9954
      %v9956 = vrot.slane %v9579, 4
      %v9957 = vsel %vm1211, %v9954, %v9956
      %v9958 = vrot.slane %v9584, 4
      %v9959 = vsel %vm1211, %v9956, %v9958
      %v9960 = vrot.slane %v9587, 4
      %v9961 = vsel %vm1211, %v9958, %v9960
      %v9962 = vrot.slane %v9592, 4
      %v9963 = vsel %vm1211, %v9960, %v9962
      %v9964 = vrot.slane %v9595, 4
      %v9965 = vsel %vm1211, %v9962, %v9964
      %v9966 = vrot.slane %v9600, 4
      %v9967 = vsel %vm1211, %v9964, %v9966
      %v9968 = vrot.slane %v9603, 4
      %v9969 = vsel %vm1211, %v9966, %v9968
      %v9970 = vrot.slane %v9608, 4
      %v9971 = vsel %vm1211, %v9968, %v9970
      %v9972 = vrot.slane %v9611, 4
      %v9973 = vsel %vm1211, %v9970, %v9972
      %v9974 = vrot.slane %v9616, 4
      %v9975 = vsel %vm1211, %v9972, %v9974
      %v9976 = vrot.slane %v9619, 4
      %v9977 = vsel %vm1211, %v9974, %v9976
      %v9978 = vrot.slane %v9624, 4
      %v9979 = vsel %vm1211, %v9976, %v9978
      %v9980 = vrot.slane %v9627, 4
      %v9981 = vsel %vm1211, %v9978, %v9980
      %9982 = vrot.lane.b32.xlu0 %v9949, 96
      %v9983 = vpop.permute.xlu0 %9982
      %9984 = vrot.lane.b32.xlu0 %v9951, 96
      %v9985 = vpop.permute.xlu0 %9984
      %9986 = vrot.lane.b32.xlu0 %v9953, 96
      %v9987 = vpop.permute.xlu0 %9986
      %9988 = vrot.lane.b32.xlu0 %v9955, 96
      %v9989 = vpop.permute.xlu0 %9988
      %9990 = vrot.lane.b32.xlu0 %v9957, 96
      %v9991 = vpop.permute.xlu0 %9990
      %9992 = vrot.lane.b32.xlu0 %v9959, 96
      %v9993 = vpop.permute.xlu0 %9992
      %9994 = vrot.lane.b32.xlu0 %v9961, 96
      %v9995 = vpop.permute.xlu0 %9994
      %9996 = vrot.lane.b32.xlu0 %v9963, 96
      %v9997 = vpop.permute.xlu0 %9996
      %9998 = vrot.lane.b32.xlu0 %v9965, 96
      %v9999 = vpop.permute.xlu0 %9998
      %10000 = vrot.lane.b32.xlu0 %v9967, 96
      %v10001 = vpop.permute.xlu0 %10000
      %10002 = vrot.lane.b32.xlu0 %v9969, 96
      %v10003 = vpop.permute.xlu0 %10002
      %10004 = vrot.lane.b32.xlu0 %v9971, 96
      %v10005 = vpop.permute.xlu0 %10004
      %10006 = vrot.lane.b32.xlu0 %v9973, 96
      %v10007 = vpop.permute.xlu0 %10006
      %10008 = vrot.lane.b32.xlu0 %v9975, 96
      %v10009 = vpop.permute.xlu0 %10008
      %10010 = vrot.lane.b32.xlu0 %v9977, 96
      %v10011 = vpop.permute.xlu0 %10010
      %10012 = vrot.lane.b32.xlu0 %v9979, 96
      %v10013 = vpop.permute.xlu0 %10012
      %10014 = vrot.lane.b32.xlu0 %v9981, 96
      %v10015 = vpop.permute.xlu0 %10014
      %v10033 = vadd.f32 %v9931, %v9983
      %v10034 = vadd.f32 %v9932, %v9985
      %v10035 = vadd.f32 %v9933, %v9987
      %v10036 = vadd.f32 %v9934, %v9989
      %v10037 = vadd.f32 %v9935, %v9991
      %v10038 = vadd.f32 %v9936, %v9993
      %v10039 = vadd.f32 %v9937, %v9995
      %v10040 = vadd.f32 %v9938, %v9997
      %v10041 = vadd.f32 %v9939, %v9999
      %v10042 = vadd.f32 %v9940, %v10001
      %v10043 = vadd.f32 %v9941, %v10003
      %v10044 = vadd.f32 %v9942, %v10005
      %v10045 = vadd.f32 %v9943, %v10007
      %v10046 = vadd.f32 %v9944, %v10009
      %v10047 = vadd.f32 %v9945, %v10011
      %v10048 = vadd.f32 %v9946, %v10013
      %v10049 = vadd.f32 %v9947, %v10015
      %v10050 = vrot.slane %v9563, 5
      %v10051 = vrot.slane %v9568, 5
      %v10052 = vsel %vm1247, %v10050, %v10051
      %v10053 = vrot.slane %v9571, 5
      %v10054 = vsel %vm1247, %v10051, %v10053
      %v10055 = vrot.slane %v9576, 5
      %v10056 = vsel %vm1247, %v10053, %v10055
      %v10057 = vrot.slane %v9579, 5
      %v10058 = vsel %vm1247, %v10055, %v10057
      %v10059 = vrot.slane %v9584, 5
      %v10060 = vsel %vm1247, %v10057, %v10059
      %v10061 = vrot.slane %v9587, 5
      %v10062 = vsel %vm1247, %v10059, %v10061
      %v10063 = vrot.slane %v9592, 5
      %v10064 = vsel %vm1247, %v10061, %v10063
      %v10065 = vrot.slane %v9595, 5
      %v10066 = vsel %vm1247, %v10063, %v10065
      %v10067 = vrot.slane %v9600, 5
      %v10068 = vsel %vm1247, %v10065, %v10067
      %v10069 = vrot.slane %v9603, 5
      %v10070 = vsel %vm1247, %v10067, %v10069
      %v10071 = vrot.slane %v9608, 5
      %v10072 = vsel %vm1247, %v10069, %v10071
      %v10073 = vrot.slane %v9611, 5
      %v10074 = vsel %vm1247, %v10071, %v10073
      %v10075 = vrot.slane %v9616, 5
      %v10076 = vsel %vm1247, %v10073, %v10075
      %v10077 = vrot.slane %v9619, 5
      %v10078 = vsel %vm1247, %v10075, %v10077
      %v10079 = vrot.slane %v9624, 5
      %v10080 = vsel %vm1247, %v10077, %v10079
      %v10081 = vrot.slane %v9627, 5
      %v10082 = vsel %vm1247, %v10079, %v10081
      %10083 = vrot.lane.b32.xlu0 %v10050, 88
      %v10084 = vpop.permute.xlu0 %10083
      %10085 = vrot.lane.b32.xlu0 %v10052, 88
      %v10086 = vpop.permute.xlu0 %10085
      %10087 = vrot.lane.b32.xlu0 %v10054, 88
      %v10088 = vpop.permute.xlu0 %10087
      %10089 = vrot.lane.b32.xlu0 %v10056, 88
      %v10090 = vpop.permute.xlu0 %10089
      %10091 = vrot.lane.b32.xlu0 %v10058, 88
      %v10092 = vpop.permute.xlu0 %10091
      %10093 = vrot.lane.b32.xlu0 %v10060, 88
      %v10094 = vpop.permute.xlu0 %10093
      %10095 = vrot.lane.b32.xlu0 %v10062, 88
      %v10096 = vpop.permute.xlu0 %10095
      %10097 = vrot.lane.b32.xlu0 %v10064, 88
      %v10098 = vpop.permute.xlu0 %10097
      %10099 = vrot.lane.b32.xlu0 %v10066, 88
      %v10100 = vpop.permute.xlu0 %10099
      %10101 = vrot.lane.b32.xlu0 %v10068, 88
      %v10102 = vpop.permute.xlu0 %10101
      %10103 = vrot.lane.b32.xlu0 %v10070, 88
      %v10104 = vpop.permute.xlu0 %10103
      %10105 = vrot.lane.b32.xlu0 %v10072, 88
      %v10106 = vpop.permute.xlu0 %10105
      %10107 = vrot.lane.b32.xlu0 %v10074, 88
      %v10108 = vpop.permute.xlu0 %10107
      %10109 = vrot.lane.b32.xlu0 %v10076, 88
      %v10110 = vpop.permute.xlu0 %10109
      %10111 = vrot.lane.b32.xlu0 %v10078, 88
      %v10112 = vpop.permute.xlu0 %10111
      %10113 = vrot.lane.b32.xlu0 %v10080, 88
      %v10114 = vpop.permute.xlu0 %10113
      %10115 = vrot.lane.b32.xlu0 %v10082, 88
      %v10116 = vpop.permute.xlu0 %10115
      %v10134 = vadd.f32 %v10033, %v10084
      %v10135 = vadd.f32 %v10034, %v10086
      %v10136 = vadd.f32 %v10035, %v10088
      %v10137 = vadd.f32 %v10036, %v10090
      %v10138 = vadd.f32 %v10037, %v10092
      %v10139 = vadd.f32 %v10038, %v10094
      %v10140 = vadd.f32 %v10039, %v10096
      %v10141 = vadd.f32 %v10040, %v10098
      %v10142 = vadd.f32 %v10041, %v10100
      %v10143 = vadd.f32 %v10042, %v10102
      %v10144 = vadd.f32 %v10043, %v10104
      %v10145 = vadd.f32 %v10044, %v10106
      %v10146 = vadd.f32 %v10045, %v10108
      %v10147 = vadd.f32 %v10046, %v10110
      %v10148 = vadd.f32 %v10047, %v10112
      %v10149 = vadd.f32 %v10048, %v10114
      %v10150 = vadd.f32 %v10049, %v10116
      %v10151 = vrot.slane %v9563, 6
      %v10152 = vrot.slane %v9568, 6
      %v10153 = vsel %vm401, %v10151, %v10152
      %v10154 = vrot.slane %v9571, 6
      %v10155 = vsel %vm401, %v10152, %v10154
      %v10156 = vrot.slane %v9576, 6
      %v10157 = vsel %vm401, %v10154, %v10156
      %v10158 = vrot.slane %v9579, 6
      %v10159 = vsel %vm401, %v10156, %v10158
      %v10160 = vrot.slane %v9584, 6
      %v10161 = vsel %vm401, %v10158, %v10160
      %v10162 = vrot.slane %v9587, 6
      %v10163 = vsel %vm401, %v10160, %v10162
      %v10164 = vrot.slane %v9592, 6
      %v10165 = vsel %vm401, %v10162, %v10164
      %v10166 = vrot.slane %v9595, 6
      %v10167 = vsel %vm401, %v10164, %v10166
      %v10168 = vrot.slane %v9600, 6
      %v10169 = vsel %vm401, %v10166, %v10168
      %v10170 = vrot.slane %v9603, 6
      %v10171 = vsel %vm401, %v10168, %v10170
      %v10172 = vrot.slane %v9608, 6
      %v10173 = vsel %vm401, %v10170, %v10172
      %v10174 = vrot.slane %v9611, 6
      %v10175 = vsel %vm401, %v10172, %v10174
      %v10176 = vrot.slane %v9616, 6
      %v10177 = vsel %vm401, %v10174, %v10176
      %v10178 = vrot.slane %v9619, 6
      %v10179 = vsel %vm401, %v10176, %v10178
      %v10180 = vrot.slane %v9624, 6
      %v10181 = vsel %vm401, %v10178, %v10180
      %v10182 = vrot.slane %v9627, 6
      %v10183 = vsel %vm401, %v10180, %v10182
      %10184 = vrot.lane.b32.xlu0 %v10151, 80
      %v10185 = vpop.permute.xlu0 %10184
      %10186 = vrot.lane.b32.xlu0 %v10153, 80
      %v10187 = vpop.permute.xlu0 %10186
      %10188 = vrot.lane.b32.xlu0 %v10155, 80
      %v10189 = vpop.permute.xlu0 %10188
      %10190 = vrot.lane.b32.xlu0 %v10157, 80
      %v10191 = vpop.permute.xlu0 %10190
      %10192 = vrot.lane.b32.xlu0 %v10159, 80
      %v10193 = vpop.permute.xlu0 %10192
      %10194 = vrot.lane.b32.xlu0 %v10161, 80
      %v10195 = vpop.permute.xlu0 %10194
      %10196 = vrot.lane.b32.xlu0 %v10163, 80
      %v10197 = vpop.permute.xlu0 %10196
      %10198 = vrot.lane.b32.xlu0 %v10165, 80
      %v10199 = vpop.permute.xlu0 %10198
      %10200 = vrot.lane.b32.xlu0 %v10167, 80
      %v10201 = vpop.permute.xlu0 %10200
      %10202 = vrot.lane.b32.xlu0 %v10169, 80
      %v10203 = vpop.permute.xlu0 %10202
      %10204 = vrot.lane.b32.xlu0 %v10171, 80
      %v10205 = vpop.permute.xlu0 %10204
      %10206 = vrot.lane.b32.xlu0 %v10173, 80
      %v10207 = vpop.permute.xlu0 %10206
      %10208 = vrot.lane.b32.xlu0 %v10175, 80
      %v10209 = vpop.permute.xlu0 %10208
      %10210 = vrot.lane.b32.xlu0 %v10177, 80
      %v10211 = vpop.permute.xlu0 %10210
      %10212 = vrot.lane.b32.xlu0 %v10179, 80
      %v10213 = vpop.permute.xlu0 %10212
      %10214 = vrot.lane.b32.xlu0 %v10181, 80
      %v10215 = vpop.permute.xlu0 %10214
      %10216 = vrot.lane.b32.xlu0 %v10183, 80
      %v10217 = vpop.permute.xlu0 %10216
      %v10235 = vadd.f32 %v10134, %v10185
      %v10236 = vadd.f32 %v10135, %v10187
      %v10237 = vadd.f32 %v10136, %v10189
      %v10238 = vadd.f32 %v10137, %v10191
      %v10239 = vadd.f32 %v10138, %v10193
      %v10240 = vadd.f32 %v10139, %v10195
      %v10241 = vadd.f32 %v10140, %v10197
      %v10242 = vadd.f32 %v10141, %v10199
      %v10243 = vadd.f32 %v10142, %v10201
      %v10244 = vadd.f32 %v10143, %v10203
      %v10245 = vadd.f32 %v10144, %v10205
      %v10246 = vadd.f32 %v10145, %v10207
      %v10247 = vadd.f32 %v10146, %v10209
      %v10248 = vadd.f32 %v10147, %v10211
      %v10249 = vadd.f32 %v10148, %v10213
      %v10250 = vadd.f32 %v10149, %v10215
      %v10251 = vadd.f32 %v10150, %v10217
      %v10252 = vadd.f32 %v10235, %v9248
      %v10253 = vadd.f32 %v10236, %v9248
      %v10254 = vadd.f32 %v10237, %v9248
      %v10255 = vadd.f32 %v10238, %v9248
      %v10256 = vadd.f32 %v10239, %v9248
      %v10257 = vadd.f32 %v10240, %v9248
      %v10258 = vadd.f32 %v10241, %v9248
      %v10259 = vadd.f32 %v10242, %v9248
      %v10260 = vadd.f32 %v10243, %v9248
      %v10261 = vadd.f32 %v10244, %v9248
      %v10262 = vadd.f32 %v10245, %v9248
      %v10263 = vadd.f32 %v10246, %v9248
      %v10264 = vadd.f32 %v10247, %v9248
      %v10265 = vadd.f32 %v10248, %v9248
      %v10266 = vadd.f32 %v10249, %v9248
      %v10267 = vadd.f32 %v10250, %v9248
      %v10268 = vadd.f32 %v10251, %v9248
      %10269 = vst.msk [vmem:[%s305 + $0x7b] sm:$0xe0] %vm9267, %v10252
      %10270 = vst.msk [vmem:[%s305 + $0x83] sm:$0xff] %vm9269, %v10253
      %10271 = vst.msk [vmem:[%s305 + $0x8b] sm:$0xff] %vm9269, %v10254
      %10272 = vst.msk [vmem:[%s305 + $0x93] sm:$0xff] %vm9269, %v10255
      %10273 = vst.msk [vmem:[%s305 + $0x9b] sm:$0xff] %vm9269, %v10256
      %10274 = vst.msk [vmem:[%s305 + $0xa3] sm:$0xff] %vm9269, %v10257
      %10275 = vst.msk [vmem:[%s305 + $0xab] sm:$0xff] %vm9269, %v10258
      %10276 = vst.msk [vmem:[%s305 + $0xb3] sm:$0xff] %vm9269, %v10259
      %10277 = vst.msk [vmem:[%s305 + $0xbb] sm:$0xff] %vm9269, %v10260
      %10278 = vst.msk [vmem:[%s305 + $0xc3] sm:$0xff] %vm9269, %v10261
      %10279 = vst.msk [vmem:[%s305 + $0xcb] sm:$0xff] %vm9269, %v10262
      %10280 = vst.msk [vmem:[%s305 + $0xd3] sm:$0xff] %vm9269, %v10263
      %10281 = vst.msk [vmem:[%s305 + $0xdb] sm:$0xff] %vm9269, %v10264
      %10282 = vst.msk [vmem:[%s305 + $0xe3] sm:$0xff] %vm9269, %v10265
      %10283 = vst.msk [vmem:[%s305 + $0xeb] sm:$0xff] %vm9269, %v10266
      %10284 = vst.msk [vmem:[%s305 + $0xf3] sm:$0xff] %vm9269, %v10267
      %10285 = vst.msk [vmem:[%s305 + $0xfb] sm:$0x1f] %vm9285, %v10268
      %p10286 = scmp.lt.s32.totalorder %s19, 1
      %s10287 = scalar_select %p10286, %s19, 1
      %s10288 = smul.addr %s10287, 32
      %s10289 = smul.addr %s10288, 8
      %s10290 = scalar_lea.vmem %s8, %s10289
      // Predicated region
      $region53: #{context_net_forward.1} parent=51 // pred_check
        %p10291 = pneg %p210
      $region54: #{context_net_forward.1} parent=51 // pred_check_branch
        %10293 = sbr.rel (%p10291) target = $region56
      $region55: #{context_net_forward.1} parent=51 // pred_region
        _
      $region56: #{context_net_forward.1} parent=51 // pred_fallthru
        _
    $region52: #{context_net_forward.1} parent=5 // pred_fallthru
      _
    %p10294 = scmp.le.s32.totalorder 2, %s14
    // Predicated region
    $region57: #{context_net_forward.1} parent=5 // pred_check
      %p10295 = pneg %p10294
    $region58: #{context_net_forward.1} parent=5 // pred_check_branch
      %10297 = sbr.rel (%p10295) target = $region60
    $region59: #{context_net_forward.1} parent=5 // pred_region
      %s10298 = ssub.s32 %s14, 2
      // Predicated region
      $region61: #{context_net_forward.1} parent=59 // pred_check
        %p10299 = pneg %p216
      $region62: #{context_net_forward.1} parent=59 // pred_check_branch
        %10301 = sbr.rel (%p10299) target = $region64
      $region63: #{context_net_forward.1} parent=59 // pred_region
        %p10302 = scmp.lt.s32.totalorder %s20, 1
        %s10303 = scalar_select %p10302, %s20, 1
        %s10304 = smul.addr %s10303, 32
        %s10305 = smul.addr %s10304, 8
        %s10306 = scalar_lea.vmem %s8, %s10305
      $region64: #{context_net_forward.1} parent=59 // pred_fallthru
        _
    $region60: #{context_net_forward.1} parent=5 // pred_fallthru
      _
  $region6: #{context_net_forward.1} parent=0 // loop_footer
    %s18 = sadd.s32 1, %s14
  $region7: #{context_net_forward.1} parent=0 // loop_footer_branch
    %13 = sbr.rel target = $region3
  $region8: #{context_net_forward.1} parent=0 // loop_exit
    _

</llo_original>
